<compile_context>
chip_gen: v7x
topology: tpu7x:2x2x1
jax: 0.10.0
libtpu: 0.0.40
codegen_flags: <defaults>
</compile_context>

<pallas_src>
import functools
import math

import jax
import jax.numpy as jnp
from jax import lax
from jax.experimental import pallas as pl
from jax.experimental.pallas import tpu as pltpu


LN_EPS = 1e-5
NEG_INF = -1e30
N_PER_LAYER = 12   # refs per encoder layer passed to the fused kernel


# ----------------------------- Pallas kernel ---------------------------------

def _encoder_layer_step(x, bias, refs, *, nhead, dh):
    """One nn.TransformerEncoderLayer (post-norm, ReLU FFN, eval mode) on an (S, d) slab."""
    (wqkv_ref, bqkv_ref, wo_ref, bo_ref,
     ln1w_ref, ln1b_ref, ln2w_ref, ln2b_ref,
     w1_ref, b1_ref, w2_ref, b2_ref) = refs
    n, d = x.shape
    scale = 1.0 / math.sqrt(dh)

    # ---- fused, lane-dense QKV projection: one (n,d)x(d,3d) MXU push ----
    qkv = jnp.dot(x, wqkv_ref[...], preferred_element_type=jnp.float32) + bqkv_ref[...]
    q = qkv[:, 0 * d:1 * d].reshape(n, nhead, dh)
    k = qkv[:, 1 * d:2 * d].reshape(n, nhead, dh)
    v = qkv[:, 2 * d:3 * d].reshape(n, nhead, dh)

    # ---- attention scores per head (head split rides the idle XLU slot) ----
    s = jnp.einsum('qhc,khc->hqk', q, k,
                   preferred_element_type=jnp.float32) * scale               # (H, S, S)
    s = s + bias[None]                                                       # key-padding bias
    s = s - jnp.max(s, axis=-1, keepdims=True)
    p = jnp.exp(s)
    p = p * pl.reciprocal(jnp.sum(p, axis=-1, keepdims=True), approx=True)   # EUP reciprocal

    ctx = jnp.einsum('hqk,khc->qhc', p, v,
                     preferred_element_type=jnp.float32).reshape(n, d)       # concat heads
    attn = jnp.dot(ctx, wo_ref[...], preferred_element_type=jnp.float32) + bo_ref[...]

    # ---- residual + LayerNorm1 ----
    y = x + attn
    mu = jnp.mean(y, axis=-1, keepdims=True)
    var = jnp.mean((y - mu) ** 2, axis=-1, keepdims=True)
    y = (y - mu) * lax.rsqrt(var + LN_EPS) * ln1w_ref[...] + ln1b_ref[...]

    # ---- feed-forward: native bf16 x bf16 MXU path, f32 accumulate ----
    h1 = jnp.dot(y.astype(jnp.bfloat16), w1_ref[...],
                 preferred_element_type=jnp.float32) + b1_ref[...]
    h1 = jnp.maximum(h1, 0.0)
    ff = jnp.dot(h1.astype(jnp.bfloat16), w2_ref[...],
                 preferred_element_type=jnp.float32) + b2_ref[...]

    # ---- residual + LayerNorm2 ----
    z = y + ff
    mu = jnp.mean(z, axis=-1, keepdims=True)
    var = jnp.mean((z - mu) ** 2, axis=-1, keepdims=True)
    return (z - mu) * lax.rsqrt(var + LN_EPS) * ln2w_ref[...] + ln2b_ref[...]


def _fused_forward_kernel(*refs, num_layers, nhead, dh):
    """Whole RaceTransformer forward for one batch item (S, d); grid=(B,) over batch."""
    cat_ref, feats_ref, mask_ref, w_in_ref, b_in_ref = refs[:5]
    rest = refs[5:]
    layer_refs = rest[:num_layers * N_PER_LAYER]
    wh1_ref, bh1_ref, wh2t_ref, bh2_ref, o_ref = rest[num_layers * N_PER_LAYER:]

    # EmbeddingHeads: cat_emb (zero-padded to d in wrapper) + block-diagonal projection
    # of [float | comment | spotlight] landing in columns cat_dim:d.
    x = cat_ref[...] + (
        jnp.dot(feats_ref[...], w_in_ref[...], preferred_element_type=jnp.float32)
        + b_in_ref[...])                                                     # (S, d)

    # src_key_padding_mask == (mask == 0): additive key bias, built in-kernel, O(S).
    bias = jnp.where(mask_ref[...] != 0.0, 0.0, NEG_INF)                     # (1, S)

    for l in range(num_layers):                  # tiny depth -> unrolled inside one grid step
        x = _encoder_layer_step(
            x, bias, layer_refs[l * N_PER_LAYER:(l + 1) * N_PER_LAYER],
            nhead=nhead, dh=dh)

    # Output head: Linear -> ReLU -> Linear(d -> 1), written lane-dense as (1, S).
    h = jnp.maximum(
        jnp.dot(x, wh1_ref[...], preferred_element_type=jnp.float32) + bh1_ref[...], 0.0)
    pred = lax.dot_general(wh2t_ref[...], h, (((1,), (1,)), ((), ())),
                           preferred_element_type=jnp.float32) + bh2_ref[...]
    o_ref[...] = pred


# ----------------------------- model forward ---------------------------------

def race_transformer_forward(params, float_feats, idx_feats, comment_vecs,
                             spotlight_vecs, mask, *, nhead):
    b, s, _ = float_feats.shape
    emb_dim = params['emb_tables'][0].shape[1]
    cat_dim = emb_dim * len(params['emb_tables'])
    d = cat_dim + 3 * emb_dim
    dh = d // nhead
    num_layers = len(params['layers'])
    dff = params['layers'][0]['w1'].shape[1]

    # TODO(synk): categorical nn.Embedding gather is a data-dependent lookup; kept in JAX glue.
    cat_emb = jnp.concatenate(
        [tab[idx_feats[..., i]] for i, tab in enumerate(params['emb_tables'])], axis=-1)
    cat_pad = jnp.pad(cat_emb, ((0, 0), (0, 0), (0, d - cat_dim)))           # (B, S, d)

    feats = jnp.concatenate([float_feats, comment_vecs, spotlight_vecs], axis=-1)  # (B, S, f)
    f_dim = feats.shape[-1]
    maskf = mask.astype(jnp.float32).reshape(b, 1, s)

    def const_spec(shape):
        return pl.BlockSpec(shape, lambda i: (0,) * len(shape))

    def batch_spec(shape):
        return pl.BlockSpec((None,) + shape, lambda i: (i,) + (0,) * len(shape))

    args = [cat_pad, feats, maskf, params['w_in'], params['b_in']]
    in_specs = [batch_spec((s, d)), batch_spec((s, f_dim)), batch_spec((1, s)),
                const_spec((f_dim, d)), const_spec((1, d))]

    for p in params['layers']:
        layer_args = [p['wqkv'], p['bqkv'].reshape(1, 3 * d),
                      p['wo'], p['bo'].reshape(1, d),
                      p['ln1w'].reshape(1, d), p['ln1b'].reshape(1, d),
                      p['ln2w'].reshape(1, d), p['ln2b'].reshape(1, d),
                      p['w1'], p['b1'].reshape(1, dff),
                      p['w2'], p['b2'].reshape(1, d)]
        args += layer_args
        in_specs += [const_spec(a.shape) for a in layer_args]

    head_args = [params['wh1'], params['bh1'].reshape(1, d),
                 params['wh2'].reshape(1, d), params['bh2'].reshape(1, 1)]
    args += head_args
    in_specs += [const_spec(a.shape) for a in head_args]

    out = pl.pallas_call(
        functools.partial(_fused_forward_kernel,
                          num_layers=num_layers, nhead=nhead, dh=dh),
        grid=(b,),
        in_specs=in_specs,
        out_specs=pl.BlockSpec((None, 1, s), lambda i: (i, 0, 0)),
        out_shape=jax.ShapeDtypeStruct((b, 1, s), jnp.float32),
        compiler_params=pltpu.CompilerParams(dimension_semantics=("parallel",)),
    )(*args)
    return out.reshape(b, s)                                                 # .squeeze(-1)


# ----------------------------- parameters ------------------------------------

def init_params(key, vocab_sizes, float_dim, embedding_dim, nlp_dim,
                nhead, num_layers, dim_feedforward):
    del nhead
    cat_dim = embedding_dim * len(vocab_sizes)
    d = cat_dim + 3 * embedding_dim
    keys = iter(jax.random.split(key, 64))

    def w(shape, scale=0.05):
        return (scale * jax.random.normal(next(keys), shape)).astype(jnp.float32)

    params = {
        'emb_tables': [w((v, embedding_dim), 0.5) for v in vocab_sizes],
        'wf': w((float_dim, embedding_dim)), 'bf': w((embedding_dim,)),
        'wc': w((nlp_dim, embedding_dim)), 'bc': w((embedding_dim,)),
        'ws': w((nlp_dim, embedding_dim)), 'bs': w((embedding_dim,)),
        'layers': [],
        'wh1': w((d, d)), 'bh1': w((d,)),
        'wh2': w((d, 1)), 'bh2': w((1,)),
    }
    for _ in range(num_layers):
        params['layers'].append({
            'wqkv': w((d, 3 * d)), 'bqkv': w((3 * d,)),
            'wo': w((d, d)), 'bo': w((d,)),
            'ln1w': jnp.ones((d,), jnp.float32), 'ln1b': jnp.zeros((d,), jnp.float32),
            'ln2w': jnp.ones((d,), jnp.float32), 'ln2b': jnp.zeros((d,), jnp.float32),
            # FFN weights stored in bf16 (dominant HBM bytes); used directly on the MXU.
            'w1': w((d, dim_feedforward)).astype(jnp.bfloat16), 'b1': w((dim_feedforward,)),
            'w2': w((dim_feedforward, d)).astype(jnp.bfloat16), 'b2': w((d,)),
        })

    # Fused input projection (block-diagonal), assembled ONCE at param-prep time:
    # concat([float, comment, spotlight]) @ w_in lands each projection in columns
    # [cat_dim:cat_dim+e | +e | +e] of the d_model vector.
    f_dim = float_dim + 2 * nlp_dim
    w_in = jnp.zeros((f_dim, d), jnp.float32)
    w_in = w_in.at[:float_dim, cat_dim:cat_dim + embedding_dim].set(params['wf'])
    w_in = w_in.at[float_dim:float_dim + nlp_dim,
                   cat_dim + embedding_dim:cat_dim + 2 * embedding_dim].set(params['wc'])
    w_in = w_in.at[float_dim + nlp_dim:, cat_dim + 2 * embedding_dim:].set(params['ws'])
    b_in = jnp.zeros((1, d), jnp.float32)
    b_in = b_in.at[0, cat_dim:cat_dim + embedding_dim].set(params['bf'])
    b_in = b_in.at[0, cat_dim + embedding_dim:cat_dim + 2 * embedding_dim].set(params['bc'])
    b_in = b_in.at[0, cat_dim + 2 * embedding_dim:].set(params['bs'])
    params['w_in'] = w_in
    params['b_in'] = b_in
    return params


# ----------------------------- pure-JAX reference -----------------------------

def _ln(x, w, b, eps=LN_EPS):
    mu = jnp.mean(x, axis=-1, keepdims=True)
    var = jnp.mean((x - mu) ** 2, axis=-1, keepdims=True)
    return (x - mu) * lax.rsqrt(var + eps) * w + b


def ref_forward(params, float_feats, idx_feats, comment_vecs, spotlight_vecs, mask, *, nhead):
    cat_emb = jnp.concatenate(
        [tab[idx_feats[..., i]] for i, tab in enumerate(params['emb_tables'])], axis=-1)
    fp = float_feats @ params['wf'] + params['bf']
    cp = comment_vecs @ params['wc'] + params['bc']
    sp = spotlight_vecs @ params['ws'] + params['bs']
    x = jnp.concatenate([cat_emb, fp, cp, sp], axis=-1)
    b, s, d = x.shape
    dh = d // nhead
    bias = jnp.where(mask == 0, NEG_INF, 0.0)[:, None, None, :].astype(jnp.float32)
    for p in params['layers']:
        qkv = x @ p['wqkv'] + p['bqkv']
        q, k, v = jnp.split(qkv, 3, axis=-1)
        q = q.reshape(b, s, nhead, dh).transpose(0, 2, 1, 3)
        k = k.reshape(b, s, nhead, dh).transpose(0, 2, 1, 3)
        v = v.reshape(b, s, nhead, dh).transpose(0, 2, 1, 3)
        scores = q @ jnp.swapaxes(k, -1, -2) / math.sqrt(dh) + bias
        attn = jax.nn.softmax(scores, axis=-1)
        ctx = (attn @ v).transpose(0, 2, 1, 3).reshape(b, s, d)
        ctx = ctx @ p['wo'] + p['bo']
        y = _ln(x + ctx, p['ln1w'], p['ln1b'])
        ff = (jnp.maximum(y @ p['w1'].astype(jnp.float32) + p['b1'], 0.0)
              @ p['w2'].astype(jnp.float32) + p['b2'])
        x = _ln(y + ff, p['ln2w'], p['ln2b'])
    h = jnp.maximum(x.reshape(b * s, d) @ params['wh1'] + params['bh1'], 0.0)
    return (h @ params['wh2'] + params['bh2']).reshape(b, s)


# ----------------------------- main -------------------------------------------

if __name__ == "__main__":
    key = jax.random.PRNGKey(0)
    B, S = 2, 8
    float_dim, embedding_dim, nlp_dim = 6, 8, 16
    vocab_sizes = (5, 7, 9)            # 3 categorical label-encoders
    nhead, num_layers = 4, 2
    hidden_dim = 32                    # unused by the PyTorch module (kept for parity)
    dim_feedforward = 2048             # nn.TransformerEncoderLayer default
    # d_model = 8*3 + 8*3 = 48

    kp, kf, ki, kc, ks = jax.random.split(key, 5)
    params = init_params(kp, vocab_sizes, float_dim, embedding_dim, nlp_dim,
                         nhead, num_layers, dim_feedforward)

    float_feats = jax.random.normal(kf, (B, S, float_dim), jnp.float32)
    idx_feats = jnp.stack(
        [jax.random.randint(jax.random.fold_in(ki, i), (B, S), 0, v)
         for i, v in enumerate(vocab_sizes)], axis=-1)
    comment_vecs = jax.random.normal(kc, (B, S, nlp_dim), jnp.float32)
    spotlight_vecs = jax.random.normal(ks, (B, S, nlp_dim), jnp.float32)
    mask = jnp.array([[1, 1, 1, 1, 1, 1, 1, 1],
                      [1, 1, 1, 1, 1, 0, 0, 0]], dtype=jnp.int32)

    out = race_transformer_forward(params, float_feats, idx_feats, comment_vecs,
                                   spotlight_vecs, mask, nhead=nhead)
    out = jax.block_until_ready(out)

    ref = ref_forward(params, float_feats, idx_feats, comment_vecs,
                      spotlight_vecs, mask, nhead=nhead)
    assert out.shape == (B, S)
    assert bool(jnp.all(jnp.isfinite(out)))
    assert bool(jnp.allclose(out, ref, atol=2e-2, rtol=2e-2)), (
        f"max abs diff {float(jnp.max(jnp.abs(out - ref)))}")
    print("KERNEL_OK")
</pallas_src>

<mosaic_0001>
module attributes {stable_mosaic.version = 11 : i64} {
  func.func @_fused_forward_kernel(%arg0: i32, %arg1: memref<1x8x48xf32, #tpu.memory_space<vmem>>, %arg2: memref<1x8x38xf32, #tpu.memory_space<vmem>>, %arg3: memref<1x1x8xf32, #tpu.memory_space<vmem>>, %arg4: memref<38x48xf32, #tpu.memory_space<vmem>>, %arg5: memref<1x48xf32, #tpu.memory_space<vmem>>, %arg6: memref<48x144xf32, #tpu.memory_space<vmem>>, %arg7: memref<1x144xf32, #tpu.memory_space<vmem>>, %arg8: memref<48x48xf32, #tpu.memory_space<vmem>>, %arg9: memref<1x48xf32, #tpu.memory_space<vmem>>, %arg10: memref<1x48xf32, #tpu.memory_space<vmem>>, %arg11: memref<1x48xf32, #tpu.memory_space<vmem>>, %arg12: memref<1x48xf32, #tpu.memory_space<vmem>>, %arg13: memref<1x48xf32, #tpu.memory_space<vmem>>, %arg14: memref<48x2048xbf16, #tpu.memory_space<vmem>>, %arg15: memref<1x2048xf32, #tpu.memory_space<vmem>>, %arg16: memref<2048x48xbf16, #tpu.memory_space<vmem>>, %arg17: memref<1x48xf32, #tpu.memory_space<vmem>>, %arg18: memref<48x144xf32, #tpu.memory_space<vmem>>, %arg19: memref<1x144xf32, #tpu.memory_space<vmem>>, %arg20: memref<48x48xf32, #tpu.memory_space<vmem>>, %arg21: memref<1x48xf32, #tpu.memory_space<vmem>>, %arg22: memref<1x48xf32, #tpu.memory_space<vmem>>, %arg23: memref<1x48xf32, #tpu.memory_space<vmem>>, %arg24: memref<1x48xf32, #tpu.memory_space<vmem>>, %arg25: memref<1x48xf32, #tpu.memory_space<vmem>>, %arg26: memref<48x2048xbf16, #tpu.memory_space<vmem>>, %arg27: memref<1x2048xf32, #tpu.memory_space<vmem>>, %arg28: memref<2048x48xbf16, #tpu.memory_space<vmem>>, %arg29: memref<1x48xf32, #tpu.memory_space<vmem>>, %arg30: memref<48x48xf32, #tpu.memory_space<vmem>>, %arg31: memref<1x48xf32, #tpu.memory_space<vmem>>, %arg32: memref<1x48xf32, #tpu.memory_space<vmem>>, %arg33: memref<1x1xf32, #tpu.memory_space<vmem>>, %arg34: memref<1x1x8xf32, #tpu.memory_space<vmem>>) attributes {dimension_semantics = [#tpu.dimension_semantics<parallel>], iteration_bounds = array<i64: 2>, scalar_prefetch = 0 : i64, scratch_operands = 0 : i64, tpu.core_type = #tpu.core_type<tc>, window_params = [{transform_indices = @transform_0, window_bounds = array<i64: 1, 8, 48>}, {transform_indices = @transform_1, window_bounds = array<i64: 1, 8, 38>}, {transform_indices = @transform_2, window_bounds = array<i64: 1, 1, 8>}, {pipeline_mode = #tpu.pipeline_mode<synchronous>, transform_indices = @transform_3, window_bounds = array<i64: 38, 48>}, {pipeline_mode = #tpu.pipeline_mode<synchronous>, transform_indices = @transform_4, window_bounds = array<i64: 1, 48>}, {pipeline_mode = #tpu.pipeline_mode<synchronous>, transform_indices = @transform_5, window_bounds = array<i64: 48, 144>}, {pipeline_mode = #tpu.pipeline_mode<synchronous>, transform_indices = @transform_6, window_bounds = array<i64: 1, 144>}, {pipeline_mode = #tpu.pipeline_mode<synchronous>, transform_indices = @transform_7, window_bounds = array<i64: 48, 48>}, {pipeline_mode = #tpu.pipeline_mode<synchronous>, transform_indices = @transform_8, window_bounds = array<i64: 1, 48>}, {pipeline_mode = #tpu.pipeline_mode<synchronous>, transform_indices = @transform_9, window_bounds = array<i64: 1, 48>}, {pipeline_mode = #tpu.pipeline_mode<synchronous>, transform_indices = @transform_10, window_bounds = array<i64: 1, 48>}, {pipeline_mode = #tpu.pipeline_mode<synchronous>, transform_indices = @transform_11, window_bounds = array<i64: 1, 48>}, {pipeline_mode = #tpu.pipeline_mode<synchronous>, transform_indices = @transform_12, window_bounds = array<i64: 1, 48>}, {pipeline_mode = #tpu.pipeline_mode<synchronous>, transform_indices = @transform_13, window_bounds = array<i64: 48, 2048>}, {pipeline_mode = #tpu.pipeline_mode<synchronous>, transform_indices = @transform_14, window_bounds = array<i64: 1, 2048>}, {pipeline_mode = #tpu.pipeline_mode<synchronous>, transform_indices = @transform_15, window_bounds = array<i64: 2048, 48>}, {pipeline_mode = #tpu.pipeline_mode<synchronous>, transform_indices = @transform_16, window_bounds = array<i64: 1, 48>}, {pipeline_mode = #tpu.pipeline_mode<synchronous>, transform_indices = @transform_17, window_bounds = array<i64: 48, 144>}, {pipeline_mode = #tpu.pipeline_mode<synchronous>, transform_indices = @transform_18, window_bounds = array<i64: 1, 144>}, {pipeline_mode = #tpu.pipeline_mode<synchronous>, transform_indices = @transform_19, window_bounds = array<i64: 48, 48>}, {pipeline_mode = #tpu.pipeline_mode<synchronous>, transform_indices = @transform_20, window_bounds = array<i64: 1, 48>}, {pipeline_mode = #tpu.pipeline_mode<synchronous>, transform_indices = @transform_21, window_bounds = array<i64: 1, 48>}, {pipeline_mode = #tpu.pipeline_mode<synchronous>, transform_indices = @transform_22, window_bounds = array<i64: 1, 48>}, {pipeline_mode = #tpu.pipeline_mode<synchronous>, transform_indices = @transform_23, window_bounds = array<i64: 1, 48>}, {pipeline_mode = #tpu.pipeline_mode<synchronous>, transform_indices = @transform_24, window_bounds = array<i64: 1, 48>}, {pipeline_mode = #tpu.pipeline_mode<synchronous>, transform_indices = @transform_25, window_bounds = array<i64: 48, 2048>}, {pipeline_mode = #tpu.pipeline_mode<synchronous>, transform_indices = @transform_26, window_bounds = array<i64: 1, 2048>}, {pipeline_mode = #tpu.pipeline_mode<synchronous>, transform_indices = @transform_27, window_bounds = array<i64: 2048, 48>}, {pipeline_mode = #tpu.pipeline_mode<synchronous>, transform_indices = @transform_28, window_bounds = array<i64: 1, 48>}, {pipeline_mode = #tpu.pipeline_mode<synchronous>, transform_indices = @transform_29, window_bounds = array<i64: 48, 48>}, {pipeline_mode = #tpu.pipeline_mode<synchronous>, transform_indices = @transform_30, window_bounds = array<i64: 1, 48>}, {pipeline_mode = #tpu.pipeline_mode<synchronous>, transform_indices = @transform_31, window_bounds = array<i64: 1, 48>}, {pipeline_mode = #tpu.pipeline_mode<synchronous>, transform_indices = @transform_32, window_bounds = array<i64: 1, 1>}, {transform_indices = @transform_33, window_bounds = array<i64: 1, 1, 8>}]} {
    %c0 = arith.constant 0 : index
    %c0_0 = arith.constant 0 : index
    %c0_1 = arith.constant 0 : index
    %0 = vector.load %arg1[%c0, %c0_0, %c0_1] : memref<1x8x48xf32, #tpu.memory_space<vmem>>, vector<1x8x48xf32>
    %1 = vector.shape_cast %0 : vector<1x8x48xf32> to vector<8x48xf32>
    %c0_2 = arith.constant 0 : index
    %c0_3 = arith.constant 0 : index
    %c0_4 = arith.constant 0 : index
    %2 = vector.load %arg2[%c0_2, %c0_3, %c0_4] : memref<1x8x38xf32, #tpu.memory_space<vmem>>, vector<1x8x38xf32>
    %3 = vector.shape_cast %2 : vector<1x8x38xf32> to vector<8x38xf32>
    %c0_5 = arith.constant 0 : index
    %c0_6 = arith.constant 0 : index
    %4 = vector.load %arg4[%c0_5, %c0_6] : memref<38x48xf32, #tpu.memory_space<vmem>>, vector<38x48xf32>
    %cst = arith.constant dense<0.000000e+00> : vector<8x48xf32>
    %5 = tpu.matmul %3, %4, %cst {dimension_numbers = #tpu.dot_dimension_numbers<[1], [0], [0], [1], [0, 0, 1, 1], [], []>} : vector<8x38xf32>, vector<38x48xf32>, vector<8x48xf32> -> vector<8x48xf32>
    %c0_7 = arith.constant 0 : index
    %c0_8 = arith.constant 0 : index
    %6 = vector.load %arg5[%c0_7, %c0_8] : memref<1x48xf32, #tpu.memory_space<vmem>>, vector<1x48xf32>
    %7 = vector.broadcast %6 : vector<1x48xf32> to vector<8x48xf32>
    %8 = arith.addf %5, %7 : vector<8x48xf32>
    %9 = arith.addf %1, %8 : vector<8x48xf32>
    %c0_9 = arith.constant 0 : index
    %c0_10 = arith.constant 0 : index
    %c0_11 = arith.constant 0 : index
    %10 = vector.load %arg3[%c0_9, %c0_10, %c0_11] : memref<1x1x8xf32, #tpu.memory_space<vmem>>, vector<1x1x8xf32>
    %11 = vector.shape_cast %10 : vector<1x1x8xf32> to vector<1x8xf32>
    %cst_12 = arith.constant 0.000000e+00 : f32
    %12 = vector.broadcast %cst_12 : f32 to vector<1x8xf32>
    %13 = arith.cmpf one, %11, %12 : vector<1x8xf32>
    %cst_13 = arith.constant 0.000000e+00 : f32
    %cst_14 = arith.constant -1.000000e+30 : f32
    %14 = vector.broadcast %cst_13 : f32 to vector<1x8xf32>
    %15 = vector.broadcast %cst_14 : f32 to vector<1x8xf32>
    %16 = arith.select %13, %14, %15 : vector<1x8xi1>, vector<1x8xf32>
    %c0_15 = arith.constant 0 : index
    %c0_16 = arith.constant 0 : index
    %17 = vector.load %arg6[%c0_15, %c0_16] : memref<48x144xf32, #tpu.memory_space<vmem>>, vector<48x144xf32>
    %cst_17 = arith.constant dense<0.000000e+00> : vector<8x144xf32>
    %18 = tpu.matmul %9, %17, %cst_17 {dimension_numbers = #tpu.dot_dimension_numbers<[1], [0], [0], [1], [0, 0, 1, 1], [], []>} : vector<8x48xf32>, vector<48x144xf32>, vector<8x144xf32> -> vector<8x144xf32>
    %c0_18 = arith.constant 0 : index
    %c0_19 = arith.constant 0 : index
    %19 = vector.load %arg7[%c0_18, %c0_19] : memref<1x144xf32, #tpu.memory_space<vmem>>, vector<1x144xf32>
    %20 = vector.broadcast %19 : vector<1x144xf32> to vector<8x144xf32>
    %21 = arith.addf %18, %20 : vector<8x144xf32>
    %22 = vector.extract_strided_slice %21 {offsets = [0, 0], sizes = [8, 48], strides = [1, 1]} : vector<8x144xf32> to vector<8x48xf32>
    %23 = vector.shape_cast %22 : vector<8x48xf32> to vector<8x4x12xf32>
    %24 = vector.extract_strided_slice %21 {offsets = [0, 48], sizes = [8, 48], strides = [1, 1]} : vector<8x144xf32> to vector<8x48xf32>
    %25 = vector.shape_cast %24 : vector<8x48xf32> to vector<8x4x12xf32>
    %26 = vector.extract_strided_slice %21 {offsets = [0, 96], sizes = [8, 48], strides = [1, 1]} : vector<8x144xf32> to vector<8x48xf32>
    %27 = vector.shape_cast %26 : vector<8x48xf32> to vector<8x4x12xf32>
    "tpu.trace_start"() <{level = 10 : i32, message = "qhc,khc->hqk"}> : () -> ()
    %cst_20 = arith.constant dense<0.000000e+00> : vector<4x8x8xf32>
    %28 = tpu.matmul %23, %25, %cst_20 {dimension_numbers = #tpu.dot_dimension_numbers<[2], [2], [0], [0], [0, 1, 0, 0, 1, 0], [1], [1]>} : vector<8x4x12xf32>, vector<8x4x12xf32>, vector<4x8x8xf32> -> vector<4x8x8xf32>
    "tpu.trace_stop"() : () -> ()
    %cst_21 = arith.constant 0.288675129 : f32
    %29 = vector.broadcast %cst_21 : f32 to vector<4x8x8xf32>
    %30 = arith.mulf %28, %29 : vector<4x8x8xf32>
    %31 = vector.shape_cast %16 : vector<1x8xf32> to vector<1x1x8xf32>
    %32 = vector.broadcast %31 : vector<1x1x8xf32> to vector<4x8x8xf32>
    %33 = arith.addf %30, %32 : vector<4x8x8xf32>
    %cst_22 = arith.constant dense<0xFF800000> : vector<4x8xf32>
    %34 = vector.multi_reduction <maximumf>, %33, %cst_22 [2] : vector<4x8x8xf32> to vector<4x8xf32>
    %35 = vector.shape_cast %34 : vector<4x8xf32> to vector<4x8x1xf32>
    %36 = vector.broadcast %35 : vector<4x8x1xf32> to vector<4x8x8xf32>
    %37 = arith.subf %33, %36 : vector<4x8x8xf32>
    %38 = math.exp %37 : vector<4x8x8xf32>
    %cst_23 = arith.constant dense<0.000000e+00> : vector<4x8xf32>
    %39 = vector.multi_reduction <add>, %38, %cst_23 [2] : vector<4x8x8xf32> to vector<4x8xf32>
    %40 = vector.shape_cast %39 : vector<4x8xf32> to vector<4x8x1xf32>
    %41 = tpu.reciprocal %40 {approx = true} : vector<4x8x1xf32> -> vector<4x8x1xf32>
    %42 = vector.broadcast %41 : vector<4x8x1xf32> to vector<4x8x8xf32>
    %43 = arith.mulf %38, %42 : vector<4x8x8xf32>
    "tpu.trace_start"() <{level = 10 : i32, message = "hqk,khc->qhc"}> : () -> ()
    %cst_24 = arith.constant dense<0.000000e+00> : vector<4x12x8xf32>
    %44 = tpu.matmul %27, %43, %cst_24 {dimension_numbers = #tpu.dot_dimension_numbers<[0], [2], [2], [1], [0, 1, 0, 2, 1, 1], [1], [0]>} : vector<8x4x12xf32>, vector<4x8x8xf32>, vector<4x12x8xf32> -> vector<4x12x8xf32>
    %45 = tpu.transpose %44, [2, 0, 1] : vector<4x12x8xf32> -> vector<8x4x12xf32>
    "tpu.trace_stop"() : () -> ()
    %46 = vector.shape_cast %45 : vector<8x4x12xf32> to vector<8x48xf32>
    %c0_25 = arith.constant 0 : index
    %c0_26 = arith.constant 0 : index
    %47 = vector.load %arg8[%c0_25, %c0_26] : memref<48x48xf32, #tpu.memory_space<vmem>>, vector<48x48xf32>
    %cst_27 = arith.constant dense<0.000000e+00> : vector<8x48xf32>
    %48 = tpu.matmul %46, %47, %cst_27 {dimension_numbers = #tpu.dot_dimension_numbers<[1], [0], [0], [1], [0, 0, 1, 1], [], []>} : vector<8x48xf32>, vector<48x48xf32>, vector<8x48xf32> -> vector<8x48xf32>
    %c0_28 = arith.constant 0 : index
    %c0_29 = arith.constant 0 : index
    %49 = vector.load %arg9[%c0_28, %c0_29] : memref<1x48xf32, #tpu.memory_space<vmem>>, vector<1x48xf32>
    %50 = vector.broadcast %49 : vector<1x48xf32> to vector<8x48xf32>
    %51 = arith.addf %48, %50 : vector<8x48xf32>
    %52 = arith.addf %9, %51 : vector<8x48xf32>
    %cst_30 = arith.constant dense<0.000000e+00> : vector<8xf32>
    %53 = vector.multi_reduction <add>, %52, %cst_30 [1] : vector<8x48xf32> to vector<8xf32>
    %54 = vector.shape_cast %53 : vector<8xf32> to vector<8x1xf32>
    %cst_31 = arith.constant 4.800000e+01 : f32
    %55 = vector.broadcast %cst_31 : f32 to vector<8x1xf32>
    %56 = arith.divf %54, %55 : vector<8x1xf32>
    %57 = vector.broadcast %56 : vector<8x1xf32> to vector<8x48xf32>
    %58 = arith.subf %52, %57 : vector<8x48xf32>
    %59 = arith.mulf %58, %58 : vector<8x48xf32>
    %cst_32 = arith.constant dense<0.000000e+00> : vector<8xf32>
    %60 = vector.multi_reduction <add>, %59, %cst_32 [1] : vector<8x48xf32> to vector<8xf32>
    %61 = vector.shape_cast %60 : vector<8xf32> to vector<8x1xf32>
    %cst_33 = arith.constant 4.800000e+01 : f32
    %62 = vector.broadcast %cst_33 : f32 to vector<8x1xf32>
    %63 = arith.divf %61, %62 : vector<8x1xf32>
    %64 = vector.broadcast %56 : vector<8x1xf32> to vector<8x48xf32>
    %65 = arith.subf %52, %64 : vector<8x48xf32>
    %cst_34 = arith.constant 9.99999974E-6 : f32
    %66 = vector.broadcast %cst_34 : f32 to vector<8x1xf32>
    %67 = arith.addf %63, %66 : vector<8x1xf32>
    %68 = math.rsqrt %67 : vector<8x1xf32>
    %69 = vector.broadcast %68 : vector<8x1xf32> to vector<8x48xf32>
    %70 = arith.mulf %65, %69 : vector<8x48xf32>
    %c0_35 = arith.constant 0 : index
    %c0_36 = arith.constant 0 : index
    %71 = vector.load %arg10[%c0_35, %c0_36] : memref<1x48xf32, #tpu.memory_space<vmem>>, vector<1x48xf32>
    %72 = vector.broadcast %71 : vector<1x48xf32> to vector<8x48xf32>
    %73 = arith.mulf %70, %72 : vector<8x48xf32>
    %c0_37 = arith.constant 0 : index
    %c0_38 = arith.constant 0 : index
    %74 = vector.load %arg11[%c0_37, %c0_38] : memref<1x48xf32, #tpu.memory_space<vmem>>, vector<1x48xf32>
    %75 = vector.broadcast %74 : vector<1x48xf32> to vector<8x48xf32>
    %76 = arith.addf %73, %75 : vector<8x48xf32>
    %77 = arith.truncf %76 : vector<8x48xf32> to vector<8x48xbf16>
    %c0_39 = arith.constant 0 : index
    %c0_40 = arith.constant 0 : index
    %78 = vector.load %arg14[%c0_39, %c0_40] : memref<48x2048xbf16, #tpu.memory_space<vmem>>, vector<48x2048xbf16>
    %cst_41 = arith.constant dense<0.000000e+00> : vector<8x2048xf32>
    %79 = tpu.matmul %77, %78, %cst_41 {dimension_numbers = #tpu.dot_dimension_numbers<[1], [0], [0], [1], [0, 0, 1, 1], [], []>} : vector<8x48xbf16>, vector<48x2048xbf16>, vector<8x2048xf32> -> vector<8x2048xf32>
    %c0_42 = arith.constant 0 : index
    %c0_43 = arith.constant 0 : index
    %80 = vector.load %arg15[%c0_42, %c0_43] : memref<1x2048xf32, #tpu.memory_space<vmem>>, vector<1x2048xf32>
    %81 = vector.broadcast %80 : vector<1x2048xf32> to vector<8x2048xf32>
    %82 = arith.addf %79, %81 : vector<8x2048xf32>
    %cst_44 = arith.constant 0.000000e+00 : f32
    %83 = vector.broadcast %cst_44 : f32 to vector<8x2048xf32>
    %84 = arith.maximumf %82, %83 : vector<8x2048xf32>
    %85 = arith.truncf %84 : vector<8x2048xf32> to vector<8x2048xbf16>
    %c0_45 = arith.constant 0 : index
    %c0_46 = arith.constant 0 : index
    %86 = vector.load %arg16[%c0_45, %c0_46] : memref<2048x48xbf16, #tpu.memory_space<vmem>>, vector<2048x48xbf16>
    %cst_47 = arith.constant dense<0.000000e+00> : vector<8x48xf32>
    %87 = tpu.matmul %85, %86, %cst_47 {dimension_numbers = #tpu.dot_dimension_numbers<[1], [0], [0], [1], [0, 0, 1, 1], [], []>} : vector<8x2048xbf16>, vector<2048x48xbf16>, vector<8x48xf32> -> vector<8x48xf32>
    %c0_48 = arith.constant 0 : index
    %c0_49 = arith.constant 0 : index
    %88 = vector.load %arg17[%c0_48, %c0_49] : memref<1x48xf32, #tpu.memory_space<vmem>>, vector<1x48xf32>
    %89 = vector.broadcast %88 : vector<1x48xf32> to vector<8x48xf32>
    %90 = arith.addf %87, %89 : vector<8x48xf32>
    %91 = arith.addf %76, %90 : vector<8x48xf32>
    %cst_50 = arith.constant dense<0.000000e+00> : vector<8xf32>
    %92 = vector.multi_reduction <add>, %91, %cst_50 [1] : vector<8x48xf32> to vector<8xf32>
    %93 = vector.shape_cast %92 : vector<8xf32> to vector<8x1xf32>
    %cst_51 = arith.constant 4.800000e+01 : f32
    %94 = vector.broadcast %cst_51 : f32 to vector<8x1xf32>
    %95 = arith.divf %93, %94 : vector<8x1xf32>
    %96 = vector.broadcast %95 : vector<8x1xf32> to vector<8x48xf32>
    %97 = arith.subf %91, %96 : vector<8x48xf32>
    %98 = arith.mulf %97, %97 : vector<8x48xf32>
    %cst_52 = arith.constant dense<0.000000e+00> : vector<8xf32>
    %99 = vector.multi_reduction <add>, %98, %cst_52 [1] : vector<8x48xf32> to vector<8xf32>
    %100 = vector.shape_cast %99 : vector<8xf32> to vector<8x1xf32>
    %cst_53 = arith.constant 4.800000e+01 : f32
    %101 = vector.broadcast %cst_53 : f32 to vector<8x1xf32>
    %102 = arith.divf %100, %101 : vector<8x1xf32>
    %103 = vector.broadcast %95 : vector<8x1xf32> to vector<8x48xf32>
    %104 = arith.subf %91, %103 : vector<8x48xf32>
    %cst_54 = arith.constant 9.99999974E-6 : f32
    %105 = vector.broadcast %cst_54 : f32 to vector<8x1xf32>
    %106 = arith.addf %102, %105 : vector<8x1xf32>
    %107 = math.rsqrt %106 : vector<8x1xf32>
    %108 = vector.broadcast %107 : vector<8x1xf32> to vector<8x48xf32>
    %109 = arith.mulf %104, %108 : vector<8x48xf32>
    %c0_55 = arith.constant 0 : index
    %c0_56 = arith.constant 0 : index
    %110 = vector.load %arg12[%c0_55, %c0_56] : memref<1x48xf32, #tpu.memory_space<vmem>>, vector<1x48xf32>
    %111 = vector.broadcast %110 : vector<1x48xf32> to vector<8x48xf32>
    %112 = arith.mulf %109, %111 : vector<8x48xf32>
    %c0_57 = arith.constant 0 : index
    %c0_58 = arith.constant 0 : index
    %113 = vector.load %arg13[%c0_57, %c0_58] : memref<1x48xf32, #tpu.memory_space<vmem>>, vector<1x48xf32>
    %114 = vector.broadcast %113 : vector<1x48xf32> to vector<8x48xf32>
    %115 = arith.addf %112, %114 : vector<8x48xf32>
    %c0_59 = arith.constant 0 : index
    %c0_60 = arith.constant 0 : index
    %116 = vector.load %arg18[%c0_59, %c0_60] : memref<48x144xf32, #tpu.memory_space<vmem>>, vector<48x144xf32>
    %cst_61 = arith.constant dense<0.000000e+00> : vector<8x144xf32>
    %117 = tpu.matmul %115, %116, %cst_61 {dimension_numbers = #tpu.dot_dimension_numbers<[1], [0], [0], [1], [0, 0, 1, 1], [], []>} : vector<8x48xf32>, vector<48x144xf32>, vector<8x144xf32> -> vector<8x144xf32>
    %c0_62 = arith.constant 0 : index
    %c0_63 = arith.constant 0 : index
    %118 = vector.load %arg19[%c0_62, %c0_63] : memref<1x144xf32, #tpu.memory_space<vmem>>, vector<1x144xf32>
    %119 = vector.broadcast %118 : vector<1x144xf32> to vector<8x144xf32>
    %120 = arith.addf %117, %119 : vector<8x144xf32>
    %121 = vector.extract_strided_slice %120 {offsets = [0, 0], sizes = [8, 48], strides = [1, 1]} : vector<8x144xf32> to vector<8x48xf32>
    %122 = vector.shape_cast %121 : vector<8x48xf32> to vector<8x4x12xf32>
    %123 = vector.extract_strided_slice %120 {offsets = [0, 48], sizes = [8, 48], strides = [1, 1]} : vector<8x144xf32> to vector<8x48xf32>
    %124 = vector.shape_cast %123 : vector<8x48xf32> to vector<8x4x12xf32>
    %125 = vector.extract_strided_slice %120 {offsets = [0, 96], sizes = [8, 48], strides = [1, 1]} : vector<8x144xf32> to vector<8x48xf32>
    %126 = vector.shape_cast %125 : vector<8x48xf32> to vector<8x4x12xf32>
    "tpu.trace_start"() <{level = 10 : i32, message = "qhc,khc->hqk"}> : () -> ()
    %cst_64 = arith.constant dense<0.000000e+00> : vector<4x8x8xf32>
    %127 = tpu.matmul %122, %124, %cst_64 {dimension_numbers = #tpu.dot_dimension_numbers<[2], [2], [0], [0], [0, 1, 0, 0, 1, 0], [1], [1]>} : vector<8x4x12xf32>, vector<8x4x12xf32>, vector<4x8x8xf32> -> vector<4x8x8xf32>
    "tpu.trace_stop"() : () -> ()
    %cst_65 = arith.constant 0.288675129 : f32
    %128 = vector.broadcast %cst_65 : f32 to vector<4x8x8xf32>
    %129 = arith.mulf %127, %128 : vector<4x8x8xf32>
    %130 = vector.shape_cast %16 : vector<1x8xf32> to vector<1x1x8xf32>
    %131 = vector.broadcast %130 : vector<1x1x8xf32> to vector<4x8x8xf32>
    %132 = arith.addf %129, %131 : vector<4x8x8xf32>
    %cst_66 = arith.constant dense<0xFF800000> : vector<4x8xf32>
    %133 = vector.multi_reduction <maximumf>, %132, %cst_66 [2] : vector<4x8x8xf32> to vector<4x8xf32>
    %134 = vector.shape_cast %133 : vector<4x8xf32> to vector<4x8x1xf32>
    %135 = vector.broadcast %134 : vector<4x8x1xf32> to vector<4x8x8xf32>
    %136 = arith.subf %132, %135 : vector<4x8x8xf32>
    %137 = math.exp %136 : vector<4x8x8xf32>
    %cst_67 = arith.constant dense<0.000000e+00> : vector<4x8xf32>
    %138 = vector.multi_reduction <add>, %137, %cst_67 [2] : vector<4x8x8xf32> to vector<4x8xf32>
    %139 = vector.shape_cast %138 : vector<4x8xf32> to vector<4x8x1xf32>
    %140 = tpu.reciprocal %139 {approx = true} : vector<4x8x1xf32> -> vector<4x8x1xf32>
    %141 = vector.broadcast %140 : vector<4x8x1xf32> to vector<4x8x8xf32>
    %142 = arith.mulf %137, %141 : vector<4x8x8xf32>
    "tpu.trace_start"() <{level = 10 : i32, message = "hqk,khc->qhc"}> : () -> ()
    %cst_68 = arith.constant dense<0.000000e+00> : vector<4x12x8xf32>
    %143 = tpu.matmul %126, %142, %cst_68 {dimension_numbers = #tpu.dot_dimension_numbers<[0], [2], [2], [1], [0, 1, 0, 2, 1, 1], [1], [0]>} : vector<8x4x12xf32>, vector<4x8x8xf32>, vector<4x12x8xf32> -> vector<4x12x8xf32>
    %144 = tpu.transpose %143, [2, 0, 1] : vector<4x12x8xf32> -> vector<8x4x12xf32>
    "tpu.trace_stop"() : () -> ()
    %145 = vector.shape_cast %144 : vector<8x4x12xf32> to vector<8x48xf32>
    %c0_69 = arith.constant 0 : index
    %c0_70 = arith.constant 0 : index
    %146 = vector.load %arg20[%c0_69, %c0_70] : memref<48x48xf32, #tpu.memory_space<vmem>>, vector<48x48xf32>
    %cst_71 = arith.constant dense<0.000000e+00> : vector<8x48xf32>
    %147 = tpu.matmul %145, %146, %cst_71 {dimension_numbers = #tpu.dot_dimension_numbers<[1], [0], [0], [1], [0, 0, 1, 1], [], []>} : vector<8x48xf32>, vector<48x48xf32>, vector<8x48xf32> -> vector<8x48xf32>
    %c0_72 = arith.constant 0 : index
    %c0_73 = arith.constant 0 : index
    %148 = vector.load %arg21[%c0_72, %c0_73] : memref<1x48xf32, #tpu.memory_space<vmem>>, vector<1x48xf32>
    %149 = vector.broadcast %148 : vector<1x48xf32> to vector<8x48xf32>
    %150 = arith.addf %147, %149 : vector<8x48xf32>
    %151 = arith.addf %115, %150 : vector<8x48xf32>
    %cst_74 = arith.constant dense<0.000000e+00> : vector<8xf32>
    %152 = vector.multi_reduction <add>, %151, %cst_74 [1] : vector<8x48xf32> to vector<8xf32>
    %153 = vector.shape_cast %152 : vector<8xf32> to vector<8x1xf32>
    %cst_75 = arith.constant 4.800000e+01 : f32
    %154 = vector.broadcast %cst_75 : f32 to vector<8x1xf32>
    %155 = arith.divf %153, %154 : vector<8x1xf32>
    %156 = vector.broadcast %155 : vector<8x1xf32> to vector<8x48xf32>
    %157 = arith.subf %151, %156 : vector<8x48xf32>
    %158 = arith.mulf %157, %157 : vector<8x48xf32>
    %cst_76 = arith.constant dense<0.000000e+00> : vector<8xf32>
    %159 = vector.multi_reduction <add>, %158, %cst_76 [1] : vector<8x48xf32> to vector<8xf32>
    %160 = vector.shape_cast %159 : vector<8xf32> to vector<8x1xf32>
    %cst_77 = arith.constant 4.800000e+01 : f32
    %161 = vector.broadcast %cst_77 : f32 to vector<8x1xf32>
    %162 = arith.divf %160, %161 : vector<8x1xf32>
    %163 = vector.broadcast %155 : vector<8x1xf32> to vector<8x48xf32>
    %164 = arith.subf %151, %163 : vector<8x48xf32>
    %cst_78 = arith.constant 9.99999974E-6 : f32
    %165 = vector.broadcast %cst_78 : f32 to vector<8x1xf32>
    %166 = arith.addf %162, %165 : vector<8x1xf32>
    %167 = math.rsqrt %166 : vector<8x1xf32>
    %168 = vector.broadcast %167 : vector<8x1xf32> to vector<8x48xf32>
    %169 = arith.mulf %164, %168 : vector<8x48xf32>
    %c0_79 = arith.constant 0 : index
    %c0_80 = arith.constant 0 : index
    %170 = vector.load %arg22[%c0_79, %c0_80] : memref<1x48xf32, #tpu.memory_space<vmem>>, vector<1x48xf32>
    %171 = vector.broadcast %170 : vector<1x48xf32> to vector<8x48xf32>
    %172 = arith.mulf %169, %171 : vector<8x48xf32>
    %c0_81 = arith.constant 0 : index
    %c0_82 = arith.constant 0 : index
    %173 = vector.load %arg23[%c0_81, %c0_82] : memref<1x48xf32, #tpu.memory_space<vmem>>, vector<1x48xf32>
    %174 = vector.broadcast %173 : vector<1x48xf32> to vector<8x48xf32>
    %175 = arith.addf %172, %174 : vector<8x48xf32>
    %176 = arith.truncf %175 : vector<8x48xf32> to vector<8x48xbf16>
    %c0_83 = arith.constant 0 : index
    %c0_84 = arith.constant 0 : index
    %177 = vector.load %arg26[%c0_83, %c0_84] : memref<48x2048xbf16, #tpu.memory_space<vmem>>, vector<48x2048xbf16>
    %cst_85 = arith.constant dense<0.000000e+00> : vector<8x2048xf32>
    %178 = tpu.matmul %176, %177, %cst_85 {dimension_numbers = #tpu.dot_dimension_numbers<[1], [0], [0], [1], [0, 0, 1, 1], [], []>} : vector<8x48xbf16>, vector<48x2048xbf16>, vector<8x2048xf32> -> vector<8x2048xf32>
    %c0_86 = arith.constant 0 : index
    %c0_87 = arith.constant 0 : index
    %179 = vector.load %arg27[%c0_86, %c0_87] : memref<1x2048xf32, #tpu.memory_space<vmem>>, vector<1x2048xf32>
    %180 = vector.broadcast %179 : vector<1x2048xf32> to vector<8x2048xf32>
    %181 = arith.addf %178, %180 : vector<8x2048xf32>
    %cst_88 = arith.constant 0.000000e+00 : f32
    %182 = vector.broadcast %cst_88 : f32 to vector<8x2048xf32>
    %183 = arith.maximumf %181, %182 : vector<8x2048xf32>
    %184 = arith.truncf %183 : vector<8x2048xf32> to vector<8x2048xbf16>
    %c0_89 = arith.constant 0 : index
    %c0_90 = arith.constant 0 : index
    %185 = vector.load %arg28[%c0_89, %c0_90] : memref<2048x48xbf16, #tpu.memory_space<vmem>>, vector<2048x48xbf16>
    %cst_91 = arith.constant dense<0.000000e+00> : vector<8x48xf32>
    %186 = tpu.matmul %184, %185, %cst_91 {dimension_numbers = #tpu.dot_dimension_numbers<[1], [0], [0], [1], [0, 0, 1, 1], [], []>} : vector<8x2048xbf16>, vector<2048x48xbf16>, vector<8x48xf32> -> vector<8x48xf32>
    %c0_92 = arith.constant 0 : index
    %c0_93 = arith.constant 0 : index
    %187 = vector.load %arg29[%c0_92, %c0_93] : memref<1x48xf32, #tpu.memory_space<vmem>>, vector<1x48xf32>
    %188 = vector.broadcast %187 : vector<1x48xf32> to vector<8x48xf32>
    %189 = arith.addf %186, %188 : vector<8x48xf32>
    %190 = arith.addf %175, %189 : vector<8x48xf32>
    %cst_94 = arith.constant dense<0.000000e+00> : vector<8xf32>
    %191 = vector.multi_reduction <add>, %190, %cst_94 [1] : vector<8x48xf32> to vector<8xf32>
    %192 = vector.shape_cast %191 : vector<8xf32> to vector<8x1xf32>
    %cst_95 = arith.constant 4.800000e+01 : f32
    %193 = vector.broadcast %cst_95 : f32 to vector<8x1xf32>
    %194 = arith.divf %192, %193 : vector<8x1xf32>
    %195 = vector.broadcast %194 : vector<8x1xf32> to vector<8x48xf32>
    %196 = arith.subf %190, %195 : vector<8x48xf32>
    %197 = arith.mulf %196, %196 : vector<8x48xf32>
    %cst_96 = arith.constant dense<0.000000e+00> : vector<8xf32>
    %198 = vector.multi_reduction <add>, %197, %cst_96 [1] : vector<8x48xf32> to vector<8xf32>
    %199 = vector.shape_cast %198 : vector<8xf32> to vector<8x1xf32>
    %cst_97 = arith.constant 4.800000e+01 : f32
    %200 = vector.broadcast %cst_97 : f32 to vector<8x1xf32>
    %201 = arith.divf %199, %200 : vector<8x1xf32>
    %202 = vector.broadcast %194 : vector<8x1xf32> to vector<8x48xf32>
    %203 = arith.subf %190, %202 : vector<8x48xf32>
    %cst_98 = arith.constant 9.99999974E-6 : f32
    %204 = vector.broadcast %cst_98 : f32 to vector<8x1xf32>
    %205 = arith.addf %201, %204 : vector<8x1xf32>
    %206 = math.rsqrt %205 : vector<8x1xf32>
    %207 = vector.broadcast %206 : vector<8x1xf32> to vector<8x48xf32>
    %208 = arith.mulf %203, %207 : vector<8x48xf32>
    %c0_99 = arith.constant 0 : index
    %c0_100 = arith.constant 0 : index
    %209 = vector.load %arg24[%c0_99, %c0_100] : memref<1x48xf32, #tpu.memory_space<vmem>>, vector<1x48xf32>
    %210 = vector.broadcast %209 : vector<1x48xf32> to vector<8x48xf32>
    %211 = arith.mulf %208, %210 : vector<8x48xf32>
    %c0_101 = arith.constant 0 : index
    %c0_102 = arith.constant 0 : index
    %212 = vector.load %arg25[%c0_101, %c0_102] : memref<1x48xf32, #tpu.memory_space<vmem>>, vector<1x48xf32>
    %213 = vector.broadcast %212 : vector<1x48xf32> to vector<8x48xf32>
    %214 = arith.addf %211, %213 : vector<8x48xf32>
    %c0_103 = arith.constant 0 : index
    %c0_104 = arith.constant 0 : index
    %215 = vector.load %arg30[%c0_103, %c0_104] : memref<48x48xf32, #tpu.memory_space<vmem>>, vector<48x48xf32>
    %cst_105 = arith.constant dense<0.000000e+00> : vector<8x48xf32>
    %216 = tpu.matmul %214, %215, %cst_105 {dimension_numbers = #tpu.dot_dimension_numbers<[1], [0], [0], [1], [0, 0, 1, 1], [], []>} : vector<8x48xf32>, vector<48x48xf32>, vector<8x48xf32> -> vector<8x48xf32>
    %c0_106 = arith.constant 0 : index
    %c0_107 = arith.constant 0 : index
    %217 = vector.load %arg31[%c0_106, %c0_107] : memref<1x48xf32, #tpu.memory_space<vmem>>, vector<1x48xf32>
    %218 = vector.broadcast %217 : vector<1x48xf32> to vector<8x48xf32>
    %219 = arith.addf %216, %218 : vector<8x48xf32>
    %cst_108 = arith.constant 0.000000e+00 : f32
    %220 = vector.broadcast %cst_108 : f32 to vector<8x48xf32>
    %221 = arith.maximumf %219, %220 : vector<8x48xf32>
    %c0_109 = arith.constant 0 : index
    %c0_110 = arith.constant 0 : index
    %222 = vector.load %arg32[%c0_109, %c0_110] : memref<1x48xf32, #tpu.memory_space<vmem>>, vector<1x48xf32>
    %cst_111 = arith.constant dense<0.000000e+00> : vector<1x8xf32>
    %223 = tpu.matmul %222, %221, %cst_111 {dimension_numbers = #tpu.dot_dimension_numbers<[1], [1], [0], [0], [0, 0, 1, 0], [], []>} : vector<1x48xf32>, vector<8x48xf32>, vector<1x8xf32> -> vector<1x8xf32>
    %c0_112 = arith.constant 0 : index
    %c0_113 = arith.constant 0 : index
    %224 = vector.load %arg33[%c0_112, %c0_113] : memref<1x1xf32, #tpu.memory_space<vmem>>, vector<1x1xf32>
    %225 = vector.broadcast %224 : vector<1x1xf32> to vector<1x8xf32>
    %226 = arith.addf %223, %225 : vector<1x8xf32>
    %c0_114 = arith.constant 0 : index
    %c0_115 = arith.constant 0 : index
    %c0_116 = arith.constant 0 : index
    %227 = vector.load %arg34[%c0_114, %c0_115, %c0_116] : memref<1x1x8xf32, #tpu.memory_space<vmem>>, vector<1x1x8xf32>
    %228 = vector.shape_cast %227 : vector<1x1x8xf32> to vector<1x8xf32>
    %229 = vector.shape_cast %226 : vector<1x8xf32> to vector<1x1x8xf32>
    tpu.vector_store %arg34[%c0_114, %c0_115, %c0_116], %229 {strides = array<i32>} : memref<1x1x8xf32, #tpu.memory_space<vmem>>, vector<1x1x8xf32>,
    return
  }
  func.func @transform_0(%arg0: i32) -> (i32, i32, i32) {
    %c0_i32 = arith.constant 0 : i32
    %c0_i32_0 = arith.constant 0 : i32
    %c0_i32_1 = arith.constant 0 : i32
    return %arg0, %c0_i32, %c0_i32_0 : i32, i32, i32
  }
  func.func @transform_1(%arg0: i32) -> (i32, i32, i32) {
    %c0_i32 = arith.constant 0 : i32
    %c0_i32_0 = arith.constant 0 : i32
    %c0_i32_1 = arith.constant 0 : i32
    return %arg0, %c0_i32, %c0_i32_0 : i32, i32, i32
  }
  func.func @transform_2(%arg0: i32) -> (i32, i32, i32) {
    %c0_i32 = arith.constant 0 : i32
    %c0_i32_0 = arith.constant 0 : i32
    %c0_i32_1 = arith.constant 0 : i32
    return %arg0, %c0_i32, %c0_i32_0 : i32, i32, i32
  }
  func.func @transform_3(%arg0: i32) -> (i32, i32) {
    %c0_i32 = arith.constant 0 : i32
    %c0_i32_0 = arith.constant 0 : i32
    %c0_i32_1 = arith.constant 0 : i32
    return %c0_i32, %c0_i32_0 : i32, i32
  }
  func.func @transform_4(%arg0: i32) -> (i32, i32) {
    %c0_i32 = arith.constant 0 : i32
    %c0_i32_0 = arith.constant 0 : i32
    %c0_i32_1 = arith.constant 0 : i32
    return %c0_i32, %c0_i32_0 : i32, i32
  }
  func.func @transform_5(%arg0: i32) -> (i32, i32) {
    %c0_i32 = arith.constant 0 : i32
    %c0_i32_0 = arith.constant 0 : i32
    %c0_i32_1 = arith.constant 0 : i32
    return %c0_i32, %c0_i32_0 : i32, i32
  }
  func.func @transform_6(%arg0: i32) -> (i32, i32) {
    %c0_i32 = arith.constant 0 : i32
    %c0_i32_0 = arith.constant 0 : i32
    %c0_i32_1 = arith.constant 0 : i32
    return %c0_i32, %c0_i32_0 : i32, i32
  }
  func.func @transform_7(%arg0: i32) -> (i32, i32) {
    %c0_i32 = arith.constant 0 : i32
    %c0_i32_0 = arith.constant 0 : i32
    %c0_i32_1 = arith.constant 0 : i32
    return %c0_i32, %c0_i32_0 : i32, i32
  }
  func.func @transform_8(%arg0: i32) -> (i32, i32) {
    %c0_i32 = arith.constant 0 : i32
    %c0_i32_0 = arith.constant 0 : i32
    %c0_i32_1 = arith.constant 0 : i32
    return %c0_i32, %c0_i32_0 : i32, i32
  }
  func.func @transform_9(%arg0: i32) -> (i32, i32) {
    %c0_i32 = arith.constant 0 : i32
    %c0_i32_0 = arith.constant 0 : i32
    %c0_i32_1 = arith.constant 0 : i32
    return %c0_i32, %c0_i32_0 : i32, i32
  }
  func.func @transform_10(%arg0: i32) -> (i32, i32) {
    %c0_i32 = arith.constant 0 : i32
    %c0_i32_0 = arith.constant 0 : i32
    %c0_i32_1 = arith.constant 0 : i32
    return %c0_i32, %c0_i32_0 : i32, i32
  }
  func.func @transform_11(%arg0: i32) -> (i32, i32) {
    %c0_i32 = arith.constant 0 : i32
    %c0_i32_0 = arith.constant 0 : i32
    %c0_i32_1 = arith.constant 0 : i32
    return %c0_i32, %c0_i32_0 : i32, i32
  }
  func.func @transform_12(%arg0: i32) -> (i32, i32) {
    %c0_i32 = arith.constant 0 : i32
    %c0_i32_0 = arith.constant 0 : i32
    %c0_i32_1 = arith.constant 0 : i32
    return %c0_i32, %c0_i32_0 : i32, i32
  }
  func.func @transform_13(%arg0: i32) -> (i32, i32) {
    %c0_i32 = arith.constant 0 : i32
    %c0_i32_0 = arith.constant 0 : i32
    %c0_i32_1 = arith.constant 0 : i32
    return %c0_i32, %c0_i32_0 : i32, i32
  }
  func.func @transform_14(%arg0: i32) -> (i32, i32) {
    %c0_i32 = arith.constant 0 : i32
    %c0_i32_0 = arith.constant 0 : i32
    %c0_i32_1 = arith.constant 0 : i32
    return %c0_i32, %c0_i32_0 : i32, i32
  }
  func.func @transform_15(%arg0: i32) -> (i32, i32) {
    %c0_i32 = arith.constant 0 : i32
    %c0_i32_0 = arith.constant 0 : i32
    %c0_i32_1 = arith.constant 0 : i32
    return %c0_i32, %c0_i32_0 : i32, i32
  }
  func.func @transform_16(%arg0: i32) -> (i32, i32) {
    %c0_i32 = arith.constant 0 : i32
    %c0_i32_0 = arith.constant 0 : i32
    %c0_i32_1 = arith.constant 0 : i32
    return %c0_i32, %c0_i32_0 : i32, i32
  }
  func.func @transform_17(%arg0: i32) -> (i32, i32) {
    %c0_i32 = arith.constant 0 : i32
    %c0_i32_0 = arith.constant 0 : i32
    %c0_i32_1 = arith.constant 0 : i32
    return %c0_i32, %c0_i32_0 : i32, i32
  }
  func.func @transform_18(%arg0: i32) -> (i32, i32) {
    %c0_i32 = arith.constant 0 : i32
    %c0_i32_0 = arith.constant 0 : i32
    %c0_i32_1 = arith.constant 0 : i32
    return %c0_i32, %c0_i32_0 : i32, i32
  }
  func.func @transform_19(%arg0: i32) -> (i32, i32) {
    %c0_i32 = arith.constant 0 : i32
    %c0_i32_0 = arith.constant 0 : i32
    %c0_i32_1 = arith.constant 0 : i32
    return %c0_i32, %c0_i32_0 : i32, i32
  }
  func.func @transform_20(%arg0: i32) -> (i32, i32) {
    %c0_i32 = arith.constant 0 : i32
    %c0_i32_0 = arith.constant 0 : i32
    %c0_i32_1 = arith.constant 0 : i32
    return %c0_i32, %c0_i32_0 : i32, i32
  }
  func.func @transform_21(%arg0: i32) -> (i32, i32) {
    %c0_i32 = arith.constant 0 : i32
    %c0_i32_0 = arith.constant 0 : i32
    %c0_i32_1 = arith.constant 0 : i32
    return %c0_i32, %c0_i32_0 : i32, i32
  }
  func.func @transform_22(%arg0: i32) -> (i32, i32) {
    %c0_i32 = arith.constant 0 : i32
    %c0_i32_0 = arith.constant 0 : i32
    %c0_i32_1 = arith.constant 0 : i32
    return %c0_i32, %c0_i32_0 : i32, i32
  }
  func.func @transform_23(%arg0: i32) -> (i32, i32) {
    %c0_i32 = arith.constant 0 : i32
    %c0_i32_0 = arith.constant 0 : i32
    %c0_i32_1 = arith.constant 0 : i32
    return %c0_i32, %c0_i32_0 : i32, i32
  }
  func.func @transform_24(%arg0: i32) -> (i32, i32) {
    %c0_i32 = arith.constant 0 : i32
    %c0_i32_0 = arith.constant 0 : i32
    %c0_i32_1 = arith.constant 0 : i32
    return %c0_i32, %c0_i32_0 : i32, i32
  }
  func.func @transform_25(%arg0: i32) -> (i32, i32) {
    %c0_i32 = arith.constant 0 : i32
    %c0_i32_0 = arith.constant 0 : i32
    %c0_i32_1 = arith.constant 0 : i32
    return %c0_i32, %c0_i32_0 : i32, i32
  }
  func.func @transform_26(%arg0: i32) -> (i32, i32) {
    %c0_i32 = arith.constant 0 : i32
    %c0_i32_0 = arith.constant 0 : i32
    %c0_i32_1 = arith.constant 0 : i32
    return %c0_i32, %c0_i32_0 : i32, i32
  }
  func.func @transform_27(%arg0: i32) -> (i32, i32) {
    %c0_i32 = arith.constant 0 : i32
    %c0_i32_0 = arith.constant 0 : i32
    %c0_i32_1 = arith.constant 0 : i32
    return %c0_i32, %c0_i32_0 : i32, i32
  }
  func.func @transform_28(%arg0: i32) -> (i32, i32) {
    %c0_i32 = arith.constant 0 : i32
    %c0_i32_0 = arith.constant 0 : i32
    %c0_i32_1 = arith.constant 0 : i32
    return %c0_i32, %c0_i32_0 : i32, i32
  }
  func.func @transform_29(%arg0: i32) -> (i32, i32) {
    %c0_i32 = arith.constant 0 : i32
    %c0_i32_0 = arith.constant 0 : i32
    %c0_i32_1 = arith.constant 0 : i32
    return %c0_i32, %c0_i32_0 : i32, i32
  }
  func.func @transform_30(%arg0: i32) -> (i32, i32) {
    %c0_i32 = arith.constant 0 : i32
    %c0_i32_0 = arith.constant 0 : i32
    %c0_i32_1 = arith.constant 0 : i32
    return %c0_i32, %c0_i32_0 : i32, i32
  }
  func.func @transform_31(%arg0: i32) -> (i32, i32) {
    %c0_i32 = arith.constant 0 : i32
    %c0_i32_0 = arith.constant 0 : i32
    %c0_i32_1 = arith.constant 0 : i32
    return %c0_i32, %c0_i32_0 : i32, i32
  }
  func.func @transform_32(%arg0: i32) -> (i32, i32) {
    %c0_i32 = arith.constant 0 : i32
    %c0_i32_0 = arith.constant 0 : i32
    %c0_i32_1 = arith.constant 0 : i32
    return %c0_i32, %c0_i32_0 : i32, i32
  }
  func.func @transform_33(%arg0: i32) -> (i32, i32, i32) {
    %c0_i32 = arith.constant 0 : i32
    %c0_i32_0 = arith.constant 0 : i32
    %c0_i32_1 = arith.constant 0 : i32
    return %arg0, %c0_i32, %c0_i32_0 : i32, i32, i32
  }
}

</mosaic_0001>

<llo_original>
// kernel: tpu_custom_call.1
$region0: #{tpu_custom_call.1}
  #allocation0 [shape = 'u32[]', space=smem, size = 0x4, offset = 0x4, fixed_abs, tag = 'smem constant byte address 0x4 - core index']
  #allocation1 [shape = 'u32[144,128]{1,0:T(1,128)}', space=vmem, size = 0x12000, scoped, tag = 'internal scratch']
  #allocation2 [shape = 'f32[1,1]{1,0:T(1,128)S(1)}', space=vmem, size = 0x200, scoped, tag = 'scoped memory for tpu_custom_call.1']
  %s0 = inlined_call_operand.smem [shape: u32[34], index: -1, kind: input, shape index: {}]
  %s1 = sld [smem:[%s0]]
  %s2 = scalar_lea.smem %s0, 1
  %s3 = sld [smem:[%s2]]
  %s4 = scalar_lea.smem %s0, 2
  %s5 = sld [smem:[%s4]]
  %s6 = scalar_lea.smem %s0, 3
  %s7 = sld [smem:[%s6]]
  %s8 = scalar_lea.smem %s0, 4
  %s9 = sld [smem:[%s8]]
  %s10 = scalar_lea.smem %s0, 5
  %s11 = sld [smem:[%s10]]
  %s12 = scalar_lea.smem %s0, 6
  %s13 = sld [smem:[%s12]]
  %s14 = scalar_lea.smem %s0, 7
  %s15 = sld [smem:[%s14]]
  %s16 = scalar_lea.smem %s0, 8
  %s17 = sld [smem:[%s16]]
  %s18 = scalar_lea.smem %s0, 9
  %s19 = sld [smem:[%s18]]
  %s20 = scalar_lea.smem %s0, 10
  %s21 = sld [smem:[%s20]]
  %s22 = scalar_lea.smem %s0, 11
  %s23 = sld [smem:[%s22]]
  %s24 = scalar_lea.smem %s0, 12
  %s25 = sld [smem:[%s24]]
  %s26 = scalar_lea.smem %s0, 13
  %s27 = sld [smem:[%s26]]
  %s28 = scalar_lea.smem %s0, 14
  %s29 = sld [smem:[%s28]]
  %s30 = scalar_lea.smem %s0, 15
  %s31 = sld [smem:[%s30]]
  %s32 = scalar_lea.smem %s0, 16
  %s33 = sld [smem:[%s32]]
  %s34 = scalar_lea.smem %s0, 17
  %s35 = sld [smem:[%s34]]
  %s36 = scalar_lea.smem %s0, 18
  %s37 = sld [smem:[%s36]]
  %s38 = scalar_lea.smem %s0, 19
  %s39 = sld [smem:[%s38]]
  %s40 = scalar_lea.smem %s0, 20
  %s41 = sld [smem:[%s40]]
  %s42 = scalar_lea.smem %s0, 21
  %s43 = sld [smem:[%s42]]
  %s44 = scalar_lea.smem %s0, 22
  %s45 = sld [smem:[%s44]]
  %s46 = scalar_lea.smem %s0, 23
  %s47 = sld [smem:[%s46]]
  %s48 = scalar_lea.smem %s0, 24
  %s49 = sld [smem:[%s48]]
  %s50 = scalar_lea.smem %s0, 25
  %s51 = sld [smem:[%s50]]
  %s52 = scalar_lea.smem %s0, 26
  %s53 = sld [smem:[%s52]]
  %s54 = scalar_lea.smem %s0, 27
  %s55 = sld [smem:[%s54]]
  %s56 = scalar_lea.smem %s0, 28
  %s57 = sld [smem:[%s56]]
  %s58 = scalar_lea.smem %s0, 29
  %s59 = sld [smem:[%s58]]
  %s60 = scalar_lea.smem %s0, 30
  %s61 = sld [smem:[%s60]]
  %s62 = scalar_lea.smem %s0, 31
  %s63 = sld [smem:[%s62]]
  %s64 = scalar_lea.smem %s0, 32
  %s65 = sld [smem:[%s64]]
  %s66 = scalar_lea.smem %s0, 33
  %s67 = sld [smem:[%s66]]
  %s68 = sld [smem:[#allocation0]]
  $region165: #{tpu_custom_call.1} parent=0
    _
  %s70 = ssub.s32 1, %s68
  %s71 = scalar_select 0, %s70, %s68
  %v72 = vstv %s65
  %73 = vst [vmem:[#allocation2] sm:$0x1] %v72
  $region1: #{tpu_custom_call.1} parent=0
    #allocation3 [shape = 'u8[1024]{0}', space=vmem, size = 0x400, scoped, tag = 'output window, operand 0']
    #allocation4 [shape = 's32[2]{0}', space=sflag, size = 0x8, scoped, tag = 'scoped memory for tpu_custom_call.1']
    %74 = vsyncpa [#allocation4], 0
    %s75 = scalar_lea.sflag [#allocation4], 1
    %76 = vsyncpa %s75, 0
    loop: start=0, step=1, limit=4
    $region2: #{tpu_custom_call.1} parent=1 // loop_pre_header
      _
    $region3: #{tpu_custom_call.1} parent=1 // loop_header
      %s78 = sphi 0, %s82
      %p79 = scmp.ge.s32.totalorder %s78, 4
      %s88 = sphi 0, %s90
      %s91 = sphi 0, %s88
      %s92 = sphi 0, %s91
      %s108 = sphi 0, %s92
      %s114 = sphi 0, %s116
      %s117 = sphi 0, %s114
      %s118 = sphi 0, %s117
      %s134 = sphi 0, %s118
      %s140 = sphi 0, %s142
      %s143 = sphi 0, %s140
      %s144 = sphi 0, %s143
      %s160 = sphi 0, %s144
      %s164 = sphi 0, %s164
      %s166 = sphi 0, %s164
      %s167 = sphi 0, %s166
      %s181 = sphi 0, %s167
      %s185 = sphi 0, %s185
      %s187 = sphi 0, %s185
      %s188 = sphi 0, %s187
      %s202 = sphi 0, %s188
      %s206 = sphi 0, %s206
      %s208 = sphi 0, %s206
      %s209 = sphi 0, %s208
      %s223 = sphi 0, %s209
      %s227 = sphi 0, %s227
      %s229 = sphi 0, %s227
      %s230 = sphi 0, %s229
      %s244 = sphi 0, %s230
      %s248 = sphi 0, %s248
      %s250 = sphi 0, %s248
      %s251 = sphi 0, %s250
      %s265 = sphi 0, %s251
      %s269 = sphi 0, %s269
      %s271 = sphi 0, %s269
      %s272 = sphi 0, %s271
      %s286 = sphi 0, %s272
      %s290 = sphi 0, %s290
      %s292 = sphi 0, %s290
      %s293 = sphi 0, %s292
      %s307 = sphi 0, %s293
      %s311 = sphi 0, %s311
      %s313 = sphi 0, %s311
      %s314 = sphi 0, %s313
      %s328 = sphi 0, %s314
      %s332 = sphi 0, %s332
      %s334 = sphi 0, %s332
      %s335 = sphi 0, %s334
      %s349 = sphi 0, %s335
      %s353 = sphi 0, %s353
      %s355 = sphi 0, %s353
      %s356 = sphi 0, %s355
      %s370 = sphi 0, %s356
      %s374 = sphi 0, %s374
      %s376 = sphi 0, %s374
      %s377 = sphi 0, %s376
      %s391 = sphi 0, %s377
      %s395 = sphi 0, %s395
      %s397 = sphi 0, %s395
      %s398 = sphi 0, %s397
      %s412 = sphi 0, %s398
      %s416 = sphi 0, %s416
      %s418 = sphi 0, %s416
      %s419 = sphi 0, %s418
      %s433 = sphi 0, %s419
      %s437 = sphi 0, %s437
      %s439 = sphi 0, %s437
      %s440 = sphi 0, %s439
      %s454 = sphi 0, %s440
      %s458 = sphi 0, %s458
      %s460 = sphi 0, %s458
      %s461 = sphi 0, %s460
      %s475 = sphi 0, %s461
      %s479 = sphi 0, %s479
      %s481 = sphi 0, %s479
      %s482 = sphi 0, %s481
      %s496 = sphi 0, %s482
      %s500 = sphi 0, %s500
      %s502 = sphi 0, %s500
      %s503 = sphi 0, %s502
      %s517 = sphi 0, %s503
      %s521 = sphi 0, %s521
      %s523 = sphi 0, %s521
      %s524 = sphi 0, %s523
      %s538 = sphi 0, %s524
      %s542 = sphi 0, %s542
      %s544 = sphi 0, %s542
      %s545 = sphi 0, %s544
      %s559 = sphi 0, %s545
      %s563 = sphi 0, %s563
      %s565 = sphi 0, %s563
      %s566 = sphi 0, %s565
      %s580 = sphi 0, %s566
      %s584 = sphi 0, %s584
      %s586 = sphi 0, %s584
      %s587 = sphi 0, %s586
      %s601 = sphi 0, %s587
      %s605 = sphi 0, %s605
      %s607 = sphi 0, %s605
      %s608 = sphi 0, %s607
      %s622 = sphi 0, %s608
      %s626 = sphi 0, %s626
      %s628 = sphi 0, %s626
      %s629 = sphi 0, %s628
      %s643 = sphi 0, %s629
      %s647 = sphi 0, %s647
      %s649 = sphi 0, %s647
      %s650 = sphi 0, %s649
      %s664 = sphi 0, %s650
      %s668 = sphi 0, %s668
      %s670 = sphi 0, %s668
      %s671 = sphi 0, %s670
      %s685 = sphi 0, %s671
      %s689 = sphi 0, %s689
      %s691 = sphi 0, %s689
      %s692 = sphi 0, %s691
      %s706 = sphi 0, %s692
      %s710 = sphi 0, %s710
      %s712 = sphi 0, %s710
      %s713 = sphi 0, %s712
      %s727 = sphi 0, %s713
      %s731 = sphi 0, %s731
      %s733 = sphi 0, %s731
      %s734 = sphi 0, %s733
      %s748 = sphi 0, %s734
      %s752 = sphi 0, %s752
      %s754 = sphi 0, %s752
      %s755 = sphi 0, %s754
      %s769 = sphi 0, %s755
      %s773 = sphi 0, %s773
      %s775 = sphi 0, %s773
      %s776 = sphi 0, %s775
      %s790 = sphi 0, %s776
      %s796 = sphi 0, %s798
      %s799 = sphi 0, %s796
      %s800 = sphi 0, %s799
      %s816 = sphi 0, %s800
    $region4: #{tpu_custom_call.1} parent=1 // loop_header_branch
      %81 = sbr.rel (%p79) target = $region8
    $region5: #{tpu_custom_call.1} parent=1 // loop_body
      %s83 = ssub.s32 %s78, 1
      %s84 = ssub.s32 %s78, 2
      %s85 = sadd.s32 %s78, 1
      %s86 = ssub.s32 %s78, %s85
      %p87 = scmp.eq.s32.totalorder %s86, 0
      %s89 = sadd.s32 %s88, 1
      %s90 = scalar_select %p87, %s88, %s89
      %p93 = pneg %p87
      %p94 = scmp.eq.s32.totalorder %s78, 1
      %p95 = por %p93, %p94
      %p96 = scmp.ne.s32.totalorder %s88, %s91
      %p97 = scmp.eq.s32.totalorder %s78, 0
      %p98 = por %p96, %p97
      %p99 = scmp.ne.s32.totalorder %s88, %s91
      %p100 = scmp.eq.s32.totalorder %s83, 1
      %p101 = por %p99, %p100
      %p102 = scmp.ne.s32.totalorder %s91, %s92
      %p103 = scmp.eq.s32.totalorder %s83, 0
      %p104 = por %p102, %p103
      %p105 = scmp.ne.s32.totalorder %s91, %s92
      %p106 = scmp.eq.s32.totalorder %s84, 1
      %p107 = por %p105, %p106
      %p109 = scmp.ne.s32.totalorder %s92, %s108
      %p110 = scmp.eq.s32.totalorder %s84, 0
      %p111 = por %p109, %p110
      %s112 = ssub.s32 %s78, %s85
      %p113 = scmp.eq.s32.totalorder %s112, 0
      %s115 = sadd.s32 %s114, 1
      %s116 = scalar_select %p113, %s114, %s115
      %p119 = pneg %p113
      %p120 = scmp.eq.s32.totalorder %s78, 1
      %p121 = por %p119, %p120
      %p122 = scmp.ne.s32.totalorder %s114, %s117
      %p123 = scmp.eq.s32.totalorder %s78, 0
      %p124 = por %p122, %p123
      %p125 = scmp.ne.s32.totalorder %s114, %s117
      %p126 = scmp.eq.s32.totalorder %s83, 1
      %p127 = por %p125, %p126
      %p128 = scmp.ne.s32.totalorder %s117, %s118
      %p129 = scmp.eq.s32.totalorder %s83, 0
      %p130 = por %p128, %p129
      %p131 = scmp.ne.s32.totalorder %s117, %s118
      %p132 = scmp.eq.s32.totalorder %s84, 1
      %p133 = por %p131, %p132
      %p135 = scmp.ne.s32.totalorder %s118, %s134
      %p136 = scmp.eq.s32.totalorder %s84, 0
      %p137 = por %p135, %p136
      %s138 = ssub.s32 %s78, %s85
      %p139 = scmp.eq.s32.totalorder %s138, 0
      %s141 = sadd.s32 %s140, 1
      %s142 = scalar_select %p139, %s140, %s141
      %p145 = pneg %p139
      %p146 = scmp.eq.s32.totalorder %s78, 1
      %p147 = por %p145, %p146
      %p148 = scmp.ne.s32.totalorder %s140, %s143
      %p149 = scmp.eq.s32.totalorder %s78, 0
      %p150 = por %p148, %p149
      %p151 = scmp.ne.s32.totalorder %s140, %s143
      %p152 = scmp.eq.s32.totalorder %s83, 1
      %p153 = por %p151, %p152
      %p154 = scmp.ne.s32.totalorder %s143, %s144
      %p155 = scmp.eq.s32.totalorder %s83, 0
      %p156 = por %p154, %p155
      %p157 = scmp.ne.s32.totalorder %s143, %s144
      %p158 = scmp.eq.s32.totalorder %s84, 1
      %p159 = por %p157, %p158
      %p161 = scmp.ne.s32.totalorder %s144, %s160
      %p162 = scmp.eq.s32.totalorder %s84, 0
      %p163 = por %p161, %p162
      %s165 = sadd.s32 %s164, 1
      %p168 = scmp.eq.s32.totalorder %s78, 1
      %p169 = scmp.ne.s32.totalorder %s164, %s166
      %p170 = scmp.eq.s32.totalorder %s78, 0
      %p171 = por %p169, %p170
      %p172 = scmp.ne.s32.totalorder %s164, %s166
      %p173 = scmp.eq.s32.totalorder %s83, 1
      %p174 = por %p172, %p173
      %p175 = scmp.ne.s32.totalorder %s166, %s167
      %p176 = scmp.eq.s32.totalorder %s83, 0
      %p177 = por %p175, %p176
      %p178 = scmp.ne.s32.totalorder %s166, %s167
      %p179 = scmp.eq.s32.totalorder %s84, 1
      %p180 = por %p178, %p179
      %p182 = scmp.ne.s32.totalorder %s167, %s181
      %p183 = scmp.eq.s32.totalorder %s84, 0
      %p184 = por %p182, %p183
      %s186 = sadd.s32 %s185, 1
      %p189 = scmp.eq.s32.totalorder %s78, 1
      %p190 = scmp.ne.s32.totalorder %s185, %s187
      %p191 = scmp.eq.s32.totalorder %s78, 0
      %p192 = por %p190, %p191
      %p193 = scmp.ne.s32.totalorder %s185, %s187
      %p194 = scmp.eq.s32.totalorder %s83, 1
      %p195 = por %p193, %p194
      %p196 = scmp.ne.s32.totalorder %s187, %s188
      %p197 = scmp.eq.s32.totalorder %s83, 0
      %p198 = por %p196, %p197
      %p199 = scmp.ne.s32.totalorder %s187, %s188
      %p200 = scmp.eq.s32.totalorder %s84, 1
      %p201 = por %p199, %p200
      %p203 = scmp.ne.s32.totalorder %s188, %s202
      %p204 = scmp.eq.s32.totalorder %s84, 0
      %p205 = por %p203, %p204
      %s207 = sadd.s32 %s206, 1
      %p210 = scmp.eq.s32.totalorder %s78, 1
      %p211 = scmp.ne.s32.totalorder %s206, %s208
      %p212 = scmp.eq.s32.totalorder %s78, 0
      %p213 = por %p211, %p212
      %p214 = scmp.ne.s32.totalorder %s206, %s208
      %p215 = scmp.eq.s32.totalorder %s83, 1
      %p216 = por %p214, %p215
      %p217 = scmp.ne.s32.totalorder %s208, %s209
      %p218 = scmp.eq.s32.totalorder %s83, 0
      %p219 = por %p217, %p218
      %p220 = scmp.ne.s32.totalorder %s208, %s209
      %p221 = scmp.eq.s32.totalorder %s84, 1
      %p222 = por %p220, %p221
      %p224 = scmp.ne.s32.totalorder %s209, %s223
      %p225 = scmp.eq.s32.totalorder %s84, 0
      %p226 = por %p224, %p225
      %s228 = sadd.s32 %s227, 1
      %p231 = scmp.eq.s32.totalorder %s78, 1
      %p232 = scmp.ne.s32.totalorder %s227, %s229
      %p233 = scmp.eq.s32.totalorder %s78, 0
      %p234 = por %p232, %p233
      %p235 = scmp.ne.s32.totalorder %s227, %s229
      %p236 = scmp.eq.s32.totalorder %s83, 1
      %p237 = por %p235, %p236
      %p238 = scmp.ne.s32.totalorder %s229, %s230
      %p239 = scmp.eq.s32.totalorder %s83, 0
      %p240 = por %p238, %p239
      %p241 = scmp.ne.s32.totalorder %s229, %s230
      %p242 = scmp.eq.s32.totalorder %s84, 1
      %p243 = por %p241, %p242
      %p245 = scmp.ne.s32.totalorder %s230, %s244
      %p246 = scmp.eq.s32.totalorder %s84, 0
      %p247 = por %p245, %p246
      %s249 = sadd.s32 %s248, 1
      %p252 = scmp.eq.s32.totalorder %s78, 1
      %p253 = scmp.ne.s32.totalorder %s248, %s250
      %p254 = scmp.eq.s32.totalorder %s78, 0
      %p255 = por %p253, %p254
      %p256 = scmp.ne.s32.totalorder %s248, %s250
      %p257 = scmp.eq.s32.totalorder %s83, 1
      %p258 = por %p256, %p257
      %p259 = scmp.ne.s32.totalorder %s250, %s251
      %p260 = scmp.eq.s32.totalorder %s83, 0
      %p261 = por %p259, %p260
      %p262 = scmp.ne.s32.totalorder %s250, %s251
      %p263 = scmp.eq.s32.totalorder %s84, 1
      %p264 = por %p262, %p263
      %p266 = scmp.ne.s32.totalorder %s251, %s265
      %p267 = scmp.eq.s32.totalorder %s84, 0
      %p268 = por %p266, %p267
      %s270 = sadd.s32 %s269, 1
      %p273 = scmp.eq.s32.totalorder %s78, 1
      %p274 = scmp.ne.s32.totalorder %s269, %s271
      %p275 = scmp.eq.s32.totalorder %s78, 0
      %p276 = por %p274, %p275
      %p277 = scmp.ne.s32.totalorder %s269, %s271
      %p278 = scmp.eq.s32.totalorder %s83, 1
      %p279 = por %p277, %p278
      %p280 = scmp.ne.s32.totalorder %s271, %s272
      %p281 = scmp.eq.s32.totalorder %s83, 0
      %p282 = por %p280, %p281
      %p283 = scmp.ne.s32.totalorder %s271, %s272
      %p284 = scmp.eq.s32.totalorder %s84, 1
      %p285 = por %p283, %p284
      %p287 = scmp.ne.s32.totalorder %s272, %s286
      %p288 = scmp.eq.s32.totalorder %s84, 0
      %p289 = por %p287, %p288
      %s291 = sadd.s32 %s290, 1
      %p294 = scmp.eq.s32.totalorder %s78, 1
      %p295 = scmp.ne.s32.totalorder %s290, %s292
      %p296 = scmp.eq.s32.totalorder %s78, 0
      %p297 = por %p295, %p296
      %p298 = scmp.ne.s32.totalorder %s290, %s292
      %p299 = scmp.eq.s32.totalorder %s83, 1
      %p300 = por %p298, %p299
      %p301 = scmp.ne.s32.totalorder %s292, %s293
      %p302 = scmp.eq.s32.totalorder %s83, 0
      %p303 = por %p301, %p302
      %p304 = scmp.ne.s32.totalorder %s292, %s293
      %p305 = scmp.eq.s32.totalorder %s84, 1
      %p306 = por %p304, %p305
      %p308 = scmp.ne.s32.totalorder %s293, %s307
      %p309 = scmp.eq.s32.totalorder %s84, 0
      %p310 = por %p308, %p309
      %s312 = sadd.s32 %s311, 1
      %p315 = scmp.eq.s32.totalorder %s78, 1
      %p316 = scmp.ne.s32.totalorder %s311, %s313
      %p317 = scmp.eq.s32.totalorder %s78, 0
      %p318 = por %p316, %p317
      %p319 = scmp.ne.s32.totalorder %s311, %s313
      %p320 = scmp.eq.s32.totalorder %s83, 1
      %p321 = por %p319, %p320
      %p322 = scmp.ne.s32.totalorder %s313, %s314
      %p323 = scmp.eq.s32.totalorder %s83, 0
      %p324 = por %p322, %p323
      %p325 = scmp.ne.s32.totalorder %s313, %s314
      %p326 = scmp.eq.s32.totalorder %s84, 1
      %p327 = por %p325, %p326
      %p329 = scmp.ne.s32.totalorder %s314, %s328
      %p330 = scmp.eq.s32.totalorder %s84, 0
      %p331 = por %p329, %p330
      %s333 = sadd.s32 %s332, 1
      %p336 = scmp.eq.s32.totalorder %s78, 1
      %p337 = scmp.ne.s32.totalorder %s332, %s334
      %p338 = scmp.eq.s32.totalorder %s78, 0
      %p339 = por %p337, %p338
      %p340 = scmp.ne.s32.totalorder %s332, %s334
      %p341 = scmp.eq.s32.totalorder %s83, 1
      %p342 = por %p340, %p341
      %p343 = scmp.ne.s32.totalorder %s334, %s335
      %p344 = scmp.eq.s32.totalorder %s83, 0
      %p345 = por %p343, %p344
      %p346 = scmp.ne.s32.totalorder %s334, %s335
      %p347 = scmp.eq.s32.totalorder %s84, 1
      %p348 = por %p346, %p347
      %p350 = scmp.ne.s32.totalorder %s335, %s349
      %p351 = scmp.eq.s32.totalorder %s84, 0
      %p352 = por %p350, %p351
      %s354 = sadd.s32 %s353, 1
      %p357 = scmp.eq.s32.totalorder %s78, 1
      %p358 = scmp.ne.s32.totalorder %s353, %s355
      %p359 = scmp.eq.s32.totalorder %s78, 0
      %p360 = por %p358, %p359
      %p361 = scmp.ne.s32.totalorder %s353, %s355
      %p362 = scmp.eq.s32.totalorder %s83, 1
      %p363 = por %p361, %p362
      %p364 = scmp.ne.s32.totalorder %s355, %s356
      %p365 = scmp.eq.s32.totalorder %s83, 0
      %p366 = por %p364, %p365
      %p367 = scmp.ne.s32.totalorder %s355, %s356
      %p368 = scmp.eq.s32.totalorder %s84, 1
      %p369 = por %p367, %p368
      %p371 = scmp.ne.s32.totalorder %s356, %s370
      %p372 = scmp.eq.s32.totalorder %s84, 0
      %p373 = por %p371, %p372
      %s375 = sadd.s32 %s374, 1
      %p378 = scmp.eq.s32.totalorder %s78, 1
      %p379 = scmp.ne.s32.totalorder %s374, %s376
      %p380 = scmp.eq.s32.totalorder %s78, 0
      %p381 = por %p379, %p380
      %p382 = scmp.ne.s32.totalorder %s374, %s376
      %p383 = scmp.eq.s32.totalorder %s83, 1
      %p384 = por %p382, %p383
      %p385 = scmp.ne.s32.totalorder %s376, %s377
      %p386 = scmp.eq.s32.totalorder %s83, 0
      %p387 = por %p385, %p386
      %p388 = scmp.ne.s32.totalorder %s376, %s377
      %p389 = scmp.eq.s32.totalorder %s84, 1
      %p390 = por %p388, %p389
      %p392 = scmp.ne.s32.totalorder %s377, %s391
      %p393 = scmp.eq.s32.totalorder %s84, 0
      %p394 = por %p392, %p393
      %s396 = sadd.s32 %s395, 1
      %p399 = scmp.eq.s32.totalorder %s78, 1
      %p400 = scmp.ne.s32.totalorder %s395, %s397
      %p401 = scmp.eq.s32.totalorder %s78, 0
      %p402 = por %p400, %p401
      %p403 = scmp.ne.s32.totalorder %s395, %s397
      %p404 = scmp.eq.s32.totalorder %s83, 1
      %p405 = por %p403, %p404
      %p406 = scmp.ne.s32.totalorder %s397, %s398
      %p407 = scmp.eq.s32.totalorder %s83, 0
      %p408 = por %p406, %p407
      %p409 = scmp.ne.s32.totalorder %s397, %s398
      %p410 = scmp.eq.s32.totalorder %s84, 1
      %p411 = por %p409, %p410
      %p413 = scmp.ne.s32.totalorder %s398, %s412
      %p414 = scmp.eq.s32.totalorder %s84, 0
      %p415 = por %p413, %p414
      %s417 = sadd.s32 %s416, 1
      %p420 = scmp.eq.s32.totalorder %s78, 1
      %p421 = scmp.ne.s32.totalorder %s416, %s418
      %p422 = scmp.eq.s32.totalorder %s78, 0
      %p423 = por %p421, %p422
      %p424 = scmp.ne.s32.totalorder %s416, %s418
      %p425 = scmp.eq.s32.totalorder %s83, 1
      %p426 = por %p424, %p425
      %p427 = scmp.ne.s32.totalorder %s418, %s419
      %p428 = scmp.eq.s32.totalorder %s83, 0
      %p429 = por %p427, %p428
      %p430 = scmp.ne.s32.totalorder %s418, %s419
      %p431 = scmp.eq.s32.totalorder %s84, 1
      %p432 = por %p430, %p431
      %p434 = scmp.ne.s32.totalorder %s419, %s433
      %p435 = scmp.eq.s32.totalorder %s84, 0
      %p436 = por %p434, %p435
      %s438 = sadd.s32 %s437, 1
      %p441 = scmp.eq.s32.totalorder %s78, 1
      %p442 = scmp.ne.s32.totalorder %s437, %s439
      %p443 = scmp.eq.s32.totalorder %s78, 0
      %p444 = por %p442, %p443
      %p445 = scmp.ne.s32.totalorder %s437, %s439
      %p446 = scmp.eq.s32.totalorder %s83, 1
      %p447 = por %p445, %p446
      %p448 = scmp.ne.s32.totalorder %s439, %s440
      %p449 = scmp.eq.s32.totalorder %s83, 0
      %p450 = por %p448, %p449
      %p451 = scmp.ne.s32.totalorder %s439, %s440
      %p452 = scmp.eq.s32.totalorder %s84, 1
      %p453 = por %p451, %p452
      %p455 = scmp.ne.s32.totalorder %s440, %s454
      %p456 = scmp.eq.s32.totalorder %s84, 0
      %p457 = por %p455, %p456
      %s459 = sadd.s32 %s458, 1
      %p462 = scmp.eq.s32.totalorder %s78, 1
      %p463 = scmp.ne.s32.totalorder %s458, %s460
      %p464 = scmp.eq.s32.totalorder %s78, 0
      %p465 = por %p463, %p464
      %p466 = scmp.ne.s32.totalorder %s458, %s460
      %p467 = scmp.eq.s32.totalorder %s83, 1
      %p468 = por %p466, %p467
      %p469 = scmp.ne.s32.totalorder %s460, %s461
      %p470 = scmp.eq.s32.totalorder %s83, 0
      %p471 = por %p469, %p470
      %p472 = scmp.ne.s32.totalorder %s460, %s461
      %p473 = scmp.eq.s32.totalorder %s84, 1
      %p474 = por %p472, %p473
      %p476 = scmp.ne.s32.totalorder %s461, %s475
      %p477 = scmp.eq.s32.totalorder %s84, 0
      %p478 = por %p476, %p477
      %s480 = sadd.s32 %s479, 1
      %p483 = scmp.eq.s32.totalorder %s78, 1
      %p484 = scmp.ne.s32.totalorder %s479, %s481
      %p485 = scmp.eq.s32.totalorder %s78, 0
      %p486 = por %p484, %p485
      %p487 = scmp.ne.s32.totalorder %s479, %s481
      %p488 = scmp.eq.s32.totalorder %s83, 1
      %p489 = por %p487, %p488
      %p490 = scmp.ne.s32.totalorder %s481, %s482
      %p491 = scmp.eq.s32.totalorder %s83, 0
      %p492 = por %p490, %p491
      %p493 = scmp.ne.s32.totalorder %s481, %s482
      %p494 = scmp.eq.s32.totalorder %s84, 1
      %p495 = por %p493, %p494
      %p497 = scmp.ne.s32.totalorder %s482, %s496
      %p498 = scmp.eq.s32.totalorder %s84, 0
      %p499 = por %p497, %p498
      %s501 = sadd.s32 %s500, 1
      %p504 = scmp.eq.s32.totalorder %s78, 1
      %p505 = scmp.ne.s32.totalorder %s500, %s502
      %p506 = scmp.eq.s32.totalorder %s78, 0
      %p507 = por %p505, %p506
      %p508 = scmp.ne.s32.totalorder %s500, %s502
      %p509 = scmp.eq.s32.totalorder %s83, 1
      %p510 = por %p508, %p509
      %p511 = scmp.ne.s32.totalorder %s502, %s503
      %p512 = scmp.eq.s32.totalorder %s83, 0
      %p513 = por %p511, %p512
      %p514 = scmp.ne.s32.totalorder %s502, %s503
      %p515 = scmp.eq.s32.totalorder %s84, 1
      %p516 = por %p514, %p515
      %p518 = scmp.ne.s32.totalorder %s503, %s517
      %p519 = scmp.eq.s32.totalorder %s84, 0
      %p520 = por %p518, %p519
      %s522 = sadd.s32 %s521, 1
      %p525 = scmp.eq.s32.totalorder %s78, 1
      %p526 = scmp.ne.s32.totalorder %s521, %s523
      %p527 = scmp.eq.s32.totalorder %s78, 0
      %p528 = por %p526, %p527
      %p529 = scmp.ne.s32.totalorder %s521, %s523
      %p530 = scmp.eq.s32.totalorder %s83, 1
      %p531 = por %p529, %p530
      %p532 = scmp.ne.s32.totalorder %s523, %s524
      %p533 = scmp.eq.s32.totalorder %s83, 0
      %p534 = por %p532, %p533
      %p535 = scmp.ne.s32.totalorder %s523, %s524
      %p536 = scmp.eq.s32.totalorder %s84, 1
      %p537 = por %p535, %p536
      %p539 = scmp.ne.s32.totalorder %s524, %s538
      %p540 = scmp.eq.s32.totalorder %s84, 0
      %p541 = por %p539, %p540
      %s543 = sadd.s32 %s542, 1
      %p546 = scmp.eq.s32.totalorder %s78, 1
      %p547 = scmp.ne.s32.totalorder %s542, %s544
      %p548 = scmp.eq.s32.totalorder %s78, 0
      %p549 = por %p547, %p548
      %p550 = scmp.ne.s32.totalorder %s542, %s544
      %p551 = scmp.eq.s32.totalorder %s83, 1
      %p552 = por %p550, %p551
      %p553 = scmp.ne.s32.totalorder %s544, %s545
      %p554 = scmp.eq.s32.totalorder %s83, 0
      %p555 = por %p553, %p554
      %p556 = scmp.ne.s32.totalorder %s544, %s545
      %p557 = scmp.eq.s32.totalorder %s84, 1
      %p558 = por %p556, %p557
      %p560 = scmp.ne.s32.totalorder %s545, %s559
      %p561 = scmp.eq.s32.totalorder %s84, 0
      %p562 = por %p560, %p561
      %s564 = sadd.s32 %s563, 1
      %p567 = scmp.eq.s32.totalorder %s78, 1
      %p568 = scmp.ne.s32.totalorder %s563, %s565
      %p569 = scmp.eq.s32.totalorder %s78, 0
      %p570 = por %p568, %p569
      %p571 = scmp.ne.s32.totalorder %s563, %s565
      %p572 = scmp.eq.s32.totalorder %s83, 1
      %p573 = por %p571, %p572
      %p574 = scmp.ne.s32.totalorder %s565, %s566
      %p575 = scmp.eq.s32.totalorder %s83, 0
      %p576 = por %p574, %p575
      %p577 = scmp.ne.s32.totalorder %s565, %s566
      %p578 = scmp.eq.s32.totalorder %s84, 1
      %p579 = por %p577, %p578
      %p581 = scmp.ne.s32.totalorder %s566, %s580
      %p582 = scmp.eq.s32.totalorder %s84, 0
      %p583 = por %p581, %p582
      %s585 = sadd.s32 %s584, 1
      %p588 = scmp.eq.s32.totalorder %s78, 1
      %p589 = scmp.ne.s32.totalorder %s584, %s586
      %p590 = scmp.eq.s32.totalorder %s78, 0
      %p591 = por %p589, %p590
      %p592 = scmp.ne.s32.totalorder %s584, %s586
      %p593 = scmp.eq.s32.totalorder %s83, 1
      %p594 = por %p592, %p593
      %p595 = scmp.ne.s32.totalorder %s586, %s587
      %p596 = scmp.eq.s32.totalorder %s83, 0
      %p597 = por %p595, %p596
      %p598 = scmp.ne.s32.totalorder %s586, %s587
      %p599 = scmp.eq.s32.totalorder %s84, 1
      %p600 = por %p598, %p599
      %p602 = scmp.ne.s32.totalorder %s587, %s601
      %p603 = scmp.eq.s32.totalorder %s84, 0
      %p604 = por %p602, %p603
      %s606 = sadd.s32 %s605, 1
      %p609 = scmp.eq.s32.totalorder %s78, 1
      %p610 = scmp.ne.s32.totalorder %s605, %s607
      %p611 = scmp.eq.s32.totalorder %s78, 0
      %p612 = por %p610, %p611
      %p613 = scmp.ne.s32.totalorder %s605, %s607
      %p614 = scmp.eq.s32.totalorder %s83, 1
      %p615 = por %p613, %p614
      %p616 = scmp.ne.s32.totalorder %s607, %s608
      %p617 = scmp.eq.s32.totalorder %s83, 0
      %p618 = por %p616, %p617
      %p619 = scmp.ne.s32.totalorder %s607, %s608
      %p620 = scmp.eq.s32.totalorder %s84, 1
      %p621 = por %p619, %p620
      %p623 = scmp.ne.s32.totalorder %s608, %s622
      %p624 = scmp.eq.s32.totalorder %s84, 0
      %p625 = por %p623, %p624
      %s627 = sadd.s32 %s626, 1
      %p630 = scmp.eq.s32.totalorder %s78, 1
      %p631 = scmp.ne.s32.totalorder %s626, %s628
      %p632 = scmp.eq.s32.totalorder %s78, 0
      %p633 = por %p631, %p632
      %p634 = scmp.ne.s32.totalorder %s626, %s628
      %p635 = scmp.eq.s32.totalorder %s83, 1
      %p636 = por %p634, %p635
      %p637 = scmp.ne.s32.totalorder %s628, %s629
      %p638 = scmp.eq.s32.totalorder %s83, 0
      %p639 = por %p637, %p638
      %p640 = scmp.ne.s32.totalorder %s628, %s629
      %p641 = scmp.eq.s32.totalorder %s84, 1
      %p642 = por %p640, %p641
      %p644 = scmp.ne.s32.totalorder %s629, %s643
      %p645 = scmp.eq.s32.totalorder %s84, 0
      %p646 = por %p644, %p645
      %s648 = sadd.s32 %s647, 1
      %p651 = scmp.eq.s32.totalorder %s78, 1
      %p652 = scmp.ne.s32.totalorder %s647, %s649
      %p653 = scmp.eq.s32.totalorder %s78, 0
      %p654 = por %p652, %p653
      %p655 = scmp.ne.s32.totalorder %s647, %s649
      %p656 = scmp.eq.s32.totalorder %s83, 1
      %p657 = por %p655, %p656
      %p658 = scmp.ne.s32.totalorder %s649, %s650
      %p659 = scmp.eq.s32.totalorder %s83, 0
      %p660 = por %p658, %p659
      %p661 = scmp.ne.s32.totalorder %s649, %s650
      %p662 = scmp.eq.s32.totalorder %s84, 1
      %p663 = por %p661, %p662
      %p665 = scmp.ne.s32.totalorder %s650, %s664
      %p666 = scmp.eq.s32.totalorder %s84, 0
      %p667 = por %p665, %p666
      %s669 = sadd.s32 %s668, 1
      %p672 = scmp.eq.s32.totalorder %s78, 1
      %p673 = scmp.ne.s32.totalorder %s668, %s670
      %p674 = scmp.eq.s32.totalorder %s78, 0
      %p675 = por %p673, %p674
      %p676 = scmp.ne.s32.totalorder %s668, %s670
      %p677 = scmp.eq.s32.totalorder %s83, 1
      %p678 = por %p676, %p677
      %p679 = scmp.ne.s32.totalorder %s670, %s671
      %p680 = scmp.eq.s32.totalorder %s83, 0
      %p681 = por %p679, %p680
      %p682 = scmp.ne.s32.totalorder %s670, %s671
      %p683 = scmp.eq.s32.totalorder %s84, 1
      %p684 = por %p682, %p683
      %p686 = scmp.ne.s32.totalorder %s671, %s685
      %p687 = scmp.eq.s32.totalorder %s84, 0
      %p688 = por %p686, %p687
      %s690 = sadd.s32 %s689, 1
      %p693 = scmp.eq.s32.totalorder %s78, 1
      %p694 = scmp.ne.s32.totalorder %s689, %s691
      %p695 = scmp.eq.s32.totalorder %s78, 0
      %p696 = por %p694, %p695
      %p697 = scmp.ne.s32.totalorder %s689, %s691
      %p698 = scmp.eq.s32.totalorder %s83, 1
      %p699 = por %p697, %p698
      %p700 = scmp.ne.s32.totalorder %s691, %s692
      %p701 = scmp.eq.s32.totalorder %s83, 0
      %p702 = por %p700, %p701
      %p703 = scmp.ne.s32.totalorder %s691, %s692
      %p704 = scmp.eq.s32.totalorder %s84, 1
      %p705 = por %p703, %p704
      %p707 = scmp.ne.s32.totalorder %s692, %s706
      %p708 = scmp.eq.s32.totalorder %s84, 0
      %p709 = por %p707, %p708
      %s711 = sadd.s32 %s710, 1
      %p714 = scmp.eq.s32.totalorder %s78, 1
      %p715 = scmp.ne.s32.totalorder %s710, %s712
      %p716 = scmp.eq.s32.totalorder %s78, 0
      %p717 = por %p715, %p716
      %p718 = scmp.ne.s32.totalorder %s710, %s712
      %p719 = scmp.eq.s32.totalorder %s83, 1
      %p720 = por %p718, %p719
      %p721 = scmp.ne.s32.totalorder %s712, %s713
      %p722 = scmp.eq.s32.totalorder %s83, 0
      %p723 = por %p721, %p722
      %p724 = scmp.ne.s32.totalorder %s712, %s713
      %p725 = scmp.eq.s32.totalorder %s84, 1
      %p726 = por %p724, %p725
      %p728 = scmp.ne.s32.totalorder %s713, %s727
      %p729 = scmp.eq.s32.totalorder %s84, 0
      %p730 = por %p728, %p729
      %s732 = sadd.s32 %s731, 1
      %p735 = scmp.eq.s32.totalorder %s78, 1
      %p736 = scmp.ne.s32.totalorder %s731, %s733
      %p737 = scmp.eq.s32.totalorder %s78, 0
      %p738 = por %p736, %p737
      %p739 = scmp.ne.s32.totalorder %s731, %s733
      %p740 = scmp.eq.s32.totalorder %s83, 1
      %p741 = por %p739, %p740
      %p742 = scmp.ne.s32.totalorder %s733, %s734
      %p743 = scmp.eq.s32.totalorder %s83, 0
      %p744 = por %p742, %p743
      %p745 = scmp.ne.s32.totalorder %s733, %s734
      %p746 = scmp.eq.s32.totalorder %s84, 1
      %p747 = por %p745, %p746
      %p749 = scmp.ne.s32.totalorder %s734, %s748
      %p750 = scmp.eq.s32.totalorder %s84, 0
      %p751 = por %p749, %p750
      %s753 = sadd.s32 %s752, 1
      %p756 = scmp.eq.s32.totalorder %s78, 1
      %p757 = scmp.ne.s32.totalorder %s752, %s754
      %p758 = scmp.eq.s32.totalorder %s78, 0
      %p759 = por %p757, %p758
      %p760 = scmp.ne.s32.totalorder %s752, %s754
      %p761 = scmp.eq.s32.totalorder %s83, 1
      %p762 = por %p760, %p761
      %p763 = scmp.ne.s32.totalorder %s754, %s755
      %p764 = scmp.eq.s32.totalorder %s83, 0
      %p765 = por %p763, %p764
      %p766 = scmp.ne.s32.totalorder %s754, %s755
      %p767 = scmp.eq.s32.totalorder %s84, 1
      %p768 = por %p766, %p767
      %p770 = scmp.ne.s32.totalorder %s755, %s769
      %p771 = scmp.eq.s32.totalorder %s84, 0
      %p772 = por %p770, %p771
      %s774 = sadd.s32 %s773, 1
      %p777 = scmp.eq.s32.totalorder %s78, 1
      %p778 = scmp.ne.s32.totalorder %s773, %s775
      %p779 = scmp.eq.s32.totalorder %s78, 0
      %p780 = por %p778, %p779
      %p781 = scmp.ne.s32.totalorder %s773, %s775
      %p782 = scmp.eq.s32.totalorder %s83, 1
      %p783 = por %p781, %p782
      %p784 = scmp.ne.s32.totalorder %s775, %s776
      %p785 = scmp.eq.s32.totalorder %s83, 0
      %p786 = por %p784, %p785
      %p787 = scmp.ne.s32.totalorder %s775, %s776
      %p788 = scmp.eq.s32.totalorder %s84, 1
      %p789 = por %p787, %p788
      %p791 = scmp.ne.s32.totalorder %s776, %s790
      %p792 = scmp.eq.s32.totalorder %s84, 0
      %p793 = por %p791, %p792
      %s794 = ssub.s32 %s78, %s85
      %p795 = scmp.eq.s32.totalorder %s794, 0
      %s797 = sadd.s32 %s796, 1
      %s798 = scalar_select %p795, %s796, %s797
      %p801 = pneg %p795
      %p802 = scmp.eq.s32.totalorder %s78, 1
      %p803 = por %p801, %p802
      %p804 = scmp.ne.s32.totalorder %s796, %s799
      %p805 = scmp.eq.s32.totalorder %s78, 0
      %p806 = por %p804, %p805
      %p807 = scmp.ne.s32.totalorder %s796, %s799
      %p808 = scmp.eq.s32.totalorder %s83, 1
      %p809 = por %p807, %p808
      %p810 = scmp.ne.s32.totalorder %s799, %s800
      %p811 = scmp.eq.s32.totalorder %s83, 0
      %p812 = por %p810, %p811
      %p813 = scmp.ne.s32.totalorder %s799, %s800
      %p814 = scmp.eq.s32.totalorder %s84, 1
      %p815 = por %p813, %p814
      %p817 = scmp.ne.s32.totalorder %s800, %s816
      %p818 = scmp.eq.s32.totalorder %s84, 0
      %p819 = por %p817, %p818
      %p820 = scmp.le.s32.totalorder 1, %s78
      %p821 = scmp.lt.s32.totalorder %s78, 3
      %p822 = pnand %p820, %p821
      %p823 = pneg %p822
      // Predicated region
      $region9: #{tpu_custom_call.1} parent=5 // pred_check
        _
      $region10: #{tpu_custom_call.1} parent=5 // pred_check_branch
        %825 = sbr.rel (%p822) target = $region12
      $region11: #{tpu_custom_call.1} parent=5 // pred_region
        %s826 = ssub.s32 %s78, 1
        // Predicated region
        $region13: #{tpu_custom_call.1} parent=11 // pred_check
          %p827 = pneg %p177
        $region14: #{tpu_custom_call.1} parent=11 // pred_check_branch
          %829 = sbr.rel (%p827) target = $region16
        $region15: #{tpu_custom_call.1} parent=11 // pred_region
          _
        $region16: #{tpu_custom_call.1} parent=11 // pred_fallthru
          _
        // Predicated region
        $region17: #{tpu_custom_call.1} parent=11 // pred_check
          %p830 = pneg %p198
        $region18: #{tpu_custom_call.1} parent=11 // pred_check_branch
          %832 = sbr.rel (%p830) target = $region20
        $region19: #{tpu_custom_call.1} parent=11 // pred_region
          _
        $region20: #{tpu_custom_call.1} parent=11 // pred_fallthru
          _
        // Predicated region
        $region21: #{tpu_custom_call.1} parent=11 // pred_check
          %p833 = pneg %p219
        $region22: #{tpu_custom_call.1} parent=11 // pred_check_branch
          %835 = sbr.rel (%p833) target = $region24
        $region23: #{tpu_custom_call.1} parent=11 // pred_region
          _
        $region24: #{tpu_custom_call.1} parent=11 // pred_fallthru
          _
        // Predicated region
        $region25: #{tpu_custom_call.1} parent=11 // pred_check
          %p836 = pneg %p240
        $region26: #{tpu_custom_call.1} parent=11 // pred_check_branch
          %838 = sbr.rel (%p836) target = $region28
        $region27: #{tpu_custom_call.1} parent=11 // pred_region
          _
        $region28: #{tpu_custom_call.1} parent=11 // pred_fallthru
          _
        // Predicated region
        $region29: #{tpu_custom_call.1} parent=11 // pred_check
          %p839 = pneg %p261
        $region30: #{tpu_custom_call.1} parent=11 // pred_check_branch
          %841 = sbr.rel (%p839) target = $region32
        $region31: #{tpu_custom_call.1} parent=11 // pred_region
          _
        $region32: #{tpu_custom_call.1} parent=11 // pred_fallthru
          _
        // Predicated region
        $region33: #{tpu_custom_call.1} parent=11 // pred_check
          %p842 = pneg %p282
        $region34: #{tpu_custom_call.1} parent=11 // pred_check_branch
          %844 = sbr.rel (%p842) target = $region36
        $region35: #{tpu_custom_call.1} parent=11 // pred_region
          _
        $region36: #{tpu_custom_call.1} parent=11 // pred_fallthru
          _
        // Predicated region
        $region37: #{tpu_custom_call.1} parent=11 // pred_check
          %p845 = pneg %p303
        $region38: #{tpu_custom_call.1} parent=11 // pred_check_branch
          %847 = sbr.rel (%p845) target = $region40
        $region39: #{tpu_custom_call.1} parent=11 // pred_region
          _
        $region40: #{tpu_custom_call.1} parent=11 // pred_fallthru
          _
        // Predicated region
        $region41: #{tpu_custom_call.1} parent=11 // pred_check
          %p848 = pneg %p324
        $region42: #{tpu_custom_call.1} parent=11 // pred_check_branch
          %850 = sbr.rel (%p848) target = $region44
        $region43: #{tpu_custom_call.1} parent=11 // pred_region
          _
        $region44: #{tpu_custom_call.1} parent=11 // pred_fallthru
          _
        // Predicated region
        $region45: #{tpu_custom_call.1} parent=11 // pred_check
          %p851 = pneg %p345
        $region46: #{tpu_custom_call.1} parent=11 // pred_check_branch
          %853 = sbr.rel (%p851) target = $region48
        $region47: #{tpu_custom_call.1} parent=11 // pred_region
          _
        $region48: #{tpu_custom_call.1} parent=11 // pred_fallthru
          _
        // Predicated region
        $region49: #{tpu_custom_call.1} parent=11 // pred_check
          %p854 = pneg %p366
        $region50: #{tpu_custom_call.1} parent=11 // pred_check_branch
          %856 = sbr.rel (%p854) target = $region52
        $region51: #{tpu_custom_call.1} parent=11 // pred_region
          _
        $region52: #{tpu_custom_call.1} parent=11 // pred_fallthru
          _
        // Predicated region
        $region53: #{tpu_custom_call.1} parent=11 // pred_check
          %p857 = pneg %p387
        $region54: #{tpu_custom_call.1} parent=11 // pred_check_branch
          %859 = sbr.rel (%p857) target = $region56
        $region55: #{tpu_custom_call.1} parent=11 // pred_region
          _
        $region56: #{tpu_custom_call.1} parent=11 // pred_fallthru
          _
        // Predicated region
        $region57: #{tpu_custom_call.1} parent=11 // pred_check
          %p860 = pneg %p408
        $region58: #{tpu_custom_call.1} parent=11 // pred_check_branch
          %862 = sbr.rel (%p860) target = $region60
        $region59: #{tpu_custom_call.1} parent=11 // pred_region
          _
        $region60: #{tpu_custom_call.1} parent=11 // pred_fallthru
          _
        // Predicated region
        $region61: #{tpu_custom_call.1} parent=11 // pred_check
          %p863 = pneg %p429
        $region62: #{tpu_custom_call.1} parent=11 // pred_check_branch
          %865 = sbr.rel (%p863) target = $region64
        $region63: #{tpu_custom_call.1} parent=11 // pred_region
          _
        $region64: #{tpu_custom_call.1} parent=11 // pred_fallthru
          _
        // Predicated region
        $region65: #{tpu_custom_call.1} parent=11 // pred_check
          %p866 = pneg %p450
        $region66: #{tpu_custom_call.1} parent=11 // pred_check_branch
          %868 = sbr.rel (%p866) target = $region68
        $region67: #{tpu_custom_call.1} parent=11 // pred_region
          _
        $region68: #{tpu_custom_call.1} parent=11 // pred_fallthru
          _
        // Predicated region
        $region69: #{tpu_custom_call.1} parent=11 // pred_check
          %p869 = pneg %p471
        $region70: #{tpu_custom_call.1} parent=11 // pred_check_branch
          %871 = sbr.rel (%p869) target = $region72
        $region71: #{tpu_custom_call.1} parent=11 // pred_region
          _
        $region72: #{tpu_custom_call.1} parent=11 // pred_fallthru
          _
        // Predicated region
        $region73: #{tpu_custom_call.1} parent=11 // pred_check
          %p872 = pneg %p492
        $region74: #{tpu_custom_call.1} parent=11 // pred_check_branch
          %874 = sbr.rel (%p872) target = $region76
        $region75: #{tpu_custom_call.1} parent=11 // pred_region
          _
        $region76: #{tpu_custom_call.1} parent=11 // pred_fallthru
          _
        // Predicated region
        $region77: #{tpu_custom_call.1} parent=11 // pred_check
          %p875 = pneg %p513
        $region78: #{tpu_custom_call.1} parent=11 // pred_check_branch
          %877 = sbr.rel (%p875) target = $region80
        $region79: #{tpu_custom_call.1} parent=11 // pred_region
          _
        $region80: #{tpu_custom_call.1} parent=11 // pred_fallthru
          _
        // Predicated region
        $region81: #{tpu_custom_call.1} parent=11 // pred_check
          %p878 = pneg %p534
        $region82: #{tpu_custom_call.1} parent=11 // pred_check_branch
          %880 = sbr.rel (%p878) target = $region84
        $region83: #{tpu_custom_call.1} parent=11 // pred_region
          _
        $region84: #{tpu_custom_call.1} parent=11 // pred_fallthru
          _
        // Predicated region
        $region85: #{tpu_custom_call.1} parent=11 // pred_check
          %p881 = pneg %p555
        $region86: #{tpu_custom_call.1} parent=11 // pred_check_branch
          %883 = sbr.rel (%p881) target = $region88
        $region87: #{tpu_custom_call.1} parent=11 // pred_region
          _
        $region88: #{tpu_custom_call.1} parent=11 // pred_fallthru
          _
        // Predicated region
        $region89: #{tpu_custom_call.1} parent=11 // pred_check
          %p884 = pneg %p576
        $region90: #{tpu_custom_call.1} parent=11 // pred_check_branch
          %886 = sbr.rel (%p884) target = $region92
        $region91: #{tpu_custom_call.1} parent=11 // pred_region
          _
        $region92: #{tpu_custom_call.1} parent=11 // pred_fallthru
          _
        // Predicated region
        $region93: #{tpu_custom_call.1} parent=11 // pred_check
          %p887 = pneg %p597
        $region94: #{tpu_custom_call.1} parent=11 // pred_check_branch
          %889 = sbr.rel (%p887) target = $region96
        $region95: #{tpu_custom_call.1} parent=11 // pred_region
          _
        $region96: #{tpu_custom_call.1} parent=11 // pred_fallthru
          _
        // Predicated region
        $region97: #{tpu_custom_call.1} parent=11 // pred_check
          %p890 = pneg %p618
        $region98: #{tpu_custom_call.1} parent=11 // pred_check_branch
          %892 = sbr.rel (%p890) target = $region100
        $region99: #{tpu_custom_call.1} parent=11 // pred_region
          _
        $region100: #{tpu_custom_call.1} parent=11 // pred_fallthru
          _
        // Predicated region
        $region101: #{tpu_custom_call.1} parent=11 // pred_check
          %p893 = pneg %p639
        $region102: #{tpu_custom_call.1} parent=11 // pred_check_branch
          %895 = sbr.rel (%p893) target = $region104
        $region103: #{tpu_custom_call.1} parent=11 // pred_region
          _
        $region104: #{tpu_custom_call.1} parent=11 // pred_fallthru
          _
        // Predicated region
        $region105: #{tpu_custom_call.1} parent=11 // pred_check
          %p896 = pneg %p660
        $region106: #{tpu_custom_call.1} parent=11 // pred_check_branch
          %898 = sbr.rel (%p896) target = $region108
        $region107: #{tpu_custom_call.1} parent=11 // pred_region
          _
        $region108: #{tpu_custom_call.1} parent=11 // pred_fallthru
          _
        // Predicated region
        $region109: #{tpu_custom_call.1} parent=11 // pred_check
          %p899 = pneg %p681
        $region110: #{tpu_custom_call.1} parent=11 // pred_check_branch
          %901 = sbr.rel (%p899) target = $region112
        $region111: #{tpu_custom_call.1} parent=11 // pred_region
          _
        $region112: #{tpu_custom_call.1} parent=11 // pred_fallthru
          _
        // Predicated region
        $region113: #{tpu_custom_call.1} parent=11 // pred_check
          %p902 = pneg %p702
        $region114: #{tpu_custom_call.1} parent=11 // pred_check_branch
          %904 = sbr.rel (%p902) target = $region116
        $region115: #{tpu_custom_call.1} parent=11 // pred_region
          _
        $region116: #{tpu_custom_call.1} parent=11 // pred_fallthru
          _
        // Predicated region
        $region117: #{tpu_custom_call.1} parent=11 // pred_check
          %p905 = pneg %p723
        $region118: #{tpu_custom_call.1} parent=11 // pred_check_branch
          %907 = sbr.rel (%p905) target = $region120
        $region119: #{tpu_custom_call.1} parent=11 // pred_region
          _
        $region120: #{tpu_custom_call.1} parent=11 // pred_fallthru
          _
        // Predicated region
        $region121: #{tpu_custom_call.1} parent=11 // pred_check
          %p908 = pneg %p744
        $region122: #{tpu_custom_call.1} parent=11 // pred_check_branch
          %910 = sbr.rel (%p908) target = $region124
        $region123: #{tpu_custom_call.1} parent=11 // pred_region
          _
        $region124: #{tpu_custom_call.1} parent=11 // pred_fallthru
          _
        // Predicated region
        $region125: #{tpu_custom_call.1} parent=11 // pred_check
          %p911 = pneg %p765
        $region126: #{tpu_custom_call.1} parent=11 // pred_check_branch
          %913 = sbr.rel (%p911) target = $region128
        $region127: #{tpu_custom_call.1} parent=11 // pred_region
          _
        $region128: #{tpu_custom_call.1} parent=11 // pred_fallthru
          _
        // Predicated region
        $region129: #{tpu_custom_call.1} parent=11 // pred_check
          %p914 = pneg %p786
        $region130: #{tpu_custom_call.1} parent=11 // pred_check_branch
          %916 = sbr.rel (%p914) target = $region132
        $region131: #{tpu_custom_call.1} parent=11 // pred_region
          _
        $region132: #{tpu_custom_call.1} parent=11 // pred_fallthru
          _
      $region12: #{tpu_custom_call.1} parent=5 // pred_fallthru
        _
      %p917 = scmp.lt.s32.totalorder %s78, 2
      // Predicated region
      $region133: #{tpu_custom_call.1} parent=5 // pred_check
        %p918 = pneg %p917
      $region134: #{tpu_custom_call.1} parent=5 // pred_check_branch
        %920 = sbr.rel (%p918) target = $region136
      $region135: #{tpu_custom_call.1} parent=5 // pred_region
        // Predicated region
        $region137: #{tpu_custom_call.1} parent=135 // pred_check
          %p921 = pneg %p98
        $region138: #{tpu_custom_call.1} parent=135 // pred_check_branch
          %923 = sbr.rel (%p921) target = $region140
        $region139: #{tpu_custom_call.1} parent=135 // pred_region
          %p924 = scmp.lt.s32.totalorder %s78, 1
          %s925 = scalar_select %p924, %s78, 1
          %s926 = smul.addr %s925, 8
          %s927 = scalar_lea.vmem %s1, %s926
        $region140: #{tpu_custom_call.1} parent=135 // pred_fallthru
          _
        // Predicated region
        $region141: #{tpu_custom_call.1} parent=135 // pred_check
          %p928 = pneg %p124
        $region142: #{tpu_custom_call.1} parent=135 // pred_check_branch
          %930 = sbr.rel (%p928) target = $region144
        $region143: #{tpu_custom_call.1} parent=135 // pred_region
          %p931 = scmp.lt.s32.totalorder %s78, 1
          %s932 = scalar_select %p931, %s78, 1
          %s933 = smul.addr %s932, 8
          %s934 = scalar_lea.vmem %s3, %s933
        $region144: #{tpu_custom_call.1} parent=135 // pred_fallthru
          _
        // Predicated region
        $region145: #{tpu_custom_call.1} parent=135 // pred_check
          %p935 = pneg %p150
        $region146: #{tpu_custom_call.1} parent=135 // pred_check_branch
          %937 = sbr.rel (%p935) target = $region148
        $region147: #{tpu_custom_call.1} parent=135 // pred_region
          %p938 = scmp.lt.s32.totalorder %s78, 1
          %s939 = scalar_select %p938, %s78, 1
          %s940 = scalar_lea.vmem %s5, %s939
        $region148: #{tpu_custom_call.1} parent=135 // pred_fallthru
          _
      $region136: #{tpu_custom_call.1} parent=5 // pred_fallthru
        _
      %p941 = scmp.le.s32.totalorder 1, %s78
      %p942 = scmp.lt.s32.totalorder %s78, 3
      %p943 = pnand %p941, %p942
      %p944 = pneg %p943
      // Predicated region
      $region149: #{tpu_custom_call.1} parent=5 // pred_check
        _
      $region150: #{tpu_custom_call.1} parent=5 // pred_check_branch
        %946 = sbr.rel (%p943) target = $region152
      $region151: #{tpu_custom_call.1} parent=5 // pred_region
        %s947 = ssub.s32 %s78, 1
        %p948 = scmp.lt.s32.totalorder %s83, 1
        %s949 = scalar_select %p948, %s83, 1
        %s950 = smul.addr %s949, 8
        %s951 = scalar_lea.vmem %s1, %s950
        %p952 = pneg %p104
        %p953 = pneg %p101
        %p954 = scmp.lt.s32.totalorder %s83, 1
        %s955 = scalar_select %p954, %s83, 1
        %s956 = smul.addr %s955, 8
        %s957 = scalar_lea.vmem %s3, %s956
        %p958 = pneg %p130
        %p959 = pneg %p127
        %p960 = scmp.lt.s32.totalorder %s83, 1
        %s961 = scalar_select %p960, %s83, 1
        %s962 = scalar_lea.vmem %s5, %s961
        %p963 = pneg %p156
        %p964 = pneg %p153
        %p965 = pneg %p177
        %p966 = pneg %p174
        %p967 = pneg %p198
        %p968 = pneg %p195
        %p969 = pneg %p219
        %p970 = pneg %p216
        %p971 = pneg %p240
        %p972 = pneg %p237
        %p973 = pneg %p261
        %p974 = pneg %p258
        %p975 = pneg %p282
        %p976 = pneg %p279
        %p977 = pneg %p303
        %p978 = pneg %p300
        %p979 = pneg %p324
        %p980 = pneg %p321
        %p981 = pneg %p345
        %p982 = pneg %p342
        %p983 = pneg %p366
        %p984 = pneg %p363
        %p985 = pneg %p387
        %p986 = pneg %p384
        %p987 = pneg %p408
        %p988 = pneg %p405
        %p989 = pneg %p429
        %p990 = pneg %p426
        %p991 = pneg %p450
        %p992 = pneg %p447
        %p993 = pneg %p471
        %p994 = pneg %p468
        %p995 = pneg %p492
        %p996 = pneg %p489
        %p997 = pneg %p513
        %p998 = pneg %p510
        %p999 = pneg %p534
        %p1000 = pneg %p531
        %p1001 = pneg %p555
        %p1002 = pneg %p552
        %p1003 = pneg %p576
        %p1004 = pneg %p573
        %p1005 = pneg %p597
        %p1006 = pneg %p594
        %p1007 = pneg %p618
        %p1008 = pneg %p615
        %p1009 = pneg %p639
        %p1010 = pneg %p636
        %p1011 = pneg %p660
        %p1012 = pneg %p657
        %p1013 = pneg %p681
        %p1014 = pneg %p678
        %p1015 = pneg %p702
        %p1016 = pneg %p699
        %p1017 = pneg %p723
        %p1018 = pneg %p720
        %p1019 = pneg %p744
        %p1020 = pneg %p741
        %p1021 = pneg %p765
        %p1022 = pneg %p762
        %p1023 = pneg %p786
        %p1024 = pneg %p783
        %p1025 = pneg %p812
        %p1026 = pneg %p809
        %s1027 = sand.u32 %s799, 1
        %s1028 = scalar_lea.sflag [#allocation4], %s1027
        %s1029 = sand.u32 %s799, 1
        %s1030 = scalar_lea.vmem [#allocation3], %s1029
        %p1031 = scmp.lt.s32.totalorder %s83, 1
        %s1032 = scalar_select %p1031, %s83, 1
        %s1033 = smul.addr %s1032, 8
        %s1034 = scalar_lea.vmem %s1, %s1033
        %p1035 = scmp.lt.s32.totalorder %s83, 1
        %s1036 = scalar_select %p1035, %s83, 1
        %s1037 = smul.addr %s1036, 8
        %s1038 = scalar_lea.vmem %s3, %s1037
        %p1039 = scmp.lt.s32.totalorder %s83, 1
        %s1040 = scalar_select %p1039, %s83, 1
        %s1041 = scalar_lea.vmem %s5, %s1040
        %v1043 = vld [vmem:[%s1034] sm:$0xff]
        %v1044 = vld [vmem:[%s1038] sm:$0xff]
        %v1045 = vld [vmem:[%s7] sm:$0xff]
        %v1046 = vld [vmem:[%s7 + $0x8] sm:$0xff]
        %v1047 = vld [vmem:[%s7 + $0x10] sm:$0xff]
        %v1048 = vld [vmem:[%s7 + $0x18] sm:$0xff]
        %v1049 = vld [vmem:[%s7 + $0x20] sm:$0x3f]
        %v1050 = vld [vmem:[%s9] sm:$0x1]
        %v1052 = vlaneseq
        %v1053 = vshrl.u32 %v1052, 7
        %v1054 = vsub.s32 0, %v1053
        %v1055 = vrot.slane %v1050, %v1054
        %vm1057 = vcmask 310272
        %v1059 = vsel %vm1057, %v1044, 0
        %vm1061 = vcmask 1045504
        %v1063 = vsel %vm1061, %v1049, 0
        %1065 = vmatprep.subr.mxu0 0.0
        %1066 = vmatpush1.msra.mxu0 %v1045
        %1067 = vmatprep.subr.mxu0 0.0
        %1068 = vmatpush1.msra.mxu0 %v1046
        %1069 = vmatprep.subr.mxu0 0.0
        %1070 = vmatpush1.msra.mxu0 %v1047
        %1071 = vmatprep.subr.mxu0 0.0
        %1072 = vmatpush1.msra.mxu0 %v1048
        %1073 = vmatprep.subr.mxu0 0.0
        %1074 = vmatpush1.msra.mxu0 %v1063
        %1075 = vmatprep.subr.mxu0 0.0
        %1076 = vmatpush1.msra.mxu0 0.0
        %1077 = vmatprep.subr.mxu0 0.0
        %1078 = vmatpush1.msra.mxu0 0.0
        %1079 = vmatprep.subr.mxu0 0.0
        %1080 = vmatpush1.msra.mxu0 0.0
        %1081 = vmatprep.subr.mxu0 0.0
        %1082 = vmatpush1.msra.mxu0 0.0
        %1083 = vmatprep.subr.mxu0 0.0
        %1084 = vmatpush1.msra.mxu0 0.0
        %1085 = vmatprep.subr.mxu0 0.0
        %1086 = vmatpush1.msra.mxu0 0.0
        %1087 = vmatprep.subr.mxu0 0.0
        %1088 = vmatpush1.msra.mxu0 0.0
        %1089 = vmatprep.subr.mxu0 0.0
        %1090 = vmatpush1.msra.mxu0 0.0
        %1091 = vmatprep.subr.mxu0 0.0
        %1092 = vmatpush1.msra.mxu0 0.0
        %1093 = vmatprep.subr.mxu0 0.0
        %1094 = vmatpush1.msra.mxu0 0.0
        %1095 = vmatprep.subr.mxu0 0.0
        %1096 = vmatpush1.msra.mxu0 0.0
        %1097 = vmatprep.subr.mxu0 0.0
        %1098 = vmatpush1.msra.mxu0 0.0
        %1099 = vmatprep.subr.mxu0 0.0
        %1100 = vmatpush1.msra.mxu0 0.0
        %1101 = vmatprep.subr.mxu0 0.0
        %1102 = vmatpush1.msra.mxu0 0.0
        %1103 = vmatprep.subr.mxu0 0.0
        %1104 = vmatpush1.msra.mxu0 0.0
        %1105 = vmatprep.subr.mxu0 0.0
        %1106 = vmatpush1.msra.mxu0 0.0
        %1107 = vmatprep.subr.mxu0 0.0
        %1108 = vmatpush1.msra.mxu0 0.0
        %1109 = vmatprep.subr.mxu0 0.0
        %1110 = vmatpush1.msra.mxu0 0.0
        %1111 = vmatprep.subr.mxu0 0.0
        %1112 = vmatpush1.msra.mxu0 0.0
        %1113 = vmatprep.subr.mxu0 0.0
        %1114 = vmatpush1.msra.mxu0 0.0
        %1115 = vmatprep.subr.mxu0 0.0
        %1116 = vmatpush1.msra.mxu0 0.0
        %1117 = vmatprep.subr.mxu0 0.0
        %1118 = vmatpush1.msra.mxu0 0.0
        %1119 = vmatprep.subr.mxu0 0.0
        %1120 = vmatpush1.msra.mxu0 0.0
        %1121 = vmatprep.subr.mxu0 0.0
        %1122 = vmatpush1.msra.mxu0 0.0
        %1123 = vmatprep.subr.mxu0 0.0
        %1124 = vmatpush1.msra.mxu0 0.0
        %1125 = vmatprep.subr.mxu0 0.0
        %1126 = vmatpush1.msra.mxu0 0.0
        %1127 = vmatprep.subr.mxu0 0.0
        %1128 = vmatpush1.msra.mxu0 0.0
        %1129 = vmatprep.mubr.f32.mxu0 0.0
        %1130 = vmatmul.mubr.f32.gmra.mrb[0].mxu0 %v1059
        %v1131 = vpop.f32.mrb[0].mxu0
        %v1132 = vadd.f32 %v1055, %v1131
        %v1133 = vpop.f32.mrb[0].mxu0
        %1134 = vdwg.mxu0
        %v1135 = vadd.f32 %v1043, %v1132
        %v1136 = vld [vmem:[%s1041] sm:$0x1]
        %vm1137 = vcmp.ne.f32.partialorder %v1136, 0.0
        %v1138 = vsel %vm1137, 0.0, -1e+30
        %v1139 = vld [vmem:[%s11] sm:$0xff]
        %v1140 = vld [vmem:[%s11 + $0x8] sm:$0xff]
        %v1141 = vld [vmem:[%s11 + $0x10] sm:$0xff]
        %v1142 = vld [vmem:[%s11 + $0x18] sm:$0xff]
        %v1143 = vld [vmem:[%s11 + $0x20] sm:$0xff]
        %v1144 = vld [vmem:[%s11 + $0x28] sm:$0xff]
        %v1145 = vld [vmem:[%s11 + $0x30] sm:$0xff]
        %v1146 = vld [vmem:[%s11 + $0x38] sm:$0xff]
        %v1147 = vld [vmem:[%s11 + $0x40] sm:$0xff]
        %v1148 = vld [vmem:[%s11 + $0x48] sm:$0xff]
        %v1149 = vld [vmem:[%s11 + $0x50] sm:$0xff]
        %v1150 = vld [vmem:[%s11 + $0x58] sm:$0xff]
        %v1151 = vld [vmem:[%s13] sm:$0x3]
        %v1153 = vlaneseq
        %v1154 = vshrl.u32 %v1153, 7
        %v1155 = vsub.s32 0, %v1154
        %v1156 = vrot.slane %v1151, %v1155
        %v1157 = vlaneseq
        %v1158 = vshrl.u32 %v1157, 7
        %v1159 = vsub.s32 1, %v1158
        %v1160 = vrot.slane %v1151, %v1159
        %vm1163 = vcmask 392192
        %v1165 = vsel %vm1163, %v1135, 0
        %1167 = vmatprep.subr.mxu0 %v1140
        %1168 = vmatpush1.msra.mxu0 %v1139
        %1169 = vmatprep.subr.mxu0 %v1142
        %1170 = vmatpush1.msra.mxu0 %v1141
        %1171 = vmatprep.subr.mxu0 %v1144
        %1172 = vmatpush1.msra.mxu0 %v1143
        %1173 = vmatprep.subr.mxu0 %v1146
        %1174 = vmatpush1.msra.mxu0 %v1145
        %1175 = vmatprep.subr.mxu0 %v1148
        %1176 = vmatpush1.msra.mxu0 %v1147
        %1177 = vmatprep.subr.mxu0 %v1150
        %1178 = vmatpush1.msra.mxu0 %v1149
        %1179 = vmatprep.subr.mxu0 0.0
        %1180 = vmatpush1.msra.mxu0 0.0
        %1181 = vmatprep.subr.mxu0 0.0
        %1182 = vmatpush1.msra.mxu0 0.0
        %1183 = vmatprep.subr.mxu0 0.0
        %1184 = vmatpush1.msra.mxu0 0.0
        %1185 = vmatprep.subr.mxu0 0.0
        %1186 = vmatpush1.msra.mxu0 0.0
        %1187 = vmatprep.subr.mxu0 0.0
        %1188 = vmatpush1.msra.mxu0 0.0
        %1189 = vmatprep.subr.mxu0 0.0
        %1190 = vmatpush1.msra.mxu0 0.0
        %1191 = vmatprep.subr.mxu0 0.0
        %1192 = vmatpush1.msra.mxu0 0.0
        %1193 = vmatprep.subr.mxu0 0.0
        %1194 = vmatpush1.msra.mxu0 0.0
        %1195 = vmatprep.subr.mxu0 0.0
        %1196 = vmatpush1.msra.mxu0 0.0
        %1197 = vmatprep.subr.mxu0 0.0
        %1198 = vmatpush1.msra.mxu0 0.0
        %1199 = vmatprep.subr.mxu0 0.0
        %1200 = vmatpush1.msra.mxu0 0.0
        %1201 = vmatprep.subr.mxu0 0.0
        %1202 = vmatpush1.msra.mxu0 0.0
        %1203 = vmatprep.subr.mxu0 0.0
        %1204 = vmatpush1.msra.mxu0 0.0
        %1205 = vmatprep.subr.mxu0 0.0
        %1206 = vmatpush1.msra.mxu0 0.0
        %1207 = vmatprep.subr.mxu0 0.0
        %1208 = vmatpush1.msra.mxu0 0.0
        %1209 = vmatprep.subr.mxu0 0.0
        %1210 = vmatpush1.msra.mxu0 0.0
        %1211 = vmatprep.subr.mxu0 0.0
        %1212 = vmatpush1.msra.mxu0 0.0
        %1213 = vmatprep.subr.mxu0 0.0
        %1214 = vmatpush1.msra.mxu0 0.0
        %1215 = vmatprep.subr.mxu0 0.0
        %1216 = vmatpush1.msra.mxu0 0.0
        %1217 = vmatprep.subr.mxu0 0.0
        %1218 = vmatpush1.msra.mxu0 0.0
        %1219 = vmatprep.subr.mxu0 0.0
        %1220 = vmatpush1.msra.mxu0 0.0
        %1221 = vmatprep.subr.mxu0 0.0
        %1222 = vmatpush1.msra.mxu0 0.0
        %1223 = vmatprep.subr.mxu0 0.0
        %1224 = vmatpush1.msra.mxu0 0.0
        %1225 = vmatprep.subr.mxu0 0.0
        %1226 = vmatpush1.msra.mxu0 0.0
        %1227 = vmatprep.subr.mxu0 0.0
        %1228 = vmatpush1.msra.mxu0 0.0
        %1229 = vmatprep.subr.mxu0 0.0
        %1230 = vmatpush1.msra.mxu0 0.0
        %1231 = vmatprep.mubr.f32.mxu0 0.0
        %1232 = vmatmul.mubr.f32.gmra.mrb[0].mxu0 %v1165
        %v1233 = vpop.f32.mrb[0].mxu0
        %v1234 = vadd.f32 %v1156, %v1233
        %v1235 = vpop.f32.mrb[0].mxu0
        %v1236 = vadd.f32 %v1160, %v1235
        %1237 = vdwg.mxu0
        %1239 = vrot.lane.b32.xlu0 %v1234, 116
        %v1240 = vpop.permute.xlu0 %1239
        %1241 = vrot.lane.b32.xlu0 %v1234, 104
        %v1242 = vpop.permute.xlu0 %1241
        %1243 = vrot.lane.b32.xlu0 %v1234, 92
        %v1244 = vpop.permute.xlu0 %1243
        %1246 = vrot.lane.b32.xlu0 %v1236, 104
        %v1247 = vpop.permute.xlu0 %1246
        %vm1248 = vcmask 850944
        %v1249 = vsel %vm1248, %v1242, %v1247
        %1250 = vrot.lane.b32.xlu0 %v1236, 92
        %v1251 = vpop.permute.xlu0 %1250
        %1252 = vrot.lane.b32.xlu0 %v1234, 80
        %v1253 = vpop.permute.xlu0 %1252
        %1254 = vrot.lane.b32.xlu0 %v1240, 80
        %v1255 = vpop.permute.xlu0 %1254
        %1256 = vrot.lane.b32.xlu0 %v1242, 80
        %v1257 = vpop.permute.xlu0 %1256
        %1258 = vrot.lane.b32.xlu0 %v1244, 80
        %v1259 = vpop.permute.xlu0 %1258
        %1264 = vxpose.xlu0.b32.start [1/16] %v1253, 128
        %1265 = vxpose.xlu0.b32.cont [2/16] 0.0, 128
        %1266 = vxpose.xlu0.b32.cont [3/16] 0.0, 128
        %1267 = vxpose.xlu0.b32.cont [4/16] 0.0, 128
        %1268 = vxpose.xlu0.b32.cont [5/16] 0.0, 128
        %1269 = vxpose.xlu0.b32.cont [6/16] 0.0, 128
        %1270 = vxpose.xlu0.b32.cont [7/16] 0.0, 128
        %1271 = vxpose.xlu0.b32.cont [8/16] 0.0, 128
        %1272 = vxpose.xlu0.b32.cont [9/16] 0.0, 128
        %1273 = vxpose.xlu0.b32.cont [10/16] 0.0, 128
        %1274 = vxpose.xlu0.b32.cont [11/16] 0.0, 128
        %1275 = vxpose.xlu0.b32.cont [12/16] 0.0, 128
        %1276 = vxpose.xlu0.b32.cont [13/16] 0.0, 128
        %1277 = vxpose.xlu0.b32.cont [14/16] 0.0, 128
        %1278 = vxpose.xlu0.b32.cont [15/16] 0.0, 128
        %1279 = vxpose.xlu0.b32.end [16/16] 0.0, 128
        %v1280 = vpop.trf.xlu0
        %v1281 = vpop.trf.xlu0
        %v1282 = vpop.trf.xlu0
        %v1283 = vpop.trf.xlu0
        %v1284 = vpop.trf.xlu0
        %v1285 = vpop.trf.xlu0
        %v1286 = vpop.trf.xlu0
        %v1287 = vpop.trf.xlu0
        %v1288 = vpop.trf.xlu0
        %v1289 = vpop.trf.xlu0
        %v1290 = vpop.trf.xlu0
        %v1291 = vpop.trf.xlu0
        %v1292 = vpop.trf.xlu0
        %v1293 = vpop.trf.xlu0
        %v1294 = vpop.trf.xlu0
        %v1295 = vpop.trf.xlu0
        %1296 = vxpose.xlu0.b32.start [1/16] %v1255, 128
        %1297 = vxpose.xlu0.b32.cont [2/16] 0.0, 128
        %1298 = vxpose.xlu0.b32.cont [3/16] 0.0, 128
        %1299 = vxpose.xlu0.b32.cont [4/16] 0.0, 128
        %1300 = vxpose.xlu0.b32.cont [5/16] 0.0, 128
        %1301 = vxpose.xlu0.b32.cont [6/16] 0.0, 128
        %1302 = vxpose.xlu0.b32.cont [7/16] 0.0, 128
        %1303 = vxpose.xlu0.b32.cont [8/16] 0.0, 128
        %1304 = vxpose.xlu0.b32.cont [9/16] 0.0, 128
        %1305 = vxpose.xlu0.b32.cont [10/16] 0.0, 128
        %1306 = vxpose.xlu0.b32.cont [11/16] 0.0, 128
        %1307 = vxpose.xlu0.b32.cont [12/16] 0.0, 128
        %1308 = vxpose.xlu0.b32.cont [13/16] 0.0, 128
        %1309 = vxpose.xlu0.b32.cont [14/16] 0.0, 128
        %1310 = vxpose.xlu0.b32.cont [15/16] 0.0, 128
        %1311 = vxpose.xlu0.b32.end [16/16] 0.0, 128
        %v1312 = vpop.trf.xlu0
        %v1313 = vpop.trf.xlu0
        %v1314 = vpop.trf.xlu0
        %v1315 = vpop.trf.xlu0
        %v1316 = vpop.trf.xlu0
        %v1317 = vpop.trf.xlu0
        %v1318 = vpop.trf.xlu0
        %v1319 = vpop.trf.xlu0
        %v1320 = vpop.trf.xlu0
        %v1321 = vpop.trf.xlu0
        %v1322 = vpop.trf.xlu0
        %v1323 = vpop.trf.xlu0
        %v1324 = vpop.trf.xlu0
        %v1325 = vpop.trf.xlu0
        %v1326 = vpop.trf.xlu0
        %v1327 = vpop.trf.xlu0
        %1328 = vxpose.xlu0.b32.start [1/16] %v1257, 128
        %1329 = vxpose.xlu0.b32.cont [2/16] 0.0, 128
        %1330 = vxpose.xlu0.b32.cont [3/16] 0.0, 128
        %1331 = vxpose.xlu0.b32.cont [4/16] 0.0, 128
        %1332 = vxpose.xlu0.b32.cont [5/16] 0.0, 128
        %1333 = vxpose.xlu0.b32.cont [6/16] 0.0, 128
        %1334 = vxpose.xlu0.b32.cont [7/16] 0.0, 128
        %1335 = vxpose.xlu0.b32.cont [8/16] 0.0, 128
        %1336 = vxpose.xlu0.b32.cont [9/16] 0.0, 128
        %1337 = vxpose.xlu0.b32.cont [10/16] 0.0, 128
        %1338 = vxpose.xlu0.b32.cont [11/16] 0.0, 128
        %1339 = vxpose.xlu0.b32.cont [12/16] 0.0, 128
        %1340 = vxpose.xlu0.b32.cont [13/16] 0.0, 128
        %1341 = vxpose.xlu0.b32.cont [14/16] 0.0, 128
        %1342 = vxpose.xlu0.b32.cont [15/16] 0.0, 128
        %1343 = vxpose.xlu0.b32.end [16/16] 0.0, 128
        %v1344 = vpop.trf.xlu0
        %v1345 = vpop.trf.xlu0
        %v1346 = vpop.trf.xlu0
        %v1347 = vpop.trf.xlu0
        %v1348 = vpop.trf.xlu0
        %v1349 = vpop.trf.xlu0
        %v1350 = vpop.trf.xlu0
        %v1351 = vpop.trf.xlu0
        %v1352 = vpop.trf.xlu0
        %v1353 = vpop.trf.xlu0
        %v1354 = vpop.trf.xlu0
        %v1355 = vpop.trf.xlu0
        %v1356 = vpop.trf.xlu0
        %v1357 = vpop.trf.xlu0
        %v1358 = vpop.trf.xlu0
        %v1359 = vpop.trf.xlu0
        %1360 = vxpose.xlu0.b32.start [1/16] %v1259, 128
        %1361 = vxpose.xlu0.b32.cont [2/16] 0.0, 128
        %1362 = vxpose.xlu0.b32.cont [3/16] 0.0, 128
        %1363 = vxpose.xlu0.b32.cont [4/16] 0.0, 128
        %1364 = vxpose.xlu0.b32.cont [5/16] 0.0, 128
        %1365 = vxpose.xlu0.b32.cont [6/16] 0.0, 128
        %1366 = vxpose.xlu0.b32.cont [7/16] 0.0, 128
        %1367 = vxpose.xlu0.b32.cont [8/16] 0.0, 128
        %1368 = vxpose.xlu0.b32.cont [9/16] 0.0, 128
        %1369 = vxpose.xlu0.b32.cont [10/16] 0.0, 128
        %1370 = vxpose.xlu0.b32.cont [11/16] 0.0, 128
        %1371 = vxpose.xlu0.b32.cont [12/16] 0.0, 128
        %1372 = vxpose.xlu0.b32.cont [13/16] 0.0, 128
        %1373 = vxpose.xlu0.b32.cont [14/16] 0.0, 128
        %1374 = vxpose.xlu0.b32.cont [15/16] 0.0, 128
        %1375 = vxpose.xlu0.b32.end [16/16] 0.0, 128
        %v1376 = vpop.trf.xlu0
        %v1377 = vpop.trf.xlu0
        %v1378 = vpop.trf.xlu0
        %v1379 = vpop.trf.xlu0
        %v1380 = vpop.trf.xlu0
        %v1381 = vpop.trf.xlu0
        %v1382 = vpop.trf.xlu0
        %v1383 = vpop.trf.xlu0
        %v1384 = vpop.trf.xlu0
        %v1385 = vpop.trf.xlu0
        %v1386 = vpop.trf.xlu0
        %v1387 = vpop.trf.xlu0
        %v1388 = vpop.trf.xlu0
        %v1389 = vpop.trf.xlu0
        %v1390 = vpop.trf.xlu0
        %v1391 = vpop.trf.xlu0
        %vm1392 = vcmask 97280
        %v1393 = vsel %vm1392, %v1234, 0
        %vm1395 = vcmask 1043456
        %v1397 = vsel %vm1395, %v1281, 0
        %1399 = vmatprep.subr.mxu0 0.0
        %1400 = vmatpush1.msra.mxu0 %v1280
        %1401 = vmatprep.subr.mxu0 0.0
        %1402 = vmatpush1.msra.mxu0 %v1397
        %1403 = vmatprep.subr.mxu0 0.0
        %1404 = vmatpush1.msra.mxu0 0.0
        %1405 = vmatprep.subr.mxu0 0.0
        %1406 = vmatpush1.msra.mxu0 0.0
        %1407 = vmatprep.subr.mxu0 0.0
        %1408 = vmatpush1.msra.mxu0 0.0
        %1409 = vmatprep.subr.mxu0 0.0
        %1410 = vmatpush1.msra.mxu0 0.0
        %1411 = vmatprep.subr.mxu0 0.0
        %1412 = vmatpush1.msra.mxu0 0.0
        %1413 = vmatprep.subr.mxu0 0.0
        %1414 = vmatpush1.msra.mxu0 0.0
        %1415 = vmatprep.subr.mxu0 0.0
        %1416 = vmatpush1.msra.mxu0 0.0
        %1417 = vmatprep.subr.mxu0 0.0
        %1418 = vmatpush1.msra.mxu0 0.0
        %1419 = vmatprep.subr.mxu0 0.0
        %1420 = vmatpush1.msra.mxu0 0.0
        %1421 = vmatprep.subr.mxu0 0.0
        %1422 = vmatpush1.msra.mxu0 0.0
        %1423 = vmatprep.subr.mxu0 0.0
        %1424 = vmatpush1.msra.mxu0 0.0
        %1425 = vmatprep.subr.mxu0 0.0
        %1426 = vmatpush1.msra.mxu0 0.0
        %1427 = vmatprep.subr.mxu0 0.0
        %1428 = vmatpush1.msra.mxu0 0.0
        %1429 = vmatprep.subr.mxu0 0.0
        %1430 = vmatpush1.msra.mxu0 0.0
        %1431 = vmatprep.subr.mxu0 0.0
        %1432 = vmatpush1.msra.mxu0 0.0
        %1433 = vmatprep.subr.mxu0 0.0
        %1434 = vmatpush1.msra.mxu0 0.0
        %1435 = vmatprep.subr.mxu0 0.0
        %1436 = vmatpush1.msra.mxu0 0.0
        %1437 = vmatprep.subr.mxu0 0.0
        %1438 = vmatpush1.msra.mxu0 0.0
        %1439 = vmatprep.subr.mxu0 0.0
        %1440 = vmatpush1.msra.mxu0 0.0
        %1441 = vmatprep.subr.mxu0 0.0
        %1442 = vmatpush1.msra.mxu0 0.0
        %1443 = vmatprep.subr.mxu0 0.0
        %1444 = vmatpush1.msra.mxu0 0.0
        %1445 = vmatprep.subr.mxu0 0.0
        %1446 = vmatpush1.msra.mxu0 0.0
        %1447 = vmatprep.subr.mxu0 0.0
        %1448 = vmatpush1.msra.mxu0 0.0
        %1449 = vmatprep.subr.mxu0 0.0
        %1450 = vmatpush1.msra.mxu0 0.0
        %1451 = vmatprep.subr.mxu0 0.0
        %1452 = vmatpush1.msra.mxu0 0.0
        %1453 = vmatprep.subr.mxu0 0.0
        %1454 = vmatpush1.msra.mxu0 0.0
        %1455 = vmatprep.subr.mxu0 0.0
        %1456 = vmatpush1.msra.mxu0 0.0
        %1457 = vmatprep.subr.mxu0 0.0
        %1458 = vmatpush1.msra.mxu0 0.0
        %1459 = vmatprep.subr.mxu0 0.0
        %1460 = vmatpush1.msra.mxu0 0.0
        %1461 = vmatprep.subr.mxu0 0.0
        %1462 = vmatpush1.msra.mxu0 0.0
        %1463 = vmatprep.mubr.f32.mxu0 0.0
        %1464 = vmatmul.mubr.f32.gmra.mrb[0].mxu0 %v1393
        %v1465 = vpop.f32.mrb[0].mxu0
        %v1466 = vadd.f32 0.0, %v1465
        %v1467 = vpop.f32.mrb[0].mxu0
        %1468 = vdwg.mxu0
        %v1469 = vsel %vm1392, %v1240, 0
        %v1472 = vsel %vm1395, %v1313, 0
        %1474 = vmatprep.subr.mxu0 0.0
        %1475 = vmatpush1.msra.mxu0 %v1312
        %1476 = vmatprep.subr.mxu0 0.0
        %1477 = vmatpush1.msra.mxu0 %v1472
        %1478 = vmatprep.subr.mxu0 0.0
        %1479 = vmatpush1.msra.mxu0 0.0
        %1480 = vmatprep.subr.mxu0 0.0
        %1481 = vmatpush1.msra.mxu0 0.0
        %1482 = vmatprep.subr.mxu0 0.0
        %1483 = vmatpush1.msra.mxu0 0.0
        %1484 = vmatprep.subr.mxu0 0.0
        %1485 = vmatpush1.msra.mxu0 0.0
        %1486 = vmatprep.subr.mxu0 0.0
        %1487 = vmatpush1.msra.mxu0 0.0
        %1488 = vmatprep.subr.mxu0 0.0
        %1489 = vmatpush1.msra.mxu0 0.0
        %1490 = vmatprep.subr.mxu0 0.0
        %1491 = vmatpush1.msra.mxu0 0.0
        %1492 = vmatprep.subr.mxu0 0.0
        %1493 = vmatpush1.msra.mxu0 0.0
        %1494 = vmatprep.subr.mxu0 0.0
        %1495 = vmatpush1.msra.mxu0 0.0
        %1496 = vmatprep.subr.mxu0 0.0
        %1497 = vmatpush1.msra.mxu0 0.0
        %1498 = vmatprep.subr.mxu0 0.0
        %1499 = vmatpush1.msra.mxu0 0.0
        %1500 = vmatprep.subr.mxu0 0.0
        %1501 = vmatpush1.msra.mxu0 0.0
        %1502 = vmatprep.subr.mxu0 0.0
        %1503 = vmatpush1.msra.mxu0 0.0
        %1504 = vmatprep.subr.mxu0 0.0
        %1505 = vmatpush1.msra.mxu0 0.0
        %1506 = vmatprep.subr.mxu0 0.0
        %1507 = vmatpush1.msra.mxu0 0.0
        %1508 = vmatprep.subr.mxu0 0.0
        %1509 = vmatpush1.msra.mxu0 0.0
        %1510 = vmatprep.subr.mxu0 0.0
        %1511 = vmatpush1.msra.mxu0 0.0
        %1512 = vmatprep.subr.mxu0 0.0
        %1513 = vmatpush1.msra.mxu0 0.0
        %1514 = vmatprep.subr.mxu0 0.0
        %1515 = vmatpush1.msra.mxu0 0.0
        %1516 = vmatprep.subr.mxu0 0.0
        %1517 = vmatpush1.msra.mxu0 0.0
        %1518 = vmatprep.subr.mxu0 0.0
        %1519 = vmatpush1.msra.mxu0 0.0
        %1520 = vmatprep.subr.mxu0 0.0
        %1521 = vmatpush1.msra.mxu0 0.0
        %1522 = vmatprep.subr.mxu0 0.0
        %1523 = vmatpush1.msra.mxu0 0.0
        %1524 = vmatprep.subr.mxu0 0.0
        %1525 = vmatpush1.msra.mxu0 0.0
        %1526 = vmatprep.subr.mxu0 0.0
        %1527 = vmatpush1.msra.mxu0 0.0
        %1528 = vmatprep.subr.mxu0 0.0
        %1529 = vmatpush1.msra.mxu0 0.0
        %1530 = vmatprep.subr.mxu0 0.0
        %1531 = vmatpush1.msra.mxu0 0.0
        %1532 = vmatprep.subr.mxu0 0.0
        %1533 = vmatpush1.msra.mxu0 0.0
        %1534 = vmatprep.subr.mxu0 0.0
        %1535 = vmatpush1.msra.mxu0 0.0
        %1536 = vmatprep.subr.mxu0 0.0
        %1537 = vmatpush1.msra.mxu0 0.0
        %1538 = vmatprep.mubr.f32.mxu0 0.0
        %1539 = vmatmul.mubr.f32.gmra.mrb[0].mxu0 %v1469
        %v1540 = vpop.f32.mrb[0].mxu0
        %v1541 = vadd.f32 0.0, %v1540
        %v1542 = vpop.f32.mrb[0].mxu0
        %1543 = vdwg.mxu0
        %v1544 = vsel %vm1392, %v1242, 0
        %v1547 = vsel %vm1395, %v1345, 0
        %1549 = vmatprep.subr.mxu0 0.0
        %1550 = vmatpush1.msra.mxu0 %v1344
        %1551 = vmatprep.subr.mxu0 0.0
        %1552 = vmatpush1.msra.mxu0 %v1547
        %1553 = vmatprep.subr.mxu0 0.0
        %1554 = vmatpush1.msra.mxu0 0.0
        %1555 = vmatprep.subr.mxu0 0.0
        %1556 = vmatpush1.msra.mxu0 0.0
        %1557 = vmatprep.subr.mxu0 0.0
        %1558 = vmatpush1.msra.mxu0 0.0
        %1559 = vmatprep.subr.mxu0 0.0
        %1560 = vmatpush1.msra.mxu0 0.0
        %1561 = vmatprep.subr.mxu0 0.0
        %1562 = vmatpush1.msra.mxu0 0.0
        %1563 = vmatprep.subr.mxu0 0.0
        %1564 = vmatpush1.msra.mxu0 0.0
        %1565 = vmatprep.subr.mxu0 0.0
        %1566 = vmatpush1.msra.mxu0 0.0
        %1567 = vmatprep.subr.mxu0 0.0
        %1568 = vmatpush1.msra.mxu0 0.0
        %1569 = vmatprep.subr.mxu0 0.0
        %1570 = vmatpush1.msra.mxu0 0.0
        %1571 = vmatprep.subr.mxu0 0.0
        %1572 = vmatpush1.msra.mxu0 0.0
        %1573 = vmatprep.subr.mxu0 0.0
        %1574 = vmatpush1.msra.mxu0 0.0
        %1575 = vmatprep.subr.mxu0 0.0
        %1576 = vmatpush1.msra.mxu0 0.0
        %1577 = vmatprep.subr.mxu0 0.0
        %1578 = vmatpush1.msra.mxu0 0.0
        %1579 = vmatprep.subr.mxu0 0.0
        %1580 = vmatpush1.msra.mxu0 0.0
        %1581 = vmatprep.subr.mxu0 0.0
        %1582 = vmatpush1.msra.mxu0 0.0
        %1583 = vmatprep.subr.mxu0 0.0
        %1584 = vmatpush1.msra.mxu0 0.0
        %1585 = vmatprep.subr.mxu0 0.0
        %1586 = vmatpush1.msra.mxu0 0.0
        %1587 = vmatprep.subr.mxu0 0.0
        %1588 = vmatpush1.msra.mxu0 0.0
        %1589 = vmatprep.subr.mxu0 0.0
        %1590 = vmatpush1.msra.mxu0 0.0
        %1591 = vmatprep.subr.mxu0 0.0
        %1592 = vmatpush1.msra.mxu0 0.0
        %1593 = vmatprep.subr.mxu0 0.0
        %1594 = vmatpush1.msra.mxu0 0.0
        %1595 = vmatprep.subr.mxu0 0.0
        %1596 = vmatpush1.msra.mxu0 0.0
        %1597 = vmatprep.subr.mxu0 0.0
        %1598 = vmatpush1.msra.mxu0 0.0
        %1599 = vmatprep.subr.mxu0 0.0
        %1600 = vmatpush1.msra.mxu0 0.0
        %1601 = vmatprep.subr.mxu0 0.0
        %1602 = vmatpush1.msra.mxu0 0.0
        %1603 = vmatprep.subr.mxu0 0.0
        %1604 = vmatpush1.msra.mxu0 0.0
        %1605 = vmatprep.subr.mxu0 0.0
        %1606 = vmatpush1.msra.mxu0 0.0
        %1607 = vmatprep.subr.mxu0 0.0
        %1608 = vmatpush1.msra.mxu0 0.0
        %1609 = vmatprep.subr.mxu0 0.0
        %1610 = vmatpush1.msra.mxu0 0.0
        %1611 = vmatprep.subr.mxu0 0.0
        %1612 = vmatpush1.msra.mxu0 0.0
        %1613 = vmatprep.mubr.f32.mxu0 0.0
        %1614 = vmatmul.mubr.f32.gmra.mrb[0].mxu0 %v1544
        %v1615 = vpop.f32.mrb[0].mxu0
        %v1616 = vadd.f32 0.0, %v1615
        %v1617 = vpop.f32.mrb[0].mxu0
        %1618 = vdwg.mxu0
        %v1619 = vsel %vm1392, %v1244, 0
        %v1622 = vsel %vm1395, %v1377, 0
        %1624 = vmatprep.subr.mxu0 0.0
        %1625 = vmatpush1.msra.mxu0 %v1376
        %1626 = vmatprep.subr.mxu0 0.0
        %1627 = vmatpush1.msra.mxu0 %v1622
        %1628 = vmatprep.subr.mxu0 0.0
        %1629 = vmatpush1.msra.mxu0 0.0
        %1630 = vmatprep.subr.mxu0 0.0
        %1631 = vmatpush1.msra.mxu0 0.0
        %1632 = vmatprep.subr.mxu0 0.0
        %1633 = vmatpush1.msra.mxu0 0.0
        %1634 = vmatprep.subr.mxu0 0.0
        %1635 = vmatpush1.msra.mxu0 0.0
        %1636 = vmatprep.subr.mxu0 0.0
        %1637 = vmatpush1.msra.mxu0 0.0
        %1638 = vmatprep.subr.mxu0 0.0
        %1639 = vmatpush1.msra.mxu0 0.0
        %1640 = vmatprep.subr.mxu0 0.0
        %1641 = vmatpush1.msra.mxu0 0.0
        %1642 = vmatprep.subr.mxu0 0.0
        %1643 = vmatpush1.msra.mxu0 0.0
        %1644 = vmatprep.subr.mxu0 0.0
        %1645 = vmatpush1.msra.mxu0 0.0
        %1646 = vmatprep.subr.mxu0 0.0
        %1647 = vmatpush1.msra.mxu0 0.0
        %1648 = vmatprep.subr.mxu0 0.0
        %1649 = vmatpush1.msra.mxu0 0.0
        %1650 = vmatprep.subr.mxu0 0.0
        %1651 = vmatpush1.msra.mxu0 0.0
        %1652 = vmatprep.subr.mxu0 0.0
        %1653 = vmatpush1.msra.mxu0 0.0
        %1654 = vmatprep.subr.mxu0 0.0
        %1655 = vmatpush1.msra.mxu0 0.0
        %1656 = vmatprep.subr.mxu0 0.0
        %1657 = vmatpush1.msra.mxu0 0.0
        %1658 = vmatprep.subr.mxu0 0.0
        %1659 = vmatpush1.msra.mxu0 0.0
        %1660 = vmatprep.subr.mxu0 0.0
        %1661 = vmatpush1.msra.mxu0 0.0
        %1662 = vmatprep.subr.mxu0 0.0
        %1663 = vmatpush1.msra.mxu0 0.0
        %1664 = vmatprep.subr.mxu0 0.0
        %1665 = vmatpush1.msra.mxu0 0.0
        %1666 = vmatprep.subr.mxu0 0.0
        %1667 = vmatpush1.msra.mxu0 0.0
        %1668 = vmatprep.subr.mxu0 0.0
        %1669 = vmatpush1.msra.mxu0 0.0
        %1670 = vmatprep.subr.mxu0 0.0
        %1671 = vmatpush1.msra.mxu0 0.0
        %1672 = vmatprep.subr.mxu0 0.0
        %1673 = vmatpush1.msra.mxu0 0.0
        %1674 = vmatprep.subr.mxu0 0.0
        %1675 = vmatpush1.msra.mxu0 0.0
        %1676 = vmatprep.subr.mxu0 0.0
        %1677 = vmatpush1.msra.mxu0 0.0
        %1678 = vmatprep.subr.mxu0 0.0
        %1679 = vmatpush1.msra.mxu0 0.0
        %1680 = vmatprep.subr.mxu0 0.0
        %1681 = vmatpush1.msra.mxu0 0.0
        %1682 = vmatprep.subr.mxu0 0.0
        %1683 = vmatpush1.msra.mxu0 0.0
        %1684 = vmatprep.subr.mxu0 0.0
        %1685 = vmatpush1.msra.mxu0 0.0
        %1686 = vmatprep.subr.mxu0 0.0
        %1687 = vmatpush1.msra.mxu0 0.0
        %1688 = vmatprep.mubr.f32.mxu0 0.0
        %1689 = vmatmul.mubr.f32.gmra.mrb[0].mxu0 %v1619
        %v1690 = vpop.f32.mrb[0].mxu0
        %v1691 = vadd.f32 0.0, %v1690
        %v1692 = vpop.f32.mrb[0].mxu0
        %1693 = vdwg.mxu0
        %v1694 = vmul.f32 %v1466, 0.28867513
        %v1695 = vmul.f32 %v1541, 0.28867513
        %v1696 = vmul.f32 %v1616, 0.28867513
        %v1697 = vmul.f32 %v1691, 0.28867513
        %v1699 = vlaneseq
        %v1700 = vshrl.u32 %v1699, 7
        %v1701 = vsub.s32 0, %v1700
        %v1702 = vrot.slane %v1138, %v1701
        %v1704 = vadd.f32 %v1694, %v1702
        %v1705 = vadd.f32 %v1695, %v1702
        %v1706 = vadd.f32 %v1696, %v1702
        %v1707 = vadd.f32 %v1697, %v1702
        %vm1708 = vcmask 64512
        %v1709 = vsel %vm1708, %v1704, -inf
        %1710 = vmax.xlane.f32.xlu0 %v1709
        %v1711 = vpop.xlane.xlu0 %1710
        %v1712 = vsel %vm1708, %v1705, -inf
        %1713 = vmax.xlane.f32.xlu0 %v1712
        %v1714 = vpop.xlane.xlu0 %1713
        %v1715 = vsel %vm1708, %v1706, -inf
        %1716 = vmax.xlane.f32.xlu0 %v1715
        %v1717 = vpop.xlane.xlu0 %1716
        %v1718 = vsel %vm1708, %v1707, -inf
        %1719 = vmax.xlane.f32.xlu0 %v1718
        %v1720 = vpop.xlane.xlu0 %1719
        %v1721 = vsub.f32 %v1704, %v1711
        %v1722 = vsub.f32 %v1705, %v1714
        %v1723 = vsub.f32 %v1706, %v1717
        %v1724 = vsub.f32 %v1707, %v1720
        %v1725 = vmul.f32 %v1721, 1.442695
        %v1726 = vpow.pop %v1725
        %v1727 = vmul.f32 %v1722, 1.442695
        %v1728 = vpow.pop %v1727
        %v1729 = vmul.f32 %v1723, 1.442695
        %v1730 = vpow.pop %v1729
        %v1731 = vmul.f32 %v1724, 1.442695
        %v1732 = vpow.pop %v1731
        %v1733 = vsel %vm1708, %v1726, 0.0
        %1734 = vadd.xlane.f32.xlu0 %v1733
        %v1735 = vpop.xlane.xlu0 %1734
        %v1736 = vsel %vm1708, %v1728, 0.0
        %1737 = vadd.xlane.f32.xlu0 %v1736
        %v1738 = vpop.xlane.xlu0 %1737
        %v1739 = vsel %vm1708, %v1730, 0.0
        %1740 = vadd.xlane.f32.xlu0 %v1739
        %v1741 = vpop.xlane.xlu0 %1740
        %v1742 = vsel %vm1708, %v1732, 0.0
        %1743 = vadd.xlane.f32.xlu0 %v1742
        %v1744 = vpop.xlane.xlu0 %1743
        %v1745 = vrcp.pop %v1735
        %v1746 = vrcp.pop %v1738
        %v1747 = vrcp.pop %v1741
        %v1748 = vrcp.pop %v1744
        %v1749 = vmul.f32 %v1726, %v1745
        %v1750 = vmul.f32 %v1728, %v1746
        %v1751 = vmul.f32 %v1730, %v1747
        %v1752 = vmul.f32 %v1732, %v1748
        %1753 = vrot.lane.b32.xlu0 %v1234, 32
        %v1754 = vpop.permute.xlu0 %1753
        %1755 = vrot.lane.b32.xlu0 %v1240, 32
        %v1756 = vpop.permute.xlu0 %1755
        %1757 = vrot.lane.b32.xlu0 %v1249, 32
        %v1758 = vpop.permute.xlu0 %1757
        %1759 = vrot.lane.b32.xlu0 %v1251, 32
        %v1760 = vpop.permute.xlu0 %1759
        %1765 = vxpose.xlu0.b32.start [1/16] %v1754, 128
        %1766 = vxpose.xlu0.b32.cont [2/16] 0.0, 128
        %1767 = vxpose.xlu0.b32.cont [3/16] 0.0, 128
        %1768 = vxpose.xlu0.b32.cont [4/16] 0.0, 128
        %1769 = vxpose.xlu0.b32.cont [5/16] 0.0, 128
        %1770 = vxpose.xlu0.b32.cont [6/16] 0.0, 128
        %1771 = vxpose.xlu0.b32.cont [7/16] 0.0, 128
        %1772 = vxpose.xlu0.b32.cont [8/16] 0.0, 128
        %1773 = vxpose.xlu0.b32.cont [9/16] 0.0, 128
        %1774 = vxpose.xlu0.b32.cont [10/16] 0.0, 128
        %1775 = vxpose.xlu0.b32.cont [11/16] 0.0, 128
        %1776 = vxpose.xlu0.b32.cont [12/16] 0.0, 128
        %1777 = vxpose.xlu0.b32.cont [13/16] 0.0, 128
        %1778 = vxpose.xlu0.b32.cont [14/16] 0.0, 128
        %1779 = vxpose.xlu0.b32.cont [15/16] 0.0, 128
        %1780 = vxpose.xlu0.b32.end [16/16] 0.0, 128
        %v1781 = vpop.trf.xlu0
        %v1782 = vpop.trf.xlu0
        %v1783 = vpop.trf.xlu0
        %v1784 = vpop.trf.xlu0
        %v1785 = vpop.trf.xlu0
        %v1786 = vpop.trf.xlu0
        %v1787 = vpop.trf.xlu0
        %v1788 = vpop.trf.xlu0
        %v1789 = vpop.trf.xlu0
        %v1790 = vpop.trf.xlu0
        %v1791 = vpop.trf.xlu0
        %v1792 = vpop.trf.xlu0
        %v1793 = vpop.trf.xlu0
        %v1794 = vpop.trf.xlu0
        %v1795 = vpop.trf.xlu0
        %v1796 = vpop.trf.xlu0
        %1797 = vxpose.xlu0.b32.start [1/16] %v1756, 128
        %1798 = vxpose.xlu0.b32.cont [2/16] 0.0, 128
        %1799 = vxpose.xlu0.b32.cont [3/16] 0.0, 128
        %1800 = vxpose.xlu0.b32.cont [4/16] 0.0, 128
        %1801 = vxpose.xlu0.b32.cont [5/16] 0.0, 128
        %1802 = vxpose.xlu0.b32.cont [6/16] 0.0, 128
        %1803 = vxpose.xlu0.b32.cont [7/16] 0.0, 128
        %1804 = vxpose.xlu0.b32.cont [8/16] 0.0, 128
        %1805 = vxpose.xlu0.b32.cont [9/16] 0.0, 128
        %1806 = vxpose.xlu0.b32.cont [10/16] 0.0, 128
        %1807 = vxpose.xlu0.b32.cont [11/16] 0.0, 128
        %1808 = vxpose.xlu0.b32.cont [12/16] 0.0, 128
        %1809 = vxpose.xlu0.b32.cont [13/16] 0.0, 128
        %1810 = vxpose.xlu0.b32.cont [14/16] 0.0, 128
        %1811 = vxpose.xlu0.b32.cont [15/16] 0.0, 128
        %1812 = vxpose.xlu0.b32.end [16/16] 0.0, 128
        %v1813 = vpop.trf.xlu0
        %v1814 = vpop.trf.xlu0
        %v1815 = vpop.trf.xlu0
        %v1816 = vpop.trf.xlu0
        %v1817 = vpop.trf.xlu0
        %v1818 = vpop.trf.xlu0
        %v1819 = vpop.trf.xlu0
        %v1820 = vpop.trf.xlu0
        %v1821 = vpop.trf.xlu0
        %v1822 = vpop.trf.xlu0
        %v1823 = vpop.trf.xlu0
        %v1824 = vpop.trf.xlu0
        %v1825 = vpop.trf.xlu0
        %v1826 = vpop.trf.xlu0
        %v1827 = vpop.trf.xlu0
        %v1828 = vpop.trf.xlu0
        %1829 = vxpose.xlu0.b32.start [1/16] %v1758, 128
        %1830 = vxpose.xlu0.b32.cont [2/16] 0.0, 128
        %1831 = vxpose.xlu0.b32.cont [3/16] 0.0, 128
        %1832 = vxpose.xlu0.b32.cont [4/16] 0.0, 128
        %1833 = vxpose.xlu0.b32.cont [5/16] 0.0, 128
        %1834 = vxpose.xlu0.b32.cont [6/16] 0.0, 128
        %1835 = vxpose.xlu0.b32.cont [7/16] 0.0, 128
        %1836 = vxpose.xlu0.b32.cont [8/16] 0.0, 128
        %1837 = vxpose.xlu0.b32.cont [9/16] 0.0, 128
        %1838 = vxpose.xlu0.b32.cont [10/16] 0.0, 128
        %1839 = vxpose.xlu0.b32.cont [11/16] 0.0, 128
        %1840 = vxpose.xlu0.b32.cont [12/16] 0.0, 128
        %1841 = vxpose.xlu0.b32.cont [13/16] 0.0, 128
        %1842 = vxpose.xlu0.b32.cont [14/16] 0.0, 128
        %1843 = vxpose.xlu0.b32.cont [15/16] 0.0, 128
        %1844 = vxpose.xlu0.b32.end [16/16] 0.0, 128
        %v1845 = vpop.trf.xlu0
        %v1846 = vpop.trf.xlu0
        %v1847 = vpop.trf.xlu0
        %v1848 = vpop.trf.xlu0
        %v1849 = vpop.trf.xlu0
        %v1850 = vpop.trf.xlu0
        %v1851 = vpop.trf.xlu0
        %v1852 = vpop.trf.xlu0
        %v1853 = vpop.trf.xlu0
        %v1854 = vpop.trf.xlu0
        %v1855 = vpop.trf.xlu0
        %v1856 = vpop.trf.xlu0
        %v1857 = vpop.trf.xlu0
        %v1858 = vpop.trf.xlu0
        %v1859 = vpop.trf.xlu0
        %v1860 = vpop.trf.xlu0
        %1861 = vxpose.xlu0.b32.start [1/16] %v1760, 128
        %1862 = vxpose.xlu0.b32.cont [2/16] 0.0, 128
        %1863 = vxpose.xlu0.b32.cont [3/16] 0.0, 128
        %1864 = vxpose.xlu0.b32.cont [4/16] 0.0, 128
        %1865 = vxpose.xlu0.b32.cont [5/16] 0.0, 128
        %1866 = vxpose.xlu0.b32.cont [6/16] 0.0, 128
        %1867 = vxpose.xlu0.b32.cont [7/16] 0.0, 128
        %1868 = vxpose.xlu0.b32.cont [8/16] 0.0, 128
        %1869 = vxpose.xlu0.b32.cont [9/16] 0.0, 128
        %1870 = vxpose.xlu0.b32.cont [10/16] 0.0, 128
        %1871 = vxpose.xlu0.b32.cont [11/16] 0.0, 128
        %1872 = vxpose.xlu0.b32.cont [12/16] 0.0, 128
        %1873 = vxpose.xlu0.b32.cont [13/16] 0.0, 128
        %1874 = vxpose.xlu0.b32.cont [14/16] 0.0, 128
        %1875 = vxpose.xlu0.b32.cont [15/16] 0.0, 128
        %1876 = vxpose.xlu0.b32.end [16/16] 0.0, 128
        %v1877 = vpop.trf.xlu0
        %v1878 = vpop.trf.xlu0
        %v1879 = vpop.trf.xlu0
        %v1880 = vpop.trf.xlu0
        %v1881 = vpop.trf.xlu0
        %v1882 = vpop.trf.xlu0
        %v1883 = vpop.trf.xlu0
        %v1884 = vpop.trf.xlu0
        %v1885 = vpop.trf.xlu0
        %v1886 = vpop.trf.xlu0
        %v1887 = vpop.trf.xlu0
        %v1888 = vpop.trf.xlu0
        %v1889 = vpop.trf.xlu0
        %v1890 = vpop.trf.xlu0
        %v1891 = vpop.trf.xlu0
        %v1892 = vpop.trf.xlu0
        %v1894 = vsel %vm1708, %v1781, 0
        %v1897 = vsel %vm1708, %v1782, 0
        %v1900 = vsel %vm1708, %v1749, 0
        %1902 = vmatprep.subr.mxu0 0.0
        %1903 = vmatpush1.xpose.msra.mxu0 %v1900
        %1904 = vmatprep.subr.mxu0 0.0
        %1905 = vmatpush1.xpose.msra.mxu0 0.0
        %1906 = vmatprep.subr.mxu0 0.0
        %1907 = vmatpush1.xpose.msra.mxu0 0.0
        %1908 = vmatprep.subr.mxu0 0.0
        %1909 = vmatpush1.xpose.msra.mxu0 0.0
        %1910 = vmatprep.subr.mxu0 0.0
        %1911 = vmatpush1.xpose.msra.mxu0 0.0
        %1912 = vmatprep.subr.mxu0 0.0
        %1913 = vmatpush1.xpose.msra.mxu0 0.0
        %1914 = vmatprep.subr.mxu0 0.0
        %1915 = vmatpush1.xpose.msra.mxu0 0.0
        %1916 = vmatprep.subr.mxu0 0.0
        %1917 = vmatpush1.xpose.msra.mxu0 0.0
        %1918 = vmatprep.subr.mxu0 0.0
        %1919 = vmatpush1.xpose.msra.mxu0 0.0
        %1920 = vmatprep.subr.mxu0 0.0
        %1921 = vmatpush1.xpose.msra.mxu0 0.0
        %1922 = vmatprep.subr.mxu0 0.0
        %1923 = vmatpush1.xpose.msra.mxu0 0.0
        %1924 = vmatprep.subr.mxu0 0.0
        %1925 = vmatpush1.xpose.msra.mxu0 0.0
        %1926 = vmatprep.subr.mxu0 0.0
        %1927 = vmatpush1.xpose.msra.mxu0 0.0
        %1928 = vmatprep.subr.mxu0 0.0
        %1929 = vmatpush1.xpose.msra.mxu0 0.0
        %1930 = vmatprep.subr.mxu0 0.0
        %1931 = vmatpush1.xpose.msra.mxu0 0.0
        %1932 = vmatprep.subr.mxu0 0.0
        %1933 = vmatpush1.xpose.msra.mxu0 0.0
        %1934 = vmatprep.subr.mxu0 0.0
        %1935 = vmatpush1.xpose.msra.mxu0 0.0
        %1936 = vmatprep.subr.mxu0 0.0
        %1937 = vmatpush1.xpose.msra.mxu0 0.0
        %1938 = vmatprep.subr.mxu0 0.0
        %1939 = vmatpush1.xpose.msra.mxu0 0.0
        %1940 = vmatprep.subr.mxu0 0.0
        %1941 = vmatpush1.xpose.msra.mxu0 0.0
        %1942 = vmatprep.subr.mxu0 0.0
        %1943 = vmatpush1.xpose.msra.mxu0 0.0
        %1944 = vmatprep.subr.mxu0 0.0
        %1945 = vmatpush1.xpose.msra.mxu0 0.0
        %1946 = vmatprep.subr.mxu0 0.0
        %1947 = vmatpush1.xpose.msra.mxu0 0.0
        %1948 = vmatprep.subr.mxu0 0.0
        %1949 = vmatpush1.xpose.msra.mxu0 0.0
        %1950 = vmatprep.subr.mxu0 0.0
        %1951 = vmatpush1.xpose.msra.mxu0 0.0
        %1952 = vmatprep.subr.mxu0 0.0
        %1953 = vmatpush1.xpose.msra.mxu0 0.0
        %1954 = vmatprep.subr.mxu0 0.0
        %1955 = vmatpush1.xpose.msra.mxu0 0.0
        %1956 = vmatprep.subr.mxu0 0.0
        %1957 = vmatpush1.xpose.msra.mxu0 0.0
        %1958 = vmatprep.subr.mxu0 0.0
        %1959 = vmatpush1.xpose.msra.mxu0 0.0
        %1960 = vmatprep.subr.mxu0 0.0
        %1961 = vmatpush1.xpose.msra.mxu0 0.0
        %1962 = vmatprep.subr.mxu0 0.0
        %1963 = vmatpush1.xpose.msra.mxu0 0.0
        %1964 = vmatprep.subr.mxu0 0.0
        %1965 = vmatpush1.xpose.msra.mxu0 0.0
        %1966 = vmatprep.mubr.f32.mxu0 0.0
        %1967 = vmatmul.mubr.f32.gmra.mrb[0].mxu0 %v1894
        %v1968 = vpop.f32.mrb[0].mxu0
        %v1969 = vadd.f32 0.0, %v1968
        %v1970 = vpop.f32.mrb[0].mxu0
        %1971 = vmatprep.mubr.f32.mxu0 0.0
        %1972 = vmatmul.mubr.f32.gmra.mrb[0].mxu0 %v1897
        %v1973 = vpop.f32.mrb[0].mxu0
        %v1974 = vadd.f32 0.0, %v1973
        %v1975 = vpop.f32.mrb[0].mxu0
        %1976 = vdwg.mxu0
        %v1978 = vsel %vm1708, %v1813, 0
        %v1981 = vsel %vm1708, %v1814, 0
        %v1984 = vsel %vm1708, %v1750, 0
        %1986 = vmatprep.subr.mxu0 0.0
        %1987 = vmatpush1.xpose.msra.mxu0 %v1984
        %1988 = vmatprep.subr.mxu0 0.0
        %1989 = vmatpush1.xpose.msra.mxu0 0.0
        %1990 = vmatprep.subr.mxu0 0.0
        %1991 = vmatpush1.xpose.msra.mxu0 0.0
        %1992 = vmatprep.subr.mxu0 0.0
        %1993 = vmatpush1.xpose.msra.mxu0 0.0
        %1994 = vmatprep.subr.mxu0 0.0
        %1995 = vmatpush1.xpose.msra.mxu0 0.0
        %1996 = vmatprep.subr.mxu0 0.0
        %1997 = vmatpush1.xpose.msra.mxu0 0.0
        %1998 = vmatprep.subr.mxu0 0.0
        %1999 = vmatpush1.xpose.msra.mxu0 0.0
        %2000 = vmatprep.subr.mxu0 0.0
        %2001 = vmatpush1.xpose.msra.mxu0 0.0
        %2002 = vmatprep.subr.mxu0 0.0
        %2003 = vmatpush1.xpose.msra.mxu0 0.0
        %2004 = vmatprep.subr.mxu0 0.0
        %2005 = vmatpush1.xpose.msra.mxu0 0.0
        %2006 = vmatprep.subr.mxu0 0.0
        %2007 = vmatpush1.xpose.msra.mxu0 0.0
        %2008 = vmatprep.subr.mxu0 0.0
        %2009 = vmatpush1.xpose.msra.mxu0 0.0
        %2010 = vmatprep.subr.mxu0 0.0
        %2011 = vmatpush1.xpose.msra.mxu0 0.0
        %2012 = vmatprep.subr.mxu0 0.0
        %2013 = vmatpush1.xpose.msra.mxu0 0.0
        %2014 = vmatprep.subr.mxu0 0.0
        %2015 = vmatpush1.xpose.msra.mxu0 0.0
        %2016 = vmatprep.subr.mxu0 0.0
        %2017 = vmatpush1.xpose.msra.mxu0 0.0
        %2018 = vmatprep.subr.mxu0 0.0
        %2019 = vmatpush1.xpose.msra.mxu0 0.0
        %2020 = vmatprep.subr.mxu0 0.0
        %2021 = vmatpush1.xpose.msra.mxu0 0.0
        %2022 = vmatprep.subr.mxu0 0.0
        %2023 = vmatpush1.xpose.msra.mxu0 0.0
        %2024 = vmatprep.subr.mxu0 0.0
        %2025 = vmatpush1.xpose.msra.mxu0 0.0
        %2026 = vmatprep.subr.mxu0 0.0
        %2027 = vmatpush1.xpose.msra.mxu0 0.0
        %2028 = vmatprep.subr.mxu0 0.0
        %2029 = vmatpush1.xpose.msra.mxu0 0.0
        %2030 = vmatprep.subr.mxu0 0.0
        %2031 = vmatpush1.xpose.msra.mxu0 0.0
        %2032 = vmatprep.subr.mxu0 0.0
        %2033 = vmatpush1.xpose.msra.mxu0 0.0
        %2034 = vmatprep.subr.mxu0 0.0
        %2035 = vmatpush1.xpose.msra.mxu0 0.0
        %2036 = vmatprep.subr.mxu0 0.0
        %2037 = vmatpush1.xpose.msra.mxu0 0.0
        %2038 = vmatprep.subr.mxu0 0.0
        %2039 = vmatpush1.xpose.msra.mxu0 0.0
        %2040 = vmatprep.subr.mxu0 0.0
        %2041 = vmatpush1.xpose.msra.mxu0 0.0
        %2042 = vmatprep.subr.mxu0 0.0
        %2043 = vmatpush1.xpose.msra.mxu0 0.0
        %2044 = vmatprep.subr.mxu0 0.0
        %2045 = vmatpush1.xpose.msra.mxu0 0.0
        %2046 = vmatprep.subr.mxu0 0.0
        %2047 = vmatpush1.xpose.msra.mxu0 0.0
        %2048 = vmatprep.subr.mxu0 0.0
        %2049 = vmatpush1.xpose.msra.mxu0 0.0
        %2050 = vmatprep.mubr.f32.mxu0 0.0
        %2051 = vmatmul.mubr.f32.gmra.mrb[0].mxu0 %v1978
        %v2052 = vpop.f32.mrb[0].mxu0
        %v2053 = vadd.f32 0.0, %v2052
        %v2054 = vpop.f32.mrb[0].mxu0
        %2055 = vmatprep.mubr.f32.mxu0 0.0
        %2056 = vmatmul.mubr.f32.gmra.mrb[0].mxu0 %v1981
        %v2057 = vpop.f32.mrb[0].mxu0
        %v2058 = vadd.f32 0.0, %v2057
        %v2059 = vpop.f32.mrb[0].mxu0
        %2060 = vdwg.mxu0
        %v2062 = vsel %vm1708, %v1845, 0
        %v2065 = vsel %vm1708, %v1846, 0
        %v2068 = vsel %vm1708, %v1751, 0
        %2070 = vmatprep.subr.mxu0 0.0
        %2071 = vmatpush1.xpose.msra.mxu0 %v2068
        %2072 = vmatprep.subr.mxu0 0.0
        %2073 = vmatpush1.xpose.msra.mxu0 0.0
        %2074 = vmatprep.subr.mxu0 0.0
        %2075 = vmatpush1.xpose.msra.mxu0 0.0
        %2076 = vmatprep.subr.mxu0 0.0
        %2077 = vmatpush1.xpose.msra.mxu0 0.0
        %2078 = vmatprep.subr.mxu0 0.0
        %2079 = vmatpush1.xpose.msra.mxu0 0.0
        %2080 = vmatprep.subr.mxu0 0.0
        %2081 = vmatpush1.xpose.msra.mxu0 0.0
        %2082 = vmatprep.subr.mxu0 0.0
        %2083 = vmatpush1.xpose.msra.mxu0 0.0
        %2084 = vmatprep.subr.mxu0 0.0
        %2085 = vmatpush1.xpose.msra.mxu0 0.0
        %2086 = vmatprep.subr.mxu0 0.0
        %2087 = vmatpush1.xpose.msra.mxu0 0.0
        %2088 = vmatprep.subr.mxu0 0.0
        %2089 = vmatpush1.xpose.msra.mxu0 0.0
        %2090 = vmatprep.subr.mxu0 0.0
        %2091 = vmatpush1.xpose.msra.mxu0 0.0
        %2092 = vmatprep.subr.mxu0 0.0
        %2093 = vmatpush1.xpose.msra.mxu0 0.0
        %2094 = vmatprep.subr.mxu0 0.0
        %2095 = vmatpush1.xpose.msra.mxu0 0.0
        %2096 = vmatprep.subr.mxu0 0.0
        %2097 = vmatpush1.xpose.msra.mxu0 0.0
        %2098 = vmatprep.subr.mxu0 0.0
        %2099 = vmatpush1.xpose.msra.mxu0 0.0
        %2100 = vmatprep.subr.mxu0 0.0
        %2101 = vmatpush1.xpose.msra.mxu0 0.0
        %2102 = vmatprep.subr.mxu0 0.0
        %2103 = vmatpush1.xpose.msra.mxu0 0.0
        %2104 = vmatprep.subr.mxu0 0.0
        %2105 = vmatpush1.xpose.msra.mxu0 0.0
        %2106 = vmatprep.subr.mxu0 0.0
        %2107 = vmatpush1.xpose.msra.mxu0 0.0
        %2108 = vmatprep.subr.mxu0 0.0
        %2109 = vmatpush1.xpose.msra.mxu0 0.0
        %2110 = vmatprep.subr.mxu0 0.0
        %2111 = vmatpush1.xpose.msra.mxu0 0.0
        %2112 = vmatprep.subr.mxu0 0.0
        %2113 = vmatpush1.xpose.msra.mxu0 0.0
        %2114 = vmatprep.subr.mxu0 0.0
        %2115 = vmatpush1.xpose.msra.mxu0 0.0
        %2116 = vmatprep.subr.mxu0 0.0
        %2117 = vmatpush1.xpose.msra.mxu0 0.0
        %2118 = vmatprep.subr.mxu0 0.0
        %2119 = vmatpush1.xpose.msra.mxu0 0.0
        %2120 = vmatprep.subr.mxu0 0.0
        %2121 = vmatpush1.xpose.msra.mxu0 0.0
        %2122 = vmatprep.subr.mxu0 0.0
        %2123 = vmatpush1.xpose.msra.mxu0 0.0
        %2124 = vmatprep.subr.mxu0 0.0
        %2125 = vmatpush1.xpose.msra.mxu0 0.0
        %2126 = vmatprep.subr.mxu0 0.0
        %2127 = vmatpush1.xpose.msra.mxu0 0.0
        %2128 = vmatprep.subr.mxu0 0.0
        %2129 = vmatpush1.xpose.msra.mxu0 0.0
        %2130 = vmatprep.subr.mxu0 0.0
        %2131 = vmatpush1.xpose.msra.mxu0 0.0
        %2132 = vmatprep.subr.mxu0 0.0
        %2133 = vmatpush1.xpose.msra.mxu0 0.0
        %2134 = vmatprep.mubr.f32.mxu0 0.0
        %2135 = vmatmul.mubr.f32.gmra.mrb[0].mxu0 %v2062
        %v2136 = vpop.f32.mrb[0].mxu0
        %v2137 = vadd.f32 0.0, %v2136
        %v2138 = vpop.f32.mrb[0].mxu0
        %2139 = vmatprep.mubr.f32.mxu0 0.0
        %2140 = vmatmul.mubr.f32.gmra.mrb[0].mxu0 %v2065
        %v2141 = vpop.f32.mrb[0].mxu0
        %v2142 = vadd.f32 0.0, %v2141
        %v2143 = vpop.f32.mrb[0].mxu0
        %2144 = vdwg.mxu0
        %v2146 = vsel %vm1708, %v1877, 0
        %v2149 = vsel %vm1708, %v1878, 0
        %v2152 = vsel %vm1708, %v1752, 0
        %2154 = vmatprep.subr.mxu0 0.0
        %2155 = vmatpush1.xpose.msra.mxu0 %v2152
        %2156 = vmatprep.subr.mxu0 0.0
        %2157 = vmatpush1.xpose.msra.mxu0 0.0
        %2158 = vmatprep.subr.mxu0 0.0
        %2159 = vmatpush1.xpose.msra.mxu0 0.0
        %2160 = vmatprep.subr.mxu0 0.0
        %2161 = vmatpush1.xpose.msra.mxu0 0.0
        %2162 = vmatprep.subr.mxu0 0.0
        %2163 = vmatpush1.xpose.msra.mxu0 0.0
        %2164 = vmatprep.subr.mxu0 0.0
        %2165 = vmatpush1.xpose.msra.mxu0 0.0
        %2166 = vmatprep.subr.mxu0 0.0
        %2167 = vmatpush1.xpose.msra.mxu0 0.0
        %2168 = vmatprep.subr.mxu0 0.0
        %2169 = vmatpush1.xpose.msra.mxu0 0.0
        %2170 = vmatprep.subr.mxu0 0.0
        %2171 = vmatpush1.xpose.msra.mxu0 0.0
        %2172 = vmatprep.subr.mxu0 0.0
        %2173 = vmatpush1.xpose.msra.mxu0 0.0
        %2174 = vmatprep.subr.mxu0 0.0
        %2175 = vmatpush1.xpose.msra.mxu0 0.0
        %2176 = vmatprep.subr.mxu0 0.0
        %2177 = vmatpush1.xpose.msra.mxu0 0.0
        %2178 = vmatprep.subr.mxu0 0.0
        %2179 = vmatpush1.xpose.msra.mxu0 0.0
        %2180 = vmatprep.subr.mxu0 0.0
        %2181 = vmatpush1.xpose.msra.mxu0 0.0
        %2182 = vmatprep.subr.mxu0 0.0
        %2183 = vmatpush1.xpose.msra.mxu0 0.0
        %2184 = vmatprep.subr.mxu0 0.0
        %2185 = vmatpush1.xpose.msra.mxu0 0.0
        %2186 = vmatprep.subr.mxu0 0.0
        %2187 = vmatpush1.xpose.msra.mxu0 0.0
        %2188 = vmatprep.subr.mxu0 0.0
        %2189 = vmatpush1.xpose.msra.mxu0 0.0
        %2190 = vmatprep.subr.mxu0 0.0
        %2191 = vmatpush1.xpose.msra.mxu0 0.0
        %2192 = vmatprep.subr.mxu0 0.0
        %2193 = vmatpush1.xpose.msra.mxu0 0.0
        %2194 = vmatprep.subr.mxu0 0.0
        %2195 = vmatpush1.xpose.msra.mxu0 0.0
        %2196 = vmatprep.subr.mxu0 0.0
        %2197 = vmatpush1.xpose.msra.mxu0 0.0
        %2198 = vmatprep.subr.mxu0 0.0
        %2199 = vmatpush1.xpose.msra.mxu0 0.0
        %2200 = vmatprep.subr.mxu0 0.0
        %2201 = vmatpush1.xpose.msra.mxu0 0.0
        %2202 = vmatprep.subr.mxu0 0.0
        %2203 = vmatpush1.xpose.msra.mxu0 0.0
        %2204 = vmatprep.subr.mxu0 0.0
        %2205 = vmatpush1.xpose.msra.mxu0 0.0
        %2206 = vmatprep.subr.mxu0 0.0
        %2207 = vmatpush1.xpose.msra.mxu0 0.0
        %2208 = vmatprep.subr.mxu0 0.0
        %2209 = vmatpush1.xpose.msra.mxu0 0.0
        %2210 = vmatprep.subr.mxu0 0.0
        %2211 = vmatpush1.xpose.msra.mxu0 0.0
        %2212 = vmatprep.subr.mxu0 0.0
        %2213 = vmatpush1.xpose.msra.mxu0 0.0
        %2214 = vmatprep.subr.mxu0 0.0
        %2215 = vmatpush1.xpose.msra.mxu0 0.0
        %2216 = vmatprep.subr.mxu0 0.0
        %2217 = vmatpush1.xpose.msra.mxu0 0.0
        %2218 = vmatprep.mubr.f32.mxu0 0.0
        %2219 = vmatmul.mubr.f32.gmra.mrb[0].mxu0 %v2146
        %v2220 = vpop.f32.mrb[0].mxu0
        %v2221 = vadd.f32 0.0, %v2220
        %v2222 = vpop.f32.mrb[0].mxu0
        %2223 = vmatprep.mubr.f32.mxu0 0.0
        %2224 = vmatmul.mubr.f32.gmra.mrb[0].mxu0 %v2149
        %v2225 = vpop.f32.mrb[0].mxu0
        %v2226 = vadd.f32 0.0, %v2225
        %v2227 = vpop.f32.mrb[0].mxu0
        %2228 = vdwg.mxu0
        %2229 = vxpose.xlu0.b32.start [1/16] %v1969, 128
        %2230 = vxpose.xlu0.b32.cont [2/16] %v1974, 128
        %2231 = vxpose.xlu0.b32.cont [3/16] 0.0, 128
        %2232 = vxpose.xlu0.b32.cont [4/16] 0.0, 128
        %2233 = vxpose.xlu0.b32.cont [5/16] 0.0, 128
        %2234 = vxpose.xlu0.b32.cont [6/16] 0.0, 128
        %2235 = vxpose.xlu0.b32.cont [7/16] 0.0, 128
        %2236 = vxpose.xlu0.b32.cont [8/16] 0.0, 128
        %2237 = vxpose.xlu0.b32.cont [9/16] 0.0, 128
        %2238 = vxpose.xlu0.b32.cont [10/16] 0.0, 128
        %2239 = vxpose.xlu0.b32.cont [11/16] 0.0, 128
        %2240 = vxpose.xlu0.b32.cont [12/16] 0.0, 128
        %2241 = vxpose.xlu0.b32.cont [13/16] 0.0, 128
        %2242 = vxpose.xlu0.b32.cont [14/16] 0.0, 128
        %2243 = vxpose.xlu0.b32.cont [15/16] 0.0, 128
        %2244 = vxpose.xlu0.b32.end [16/16] 0.0, 128
        %v2245 = vpop.trf.xlu0
        %v2246 = vpop.trf.xlu0
        %v2247 = vpop.trf.xlu0
        %v2248 = vpop.trf.xlu0
        %v2249 = vpop.trf.xlu0
        %v2250 = vpop.trf.xlu0
        %v2251 = vpop.trf.xlu0
        %v2252 = vpop.trf.xlu0
        %v2253 = vpop.trf.xlu0
        %v2254 = vpop.trf.xlu0
        %v2255 = vpop.trf.xlu0
        %v2256 = vpop.trf.xlu0
        %v2257 = vpop.trf.xlu0
        %v2258 = vpop.trf.xlu0
        %v2259 = vpop.trf.xlu0
        %v2260 = vpop.trf.xlu0
        %2261 = vxpose.xlu0.b32.start [1/16] %v2053, 128
        %2262 = vxpose.xlu0.b32.cont [2/16] %v2058, 128
        %2263 = vxpose.xlu0.b32.cont [3/16] 0.0, 128
        %2264 = vxpose.xlu0.b32.cont [4/16] 0.0, 128
        %2265 = vxpose.xlu0.b32.cont [5/16] 0.0, 128
        %2266 = vxpose.xlu0.b32.cont [6/16] 0.0, 128
        %2267 = vxpose.xlu0.b32.cont [7/16] 0.0, 128
        %2268 = vxpose.xlu0.b32.cont [8/16] 0.0, 128
        %2269 = vxpose.xlu0.b32.cont [9/16] 0.0, 128
        %2270 = vxpose.xlu0.b32.cont [10/16] 0.0, 128
        %2271 = vxpose.xlu0.b32.cont [11/16] 0.0, 128
        %2272 = vxpose.xlu0.b32.cont [12/16] 0.0, 128
        %2273 = vxpose.xlu0.b32.cont [13/16] 0.0, 128
        %2274 = vxpose.xlu0.b32.cont [14/16] 0.0, 128
        %2275 = vxpose.xlu0.b32.cont [15/16] 0.0, 128
        %2276 = vxpose.xlu0.b32.end [16/16] 0.0, 128
        %v2277 = vpop.trf.xlu0
        %v2278 = vpop.trf.xlu0
        %v2279 = vpop.trf.xlu0
        %v2280 = vpop.trf.xlu0
        %v2281 = vpop.trf.xlu0
        %v2282 = vpop.trf.xlu0
        %v2283 = vpop.trf.xlu0
        %v2284 = vpop.trf.xlu0
        %v2285 = vpop.trf.xlu0
        %v2286 = vpop.trf.xlu0
        %v2287 = vpop.trf.xlu0
        %v2288 = vpop.trf.xlu0
        %v2289 = vpop.trf.xlu0
        %v2290 = vpop.trf.xlu0
        %v2291 = vpop.trf.xlu0
        %v2292 = vpop.trf.xlu0
        %2293 = vxpose.xlu0.b32.start [1/16] %v2137, 128
        %2294 = vxpose.xlu0.b32.cont [2/16] %v2142, 128
        %2295 = vxpose.xlu0.b32.cont [3/16] 0.0, 128
        %2296 = vxpose.xlu0.b32.cont [4/16] 0.0, 128
        %2297 = vxpose.xlu0.b32.cont [5/16] 0.0, 128
        %2298 = vxpose.xlu0.b32.cont [6/16] 0.0, 128
        %2299 = vxpose.xlu0.b32.cont [7/16] 0.0, 128
        %2300 = vxpose.xlu0.b32.cont [8/16] 0.0, 128
        %2301 = vxpose.xlu0.b32.cont [9/16] 0.0, 128
        %2302 = vxpose.xlu0.b32.cont [10/16] 0.0, 128
        %2303 = vxpose.xlu0.b32.cont [11/16] 0.0, 128
        %2304 = vxpose.xlu0.b32.cont [12/16] 0.0, 128
        %2305 = vxpose.xlu0.b32.cont [13/16] 0.0, 128
        %2306 = vxpose.xlu0.b32.cont [14/16] 0.0, 128
        %2307 = vxpose.xlu0.b32.cont [15/16] 0.0, 128
        %2308 = vxpose.xlu0.b32.end [16/16] 0.0, 128
        %v2309 = vpop.trf.xlu0
        %v2310 = vpop.trf.xlu0
        %v2311 = vpop.trf.xlu0
        %v2312 = vpop.trf.xlu0
        %v2313 = vpop.trf.xlu0
        %v2314 = vpop.trf.xlu0
        %v2315 = vpop.trf.xlu0
        %v2316 = vpop.trf.xlu0
        %v2317 = vpop.trf.xlu0
        %v2318 = vpop.trf.xlu0
        %v2319 = vpop.trf.xlu0
        %v2320 = vpop.trf.xlu0
        %v2321 = vpop.trf.xlu0
        %v2322 = vpop.trf.xlu0
        %v2323 = vpop.trf.xlu0
        %v2324 = vpop.trf.xlu0
        %2325 = vxpose.xlu0.b32.start [1/16] %v2221, 128
        %2326 = vxpose.xlu0.b32.cont [2/16] %v2226, 128
        %2327 = vxpose.xlu0.b32.cont [3/16] 0.0, 128
        %2328 = vxpose.xlu0.b32.cont [4/16] 0.0, 128
        %2329 = vxpose.xlu0.b32.cont [5/16] 0.0, 128
        %2330 = vxpose.xlu0.b32.cont [6/16] 0.0, 128
        %2331 = vxpose.xlu0.b32.cont [7/16] 0.0, 128
        %2332 = vxpose.xlu0.b32.cont [8/16] 0.0, 128
        %2333 = vxpose.xlu0.b32.cont [9/16] 0.0, 128
        %2334 = vxpose.xlu0.b32.cont [10/16] 0.0, 128
        %2335 = vxpose.xlu0.b32.cont [11/16] 0.0, 128
        %2336 = vxpose.xlu0.b32.cont [12/16] 0.0, 128
        %2337 = vxpose.xlu0.b32.cont [13/16] 0.0, 128
        %2338 = vxpose.xlu0.b32.cont [14/16] 0.0, 128
        %2339 = vxpose.xlu0.b32.cont [15/16] 0.0, 128
        %2340 = vxpose.xlu0.b32.end [16/16] 0.0, 128
        %v2341 = vpop.trf.xlu0
        %v2342 = vpop.trf.xlu0
        %v2343 = vpop.trf.xlu0
        %v2344 = vpop.trf.xlu0
        %v2345 = vpop.trf.xlu0
        %v2346 = vpop.trf.xlu0
        %v2347 = vpop.trf.xlu0
        %v2348 = vpop.trf.xlu0
        %v2349 = vpop.trf.xlu0
        %v2350 = vpop.trf.xlu0
        %v2351 = vpop.trf.xlu0
        %v2352 = vpop.trf.xlu0
        %v2353 = vpop.trf.xlu0
        %v2354 = vpop.trf.xlu0
        %v2355 = vpop.trf.xlu0
        %v2356 = vpop.trf.xlu0
        %v2357 = vcombine.low %v2245, %v2309
        %v2358 = vcombine.high %v2245, %v2309
        %v2360 = vunpack.c.l.s4 1983009808
        %v2361 = vunpack.c.0.s8 %v2360
        %v2362 = vlaneseq
        %v2363 = vshrl.u32 %v2362, 7
        %v2364 = vsub.s32 %v2361, %v2363
        %v2365 = vrot.slane %v2357, %v2364
        %v2367 = vunpack.c.l.s4 1983009808
        %v2368 = vunpack.c.0.s8 %v2367
        %v2369 = vlaneseq
        %v2370 = vshrl.u32 %v2369, 7
        %v2371 = vsub.s32 %v2368, %v2370
        %v2372 = vrot.slane %v2358, %v2371
        %v2373 = vcombine.low %v2277, %v2341
        %v2374 = vcombine.high %v2277, %v2341
        %v2376 = vunpack.c.l.s4 1983009808
        %v2377 = vunpack.c.0.s8 %v2376
        %v2378 = vlaneseq
        %v2379 = vshrl.u32 %v2378, 7
        %v2380 = vsub.s32 %v2377, %v2379
        %v2381 = vrot.slane %v2373, %v2380
        %v2383 = vunpack.c.l.s4 1983009808
        %v2384 = vunpack.c.0.s8 %v2383
        %v2385 = vlaneseq
        %v2386 = vshrl.u32 %v2385, 7
        %v2387 = vsub.s32 %v2384, %v2386
        %v2388 = vrot.slane %v2374, %v2387
        %v2389 = vcombine.low %v2365, %v2381
        %v2390 = vcombine.high %v2365, %v2381
        %v2392 = vunpack.c.l.s4 1934713408
        %v2393 = vunpack.c.0.s8 %v2392
        %v2394 = vlaneseq
        %v2395 = vshrl.u32 %v2394, 7
        %v2396 = vsub.s32 %v2393, %v2395
        %v2397 = vrot.slane %v2389, %v2396
        %v2399 = vunpack.c.l.s4 1934713408
        %v2400 = vunpack.c.0.s8 %v2399
        %v2401 = vlaneseq
        %v2402 = vshrl.u32 %v2401, 7
        %v2403 = vsub.s32 %v2400, %v2402
        %v2404 = vrot.slane %v2390, %v2403
        %v2405 = vcombine.low %v2372, %v2388
        %v2406 = vcombine.high %v2372, %v2388
        %v2408 = vunpack.c.l.s4 1934713408
        %v2409 = vunpack.c.0.s8 %v2408
        %v2410 = vlaneseq
        %v2411 = vshrl.u32 %v2410, 7
        %v2412 = vsub.s32 %v2409, %v2411
        %v2413 = vrot.slane %v2405, %v2412
        %v2415 = vunpack.c.l.s4 1934713408
        %v2416 = vunpack.c.0.s8 %v2415
        %v2417 = vlaneseq
        %v2418 = vshrl.u32 %v2417, 7
        %v2419 = vsub.s32 %v2416, %v2418
        %v2420 = vrot.slane %v2406, %v2419
        %v2421 = vcombine.high %v2397, 0.0
        %v2422 = vcombine.high %v2404, 0.0
        %v2423 = vcombine.high %v2413, 0.0
        %v2424 = vcombine.high %v2420, 0.0
        %v2425 = vcombine.low %v2397, %v2404
        %v2427 = vunpack.c.l.s4 1983009808
        %v2428 = vunpack.c.0.s8 %v2427
        %v2429 = vlaneseq
        %v2430 = vshrl.u32 %v2429, 7
        %v2431 = vsub.s32 %v2428, %v2430
        %v2432 = vrot.slane %v2425, %v2431
        %v2433 = vcombine.low %v2421, %v2422
        %v2435 = vunpack.c.l.s4 1983009808
        %v2436 = vunpack.c.0.s8 %v2435
        %v2437 = vlaneseq
        %v2438 = vshrl.u32 %v2437, 7
        %v2439 = vsub.s32 %v2436, %v2438
        %v2440 = vrot.slane %v2433, %v2439
        %v2441 = vcombine.low %v2413, %v2420
        %v2443 = vunpack.c.l.s4 1983009808
        %v2444 = vunpack.c.0.s8 %v2443
        %v2445 = vlaneseq
        %v2446 = vshrl.u32 %v2445, 7
        %v2447 = vsub.s32 %v2444, %v2446
        %v2448 = vrot.slane %v2441, %v2447
        %v2449 = vcombine.low %v2423, %v2424
        %v2451 = vunpack.c.l.s4 1983009808
        %v2452 = vunpack.c.0.s8 %v2451
        %v2453 = vlaneseq
        %v2454 = vshrl.u32 %v2453, 7
        %v2455 = vsub.s32 %v2452, %v2454
        %v2456 = vrot.slane %v2449, %v2455
        %v2457 = vcombine.low %v2432, %v2440
        %v2458 = vcombine.high %v2432, %v2440
        %v2460 = vunpack.c.l.s4 1934713408
        %v2461 = vunpack.c.0.s8 %v2460
        %v2462 = vlaneseq
        %v2463 = vshrl.u32 %v2462, 7
        %v2464 = vsub.s32 %v2461, %v2463
        %v2465 = vrot.slane %v2457, %v2464
        %v2467 = vunpack.c.l.s4 1934713408
        %v2468 = vunpack.c.0.s8 %v2467
        %v2469 = vlaneseq
        %v2470 = vshrl.u32 %v2469, 7
        %v2471 = vsub.s32 %v2468, %v2470
        %v2472 = vrot.slane %v2458, %v2471
        %v2473 = vcombine.low %v2448, %v2456
        %v2474 = vcombine.high %v2448, %v2456
        %v2476 = vunpack.c.l.s4 1934713408
        %v2477 = vunpack.c.0.s8 %v2476
        %v2478 = vlaneseq
        %v2479 = vshrl.u32 %v2478, 7
        %v2480 = vsub.s32 %v2477, %v2479
        %v2481 = vrot.slane %v2473, %v2480
        %v2483 = vunpack.c.l.s4 1934713408
        %v2484 = vunpack.c.0.s8 %v2483
        %v2485 = vlaneseq
        %v2486 = vshrl.u32 %v2485, 7
        %v2487 = vsub.s32 %v2484, %v2486
        %v2488 = vrot.slane %v2474, %v2487
        %v2489 = vcombine.low %v2465, %v2481
        %v2490 = vcombine.high %v2465, %v2481
        %v2491 = vcombine.low %v2472, %v2488
        %v2492 = vcombine.high %v2472, %v2488
        %2494 = vrot.lane.b32.xlu0 %v2490, 12
        %v2495 = vpop.permute.xlu0 %2494
        %2498 = vrot.lane.b32.xlu0 %v2491, 24
        %v2499 = vpop.permute.xlu0 %2498
        %2502 = vrot.lane.b32.xlu0 %v2492, 36
        %v2503 = vpop.permute.xlu0 %2502
        %v2505 = vsel %vm1392, %v2489, %v2495
        %vm2506 = vcmask 195584
        %v2507 = vsel %vm2506, %v2505, %v2499
        %vm2508 = vcmask 293888
        %v2509 = vsel %vm2508, %v2507, %v2503
        %v2510 = vld [vmem:[%s15] sm:$0xff]
        %v2511 = vld [vmem:[%s15 + $0x8] sm:$0xff]
        %v2512 = vld [vmem:[%s15 + $0x10] sm:$0xff]
        %v2513 = vld [vmem:[%s15 + $0x18] sm:$0xff]
        %v2514 = vld [vmem:[%s15 + $0x20] sm:$0xff]
        %v2515 = vld [vmem:[%s15 + $0x28] sm:$0xff]
        %v2516 = vld [vmem:[%s17] sm:$0x1]
        %v2518 = vlaneseq
        %v2519 = vshrl.u32 %v2518, 7
        %v2520 = vsub.s32 0, %v2519
        %v2521 = vrot.slane %v2516, %v2520
        %v2524 = vsel %vm1163, %v2509, 0
        %2526 = vmatprep.subr.mxu0 0.0
        %2527 = vmatpush1.msra.mxu0 %v2510
        %2528 = vmatprep.subr.mxu0 0.0
        %2529 = vmatpush1.msra.mxu0 %v2511
        %2530 = vmatprep.subr.mxu0 0.0
        %2531 = vmatpush1.msra.mxu0 %v2512
        %2532 = vmatprep.subr.mxu0 0.0
        %2533 = vmatpush1.msra.mxu0 %v2513
        %2534 = vmatprep.subr.mxu0 0.0
        %2535 = vmatpush1.msra.mxu0 %v2514
        %2536 = vmatprep.subr.mxu0 0.0
        %2537 = vmatpush1.msra.mxu0 %v2515
        %2538 = vmatprep.subr.mxu0 0.0
        %2539 = vmatpush1.msra.mxu0 0.0
        %2540 = vmatprep.subr.mxu0 0.0
        %2541 = vmatpush1.msra.mxu0 0.0
        %2542 = vmatprep.subr.mxu0 0.0
        %2543 = vmatpush1.msra.mxu0 0.0
        %2544 = vmatprep.subr.mxu0 0.0
        %2545 = vmatpush1.msra.mxu0 0.0
        %2546 = vmatprep.subr.mxu0 0.0
        %2547 = vmatpush1.msra.mxu0 0.0
        %2548 = vmatprep.subr.mxu0 0.0
        %2549 = vmatpush1.msra.mxu0 0.0
        %2550 = vmatprep.subr.mxu0 0.0
        %2551 = vmatpush1.msra.mxu0 0.0
        %2552 = vmatprep.subr.mxu0 0.0
        %2553 = vmatpush1.msra.mxu0 0.0
        %2554 = vmatprep.subr.mxu0 0.0
        %2555 = vmatpush1.msra.mxu0 0.0
        %2556 = vmatprep.subr.mxu0 0.0
        %2557 = vmatpush1.msra.mxu0 0.0
        %2558 = vmatprep.subr.mxu0 0.0
        %2559 = vmatpush1.msra.mxu0 0.0
        %2560 = vmatprep.subr.mxu0 0.0
        %2561 = vmatpush1.msra.mxu0 0.0
        %2562 = vmatprep.subr.mxu0 0.0
        %2563 = vmatpush1.msra.mxu0 0.0
        %2564 = vmatprep.subr.mxu0 0.0
        %2565 = vmatpush1.msra.mxu0 0.0
        %2566 = vmatprep.subr.mxu0 0.0
        %2567 = vmatpush1.msra.mxu0 0.0
        %2568 = vmatprep.subr.mxu0 0.0
        %2569 = vmatpush1.msra.mxu0 0.0
        %2570 = vmatprep.subr.mxu0 0.0
        %2571 = vmatpush1.msra.mxu0 0.0
        %2572 = vmatprep.subr.mxu0 0.0
        %2573 = vmatpush1.msra.mxu0 0.0
        %2574 = vmatprep.subr.mxu0 0.0
        %2575 = vmatpush1.msra.mxu0 0.0
        %2576 = vmatprep.subr.mxu0 0.0
        %2577 = vmatpush1.msra.mxu0 0.0
        %2578 = vmatprep.subr.mxu0 0.0
        %2579 = vmatpush1.msra.mxu0 0.0
        %2580 = vmatprep.subr.mxu0 0.0
        %2581 = vmatpush1.msra.mxu0 0.0
        %2582 = vmatprep.subr.mxu0 0.0
        %2583 = vmatpush1.msra.mxu0 0.0
        %2584 = vmatprep.subr.mxu0 0.0
        %2585 = vmatpush1.msra.mxu0 0.0
        %2586 = vmatprep.subr.mxu0 0.0
        %2587 = vmatpush1.msra.mxu0 0.0
        %2588 = vmatprep.subr.mxu0 0.0
        %2589 = vmatpush1.msra.mxu0 0.0
        %2590 = vmatprep.mubr.f32.mxu0 0.0
        %2591 = vmatmul.mubr.f32.gmra.mrb[0].mxu0 %v2524
        %v2592 = vpop.f32.mrb[0].mxu0
        %v2593 = vadd.f32 %v2521, %v2592
        %v2594 = vpop.f32.mrb[0].mxu0
        %2595 = vdwg.mxu0
        %v2596 = vadd.f32 %v1135, %v2593
        %v2597 = vsel %vm1163, %v2596, 0.0
        %2598 = vadd.xlane.f32.xlu0 %v2597
        %v2599 = vpop.xlane.xlu0 %2598
        %v2600 = vrcp.pop 48.0
        %v2601 = vmul.f32 %v2599, %v2600
        %v2602 = vsub.f32 %v2596, %v2601
        %v2603 = vmul.f32 %v2602, %v2602
        %v2604 = vsel %vm1163, %v2603, 0.0
        %2605 = vadd.xlane.f32.xlu0 %v2604
        %v2606 = vpop.xlane.xlu0 %2605
        %v2607 = vmul.f32 %v2606, %v2600
        %v2608 = vadd.f32 %v2607, 1e-05
        %v2609 = vrsqrt.pop %v2608
        %v2610 = vmul.f32 %v2602, %v2609
        %v2611 = vld [vmem:[%s19] sm:$0x1]
        %v2613 = vlaneseq
        %v2614 = vshrl.u32 %v2613, 7
        %v2615 = vsub.s32 0, %v2614
        %v2616 = vrot.slane %v2611, %v2615
        %v2618 = vmul.f32 %v2610, %v2616
        %v2619 = vld [vmem:[%s21] sm:$0x1]
        %v2621 = vlaneseq
        %v2622 = vshrl.u32 %v2621, 7
        %v2623 = vsub.s32 0, %v2622
        %v2624 = vrot.slane %v2619, %v2623
        %v2626 = vadd.f32 %v2618, %v2624
        %v2627 = vpack.c.bf16 %v2626, %v2626
        %v2628 = vld [vmem:[%s27] sm:$0xff]
        %v2629 = vld [vmem:[%s27 + $0x8] sm:$0xff]
        %v2630 = vld [vmem:[%s27 + $0x10] sm:$0xff]
        %v2631 = vld [vmem:[%s27 + $0x18] sm:$0xff]
        %v2632 = vld [vmem:[%s27 + $0x20] sm:$0xff]
        %v2633 = vld [vmem:[%s27 + $0x28] sm:$0xff]
        %v2634 = vld [vmem:[%s27 + $0x30] sm:$0xff]
        %v2635 = vld [vmem:[%s27 + $0x38] sm:$0xff]
        %v2636 = vld [vmem:[%s27 + $0x40] sm:$0xff]
        %v2637 = vld [vmem:[%s27 + $0x48] sm:$0xff]
        %v2638 = vld [vmem:[%s27 + $0x50] sm:$0xff]
        %v2639 = vld [vmem:[%s27 + $0x58] sm:$0xff]
        %v2640 = vld [vmem:[%s27 + $0x60] sm:$0xff]
        %v2641 = vld [vmem:[%s27 + $0x68] sm:$0xff]
        %v2642 = vld [vmem:[%s27 + $0x70] sm:$0xff]
        %v2643 = vld [vmem:[%s27 + $0x78] sm:$0xff]
        %v2644 = vld [vmem:[%s27 + $0x80] sm:$0xff]
        %v2645 = vld [vmem:[%s27 + $0x88] sm:$0xff]
        %v2646 = vld [vmem:[%s27 + $0x90] sm:$0xff]
        %v2647 = vld [vmem:[%s27 + $0x98] sm:$0xff]
        %v2648 = vld [vmem:[%s27 + $0xa0] sm:$0xff]
        %v2649 = vld [vmem:[%s27 + $0xa8] sm:$0xff]
        %v2650 = vld [vmem:[%s27 + $0xb0] sm:$0xff]
        %v2651 = vld [vmem:[%s27 + $0xb8] sm:$0xff]
        %v2652 = vld [vmem:[%s27 + $0xc0] sm:$0xff]
        %v2653 = vld [vmem:[%s27 + $0xc8] sm:$0xff]
        %v2654 = vld [vmem:[%s27 + $0xd0] sm:$0xff]
        %v2655 = vld [vmem:[%s27 + $0xd8] sm:$0xff]
        %v2656 = vld [vmem:[%s27 + $0xe0] sm:$0xff]
        %v2657 = vld [vmem:[%s27 + $0xe8] sm:$0xff]
        %v2658 = vld [vmem:[%s27 + $0xf0] sm:$0xff]
        %v2659 = vld [vmem:[%s27 + $0xf8] sm:$0xff]
        %v2660 = vld [vmem:[%s27 + $0x100] sm:$0xff]
        %v2661 = vld [vmem:[%s27 + $0x108] sm:$0xff]
        %v2662 = vld [vmem:[%s27 + $0x110] sm:$0xff]
        %v2663 = vld [vmem:[%s27 + $0x118] sm:$0xff]
        %v2664 = vld [vmem:[%s27 + $0x120] sm:$0xff]
        %v2665 = vld [vmem:[%s27 + $0x128] sm:$0xff]
        %v2666 = vld [vmem:[%s27 + $0x130] sm:$0xff]
        %v2667 = vld [vmem:[%s27 + $0x138] sm:$0xff]
        %v2668 = vld [vmem:[%s27 + $0x140] sm:$0xff]
        %v2669 = vld [vmem:[%s27 + $0x148] sm:$0xff]
        %v2670 = vld [vmem:[%s27 + $0x150] sm:$0xff]
        %v2671 = vld [vmem:[%s27 + $0x158] sm:$0xff]
        %v2672 = vld [vmem:[%s27 + $0x160] sm:$0xff]
        %v2673 = vld [vmem:[%s27 + $0x168] sm:$0xff]
        %v2674 = vld [vmem:[%s27 + $0x170] sm:$0xff]
        %v2675 = vld [vmem:[%s27 + $0x178] sm:$0xff]
        %v2676 = vld [vmem:[%s29] sm:$0xff]
        %v2677 = vld [vmem:[%s29 + $0x8] sm:$0xff]
        %v2680 = vlaneseq
        %v2681 = vshrl.u32 %v2680, 7
        %v2682 = vsub.s32 0, %v2681
        %v2683 = vrot.slane %v2676, %v2682
        %v2684 = vlaneseq
        %v2685 = vshrl.u32 %v2684, 7
        %v2686 = vsub.s32 1, %v2685
        %v2687 = vrot.slane %v2676, %v2686
        %v2688 = vlaneseq
        %v2689 = vshrl.u32 %v2688, 7
        %v2690 = vsub.s32 2, %v2689
        %v2691 = vrot.slane %v2676, %v2690
        %v2692 = vlaneseq
        %v2693 = vshrl.u32 %v2692, 7
        %v2694 = vsub.s32 3, %v2693
        %v2695 = vrot.slane %v2676, %v2694
        %v2696 = vlaneseq
        %v2697 = vshrl.u32 %v2696, 7
        %v2698 = vsub.s32 4, %v2697
        %v2699 = vrot.slane %v2676, %v2698
        %v2700 = vlaneseq
        %v2701 = vshrl.u32 %v2700, 7
        %v2702 = vsub.s32 5, %v2701
        %v2703 = vrot.slane %v2676, %v2702
        %v2704 = vlaneseq
        %v2705 = vshrl.u32 %v2704, 7
        %v2706 = vsub.s32 6, %v2705
        %v2707 = vrot.slane %v2676, %v2706
        %v2708 = vlaneseq
        %v2709 = vshrl.u32 %v2708, 7
        %v2710 = vsub.s32 7, %v2709
        %v2711 = vrot.slane %v2676, %v2710
        %v2712 = vlaneseq
        %v2713 = vshrl.u32 %v2712, 7
        %v2714 = vsub.s32 0, %v2713
        %v2715 = vrot.slane %v2677, %v2714
        %v2716 = vlaneseq
        %v2717 = vshrl.u32 %v2716, 7
        %v2718 = vsub.s32 1, %v2717
        %v2719 = vrot.slane %v2677, %v2718
        %v2720 = vlaneseq
        %v2721 = vshrl.u32 %v2720, 7
        %v2722 = vsub.s32 2, %v2721
        %v2723 = vrot.slane %v2677, %v2722
        %v2724 = vlaneseq
        %v2725 = vshrl.u32 %v2724, 7
        %v2726 = vsub.s32 3, %v2725
        %v2727 = vrot.slane %v2677, %v2726
        %v2728 = vlaneseq
        %v2729 = vshrl.u32 %v2728, 7
        %v2730 = vsub.s32 4, %v2729
        %v2731 = vrot.slane %v2677, %v2730
        %v2732 = vlaneseq
        %v2733 = vshrl.u32 %v2732, 7
        %v2734 = vsub.s32 5, %v2733
        %v2735 = vrot.slane %v2677, %v2734
        %v2736 = vlaneseq
        %v2737 = vshrl.u32 %v2736, 7
        %v2738 = vsub.s32 6, %v2737
        %v2739 = vrot.slane %v2677, %v2738
        %v2740 = vlaneseq
        %v2741 = vshrl.u32 %v2740, 7
        %v2742 = vsub.s32 7, %v2741
        %v2743 = vrot.slane %v2677, %v2742
        %v2808 = vunpack.c.l.b16 %v2628
        %v2809 = vunpack.c.h.b16 %v2628
        %v2810 = vunpack.c.l.b16 %v2629
        %v2811 = vunpack.c.h.b16 %v2629
        %v2812 = vunpack.c.l.b16 %v2630
        %v2813 = vunpack.c.h.b16 %v2630
        %v2814 = vunpack.c.l.b16 %v2631
        %v2815 = vunpack.c.h.b16 %v2631
        %v2816 = vunpack.c.l.b16 %v2632
        %v2817 = vunpack.c.h.b16 %v2632
        %v2818 = vunpack.c.l.b16 %v2633
        %v2819 = vunpack.c.h.b16 %v2633
        %v2820 = vunpack.c.l.b16 %v2634
        %v2821 = vunpack.c.h.b16 %v2634
        %v2822 = vunpack.c.l.b16 %v2635
        %v2823 = vunpack.c.h.b16 %v2635
        %v2824 = vunpack.c.l.b16 %v2636
        %v2825 = vunpack.c.h.b16 %v2636
        %v2826 = vunpack.c.l.b16 %v2637
        %v2827 = vunpack.c.h.b16 %v2637
        %v2828 = vunpack.c.l.b16 %v2638
        %v2829 = vunpack.c.h.b16 %v2638
        %v2830 = vunpack.c.l.b16 %v2639
        %v2831 = vunpack.c.h.b16 %v2639
        %v2832 = vunpack.c.l.b16 %v2640
        %v2833 = vunpack.c.h.b16 %v2640
        %v2834 = vunpack.c.l.b16 %v2641
        %v2835 = vunpack.c.h.b16 %v2641
        %v2836 = vunpack.c.l.b16 %v2642
        %v2837 = vunpack.c.h.b16 %v2642
        %v2838 = vunpack.c.l.b16 %v2643
        %v2839 = vunpack.c.h.b16 %v2643
        %v2840 = vunpack.c.l.b16 %v2644
        %v2841 = vunpack.c.h.b16 %v2644
        %v2842 = vunpack.c.l.b16 %v2645
        %v2843 = vunpack.c.h.b16 %v2645
        %v2844 = vunpack.c.l.b16 %v2646
        %v2845 = vunpack.c.h.b16 %v2646
        %v2846 = vunpack.c.l.b16 %v2647
        %v2847 = vunpack.c.h.b16 %v2647
        %v2848 = vunpack.c.l.b16 %v2648
        %v2849 = vunpack.c.h.b16 %v2648
        %v2850 = vunpack.c.l.b16 %v2649
        %v2851 = vunpack.c.h.b16 %v2649
        %v2852 = vunpack.c.l.b16 %v2650
        %v2853 = vunpack.c.h.b16 %v2650
        %v2854 = vunpack.c.l.b16 %v2651
        %v2855 = vunpack.c.h.b16 %v2651
        %v2856 = vunpack.c.l.b16 %v2652
        %v2857 = vunpack.c.h.b16 %v2652
        %v2858 = vunpack.c.l.b16 %v2653
        %v2859 = vunpack.c.h.b16 %v2653
        %v2860 = vunpack.c.l.b16 %v2654
        %v2861 = vunpack.c.h.b16 %v2654
        %v2862 = vunpack.c.l.b16 %v2655
        %v2863 = vunpack.c.h.b16 %v2655
        %v2864 = vunpack.c.l.b16 %v2656
        %v2865 = vunpack.c.h.b16 %v2656
        %v2866 = vunpack.c.l.b16 %v2657
        %v2867 = vunpack.c.h.b16 %v2657
        %v2868 = vunpack.c.l.b16 %v2658
        %v2869 = vunpack.c.h.b16 %v2658
        %v2870 = vunpack.c.l.b16 %v2659
        %v2871 = vunpack.c.h.b16 %v2659
        %v2872 = vunpack.c.l.b16 %v2660
        %v2873 = vunpack.c.h.b16 %v2660
        %v2874 = vunpack.c.l.b16 %v2661
        %v2875 = vunpack.c.h.b16 %v2661
        %v2876 = vunpack.c.l.b16 %v2662
        %v2877 = vunpack.c.h.b16 %v2662
        %v2878 = vunpack.c.l.b16 %v2663
        %v2879 = vunpack.c.h.b16 %v2663
        %v2880 = vunpack.c.l.b16 %v2664
        %v2881 = vunpack.c.h.b16 %v2664
        %v2882 = vunpack.c.l.b16 %v2665
        %v2883 = vunpack.c.h.b16 %v2665
        %v2884 = vunpack.c.l.b16 %v2666
        %v2885 = vunpack.c.h.b16 %v2666
        %v2886 = vunpack.c.l.b16 %v2667
        %v2887 = vunpack.c.h.b16 %v2667
        %v2888 = vunpack.c.l.b16 %v2668
        %v2889 = vunpack.c.h.b16 %v2668
        %v2890 = vunpack.c.l.b16 %v2669
        %v2891 = vunpack.c.h.b16 %v2669
        %v2892 = vunpack.c.l.b16 %v2670
        %v2893 = vunpack.c.h.b16 %v2670
        %v2894 = vunpack.c.l.b16 %v2671
        %v2895 = vunpack.c.h.b16 %v2671
        %v2896 = vunpack.c.l.b16 %v2672
        %v2897 = vunpack.c.h.b16 %v2672
        %v2898 = vunpack.c.l.b16 %v2673
        %v2899 = vunpack.c.h.b16 %v2673
        %v2900 = vunpack.c.l.b16 %v2674
        %v2901 = vunpack.c.h.b16 %v2674
        %v2902 = vunpack.c.l.b16 %v2675
        %v2903 = vunpack.c.h.b16 %v2675
        %v2904 = vpack.c.b16 %v2824, %v2808
        %v2905 = vpack.c.b16 %v2825, %v2809
        %v2906 = vpack.c.b16 %v2826, %v2810
        %v2907 = vpack.c.b16 %v2827, %v2811
        %v2908 = vpack.c.b16 %v2828, %v2812
        %v2909 = vpack.c.b16 %v2829, %v2813
        %v2910 = vpack.c.b16 %v2830, %v2814
        %v2911 = vpack.c.b16 %v2831, %v2815
        %v2912 = vpack.c.b16 %v2832, %v2816
        %v2913 = vpack.c.b16 %v2833, %v2817
        %v2914 = vpack.c.b16 %v2834, %v2818
        %v2915 = vpack.c.b16 %v2835, %v2819
        %v2916 = vpack.c.b16 %v2836, %v2820
        %v2917 = vpack.c.b16 %v2837, %v2821
        %v2918 = vpack.c.b16 %v2838, %v2822
        %v2919 = vpack.c.b16 %v2839, %v2823
        %v2920 = vpack.c.b16 %v2856, %v2840
        %v2921 = vpack.c.b16 %v2857, %v2841
        %v2922 = vpack.c.b16 %v2858, %v2842
        %v2923 = vpack.c.b16 %v2859, %v2843
        %v2924 = vpack.c.b16 %v2860, %v2844
        %v2925 = vpack.c.b16 %v2861, %v2845
        %v2926 = vpack.c.b16 %v2862, %v2846
        %v2927 = vpack.c.b16 %v2863, %v2847
        %v2928 = vpack.c.b16 %v2864, %v2848
        %v2929 = vpack.c.b16 %v2865, %v2849
        %v2930 = vpack.c.b16 %v2866, %v2850
        %v2931 = vpack.c.b16 %v2867, %v2851
        %v2932 = vpack.c.b16 %v2868, %v2852
        %v2933 = vpack.c.b16 %v2869, %v2853
        %v2934 = vpack.c.b16 %v2870, %v2854
        %v2935 = vpack.c.b16 %v2871, %v2855
        %v2936 = vpack.c.b16 %v2888, %v2872
        %v2937 = vpack.c.b16 %v2889, %v2873
        %v2938 = vpack.c.b16 %v2890, %v2874
        %v2939 = vpack.c.b16 %v2891, %v2875
        %v2940 = vpack.c.b16 %v2892, %v2876
        %v2941 = vpack.c.b16 %v2893, %v2877
        %v2942 = vpack.c.b16 %v2894, %v2878
        %v2943 = vpack.c.b16 %v2895, %v2879
        %v2944 = vpack.c.b16 %v2896, %v2880
        %v2945 = vpack.c.b16 %v2897, %v2881
        %v2946 = vpack.c.b16 %v2898, %v2882
        %v2947 = vpack.c.b16 %v2899, %v2883
        %v2948 = vpack.c.b16 %v2900, %v2884
        %v2949 = vpack.c.b16 %v2901, %v2885
        %v2950 = vpack.c.b16 %v2902, %v2886
        %v2951 = vpack.c.b16 %v2903, %v2887
        %v3001 = vsel %vm1163, %v2627, 0
        %3003 = vmatprep.subr.bf16.mxu0 %v2905
        %3004 = vmatpush1.bf16.msra.mxu0 %v2904
        %3005 = vmatprep.subr.bf16.mxu0 %v2921
        %3006 = vmatpush1.bf16.msra.mxu0 %v2920
        %3007 = vmatprep.subr.bf16.mxu0 %v2937
        %3008 = vmatpush1.bf16.msra.mxu0 %v2936
        %3009 = vmatprep.subr.bf16.mxu0 0
        %3010 = vmatpush1.bf16.msra.mxu0 0
        %3011 = vmatprep.subr.bf16.mxu0 0
        %3012 = vmatpush1.bf16.msra.mxu0 0
        %3013 = vmatprep.subr.bf16.mxu0 0
        %3014 = vmatpush1.bf16.msra.mxu0 0
        %3015 = vmatprep.subr.bf16.mxu0 0
        %3016 = vmatpush1.bf16.msra.mxu0 0
        %3017 = vmatprep.subr.bf16.mxu0 0
        %3018 = vmatpush1.bf16.msra.mxu0 0
        %3019 = vmatprep.subr.bf16.mxu0 0
        %3020 = vmatpush1.bf16.msra.mxu0 0
        %3021 = vmatprep.subr.bf16.mxu0 0
        %3022 = vmatpush1.bf16.msra.mxu0 0
        %3023 = vmatprep.subr.bf16.mxu0 0
        %3024 = vmatpush1.bf16.msra.mxu0 0
        %3025 = vmatprep.subr.bf16.mxu0 0
        %3026 = vmatpush1.bf16.msra.mxu0 0
        %3027 = vmatprep.subr.bf16.mxu0 0
        %3028 = vmatpush1.bf16.msra.mxu0 0
        %3029 = vmatprep.subr.bf16.mxu0 0
        %3030 = vmatpush1.bf16.msra.mxu0 0
        %3031 = vmatprep.subr.bf16.mxu0 0
        %3032 = vmatpush1.bf16.msra.mxu0 0
        %3033 = vmatprep.subr.bf16.mxu0 0
        %3034 = vmatpush1.bf16.msra.mxu0 0
        %3035 = vmatprep.mubr.bf16.mxu0 0
        %3036 = vmatmul.mubr.bf16.gmra.mrb[0].mxu0 %v3001
        %v3037 = vpop.f32.mrb[0].mxu0
        %v3038 = vadd.f32 %v2683, %v3037
        %v3039 = vpop.f32.mrb[0].mxu0
        %v3040 = vadd.f32 %v2687, %v3039
        %v3041 = vpop.f32.mrb[0].mxu0
        %v3042 = vpop.f32.mrb[0].mxu0
        %3043 = vdwg.mxu0
        %3044 = vmatprep.subr.bf16.mxu0 %v2907
        %3045 = vmatpush1.bf16.msra.mxu0 %v2906
        %3046 = vmatprep.subr.bf16.mxu0 %v2923
        %3047 = vmatpush1.bf16.msra.mxu0 %v2922
        %3048 = vmatprep.subr.bf16.mxu0 %v2939
        %3049 = vmatpush1.bf16.msra.mxu0 %v2938
        %3050 = vmatprep.subr.bf16.mxu0 0
        %3051 = vmatpush1.bf16.msra.mxu0 0
        %3052 = vmatprep.subr.bf16.mxu0 0
        %3053 = vmatpush1.bf16.msra.mxu0 0
        %3054 = vmatprep.subr.bf16.mxu0 0
        %3055 = vmatpush1.bf16.msra.mxu0 0
        %3056 = vmatprep.subr.bf16.mxu0 0
        %3057 = vmatpush1.bf16.msra.mxu0 0
        %3058 = vmatprep.subr.bf16.mxu0 0
        %3059 = vmatpush1.bf16.msra.mxu0 0
        %3060 = vmatprep.subr.bf16.mxu0 0
        %3061 = vmatpush1.bf16.msra.mxu0 0
        %3062 = vmatprep.subr.bf16.mxu0 0
        %3063 = vmatpush1.bf16.msra.mxu0 0
        %3064 = vmatprep.subr.bf16.mxu0 0
        %3065 = vmatpush1.bf16.msra.mxu0 0
        %3066 = vmatprep.subr.bf16.mxu0 0
        %3067 = vmatpush1.bf16.msra.mxu0 0
        %3068 = vmatprep.subr.bf16.mxu0 0
        %3069 = vmatpush1.bf16.msra.mxu0 0
        %3070 = vmatprep.subr.bf16.mxu0 0
        %3071 = vmatpush1.bf16.msra.mxu0 0
        %3072 = vmatprep.subr.bf16.mxu0 0
        %3073 = vmatpush1.bf16.msra.mxu0 0
        %3074 = vmatprep.subr.bf16.mxu0 0
        %3075 = vmatpush1.bf16.msra.mxu0 0
        %3076 = vmatprep.mubr.bf16.mxu0 0
        %3077 = vmatmul.mubr.bf16.gmra.mrb[0].mxu0 %v3001
        %v3078 = vpop.f32.mrb[0].mxu0
        %v3079 = vadd.f32 %v2691, %v3078
        %v3080 = vpop.f32.mrb[0].mxu0
        %v3081 = vadd.f32 %v2695, %v3080
        %v3082 = vpop.f32.mrb[0].mxu0
        %v3083 = vpop.f32.mrb[0].mxu0
        %3084 = vdwg.mxu0
        %3085 = vmatprep.subr.bf16.mxu0 %v2909
        %3086 = vmatpush1.bf16.msra.mxu0 %v2908
        %3087 = vmatprep.subr.bf16.mxu0 %v2925
        %3088 = vmatpush1.bf16.msra.mxu0 %v2924
        %3089 = vmatprep.subr.bf16.mxu0 %v2941
        %3090 = vmatpush1.bf16.msra.mxu0 %v2940
        %3091 = vmatprep.subr.bf16.mxu0 0
        %3092 = vmatpush1.bf16.msra.mxu0 0
        %3093 = vmatprep.subr.bf16.mxu0 0
        %3094 = vmatpush1.bf16.msra.mxu0 0
        %3095 = vmatprep.subr.bf16.mxu0 0
        %3096 = vmatpush1.bf16.msra.mxu0 0
        %3097 = vmatprep.subr.bf16.mxu0 0
        %3098 = vmatpush1.bf16.msra.mxu0 0
        %3099 = vmatprep.subr.bf16.mxu0 0
        %3100 = vmatpush1.bf16.msra.mxu0 0
        %3101 = vmatprep.subr.bf16.mxu0 0
        %3102 = vmatpush1.bf16.msra.mxu0 0
        %3103 = vmatprep.subr.bf16.mxu0 0
        %3104 = vmatpush1.bf16.msra.mxu0 0
        %3105 = vmatprep.subr.bf16.mxu0 0
        %3106 = vmatpush1.bf16.msra.mxu0 0
        %3107 = vmatprep.subr.bf16.mxu0 0
        %3108 = vmatpush1.bf16.msra.mxu0 0
        %3109 = vmatprep.subr.bf16.mxu0 0
        %3110 = vmatpush1.bf16.msra.mxu0 0
        %3111 = vmatprep.subr.bf16.mxu0 0
        %3112 = vmatpush1.bf16.msra.mxu0 0
        %3113 = vmatprep.subr.bf16.mxu0 0
        %3114 = vmatpush1.bf16.msra.mxu0 0
        %3115 = vmatprep.subr.bf16.mxu0 0
        %3116 = vmatpush1.bf16.msra.mxu0 0
        %3117 = vmatprep.mubr.bf16.mxu0 0
        %3118 = vmatmul.mubr.bf16.gmra.mrb[0].mxu0 %v3001
        %v3119 = vpop.f32.mrb[0].mxu0
        %v3120 = vadd.f32 %v2699, %v3119
        %v3121 = vpop.f32.mrb[0].mxu0
        %v3122 = vadd.f32 %v2703, %v3121
        %v3123 = vpop.f32.mrb[0].mxu0
        %v3124 = vpop.f32.mrb[0].mxu0
        %3125 = vdwg.mxu0
        %3126 = vmatprep.subr.bf16.mxu0 %v2911
        %3127 = vmatpush1.bf16.msra.mxu0 %v2910
        %3128 = vmatprep.subr.bf16.mxu0 %v2927
        %3129 = vmatpush1.bf16.msra.mxu0 %v2926
        %3130 = vmatprep.subr.bf16.mxu0 %v2943
        %3131 = vmatpush1.bf16.msra.mxu0 %v2942
        %3132 = vmatprep.subr.bf16.mxu0 0
        %3133 = vmatpush1.bf16.msra.mxu0 0
        %3134 = vmatprep.subr.bf16.mxu0 0
        %3135 = vmatpush1.bf16.msra.mxu0 0
        %3136 = vmatprep.subr.bf16.mxu0 0
        %3137 = vmatpush1.bf16.msra.mxu0 0
        %3138 = vmatprep.subr.bf16.mxu0 0
        %3139 = vmatpush1.bf16.msra.mxu0 0
        %3140 = vmatprep.subr.bf16.mxu0 0
        %3141 = vmatpush1.bf16.msra.mxu0 0
        %3142 = vmatprep.subr.bf16.mxu0 0
        %3143 = vmatpush1.bf16.msra.mxu0 0
        %3144 = vmatprep.subr.bf16.mxu0 0
        %3145 = vmatpush1.bf16.msra.mxu0 0
        %3146 = vmatprep.subr.bf16.mxu0 0
        %3147 = vmatpush1.bf16.msra.mxu0 0
        %3148 = vmatprep.subr.bf16.mxu0 0
        %3149 = vmatpush1.bf16.msra.mxu0 0
        %3150 = vmatprep.subr.bf16.mxu0 0
        %3151 = vmatpush1.bf16.msra.mxu0 0
        %3152 = vmatprep.subr.bf16.mxu0 0
        %3153 = vmatpush1.bf16.msra.mxu0 0
        %3154 = vmatprep.subr.bf16.mxu0 0
        %3155 = vmatpush1.bf16.msra.mxu0 0
        %3156 = vmatprep.subr.bf16.mxu0 0
        %3157 = vmatpush1.bf16.msra.mxu0 0
        %3158 = vmatprep.mubr.bf16.mxu0 0
        %3159 = vmatmul.mubr.bf16.gmra.mrb[0].mxu0 %v3001
        %v3160 = vpop.f32.mrb[0].mxu0
        %v3161 = vadd.f32 %v2707, %v3160
        %v3162 = vpop.f32.mrb[0].mxu0
        %v3163 = vadd.f32 %v2711, %v3162
        %v3164 = vpop.f32.mrb[0].mxu0
        %v3165 = vpop.f32.mrb[0].mxu0
        %3166 = vdwg.mxu0
        %3167 = vmatprep.subr.bf16.mxu0 %v2913
        %3168 = vmatpush1.bf16.msra.mxu0 %v2912
        %3169 = vmatprep.subr.bf16.mxu0 %v2929
        %3170 = vmatpush1.bf16.msra.mxu0 %v2928
        %3171 = vmatprep.subr.bf16.mxu0 %v2945
        %3172 = vmatpush1.bf16.msra.mxu0 %v2944
        %3173 = vmatprep.subr.bf16.mxu0 0
        %3174 = vmatpush1.bf16.msra.mxu0 0
        %3175 = vmatprep.subr.bf16.mxu0 0
        %3176 = vmatpush1.bf16.msra.mxu0 0
        %3177 = vmatprep.subr.bf16.mxu0 0
        %3178 = vmatpush1.bf16.msra.mxu0 0
        %3179 = vmatprep.subr.bf16.mxu0 0
        %3180 = vmatpush1.bf16.msra.mxu0 0
        %3181 = vmatprep.subr.bf16.mxu0 0
        %3182 = vmatpush1.bf16.msra.mxu0 0
        %3183 = vmatprep.subr.bf16.mxu0 0
        %3184 = vmatpush1.bf16.msra.mxu0 0
        %3185 = vmatprep.subr.bf16.mxu0 0
        %3186 = vmatpush1.bf16.msra.mxu0 0
        %3187 = vmatprep.subr.bf16.mxu0 0
        %3188 = vmatpush1.bf16.msra.mxu0 0
        %3189 = vmatprep.subr.bf16.mxu0 0
        %3190 = vmatpush1.bf16.msra.mxu0 0
        %3191 = vmatprep.subr.bf16.mxu0 0
        %3192 = vmatpush1.bf16.msra.mxu0 0
        %3193 = vmatprep.subr.bf16.mxu0 0
        %3194 = vmatpush1.bf16.msra.mxu0 0
        %3195 = vmatprep.subr.bf16.mxu0 0
        %3196 = vmatpush1.bf16.msra.mxu0 0
        %3197 = vmatprep.subr.bf16.mxu0 0
        %3198 = vmatpush1.bf16.msra.mxu0 0
        %3199 = vmatprep.mubr.bf16.mxu0 0
        %3200 = vmatmul.mubr.bf16.gmra.mrb[0].mxu0 %v3001
        %v3201 = vpop.f32.mrb[0].mxu0
        %v3202 = vadd.f32 %v2715, %v3201
        %v3203 = vpop.f32.mrb[0].mxu0
        %v3204 = vadd.f32 %v2719, %v3203
        %v3205 = vpop.f32.mrb[0].mxu0
        %v3206 = vpop.f32.mrb[0].mxu0
        %3207 = vdwg.mxu0
        %3208 = vmatprep.subr.bf16.mxu0 %v2915
        %3209 = vmatpush1.bf16.msra.mxu0 %v2914
        %3210 = vmatprep.subr.bf16.mxu0 %v2931
        %3211 = vmatpush1.bf16.msra.mxu0 %v2930
        %3212 = vmatprep.subr.bf16.mxu0 %v2947
        %3213 = vmatpush1.bf16.msra.mxu0 %v2946
        %3214 = vmatprep.subr.bf16.mxu0 0
        %3215 = vmatpush1.bf16.msra.mxu0 0
        %3216 = vmatprep.subr.bf16.mxu0 0
        %3217 = vmatpush1.bf16.msra.mxu0 0
        %3218 = vmatprep.subr.bf16.mxu0 0
        %3219 = vmatpush1.bf16.msra.mxu0 0
        %3220 = vmatprep.subr.bf16.mxu0 0
        %3221 = vmatpush1.bf16.msra.mxu0 0
        %3222 = vmatprep.subr.bf16.mxu0 0
        %3223 = vmatpush1.bf16.msra.mxu0 0
        %3224 = vmatprep.subr.bf16.mxu0 0
        %3225 = vmatpush1.bf16.msra.mxu0 0
        %3226 = vmatprep.subr.bf16.mxu0 0
        %3227 = vmatpush1.bf16.msra.mxu0 0
        %3228 = vmatprep.subr.bf16.mxu0 0
        %3229 = vmatpush1.bf16.msra.mxu0 0
        %3230 = vmatprep.subr.bf16.mxu0 0
        %3231 = vmatpush1.bf16.msra.mxu0 0
        %3232 = vmatprep.subr.bf16.mxu0 0
        %3233 = vmatpush1.bf16.msra.mxu0 0
        %3234 = vmatprep.subr.bf16.mxu0 0
        %3235 = vmatpush1.bf16.msra.mxu0 0
        %3236 = vmatprep.subr.bf16.mxu0 0
        %3237 = vmatpush1.bf16.msra.mxu0 0
        %3238 = vmatprep.subr.bf16.mxu0 0
        %3239 = vmatpush1.bf16.msra.mxu0 0
        %3240 = vmatprep.mubr.bf16.mxu0 0
        %3241 = vmatmul.mubr.bf16.gmra.mrb[0].mxu0 %v3001
        %v3242 = vpop.f32.mrb[0].mxu0
        %v3243 = vadd.f32 %v2723, %v3242
        %v3244 = vpop.f32.mrb[0].mxu0
        %v3245 = vadd.f32 %v2727, %v3244
        %v3246 = vpop.f32.mrb[0].mxu0
        %v3247 = vpop.f32.mrb[0].mxu0
        %3248 = vdwg.mxu0
        %3249 = vmatprep.subr.bf16.mxu0 %v2917
        %3250 = vmatpush1.bf16.msra.mxu0 %v2916
        %3251 = vmatprep.subr.bf16.mxu0 %v2933
        %3252 = vmatpush1.bf16.msra.mxu0 %v2932
        %3253 = vmatprep.subr.bf16.mxu0 %v2949
        %3254 = vmatpush1.bf16.msra.mxu0 %v2948
        %3255 = vmatprep.subr.bf16.mxu0 0
        %3256 = vmatpush1.bf16.msra.mxu0 0
        %3257 = vmatprep.subr.bf16.mxu0 0
        %3258 = vmatpush1.bf16.msra.mxu0 0
        %3259 = vmatprep.subr.bf16.mxu0 0
        %3260 = vmatpush1.bf16.msra.mxu0 0
        %3261 = vmatprep.subr.bf16.mxu0 0
        %3262 = vmatpush1.bf16.msra.mxu0 0
        %3263 = vmatprep.subr.bf16.mxu0 0
        %3264 = vmatpush1.bf16.msra.mxu0 0
        %3265 = vmatprep.subr.bf16.mxu0 0
        %3266 = vmatpush1.bf16.msra.mxu0 0
        %3267 = vmatprep.subr.bf16.mxu0 0
        %3268 = vmatpush1.bf16.msra.mxu0 0
        %3269 = vmatprep.subr.bf16.mxu0 0
        %3270 = vmatpush1.bf16.msra.mxu0 0
        %3271 = vmatprep.subr.bf16.mxu0 0
        %3272 = vmatpush1.bf16.msra.mxu0 0
        %3273 = vmatprep.subr.bf16.mxu0 0
        %3274 = vmatpush1.bf16.msra.mxu0 0
        %3275 = vmatprep.subr.bf16.mxu0 0
        %3276 = vmatpush1.bf16.msra.mxu0 0
        %3277 = vmatprep.subr.bf16.mxu0 0
        %3278 = vmatpush1.bf16.msra.mxu0 0
        %3279 = vmatprep.subr.bf16.mxu0 0
        %3280 = vmatpush1.bf16.msra.mxu0 0
        %3281 = vmatprep.mubr.bf16.mxu0 0
        %3282 = vmatmul.mubr.bf16.gmra.mrb[0].mxu0 %v3001
        %v3283 = vpop.f32.mrb[0].mxu0
        %v3284 = vadd.f32 %v2731, %v3283
        %v3285 = vpop.f32.mrb[0].mxu0
        %v3286 = vadd.f32 %v2735, %v3285
        %v3287 = vpop.f32.mrb[0].mxu0
        %v3288 = vpop.f32.mrb[0].mxu0
        %3289 = vdwg.mxu0
        %3290 = vmatprep.subr.bf16.mxu0 %v2919
        %3291 = vmatpush1.bf16.msra.mxu0 %v2918
        %3292 = vmatprep.subr.bf16.mxu0 %v2935
        %3293 = vmatpush1.bf16.msra.mxu0 %v2934
        %3294 = vmatprep.subr.bf16.mxu0 %v2951
        %3295 = vmatpush1.bf16.msra.mxu0 %v2950
        %3296 = vmatprep.subr.bf16.mxu0 0
        %3297 = vmatpush1.bf16.msra.mxu0 0
        %3298 = vmatprep.subr.bf16.mxu0 0
        %3299 = vmatpush1.bf16.msra.mxu0 0
        %3300 = vmatprep.subr.bf16.mxu0 0
        %3301 = vmatpush1.bf16.msra.mxu0 0
        %3302 = vmatprep.subr.bf16.mxu0 0
        %3303 = vmatpush1.bf16.msra.mxu0 0
        %3304 = vmatprep.subr.bf16.mxu0 0
        %3305 = vmatpush1.bf16.msra.mxu0 0
        %3306 = vmatprep.subr.bf16.mxu0 0
        %3307 = vmatpush1.bf16.msra.mxu0 0
        %3308 = vmatprep.subr.bf16.mxu0 0
        %3309 = vmatpush1.bf16.msra.mxu0 0
        %3310 = vmatprep.subr.bf16.mxu0 0
        %3311 = vmatpush1.bf16.msra.mxu0 0
        %3312 = vmatprep.subr.bf16.mxu0 0
        %3313 = vmatpush1.bf16.msra.mxu0 0
        %3314 = vmatprep.subr.bf16.mxu0 0
        %3315 = vmatpush1.bf16.msra.mxu0 0
        %3316 = vmatprep.subr.bf16.mxu0 0
        %3317 = vmatpush1.bf16.msra.mxu0 0
        %3318 = vmatprep.subr.bf16.mxu0 0
        %3319 = vmatpush1.bf16.msra.mxu0 0
        %3320 = vmatprep.subr.bf16.mxu0 0
        %3321 = vmatpush1.bf16.msra.mxu0 0
        %3322 = vmatprep.mubr.bf16.mxu0 0
        %3323 = vmatmul.mubr.bf16.gmra.mrb[0].mxu0 %v3001
        %v3324 = vpop.f32.mrb[0].mxu0
        %v3325 = vadd.f32 %v2739, %v3324
        %v3326 = vpop.f32.mrb[0].mxu0
        %v3327 = vadd.f32 %v2743, %v3326
        %v3328 = vpop.f32.mrb[0].mxu0
        %v3329 = vpop.f32.mrb[0].mxu0
        %3330 = vdwg.mxu0
        %v3331 = vmax.f32 %v3038, 0.0
        %v3332 = vmax.f32 %v3040, 0.0
        %v3333 = vmax.f32 %v3079, 0.0
        %v3334 = vmax.f32 %v3081, 0.0
        %v3335 = vmax.f32 %v3120, 0.0
        %v3336 = vmax.f32 %v3122, 0.0
        %v3337 = vmax.f32 %v3161, 0.0
        %v3338 = vmax.f32 %v3163, 0.0
        %v3339 = vmax.f32 %v3202, 0.0
        %v3340 = vmax.f32 %v3204, 0.0
        %v3341 = vmax.f32 %v3243, 0.0
        %v3342 = vmax.f32 %v3245, 0.0
        %v3343 = vmax.f32 %v3284, 0.0
        %v3344 = vmax.f32 %v3286, 0.0
        %v3345 = vmax.f32 %v3325, 0.0
        %v3346 = vmax.f32 %v3327, 0.0
        %v3347 = vpack.c.bf16 %v3331, %v3331
        %v3348 = vpack.c.bf16 %v3332, %v3332
        %v3349 = vpack.c.bf16 %v3333, %v3333
        %v3350 = vpack.c.bf16 %v3334, %v3334
        %v3351 = vpack.c.bf16 %v3335, %v3335
        %v3352 = vpack.c.bf16 %v3336, %v3336
        %v3353 = vpack.c.bf16 %v3337, %v3337
        %v3354 = vpack.c.bf16 %v3338, %v3338
        %v3355 = vpack.c.bf16 %v3339, %v3339
        %v3356 = vpack.c.bf16 %v3340, %v3340
        %v3357 = vpack.c.bf16 %v3341, %v3341
        %v3358 = vpack.c.bf16 %v3342, %v3342
        %v3359 = vpack.c.bf16 %v3343, %v3343
        %v3360 = vpack.c.bf16 %v3344, %v3344
        %v3361 = vpack.c.bf16 %v3345, %v3345
        %v3362 = vpack.c.bf16 %v3346, %v3346
        %v3363 = vld [vmem:[%s31] sm:$0xf]
        %v3364 = vld [vmem:[%s31 + $0x4] sm:$0xf]
        %v3365 = vld [vmem:[%s31 + $0x8] sm:$0xf]
        %v3366 = vld [vmem:[%s31 + $0xc] sm:$0xf]
        %v3367 = vld [vmem:[%s31 + $0x10] sm:$0xf]
        %v3368 = vld [vmem:[%s31 + $0x14] sm:$0xf]
        %v3369 = vld [vmem:[%s31 + $0x18] sm:$0xf]
        %v3370 = vld [vmem:[%s31 + $0x1c] sm:$0xf]
        %v3371 = vld [vmem:[%s31 + $0x20] sm:$0xf]
        %v3372 = vld [vmem:[%s31 + $0x24] sm:$0xf]
        %v3373 = vld [vmem:[%s31 + $0x28] sm:$0xf]
        %v3374 = vld [vmem:[%s31 + $0x2c] sm:$0xf]
        %v3375 = vld [vmem:[%s31 + $0x30] sm:$0xf]
        %v3376 = vld [vmem:[%s31 + $0x34] sm:$0xf]
        %v3377 = vld [vmem:[%s31 + $0x38] sm:$0xf]
        %v3378 = vld [vmem:[%s31 + $0x3c] sm:$0xf]
        %v3379 = vld [vmem:[%s31 + $0x40] sm:$0xf]
        %v3380 = vld [vmem:[%s31 + $0x44] sm:$0xf]
        %v3381 = vld [vmem:[%s31 + $0x48] sm:$0xf]
        %v3382 = vld [vmem:[%s31 + $0x4c] sm:$0xf]
        %v3383 = vld [vmem:[%s31 + $0x50] sm:$0xf]
        %v3384 = vld [vmem:[%s31 + $0x54] sm:$0xf]
        %v3385 = vld [vmem:[%s31 + $0x58] sm:$0xf]
        %v3386 = vld [vmem:[%s31 + $0x5c] sm:$0xf]
        %v3387 = vld [vmem:[%s31 + $0x60] sm:$0xf]
        %v3388 = vld [vmem:[%s31 + $0x64] sm:$0xf]
        %v3389 = vld [vmem:[%s31 + $0x68] sm:$0xf]
        %v3390 = vld [vmem:[%s31 + $0x6c] sm:$0xf]
        %v3391 = vld [vmem:[%s31 + $0x70] sm:$0xf]
        %v3392 = vld [vmem:[%s31 + $0x74] sm:$0xf]
        %v3393 = vld [vmem:[%s31 + $0x78] sm:$0xf]
        %v3394 = vld [vmem:[%s31 + $0x7c] sm:$0xf]
        %v3395 = vld [vmem:[%s31 + $0x80] sm:$0xf]
        %v3396 = vld [vmem:[%s31 + $0x84] sm:$0xf]
        %v3397 = vld [vmem:[%s31 + $0x88] sm:$0xf]
        %v3398 = vld [vmem:[%s31 + $0x8c] sm:$0xf]
        %v3399 = vld [vmem:[%s31 + $0x90] sm:$0xf]
        %v3400 = vld [vmem:[%s31 + $0x94] sm:$0xf]
        %v3401 = vld [vmem:[%s31 + $0x98] sm:$0xf]
        %v3402 = vld [vmem:[%s31 + $0x9c] sm:$0xf]
        %v3403 = vld [vmem:[%s31 + $0xa0] sm:$0xf]
        %v3404 = vld [vmem:[%s31 + $0xa4] sm:$0xf]
        %v3405 = vld [vmem:[%s31 + $0xa8] sm:$0xf]
        %v3406 = vld [vmem:[%s31 + $0xac] sm:$0xf]
        %v3407 = vld [vmem:[%s31 + $0xb0] sm:$0xf]
        %v3408 = vld [vmem:[%s31 + $0xb4] sm:$0xf]
        %v3409 = vld [vmem:[%s31 + $0xb8] sm:$0xf]
        %v3410 = vld [vmem:[%s31 + $0xbc] sm:$0xf]
        %v3411 = vld [vmem:[%s31 + $0xc0] sm:$0xf]
        %v3412 = vld [vmem:[%s31 + $0xc4] sm:$0xf]
        %v3413 = vld [vmem:[%s31 + $0xc8] sm:$0xf]
        %v3414 = vld [vmem:[%s31 + $0xcc] sm:$0xf]
        %v3415 = vld [vmem:[%s31 + $0xd0] sm:$0xf]
        %v3416 = vld [vmem:[%s31 + $0xd4] sm:$0xf]
        %v3417 = vld [vmem:[%s31 + $0xd8] sm:$0xf]
        %v3418 = vld [vmem:[%s31 + $0xdc] sm:$0xf]
        %v3419 = vld [vmem:[%s31 + $0xe0] sm:$0xf]
        %v3420 = vld [vmem:[%s31 + $0xe4] sm:$0xf]
        %v3421 = vld [vmem:[%s31 + $0xe8] sm:$0xf]
        %v3422 = vld [vmem:[%s31 + $0xec] sm:$0xf]
        %v3423 = vld [vmem:[%s31 + $0xf0] sm:$0xf]
        %v3424 = vld [vmem:[%s31 + $0xf4] sm:$0xf]
        %v3425 = vld [vmem:[%s31 + $0xf8] sm:$0xf]
        %v3426 = vld [vmem:[%s31 + $0xfc] sm:$0xf]
        %v3427 = vld [vmem:[%s31 + $0x100] sm:$0xf]
        %v3428 = vld [vmem:[%s31 + $0x104] sm:$0xf]
        %v3429 = vld [vmem:[%s31 + $0x108] sm:$0xf]
        %v3430 = vld [vmem:[%s31 + $0x10c] sm:$0xf]
        %v3431 = vld [vmem:[%s31 + $0x110] sm:$0xf]
        %v3432 = vld [vmem:[%s31 + $0x114] sm:$0xf]
        %v3433 = vld [vmem:[%s31 + $0x118] sm:$0xf]
        %v3434 = vld [vmem:[%s31 + $0x11c] sm:$0xf]
        %v3435 = vld [vmem:[%s31 + $0x120] sm:$0xf]
        %v3436 = vld [vmem:[%s31 + $0x124] sm:$0xf]
        %v3437 = vld [vmem:[%s31 + $0x128] sm:$0xf]
        %v3438 = vld [vmem:[%s31 + $0x12c] sm:$0xf]
        %v3439 = vld [vmem:[%s31 + $0x130] sm:$0xf]
        %v3440 = vld [vmem:[%s31 + $0x134] sm:$0xf]
        %v3441 = vld [vmem:[%s31 + $0x138] sm:$0xf]
        %v3442 = vld [vmem:[%s31 + $0x13c] sm:$0xf]
        %v3443 = vld [vmem:[%s31 + $0x140] sm:$0xf]
        %v3444 = vld [vmem:[%s31 + $0x144] sm:$0xf]
        %v3445 = vld [vmem:[%s31 + $0x148] sm:$0xf]
        %v3446 = vld [vmem:[%s31 + $0x14c] sm:$0xf]
        %v3447 = vld [vmem:[%s31 + $0x150] sm:$0xf]
        %v3448 = vld [vmem:[%s31 + $0x154] sm:$0xf]
        %v3449 = vld [vmem:[%s31 + $0x158] sm:$0xf]
        %v3450 = vld [vmem:[%s31 + $0x15c] sm:$0xf]
        %v3451 = vld [vmem:[%s31 + $0x160] sm:$0xf]
        %v3452 = vld [vmem:[%s31 + $0x164] sm:$0xf]
        %v3453 = vld [vmem:[%s31 + $0x168] sm:$0xf]
        %v3454 = vld [vmem:[%s31 + $0x16c] sm:$0xf]
        %v3455 = vld [vmem:[%s31 + $0x170] sm:$0xf]
        %v3456 = vld [vmem:[%s31 + $0x174] sm:$0xf]
        %v3457 = vld [vmem:[%s31 + $0x178] sm:$0xf]
        %v3458 = vld [vmem:[%s31 + $0x17c] sm:$0xf]
        %v3459 = vld [vmem:[%s31 + $0x180] sm:$0xf]
        %v3460 = vld [vmem:[%s31 + $0x184] sm:$0xf]
        %v3461 = vld [vmem:[%s31 + $0x188] sm:$0xf]
        %v3462 = vld [vmem:[%s31 + $0x18c] sm:$0xf]
        %v3463 = vld [vmem:[%s31 + $0x190] sm:$0xf]
        %v3464 = vld [vmem:[%s31 + $0x194] sm:$0xf]
        %v3465 = vld [vmem:[%s31 + $0x198] sm:$0xf]
        %v3466 = vld [vmem:[%s31 + $0x19c] sm:$0xf]
        %v3467 = vld [vmem:[%s31 + $0x1a0] sm:$0xf]
        %v3468 = vld [vmem:[%s31 + $0x1a4] sm:$0xf]
        %v3469 = vld [vmem:[%s31 + $0x1a8] sm:$0xf]
        %v3470 = vld [vmem:[%s31 + $0x1ac] sm:$0xf]
        %v3471 = vld [vmem:[%s31 + $0x1b0] sm:$0xf]
        %v3472 = vld [vmem:[%s31 + $0x1b4] sm:$0xf]
        %v3473 = vld [vmem:[%s31 + $0x1b8] sm:$0xf]
        %v3474 = vld [vmem:[%s31 + $0x1bc] sm:$0xf]
        %v3475 = vld [vmem:[%s31 + $0x1c0] sm:$0xf]
        %v3476 = vld [vmem:[%s31 + $0x1c4] sm:$0xf]
        %v3477 = vld [vmem:[%s31 + $0x1c8] sm:$0xf]
        %v3478 = vld [vmem:[%s31 + $0x1cc] sm:$0xf]
        %v3479 = vld [vmem:[%s31 + $0x1d0] sm:$0xf]
        %v3480 = vld [vmem:[%s31 + $0x1d4] sm:$0xf]
        %v3481 = vld [vmem:[%s31 + $0x1d8] sm:$0xf]
        %v3482 = vld [vmem:[%s31 + $0x1dc] sm:$0xf]
        %v3483 = vld [vmem:[%s31 + $0x1e0] sm:$0xf]
        %v3484 = vld [vmem:[%s31 + $0x1e4] sm:$0xf]
        %v3485 = vld [vmem:[%s31 + $0x1e8] sm:$0xf]
        %v3486 = vld [vmem:[%s31 + $0x1ec] sm:$0xf]
        %v3487 = vld [vmem:[%s31 + $0x1f0] sm:$0xf]
        %v3488 = vld [vmem:[%s31 + $0x1f4] sm:$0xf]
        %v3489 = vld [vmem:[%s31 + $0x1f8] sm:$0xf]
        %v3490 = vld [vmem:[%s31 + $0x1fc] sm:$0xf]
        %v3491 = vld [vmem:[%s31 + $0x200] sm:$0xf]
        %v3492 = vld [vmem:[%s31 + $0x204] sm:$0xf]
        %v3493 = vld [vmem:[%s31 + $0x208] sm:$0xf]
        %v3494 = vld [vmem:[%s31 + $0x20c] sm:$0xf]
        %v3495 = vld [vmem:[%s31 + $0x210] sm:$0xf]
        %v3496 = vld [vmem:[%s31 + $0x214] sm:$0xf]
        %v3497 = vld [vmem:[%s31 + $0x218] sm:$0xf]
        %v3498 = vld [vmem:[%s31 + $0x21c] sm:$0xf]
        %v3499 = vld [vmem:[%s31 + $0x220] sm:$0xf]
        %v3500 = vld [vmem:[%s31 + $0x224] sm:$0xf]
        %v3501 = vld [vmem:[%s31 + $0x228] sm:$0xf]
        %v3502 = vld [vmem:[%s31 + $0x22c] sm:$0xf]
        %v3503 = vld [vmem:[%s31 + $0x230] sm:$0xf]
        %v3504 = vld [vmem:[%s31 + $0x234] sm:$0xf]
        %v3505 = vld [vmem:[%s31 + $0x238] sm:$0xf]
        %v3506 = vld [vmem:[%s31 + $0x23c] sm:$0xf]
        %v3507 = vld [vmem:[%s31 + $0x240] sm:$0xf]
        %v3508 = vld [vmem:[%s31 + $0x244] sm:$0xf]
        %v3509 = vld [vmem:[%s31 + $0x248] sm:$0xf]
        %v3510 = vld [vmem:[%s31 + $0x24c] sm:$0xf]
        %v3511 = vld [vmem:[%s31 + $0x250] sm:$0xf]
        %v3512 = vld [vmem:[%s31 + $0x254] sm:$0xf]
        %v3513 = vld [vmem:[%s31 + $0x258] sm:$0xf]
        %v3514 = vld [vmem:[%s31 + $0x25c] sm:$0xf]
        %v3515 = vld [vmem:[%s31 + $0x260] sm:$0xf]
        %v3516 = vld [vmem:[%s31 + $0x264] sm:$0xf]
        %v3517 = vld [vmem:[%s31 + $0x268] sm:$0xf]
        %v3518 = vld [vmem:[%s31 + $0x26c] sm:$0xf]
        %v3519 = vld [vmem:[%s31 + $0x270] sm:$0xf]
        %v3520 = vld [vmem:[%s31 + $0x274] sm:$0xf]
        %v3521 = vld [vmem:[%s31 + $0x278] sm:$0xf]
        %v3522 = vld [vmem:[%s31 + $0x27c] sm:$0xf]
        %v3523 = vld [vmem:[%s31 + $0x280] sm:$0xf]
        %v3524 = vld [vmem:[%s31 + $0x284] sm:$0xf]
        %v3525 = vld [vmem:[%s31 + $0x288] sm:$0xf]
        %v3526 = vld [vmem:[%s31 + $0x28c] sm:$0xf]
        %v3527 = vld [vmem:[%s31 + $0x290] sm:$0xf]
        %v3528 = vld [vmem:[%s31 + $0x294] sm:$0xf]
        %v3529 = vld [vmem:[%s31 + $0x298] sm:$0xf]
        %v3530 = vld [vmem:[%s31 + $0x29c] sm:$0xf]
        %v3531 = vld [vmem:[%s31 + $0x2a0] sm:$0xf]
        %v3532 = vld [vmem:[%s31 + $0x2a4] sm:$0xf]
        %v3533 = vld [vmem:[%s31 + $0x2a8] sm:$0xf]
        %v3534 = vld [vmem:[%s31 + $0x2ac] sm:$0xf]
        %v3535 = vld [vmem:[%s31 + $0x2b0] sm:$0xf]
        %v3536 = vld [vmem:[%s31 + $0x2b4] sm:$0xf]
        %v3537 = vld [vmem:[%s31 + $0x2b8] sm:$0xf]
        %v3538 = vld [vmem:[%s31 + $0x2bc] sm:$0xf]
        %v3539 = vld [vmem:[%s31 + $0x2c0] sm:$0xf]
        %v3540 = vld [vmem:[%s31 + $0x2c4] sm:$0xf]
        %v3541 = vld [vmem:[%s31 + $0x2c8] sm:$0xf]
        %v3542 = vld [vmem:[%s31 + $0x2cc] sm:$0xf]
        %v3543 = vld [vmem:[%s31 + $0x2d0] sm:$0xf]
        %v3544 = vld [vmem:[%s31 + $0x2d4] sm:$0xf]
        %v3545 = vld [vmem:[%s31 + $0x2d8] sm:$0xf]
        %v3546 = vld [vmem:[%s31 + $0x2dc] sm:$0xf]
        %v3547 = vld [vmem:[%s31 + $0x2e0] sm:$0xf]
        %v3548 = vld [vmem:[%s31 + $0x2e4] sm:$0xf]
        %v3549 = vld [vmem:[%s31 + $0x2e8] sm:$0xf]
        %v3550 = vld [vmem:[%s31 + $0x2ec] sm:$0xf]
        %v3551 = vld [vmem:[%s31 + $0x2f0] sm:$0xf]
        %v3552 = vld [vmem:[%s31 + $0x2f4] sm:$0xf]
        %v3553 = vld [vmem:[%s31 + $0x2f8] sm:$0xf]
        %v3554 = vld [vmem:[%s31 + $0x2fc] sm:$0xf]
        %v3555 = vld [vmem:[%s31 + $0x300] sm:$0xf]
        %v3556 = vld [vmem:[%s31 + $0x304] sm:$0xf]
        %v3557 = vld [vmem:[%s31 + $0x308] sm:$0xf]
        %v3558 = vld [vmem:[%s31 + $0x30c] sm:$0xf]
        %v3559 = vld [vmem:[%s31 + $0x310] sm:$0xf]
        %v3560 = vld [vmem:[%s31 + $0x314] sm:$0xf]
        %v3561 = vld [vmem:[%s31 + $0x318] sm:$0xf]
        %v3562 = vld [vmem:[%s31 + $0x31c] sm:$0xf]
        %v3563 = vld [vmem:[%s31 + $0x320] sm:$0xf]
        %v3564 = vld [vmem:[%s31 + $0x324] sm:$0xf]
        %v3565 = vld [vmem:[%s31 + $0x328] sm:$0xf]
        %v3566 = vld [vmem:[%s31 + $0x32c] sm:$0xf]
        %v3567 = vld [vmem:[%s31 + $0x330] sm:$0xf]
        %v3568 = vld [vmem:[%s31 + $0x334] sm:$0xf]
        %v3569 = vld [vmem:[%s31 + $0x338] sm:$0xf]
        %v3570 = vld [vmem:[%s31 + $0x33c] sm:$0xf]
        %v3571 = vld [vmem:[%s31 + $0x340] sm:$0xf]
        %v3572 = vld [vmem:[%s31 + $0x344] sm:$0xf]
        %v3573 = vld [vmem:[%s31 + $0x348] sm:$0xf]
        %v3574 = vld [vmem:[%s31 + $0x34c] sm:$0xf]
        %v3575 = vld [vmem:[%s31 + $0x350] sm:$0xf]
        %v3576 = vld [vmem:[%s31 + $0x354] sm:$0xf]
        %v3577 = vld [vmem:[%s31 + $0x358] sm:$0xf]
        %v3578 = vld [vmem:[%s31 + $0x35c] sm:$0xf]
        %v3579 = vld [vmem:[%s31 + $0x360] sm:$0xf]
        %v3580 = vld [vmem:[%s31 + $0x364] sm:$0xf]
        %v3581 = vld [vmem:[%s31 + $0x368] sm:$0xf]
        %v3582 = vld [vmem:[%s31 + $0x36c] sm:$0xf]
        %v3583 = vld [vmem:[%s31 + $0x370] sm:$0xf]
        %v3584 = vld [vmem:[%s31 + $0x374] sm:$0xf]
        %v3585 = vld [vmem:[%s31 + $0x378] sm:$0xf]
        %v3586 = vld [vmem:[%s31 + $0x37c] sm:$0xf]
        %v3587 = vld [vmem:[%s31 + $0x380] sm:$0xf]
        %v3588 = vld [vmem:[%s31 + $0x384] sm:$0xf]
        %v3589 = vld [vmem:[%s31 + $0x388] sm:$0xf]
        %v3590 = vld [vmem:[%s31 + $0x38c] sm:$0xf]
        %v3591 = vld [vmem:[%s31 + $0x390] sm:$0xf]
        %v3592 = vld [vmem:[%s31 + $0x394] sm:$0xf]
        %v3593 = vld [vmem:[%s31 + $0x398] sm:$0xf]
        %v3594 = vld [vmem:[%s31 + $0x39c] sm:$0xf]
        %v3595 = vld [vmem:[%s31 + $0x3a0] sm:$0xf]
        %v3596 = vld [vmem:[%s31 + $0x3a4] sm:$0xf]
        %v3597 = vld [vmem:[%s31 + $0x3a8] sm:$0xf]
        %v3598 = vld [vmem:[%s31 + $0x3ac] sm:$0xf]
        %v3599 = vld [vmem:[%s31 + $0x3b0] sm:$0xf]
        %v3600 = vld [vmem:[%s31 + $0x3b4] sm:$0xf]
        %v3601 = vld [vmem:[%s31 + $0x3b8] sm:$0xf]
        %v3602 = vld [vmem:[%s31 + $0x3bc] sm:$0xf]
        %v3603 = vld [vmem:[%s31 + $0x3c0] sm:$0xf]
        %v3604 = vld [vmem:[%s31 + $0x3c4] sm:$0xf]
        %v3605 = vld [vmem:[%s31 + $0x3c8] sm:$0xf]
        %v3606 = vld [vmem:[%s31 + $0x3cc] sm:$0xf]
        %v3607 = vld [vmem:[%s31 + $0x3d0] sm:$0xf]
        %v3608 = vld [vmem:[%s31 + $0x3d4] sm:$0xf]
        %v3609 = vld [vmem:[%s31 + $0x3d8] sm:$0xf]
        %v3610 = vld [vmem:[%s31 + $0x3dc] sm:$0xf]
        %v3611 = vld [vmem:[%s31 + $0x3e0] sm:$0xf]
        %v3612 = vld [vmem:[%s31 + $0x3e4] sm:$0xf]
        %v3613 = vld [vmem:[%s31 + $0x3e8] sm:$0xf]
        %v3614 = vld [vmem:[%s31 + $0x3ec] sm:$0xf]
        %v3615 = vld [vmem:[%s31 + $0x3f0] sm:$0xf]
        %v3616 = vld [vmem:[%s31 + $0x3f4] sm:$0xf]
        %v3617 = vld [vmem:[%s31 + $0x3f8] sm:$0xf]
        %v3618 = vld [vmem:[%s31 + $0x3fc] sm:$0xf]
        %v3619 = vld [vmem:[%s33] sm:$0x1]
        %v3621 = vlaneseq
        %v3622 = vshrl.u32 %v3621, 7
        %v3623 = vsub.s32 0, %v3622
        %v3624 = vrot.slane %v3619, %v3623
        %v3882 = vunpack.c.l.b16 %v3363
        %v3883 = vunpack.c.l.b16 %v3364
        %v3884 = vunpack.c.l.b16 %v3365
        %v3885 = vunpack.c.l.b16 %v3366
        %v3886 = vunpack.c.l.b16 %v3367
        %v3887 = vunpack.c.l.b16 %v3368
        %v3888 = vunpack.c.l.b16 %v3369
        %v3889 = vunpack.c.l.b16 %v3370
        %v3890 = vunpack.c.l.b16 %v3371
        %v3891 = vunpack.c.l.b16 %v3372
        %v3892 = vunpack.c.l.b16 %v3373
        %v3893 = vunpack.c.l.b16 %v3374
        %v3894 = vunpack.c.l.b16 %v3375
        %v3895 = vunpack.c.l.b16 %v3376
        %v3896 = vunpack.c.l.b16 %v3377
        %v3897 = vunpack.c.l.b16 %v3378
        %v3898 = vunpack.c.l.b16 %v3379
        %v3899 = vunpack.c.l.b16 %v3380
        %v3900 = vunpack.c.l.b16 %v3381
        %v3901 = vunpack.c.l.b16 %v3382
        %v3902 = vunpack.c.l.b16 %v3383
        %v3903 = vunpack.c.l.b16 %v3384
        %v3904 = vunpack.c.l.b16 %v3385
        %v3905 = vunpack.c.l.b16 %v3386
        %v3906 = vunpack.c.l.b16 %v3387
        %v3907 = vunpack.c.l.b16 %v3388
        %v3908 = vunpack.c.l.b16 %v3389
        %v3909 = vunpack.c.l.b16 %v3390
        %v3910 = vunpack.c.l.b16 %v3391
        %v3911 = vunpack.c.l.b16 %v3392
        %v3912 = vunpack.c.l.b16 %v3393
        %v3913 = vunpack.c.l.b16 %v3394
        %v3914 = vunpack.c.l.b16 %v3395
        %v3915 = vunpack.c.l.b16 %v3396
        %v3916 = vunpack.c.l.b16 %v3397
        %v3917 = vunpack.c.l.b16 %v3398
        %v3918 = vunpack.c.l.b16 %v3399
        %v3919 = vunpack.c.l.b16 %v3400
        %v3920 = vunpack.c.l.b16 %v3401
        %v3921 = vunpack.c.l.b16 %v3402
        %v3922 = vunpack.c.l.b16 %v3403
        %v3923 = vunpack.c.l.b16 %v3404
        %v3924 = vunpack.c.l.b16 %v3405
        %v3925 = vunpack.c.l.b16 %v3406
        %v3926 = vunpack.c.l.b16 %v3407
        %v3927 = vunpack.c.l.b16 %v3408
        %v3928 = vunpack.c.l.b16 %v3409
        %v3929 = vunpack.c.l.b16 %v3410
        %v3930 = vunpack.c.l.b16 %v3411
        %v3931 = vunpack.c.l.b16 %v3412
        %v3932 = vunpack.c.l.b16 %v3413
        %v3933 = vunpack.c.l.b16 %v3414
        %v3934 = vunpack.c.l.b16 %v3415
        %v3935 = vunpack.c.l.b16 %v3416
        %v3936 = vunpack.c.l.b16 %v3417
        %v3937 = vunpack.c.l.b16 %v3418
        %v3938 = vunpack.c.l.b16 %v3419
        %v3939 = vunpack.c.l.b16 %v3420
        %v3940 = vunpack.c.l.b16 %v3421
        %v3941 = vunpack.c.l.b16 %v3422
        %v3942 = vunpack.c.l.b16 %v3423
        %v3943 = vunpack.c.l.b16 %v3424
        %v3944 = vunpack.c.l.b16 %v3425
        %v3945 = vunpack.c.l.b16 %v3426
        %v3946 = vunpack.c.l.b16 %v3427
        %v3947 = vunpack.c.l.b16 %v3428
        %v3948 = vunpack.c.l.b16 %v3429
        %v3949 = vunpack.c.l.b16 %v3430
        %v3950 = vunpack.c.l.b16 %v3431
        %v3951 = vunpack.c.l.b16 %v3432
        %v3952 = vunpack.c.l.b16 %v3433
        %v3953 = vunpack.c.l.b16 %v3434
        %v3954 = vunpack.c.l.b16 %v3435
        %v3955 = vunpack.c.l.b16 %v3436
        %v3956 = vunpack.c.l.b16 %v3437
        %v3957 = vunpack.c.l.b16 %v3438
        %v3958 = vunpack.c.l.b16 %v3439
        %v3959 = vunpack.c.l.b16 %v3440
        %v3960 = vunpack.c.l.b16 %v3441
        %v3961 = vunpack.c.l.b16 %v3442
        %v3962 = vunpack.c.l.b16 %v3443
        %v3963 = vunpack.c.l.b16 %v3444
        %v3964 = vunpack.c.l.b16 %v3445
        %v3965 = vunpack.c.l.b16 %v3446
        %v3966 = vunpack.c.l.b16 %v3447
        %v3967 = vunpack.c.l.b16 %v3448
        %v3968 = vunpack.c.l.b16 %v3449
        %v3969 = vunpack.c.l.b16 %v3450
        %v3970 = vunpack.c.l.b16 %v3451
        %v3971 = vunpack.c.l.b16 %v3452
        %v3972 = vunpack.c.l.b16 %v3453
        %v3973 = vunpack.c.l.b16 %v3454
        %v3974 = vunpack.c.l.b16 %v3455
        %v3975 = vunpack.c.l.b16 %v3456
        %v3976 = vunpack.c.l.b16 %v3457
        %v3977 = vunpack.c.l.b16 %v3458
        %v3978 = vunpack.c.l.b16 %v3459
        %v3979 = vunpack.c.l.b16 %v3460
        %v3980 = vunpack.c.l.b16 %v3461
        %v3981 = vunpack.c.l.b16 %v3462
        %v3982 = vunpack.c.l.b16 %v3463
        %v3983 = vunpack.c.l.b16 %v3464
        %v3984 = vunpack.c.l.b16 %v3465
        %v3985 = vunpack.c.l.b16 %v3466
        %v3986 = vunpack.c.l.b16 %v3467
        %v3987 = vunpack.c.l.b16 %v3468
        %v3988 = vunpack.c.l.b16 %v3469
        %v3989 = vunpack.c.l.b16 %v3470
        %v3990 = vunpack.c.l.b16 %v3471
        %v3991 = vunpack.c.l.b16 %v3472
        %v3992 = vunpack.c.l.b16 %v3473
        %v3993 = vunpack.c.l.b16 %v3474
        %v3994 = vunpack.c.l.b16 %v3475
        %v3995 = vunpack.c.l.b16 %v3476
        %v3996 = vunpack.c.l.b16 %v3477
        %v3997 = vunpack.c.l.b16 %v3478
        %v3998 = vunpack.c.l.b16 %v3479
        %v3999 = vunpack.c.l.b16 %v3480
        %v4000 = vunpack.c.l.b16 %v3481
        %v4001 = vunpack.c.l.b16 %v3482
        %v4002 = vunpack.c.l.b16 %v3483
        %v4003 = vunpack.c.l.b16 %v3484
        %v4004 = vunpack.c.l.b16 %v3485
        %v4005 = vunpack.c.l.b16 %v3486
        %v4006 = vunpack.c.l.b16 %v3487
        %v4007 = vunpack.c.l.b16 %v3488
        %v4008 = vunpack.c.l.b16 %v3489
        %v4009 = vunpack.c.l.b16 %v3490
        %v4010 = vunpack.c.l.b16 %v3491
        %v4011 = vunpack.c.l.b16 %v3492
        %v4012 = vunpack.c.l.b16 %v3493
        %v4013 = vunpack.c.l.b16 %v3494
        %v4014 = vunpack.c.l.b16 %v3495
        %v4015 = vunpack.c.l.b16 %v3496
        %v4016 = vunpack.c.l.b16 %v3497
        %v4017 = vunpack.c.l.b16 %v3498
        %v4018 = vunpack.c.l.b16 %v3499
        %v4019 = vunpack.c.l.b16 %v3500
        %v4020 = vunpack.c.l.b16 %v3501
        %v4021 = vunpack.c.l.b16 %v3502
        %v4022 = vunpack.c.l.b16 %v3503
        %v4023 = vunpack.c.l.b16 %v3504
        %v4024 = vunpack.c.l.b16 %v3505
        %v4025 = vunpack.c.l.b16 %v3506
        %v4026 = vunpack.c.l.b16 %v3507
        %v4027 = vunpack.c.l.b16 %v3508
        %v4028 = vunpack.c.l.b16 %v3509
        %v4029 = vunpack.c.l.b16 %v3510
        %v4030 = vunpack.c.l.b16 %v3511
        %v4031 = vunpack.c.l.b16 %v3512
        %v4032 = vunpack.c.l.b16 %v3513
        %v4033 = vunpack.c.l.b16 %v3514
        %v4034 = vunpack.c.l.b16 %v3515
        %v4035 = vunpack.c.l.b16 %v3516
        %v4036 = vunpack.c.l.b16 %v3517
        %v4037 = vunpack.c.l.b16 %v3518
        %v4038 = vunpack.c.l.b16 %v3519
        %v4039 = vunpack.c.l.b16 %v3520
        %v4040 = vunpack.c.l.b16 %v3521
        %v4041 = vunpack.c.l.b16 %v3522
        %v4042 = vunpack.c.l.b16 %v3523
        %v4043 = vunpack.c.l.b16 %v3524
        %v4044 = vunpack.c.l.b16 %v3525
        %v4045 = vunpack.c.l.b16 %v3526
        %v4046 = vunpack.c.l.b16 %v3527
        %v4047 = vunpack.c.l.b16 %v3528
        %v4048 = vunpack.c.l.b16 %v3529
        %v4049 = vunpack.c.l.b16 %v3530
        %v4050 = vunpack.c.l.b16 %v3531
        %v4051 = vunpack.c.l.b16 %v3532
        %v4052 = vunpack.c.l.b16 %v3533
        %v4053 = vunpack.c.l.b16 %v3534
        %v4054 = vunpack.c.l.b16 %v3535
        %v4055 = vunpack.c.l.b16 %v3536
        %v4056 = vunpack.c.l.b16 %v3537
        %v4057 = vunpack.c.l.b16 %v3538
        %v4058 = vunpack.c.l.b16 %v3539
        %v4059 = vunpack.c.l.b16 %v3540
        %v4060 = vunpack.c.l.b16 %v3541
        %v4061 = vunpack.c.l.b16 %v3542
        %v4062 = vunpack.c.l.b16 %v3543
        %v4063 = vunpack.c.l.b16 %v3544
        %v4064 = vunpack.c.l.b16 %v3545
        %v4065 = vunpack.c.l.b16 %v3546
        %v4066 = vunpack.c.l.b16 %v3547
        %v4067 = vunpack.c.l.b16 %v3548
        %v4068 = vunpack.c.l.b16 %v3549
        %v4069 = vunpack.c.l.b16 %v3550
        %v4070 = vunpack.c.l.b16 %v3551
        %v4071 = vunpack.c.l.b16 %v3552
        %v4072 = vunpack.c.l.b16 %v3553
        %v4073 = vunpack.c.l.b16 %v3554
        %v4074 = vunpack.c.l.b16 %v3555
        %v4075 = vunpack.c.l.b16 %v3556
        %v4076 = vunpack.c.l.b16 %v3557
        %v4077 = vunpack.c.l.b16 %v3558
        %v4078 = vunpack.c.l.b16 %v3559
        %v4079 = vunpack.c.l.b16 %v3560
        %v4080 = vunpack.c.l.b16 %v3561
        %v4081 = vunpack.c.l.b16 %v3562
        %v4082 = vunpack.c.l.b16 %v3563
        %v4083 = vunpack.c.l.b16 %v3564
        %v4084 = vunpack.c.l.b16 %v3565
        %v4085 = vunpack.c.l.b16 %v3566
        %v4086 = vunpack.c.l.b16 %v3567
        %v4087 = vunpack.c.l.b16 %v3568
        %v4088 = vunpack.c.l.b16 %v3569
        %v4089 = vunpack.c.l.b16 %v3570
        %v4090 = vunpack.c.l.b16 %v3571
        %v4091 = vunpack.c.l.b16 %v3572
        %v4092 = vunpack.c.l.b16 %v3573
        %v4093 = vunpack.c.l.b16 %v3574
        %v4094 = vunpack.c.l.b16 %v3575
        %v4095 = vunpack.c.l.b16 %v3576
        %v4096 = vunpack.c.l.b16 %v3577
        %v4097 = vunpack.c.l.b16 %v3578
        %v4098 = vunpack.c.l.b16 %v3579
        %v4099 = vunpack.c.l.b16 %v3580
        %v4100 = vunpack.c.l.b16 %v3581
        %v4101 = vunpack.c.l.b16 %v3582
        %v4102 = vunpack.c.l.b16 %v3583
        %v4103 = vunpack.c.l.b16 %v3584
        %v4104 = vunpack.c.l.b16 %v3585
        %v4105 = vunpack.c.l.b16 %v3586
        %v4106 = vunpack.c.l.b16 %v3587
        %v4107 = vunpack.c.l.b16 %v3588
        %v4108 = vunpack.c.l.b16 %v3589
        %v4109 = vunpack.c.l.b16 %v3590
        %v4110 = vunpack.c.l.b16 %v3591
        %v4111 = vunpack.c.l.b16 %v3592
        %v4112 = vunpack.c.l.b16 %v3593
        %v4113 = vunpack.c.l.b16 %v3594
        %v4114 = vunpack.c.l.b16 %v3595
        %v4115 = vunpack.c.l.b16 %v3596
        %v4116 = vunpack.c.l.b16 %v3597
        %v4117 = vunpack.c.l.b16 %v3598
        %v4118 = vunpack.c.l.b16 %v3599
        %v4119 = vunpack.c.l.b16 %v3600
        %v4120 = vunpack.c.l.b16 %v3601
        %v4121 = vunpack.c.l.b16 %v3602
        %v4122 = vunpack.c.l.b16 %v3603
        %v4123 = vunpack.c.l.b16 %v3604
        %v4124 = vunpack.c.l.b16 %v3605
        %v4125 = vunpack.c.l.b16 %v3606
        %v4126 = vunpack.c.l.b16 %v3607
        %v4127 = vunpack.c.l.b16 %v3608
        %v4128 = vunpack.c.l.b16 %v3609
        %v4129 = vunpack.c.l.b16 %v3610
        %v4130 = vunpack.c.l.b16 %v3611
        %v4131 = vunpack.c.l.b16 %v3612
        %v4132 = vunpack.c.l.b16 %v3613
        %v4133 = vunpack.c.l.b16 %v3614
        %v4134 = vunpack.c.l.b16 %v3615
        %v4135 = vunpack.c.l.b16 %v3616
        %v4136 = vunpack.c.l.b16 %v3617
        %v4137 = vunpack.c.l.b16 %v3618
        %v4138 = vpack.c.b16 %v3883, %v3882
        %v4139 = vpack.c.b16 %v3885, %v3884
        %v4140 = vpack.c.b16 %v3887, %v3886
        %v4141 = vpack.c.b16 %v3889, %v3888
        %v4142 = vpack.c.b16 %v3891, %v3890
        %v4143 = vpack.c.b16 %v3893, %v3892
        %v4144 = vpack.c.b16 %v3895, %v3894
        %v4145 = vpack.c.b16 %v3897, %v3896
        %v4146 = vpack.c.b16 %v3899, %v3898
        %v4147 = vpack.c.b16 %v3901, %v3900
        %v4148 = vpack.c.b16 %v3903, %v3902
        %v4149 = vpack.c.b16 %v3905, %v3904
        %v4150 = vpack.c.b16 %v3907, %v3906
        %v4151 = vpack.c.b16 %v3909, %v3908
        %v4152 = vpack.c.b16 %v3911, %v3910
        %v4153 = vpack.c.b16 %v3913, %v3912
        %v4154 = vpack.c.b16 %v3915, %v3914
        %v4155 = vpack.c.b16 %v3917, %v3916
        %v4156 = vpack.c.b16 %v3919, %v3918
        %v4157 = vpack.c.b16 %v3921, %v3920
        %v4158 = vpack.c.b16 %v3923, %v3922
        %v4159 = vpack.c.b16 %v3925, %v3924
        %v4160 = vpack.c.b16 %v3927, %v3926
        %v4161 = vpack.c.b16 %v3929, %v3928
        %v4162 = vpack.c.b16 %v3931, %v3930
        %v4163 = vpack.c.b16 %v3933, %v3932
        %v4164 = vpack.c.b16 %v3935, %v3934
        %v4165 = vpack.c.b16 %v3937, %v3936
        %v4166 = vpack.c.b16 %v3939, %v3938
        %v4167 = vpack.c.b16 %v3941, %v3940
        %v4168 = vpack.c.b16 %v3943, %v3942
        %v4169 = vpack.c.b16 %v3945, %v3944
        %v4170 = vpack.c.b16 %v3947, %v3946
        %v4171 = vpack.c.b16 %v3949, %v3948
        %v4172 = vpack.c.b16 %v3951, %v3950
        %v4173 = vpack.c.b16 %v3953, %v3952
        %v4174 = vpack.c.b16 %v3955, %v3954
        %v4175 = vpack.c.b16 %v3957, %v3956
        %v4176 = vpack.c.b16 %v3959, %v3958
        %v4177 = vpack.c.b16 %v3961, %v3960
        %v4178 = vpack.c.b16 %v3963, %v3962
        %v4179 = vpack.c.b16 %v3965, %v3964
        %v4180 = vpack.c.b16 %v3967, %v3966
        %v4181 = vpack.c.b16 %v3969, %v3968
        %v4182 = vpack.c.b16 %v3971, %v3970
        %v4183 = vpack.c.b16 %v3973, %v3972
        %v4184 = vpack.c.b16 %v3975, %v3974
        %v4185 = vpack.c.b16 %v3977, %v3976
        %v4186 = vpack.c.b16 %v3979, %v3978
        %v4187 = vpack.c.b16 %v3981, %v3980
        %v4188 = vpack.c.b16 %v3983, %v3982
        %v4189 = vpack.c.b16 %v3985, %v3984
        %v4190 = vpack.c.b16 %v3987, %v3986
        %v4191 = vpack.c.b16 %v3989, %v3988
        %v4192 = vpack.c.b16 %v3991, %v3990
        %v4193 = vpack.c.b16 %v3993, %v3992
        %v4194 = vpack.c.b16 %v3995, %v3994
        %v4195 = vpack.c.b16 %v3997, %v3996
        %v4196 = vpack.c.b16 %v3999, %v3998
        %v4197 = vpack.c.b16 %v4001, %v4000
        %v4198 = vpack.c.b16 %v4003, %v4002
        %v4199 = vpack.c.b16 %v4005, %v4004
        %v4200 = vpack.c.b16 %v4007, %v4006
        %v4201 = vpack.c.b16 %v4009, %v4008
        %v4202 = vpack.c.b16 %v4011, %v4010
        %v4203 = vpack.c.b16 %v4013, %v4012
        %v4204 = vpack.c.b16 %v4015, %v4014
        %v4205 = vpack.c.b16 %v4017, %v4016
        %v4206 = vpack.c.b16 %v4019, %v4018
        %v4207 = vpack.c.b16 %v4021, %v4020
        %v4208 = vpack.c.b16 %v4023, %v4022
        %v4209 = vpack.c.b16 %v4025, %v4024
        %v4210 = vpack.c.b16 %v4027, %v4026
        %v4211 = vpack.c.b16 %v4029, %v4028
        %v4212 = vpack.c.b16 %v4031, %v4030
        %v4213 = vpack.c.b16 %v4033, %v4032
        %v4214 = vpack.c.b16 %v4035, %v4034
        %v4215 = vpack.c.b16 %v4037, %v4036
        %v4216 = vpack.c.b16 %v4039, %v4038
        %v4217 = vpack.c.b16 %v4041, %v4040
        %v4218 = vpack.c.b16 %v4043, %v4042
        %v4219 = vpack.c.b16 %v4045, %v4044
        %v4220 = vpack.c.b16 %v4047, %v4046
        %v4221 = vpack.c.b16 %v4049, %v4048
        %v4222 = vpack.c.b16 %v4051, %v4050
        %v4223 = vpack.c.b16 %v4053, %v4052
        %v4224 = vpack.c.b16 %v4055, %v4054
        %v4225 = vpack.c.b16 %v4057, %v4056
        %v4226 = vpack.c.b16 %v4059, %v4058
        %v4227 = vpack.c.b16 %v4061, %v4060
        %v4228 = vpack.c.b16 %v4063, %v4062
        %v4229 = vpack.c.b16 %v4065, %v4064
        %v4230 = vpack.c.b16 %v4067, %v4066
        %v4231 = vpack.c.b16 %v4069, %v4068
        %v4232 = vpack.c.b16 %v4071, %v4070
        %v4233 = vpack.c.b16 %v4073, %v4072
        %v4234 = vpack.c.b16 %v4075, %v4074
        %v4235 = vpack.c.b16 %v4077, %v4076
        %v4236 = vpack.c.b16 %v4079, %v4078
        %v4237 = vpack.c.b16 %v4081, %v4080
        %v4238 = vpack.c.b16 %v4083, %v4082
        %v4239 = vpack.c.b16 %v4085, %v4084
        %v4240 = vpack.c.b16 %v4087, %v4086
        %v4241 = vpack.c.b16 %v4089, %v4088
        %v4242 = vpack.c.b16 %v4091, %v4090
        %v4243 = vpack.c.b16 %v4093, %v4092
        %v4244 = vpack.c.b16 %v4095, %v4094
        %v4245 = vpack.c.b16 %v4097, %v4096
        %v4246 = vpack.c.b16 %v4099, %v4098
        %v4247 = vpack.c.b16 %v4101, %v4100
        %v4248 = vpack.c.b16 %v4103, %v4102
        %v4249 = vpack.c.b16 %v4105, %v4104
        %v4250 = vpack.c.b16 %v4107, %v4106
        %v4251 = vpack.c.b16 %v4109, %v4108
        %v4252 = vpack.c.b16 %v4111, %v4110
        %v4253 = vpack.c.b16 %v4113, %v4112
        %v4254 = vpack.c.b16 %v4115, %v4114
        %v4255 = vpack.c.b16 %v4117, %v4116
        %v4256 = vpack.c.b16 %v4119, %v4118
        %v4257 = vpack.c.b16 %v4121, %v4120
        %v4258 = vpack.c.b16 %v4123, %v4122
        %v4259 = vpack.c.b16 %v4125, %v4124
        %v4260 = vpack.c.b16 %v4127, %v4126
        %v4261 = vpack.c.b16 %v4129, %v4128
        %v4262 = vpack.c.b16 %v4131, %v4130
        %v4263 = vpack.c.b16 %v4133, %v4132
        %v4264 = vpack.c.b16 %v4135, %v4134
        %v4265 = vpack.c.b16 %v4137, %v4136
        %4394 = vmatprep.subr.bf16.mxu0 0
        %4395 = vmatpush1.bf16.msra.mxu0 %v4138
        %4396 = vmatprep.subr.bf16.mxu0 0
        %4397 = vmatpush1.bf16.msra.mxu0 %v4139
        %4398 = vmatprep.subr.bf16.mxu0 0
        %4399 = vmatpush1.bf16.msra.mxu0 %v4140
        %4400 = vmatprep.subr.bf16.mxu0 0
        %4401 = vmatpush1.bf16.msra.mxu0 %v4141
        %4402 = vmatprep.subr.bf16.mxu0 0
        %4403 = vmatpush1.bf16.msra.mxu0 %v4142
        %4404 = vmatprep.subr.bf16.mxu0 0
        %4405 = vmatpush1.bf16.msra.mxu0 %v4143
        %4406 = vmatprep.subr.bf16.mxu0 0
        %4407 = vmatpush1.bf16.msra.mxu0 %v4144
        %4408 = vmatprep.subr.bf16.mxu0 0
        %4409 = vmatpush1.bf16.msra.mxu0 %v4145
        %4410 = vmatprep.subr.bf16.mxu0 0
        %4411 = vmatpush1.bf16.msra.mxu0 %v4146
        %4412 = vmatprep.subr.bf16.mxu0 0
        %4413 = vmatpush1.bf16.msra.mxu0 %v4147
        %4414 = vmatprep.subr.bf16.mxu0 0
        %4415 = vmatpush1.bf16.msra.mxu0 %v4148
        %4416 = vmatprep.subr.bf16.mxu0 0
        %4417 = vmatpush1.bf16.msra.mxu0 %v4149
        %4418 = vmatprep.subr.bf16.mxu0 0
        %4419 = vmatpush1.bf16.msra.mxu0 %v4150
        %4420 = vmatprep.subr.bf16.mxu0 0
        %4421 = vmatpush1.bf16.msra.mxu0 %v4151
        %4422 = vmatprep.subr.bf16.mxu0 0
        %4423 = vmatpush1.bf16.msra.mxu0 %v4152
        %4424 = vmatprep.subr.bf16.mxu0 0
        %4425 = vmatpush1.bf16.msra.mxu0 %v4153
        %4426 = vmatprep.mubr.bf16.mxu0 %v3348
        %4427 = vmatmul.mubr.bf16.gmra.mrb[0].mxu0 %v3347
        %v4428 = vpop.f32.mrb[0].mxu0
        %v4429 = vadd.f32 %v3624, %v4428
        %v4430 = vpop.f32.mrb[0].mxu0
        %v4431 = vpop.f32.mrb[0].mxu0
        %v4432 = vpop.f32.mrb[0].mxu0
        %4433 = vdwg.mxu0
        %4434 = vmatprep.subr.bf16.mxu0 0
        %4435 = vmatpush1.bf16.msra.mxu0 %v4154
        %4436 = vmatprep.subr.bf16.mxu0 0
        %4437 = vmatpush1.bf16.msra.mxu0 %v4155
        %4438 = vmatprep.subr.bf16.mxu0 0
        %4439 = vmatpush1.bf16.msra.mxu0 %v4156
        %4440 = vmatprep.subr.bf16.mxu0 0
        %4441 = vmatpush1.bf16.msra.mxu0 %v4157
        %4442 = vmatprep.subr.bf16.mxu0 0
        %4443 = vmatpush1.bf16.msra.mxu0 %v4158
        %4444 = vmatprep.subr.bf16.mxu0 0
        %4445 = vmatpush1.bf16.msra.mxu0 %v4159
        %4446 = vmatprep.subr.bf16.mxu0 0
        %4447 = vmatpush1.bf16.msra.mxu0 %v4160
        %4448 = vmatprep.subr.bf16.mxu0 0
        %4449 = vmatpush1.bf16.msra.mxu0 %v4161
        %4450 = vmatprep.subr.bf16.mxu0 0
        %4451 = vmatpush1.bf16.msra.mxu0 %v4162
        %4452 = vmatprep.subr.bf16.mxu0 0
        %4453 = vmatpush1.bf16.msra.mxu0 %v4163
        %4454 = vmatprep.subr.bf16.mxu0 0
        %4455 = vmatpush1.bf16.msra.mxu0 %v4164
        %4456 = vmatprep.subr.bf16.mxu0 0
        %4457 = vmatpush1.bf16.msra.mxu0 %v4165
        %4458 = vmatprep.subr.bf16.mxu0 0
        %4459 = vmatpush1.bf16.msra.mxu0 %v4166
        %4460 = vmatprep.subr.bf16.mxu0 0
        %4461 = vmatpush1.bf16.msra.mxu0 %v4167
        %4462 = vmatprep.subr.bf16.mxu0 0
        %4463 = vmatpush1.bf16.msra.mxu0 %v4168
        %4464 = vmatprep.subr.bf16.mxu0 0
        %4465 = vmatpush1.bf16.msra.mxu0 %v4169
        %4466 = vmatprep.mubr.bf16.mxu0 %v3350
        %4467 = vmatmul.mubr.bf16.gmra.mrb[0].mxu0 %v3349
        %v4468 = vpop.f32.mrb[0].mxu0
        %v4469 = vadd.f32 %v4429, %v4468
        %v4470 = vpop.f32.mrb[0].mxu0
        %v4471 = vpop.f32.mrb[0].mxu0
        %v4472 = vpop.f32.mrb[0].mxu0
        %4473 = vdwg.mxu0
        %4474 = vmatprep.subr.bf16.mxu0 0
        %4475 = vmatpush1.bf16.msra.mxu0 %v4170
        %4476 = vmatprep.subr.bf16.mxu0 0
        %4477 = vmatpush1.bf16.msra.mxu0 %v4171
        %4478 = vmatprep.subr.bf16.mxu0 0
        %4479 = vmatpush1.bf16.msra.mxu0 %v4172
        %4480 = vmatprep.subr.bf16.mxu0 0
        %4481 = vmatpush1.bf16.msra.mxu0 %v4173
        %4482 = vmatprep.subr.bf16.mxu0 0
        %4483 = vmatpush1.bf16.msra.mxu0 %v4174
        %4484 = vmatprep.subr.bf16.mxu0 0
        %4485 = vmatpush1.bf16.msra.mxu0 %v4175
        %4486 = vmatprep.subr.bf16.mxu0 0
        %4487 = vmatpush1.bf16.msra.mxu0 %v4176
        %4488 = vmatprep.subr.bf16.mxu0 0
        %4489 = vmatpush1.bf16.msra.mxu0 %v4177
        %4490 = vmatprep.subr.bf16.mxu0 0
        %4491 = vmatpush1.bf16.msra.mxu0 %v4178
        %4492 = vmatprep.subr.bf16.mxu0 0
        %4493 = vmatpush1.bf16.msra.mxu0 %v4179
        %4494 = vmatprep.subr.bf16.mxu0 0
        %4495 = vmatpush1.bf16.msra.mxu0 %v4180
        %4496 = vmatprep.subr.bf16.mxu0 0
        %4497 = vmatpush1.bf16.msra.mxu0 %v4181
        %4498 = vmatprep.subr.bf16.mxu0 0
        %4499 = vmatpush1.bf16.msra.mxu0 %v4182
        %4500 = vmatprep.subr.bf16.mxu0 0
        %4501 = vmatpush1.bf16.msra.mxu0 %v4183
        %4502 = vmatprep.subr.bf16.mxu0 0
        %4503 = vmatpush1.bf16.msra.mxu0 %v4184
        %4504 = vmatprep.subr.bf16.mxu0 0
        %4505 = vmatpush1.bf16.msra.mxu0 %v4185
        %4506 = vmatprep.mubr.bf16.mxu0 %v3352
        %4507 = vmatmul.mubr.bf16.gmra.mrb[0].mxu0 %v3351
        %v4508 = vpop.f32.mrb[0].mxu0
        %v4509 = vadd.f32 %v4469, %v4508
        %v4510 = vpop.f32.mrb[0].mxu0
        %v4511 = vpop.f32.mrb[0].mxu0
        %v4512 = vpop.f32.mrb[0].mxu0
        %4513 = vdwg.mxu0
        %4514 = vmatprep.subr.bf16.mxu0 0
        %4515 = vmatpush1.bf16.msra.mxu0 %v4186
        %4516 = vmatprep.subr.bf16.mxu0 0
        %4517 = vmatpush1.bf16.msra.mxu0 %v4187
        %4518 = vmatprep.subr.bf16.mxu0 0
        %4519 = vmatpush1.bf16.msra.mxu0 %v4188
        %4520 = vmatprep.subr.bf16.mxu0 0
        %4521 = vmatpush1.bf16.msra.mxu0 %v4189
        %4522 = vmatprep.subr.bf16.mxu0 0
        %4523 = vmatpush1.bf16.msra.mxu0 %v4190
        %4524 = vmatprep.subr.bf16.mxu0 0
        %4525 = vmatpush1.bf16.msra.mxu0 %v4191
        %4526 = vmatprep.subr.bf16.mxu0 0
        %4527 = vmatpush1.bf16.msra.mxu0 %v4192
        %4528 = vmatprep.subr.bf16.mxu0 0
        %4529 = vmatpush1.bf16.msra.mxu0 %v4193
        %4530 = vmatprep.subr.bf16.mxu0 0
        %4531 = vmatpush1.bf16.msra.mxu0 %v4194
        %4532 = vmatprep.subr.bf16.mxu0 0
        %4533 = vmatpush1.bf16.msra.mxu0 %v4195
        %4534 = vmatprep.subr.bf16.mxu0 0
        %4535 = vmatpush1.bf16.msra.mxu0 %v4196
        %4536 = vmatprep.subr.bf16.mxu0 0
        %4537 = vmatpush1.bf16.msra.mxu0 %v4197
        %4538 = vmatprep.subr.bf16.mxu0 0
        %4539 = vmatpush1.bf16.msra.mxu0 %v4198
        %4540 = vmatprep.subr.bf16.mxu0 0
        %4541 = vmatpush1.bf16.msra.mxu0 %v4199
        %4542 = vmatprep.subr.bf16.mxu0 0
        %4543 = vmatpush1.bf16.msra.mxu0 %v4200
        %4544 = vmatprep.subr.bf16.mxu0 0
        %4545 = vmatpush1.bf16.msra.mxu0 %v4201
        %4546 = vmatprep.mubr.bf16.mxu0 %v3354
        %4547 = vmatmul.mubr.bf16.gmra.mrb[0].mxu0 %v3353
        %v4548 = vpop.f32.mrb[0].mxu0
        %v4549 = vadd.f32 %v4509, %v4548
        %v4550 = vpop.f32.mrb[0].mxu0
        %v4551 = vpop.f32.mrb[0].mxu0
        %v4552 = vpop.f32.mrb[0].mxu0
        %4553 = vdwg.mxu0
        %4554 = vmatprep.subr.bf16.mxu0 0
        %4555 = vmatpush1.bf16.msra.mxu0 %v4202
        %4556 = vmatprep.subr.bf16.mxu0 0
        %4557 = vmatpush1.bf16.msra.mxu0 %v4203
        %4558 = vmatprep.subr.bf16.mxu0 0
        %4559 = vmatpush1.bf16.msra.mxu0 %v4204
        %4560 = vmatprep.subr.bf16.mxu0 0
        %4561 = vmatpush1.bf16.msra.mxu0 %v4205
        %4562 = vmatprep.subr.bf16.mxu0 0
        %4563 = vmatpush1.bf16.msra.mxu0 %v4206
        %4564 = vmatprep.subr.bf16.mxu0 0
        %4565 = vmatpush1.bf16.msra.mxu0 %v4207
        %4566 = vmatprep.subr.bf16.mxu0 0
        %4567 = vmatpush1.bf16.msra.mxu0 %v4208
        %4568 = vmatprep.subr.bf16.mxu0 0
        %4569 = vmatpush1.bf16.msra.mxu0 %v4209
        %4570 = vmatprep.subr.bf16.mxu0 0
        %4571 = vmatpush1.bf16.msra.mxu0 %v4210
        %4572 = vmatprep.subr.bf16.mxu0 0
        %4573 = vmatpush1.bf16.msra.mxu0 %v4211
        %4574 = vmatprep.subr.bf16.mxu0 0
        %4575 = vmatpush1.bf16.msra.mxu0 %v4212
        %4576 = vmatprep.subr.bf16.mxu0 0
        %4577 = vmatpush1.bf16.msra.mxu0 %v4213
        %4578 = vmatprep.subr.bf16.mxu0 0
        %4579 = vmatpush1.bf16.msra.mxu0 %v4214
        %4580 = vmatprep.subr.bf16.mxu0 0
        %4581 = vmatpush1.bf16.msra.mxu0 %v4215
        %4582 = vmatprep.subr.bf16.mxu0 0
        %4583 = vmatpush1.bf16.msra.mxu0 %v4216
        %4584 = vmatprep.subr.bf16.mxu0 0
        %4585 = vmatpush1.bf16.msra.mxu0 %v4217
        %4586 = vmatprep.mubr.bf16.mxu0 %v3356
        %4587 = vmatmul.mubr.bf16.gmra.mrb[0].mxu0 %v3355
        %v4588 = vpop.f32.mrb[0].mxu0
        %v4589 = vadd.f32 %v4549, %v4588
        %v4590 = vpop.f32.mrb[0].mxu0
        %v4591 = vpop.f32.mrb[0].mxu0
        %v4592 = vpop.f32.mrb[0].mxu0
        %4593 = vdwg.mxu0
        %4594 = vmatprep.subr.bf16.mxu0 0
        %4595 = vmatpush1.bf16.msra.mxu0 %v4218
        %4596 = vmatprep.subr.bf16.mxu0 0
        %4597 = vmatpush1.bf16.msra.mxu0 %v4219
        %4598 = vmatprep.subr.bf16.mxu0 0
        %4599 = vmatpush1.bf16.msra.mxu0 %v4220
        %4600 = vmatprep.subr.bf16.mxu0 0
        %4601 = vmatpush1.bf16.msra.mxu0 %v4221
        %4602 = vmatprep.subr.bf16.mxu0 0
        %4603 = vmatpush1.bf16.msra.mxu0 %v4222
        %4604 = vmatprep.subr.bf16.mxu0 0
        %4605 = vmatpush1.bf16.msra.mxu0 %v4223
        %4606 = vmatprep.subr.bf16.mxu0 0
        %4607 = vmatpush1.bf16.msra.mxu0 %v4224
        %4608 = vmatprep.subr.bf16.mxu0 0
        %4609 = vmatpush1.bf16.msra.mxu0 %v4225
        %4610 = vmatprep.subr.bf16.mxu0 0
        %4611 = vmatpush1.bf16.msra.mxu0 %v4226
        %4612 = vmatprep.subr.bf16.mxu0 0
        %4613 = vmatpush1.bf16.msra.mxu0 %v4227
        %4614 = vmatprep.subr.bf16.mxu0 0
        %4615 = vmatpush1.bf16.msra.mxu0 %v4228
        %4616 = vmatprep.subr.bf16.mxu0 0
        %4617 = vmatpush1.bf16.msra.mxu0 %v4229
        %4618 = vmatprep.subr.bf16.mxu0 0
        %4619 = vmatpush1.bf16.msra.mxu0 %v4230
        %4620 = vmatprep.subr.bf16.mxu0 0
        %4621 = vmatpush1.bf16.msra.mxu0 %v4231
        %4622 = vmatprep.subr.bf16.mxu0 0
        %4623 = vmatpush1.bf16.msra.mxu0 %v4232
        %4624 = vmatprep.subr.bf16.mxu0 0
        %4625 = vmatpush1.bf16.msra.mxu0 %v4233
        %4626 = vmatprep.mubr.bf16.mxu0 %v3358
        %4627 = vmatmul.mubr.bf16.gmra.mrb[0].mxu0 %v3357
        %v4628 = vpop.f32.mrb[0].mxu0
        %v4629 = vadd.f32 %v4589, %v4628
        %v4630 = vpop.f32.mrb[0].mxu0
        %v4631 = vpop.f32.mrb[0].mxu0
        %v4632 = vpop.f32.mrb[0].mxu0
        %4633 = vdwg.mxu0
        %4634 = vmatprep.subr.bf16.mxu0 0
        %4635 = vmatpush1.bf16.msra.mxu0 %v4234
        %4636 = vmatprep.subr.bf16.mxu0 0
        %4637 = vmatpush1.bf16.msra.mxu0 %v4235
        %4638 = vmatprep.subr.bf16.mxu0 0
        %4639 = vmatpush1.bf16.msra.mxu0 %v4236
        %4640 = vmatprep.subr.bf16.mxu0 0
        %4641 = vmatpush1.bf16.msra.mxu0 %v4237
        %4642 = vmatprep.subr.bf16.mxu0 0
        %4643 = vmatpush1.bf16.msra.mxu0 %v4238
        %4644 = vmatprep.subr.bf16.mxu0 0
        %4645 = vmatpush1.bf16.msra.mxu0 %v4239
        %4646 = vmatprep.subr.bf16.mxu0 0
        %4647 = vmatpush1.bf16.msra.mxu0 %v4240
        %4648 = vmatprep.subr.bf16.mxu0 0
        %4649 = vmatpush1.bf16.msra.mxu0 %v4241
        %4650 = vmatprep.subr.bf16.mxu0 0
        %4651 = vmatpush1.bf16.msra.mxu0 %v4242
        %4652 = vmatprep.subr.bf16.mxu0 0
        %4653 = vmatpush1.bf16.msra.mxu0 %v4243
        %4654 = vmatprep.subr.bf16.mxu0 0
        %4655 = vmatpush1.bf16.msra.mxu0 %v4244
        %4656 = vmatprep.subr.bf16.mxu0 0
        %4657 = vmatpush1.bf16.msra.mxu0 %v4245
        %4658 = vmatprep.subr.bf16.mxu0 0
        %4659 = vmatpush1.bf16.msra.mxu0 %v4246
        %4660 = vmatprep.subr.bf16.mxu0 0
        %4661 = vmatpush1.bf16.msra.mxu0 %v4247
        %4662 = vmatprep.subr.bf16.mxu0 0
        %4663 = vmatpush1.bf16.msra.mxu0 %v4248
        %4664 = vmatprep.subr.bf16.mxu0 0
        %4665 = vmatpush1.bf16.msra.mxu0 %v4249
        %4666 = vmatprep.mubr.bf16.mxu0 %v3360
        %4667 = vmatmul.mubr.bf16.gmra.mrb[0].mxu0 %v3359
        %v4668 = vpop.f32.mrb[0].mxu0
        %v4669 = vadd.f32 %v4629, %v4668
        %v4670 = vpop.f32.mrb[0].mxu0
        %v4671 = vpop.f32.mrb[0].mxu0
        %v4672 = vpop.f32.mrb[0].mxu0
        %4673 = vdwg.mxu0
        %4674 = vmatprep.subr.bf16.mxu0 0
        %4675 = vmatpush1.bf16.msra.mxu0 %v4250
        %4676 = vmatprep.subr.bf16.mxu0 0
        %4677 = vmatpush1.bf16.msra.mxu0 %v4251
        %4678 = vmatprep.subr.bf16.mxu0 0
        %4679 = vmatpush1.bf16.msra.mxu0 %v4252
        %4680 = vmatprep.subr.bf16.mxu0 0
        %4681 = vmatpush1.bf16.msra.mxu0 %v4253
        %4682 = vmatprep.subr.bf16.mxu0 0
        %4683 = vmatpush1.bf16.msra.mxu0 %v4254
        %4684 = vmatprep.subr.bf16.mxu0 0
        %4685 = vmatpush1.bf16.msra.mxu0 %v4255
        %4686 = vmatprep.subr.bf16.mxu0 0
        %4687 = vmatpush1.bf16.msra.mxu0 %v4256
        %4688 = vmatprep.subr.bf16.mxu0 0
        %4689 = vmatpush1.bf16.msra.mxu0 %v4257
        %4690 = vmatprep.subr.bf16.mxu0 0
        %4691 = vmatpush1.bf16.msra.mxu0 %v4258
        %4692 = vmatprep.subr.bf16.mxu0 0
        %4693 = vmatpush1.bf16.msra.mxu0 %v4259
        %4694 = vmatprep.subr.bf16.mxu0 0
        %4695 = vmatpush1.bf16.msra.mxu0 %v4260
        %4696 = vmatprep.subr.bf16.mxu0 0
        %4697 = vmatpush1.bf16.msra.mxu0 %v4261
        %4698 = vmatprep.subr.bf16.mxu0 0
        %4699 = vmatpush1.bf16.msra.mxu0 %v4262
        %4700 = vmatprep.subr.bf16.mxu0 0
        %4701 = vmatpush1.bf16.msra.mxu0 %v4263
        %4702 = vmatprep.subr.bf16.mxu0 0
        %4703 = vmatpush1.bf16.msra.mxu0 %v4264
        %4704 = vmatprep.subr.bf16.mxu0 0
        %4705 = vmatpush1.bf16.msra.mxu0 %v4265
        %4706 = vmatprep.mubr.bf16.mxu0 %v3362
        %4707 = vmatmul.mubr.bf16.gmra.mrb[0].mxu0 %v3361
        %v4708 = vpop.f32.mrb[0].mxu0
        %v4709 = vadd.f32 %v4669, %v4708
        %v4710 = vpop.f32.mrb[0].mxu0
        %v4711 = vpop.f32.mrb[0].mxu0
        %v4712 = vpop.f32.mrb[0].mxu0
        %4713 = vdwg.mxu0
        %v4714 = vadd.f32 %v2626, %v4709
        %v4715 = vsel %vm1163, %v4714, 0.0
        %4716 = vadd.xlane.f32.xlu0 %v4715
        %v4717 = vpop.xlane.xlu0 %4716
        %v4718 = vmul.f32 %v4717, %v2600
        %v4719 = vsub.f32 %v4714, %v4718
        %v4720 = vmul.f32 %v4719, %v4719
        %v4721 = vsel %vm1163, %v4720, 0.0
        %4722 = vadd.xlane.f32.xlu0 %v4721
        %v4723 = vpop.xlane.xlu0 %4722
        %v4724 = vmul.f32 %v4723, %v2600
        %v4725 = vadd.f32 %v4724, 1e-05
        %v4726 = vrsqrt.pop %v4725
        %v4727 = vmul.f32 %v4719, %v4726
        %v4728 = vld [vmem:[%s23] sm:$0x1]
        %v4730 = vlaneseq
        %v4731 = vshrl.u32 %v4730, 7
        %v4732 = vsub.s32 0, %v4731
        %v4733 = vrot.slane %v4728, %v4732
        %v4735 = vmul.f32 %v4727, %v4733
        %v4736 = vld [vmem:[%s25] sm:$0x1]
        %v4738 = vlaneseq
        %v4739 = vshrl.u32 %v4738, 7
        %v4740 = vsub.s32 0, %v4739
        %v4741 = vrot.slane %v4736, %v4740
        %v4743 = vadd.f32 %v4735, %v4741
        %v4744 = vld [vmem:[%s35] sm:$0xff]
        %v4745 = vld [vmem:[%s35 + $0x8] sm:$0xff]
        %v4746 = vld [vmem:[%s35 + $0x10] sm:$0xff]
        %v4747 = vld [vmem:[%s35 + $0x18] sm:$0xff]
        %v4748 = vld [vmem:[%s35 + $0x20] sm:$0xff]
        %v4749 = vld [vmem:[%s35 + $0x28] sm:$0xff]
        %v4750 = vld [vmem:[%s35 + $0x30] sm:$0xff]
        %v4751 = vld [vmem:[%s35 + $0x38] sm:$0xff]
        %v4752 = vld [vmem:[%s35 + $0x40] sm:$0xff]
        %v4753 = vld [vmem:[%s35 + $0x48] sm:$0xff]
        %v4754 = vld [vmem:[%s35 + $0x50] sm:$0xff]
        %v4755 = vld [vmem:[%s35 + $0x58] sm:$0xff]
        %v4756 = vld [vmem:[%s37] sm:$0x3]
        %v4758 = vlaneseq
        %v4759 = vshrl.u32 %v4758, 7
        %v4760 = vsub.s32 0, %v4759
        %v4761 = vrot.slane %v4756, %v4760
        %v4762 = vlaneseq
        %v4763 = vshrl.u32 %v4762, 7
        %v4764 = vsub.s32 1, %v4763
        %v4765 = vrot.slane %v4756, %v4764
        %v4769 = vsel %vm1163, %v4743, 0
        %4771 = vmatprep.subr.mxu0 %v4745
        %4772 = vmatpush1.msra.mxu0 %v4744
        %4773 = vmatprep.subr.mxu0 %v4747
        %4774 = vmatpush1.msra.mxu0 %v4746
        %4775 = vmatprep.subr.mxu0 %v4749
        %4776 = vmatpush1.msra.mxu0 %v4748
        %4777 = vmatprep.subr.mxu0 %v4751
        %4778 = vmatpush1.msra.mxu0 %v4750
        %4779 = vmatprep.subr.mxu0 %v4753
        %4780 = vmatpush1.msra.mxu0 %v4752
        %4781 = vmatprep.subr.mxu0 %v4755
        %4782 = vmatpush1.msra.mxu0 %v4754
        %4783 = vmatprep.subr.mxu0 0.0
        %4784 = vmatpush1.msra.mxu0 0.0
        %4785 = vmatprep.subr.mxu0 0.0
        %4786 = vmatpush1.msra.mxu0 0.0
        %4787 = vmatprep.subr.mxu0 0.0
        %4788 = vmatpush1.msra.mxu0 0.0
        %4789 = vmatprep.subr.mxu0 0.0
        %4790 = vmatpush1.msra.mxu0 0.0
        %4791 = vmatprep.subr.mxu0 0.0
        %4792 = vmatpush1.msra.mxu0 0.0
        %4793 = vmatprep.subr.mxu0 0.0
        %4794 = vmatpush1.msra.mxu0 0.0
        %4795 = vmatprep.subr.mxu0 0.0
        %4796 = vmatpush1.msra.mxu0 0.0
        %4797 = vmatprep.subr.mxu0 0.0
        %4798 = vmatpush1.msra.mxu0 0.0
        %4799 = vmatprep.subr.mxu0 0.0
        %4800 = vmatpush1.msra.mxu0 0.0
        %4801 = vmatprep.subr.mxu0 0.0
        %4802 = vmatpush1.msra.mxu0 0.0
        %4803 = vmatprep.subr.mxu0 0.0
        %4804 = vmatpush1.msra.mxu0 0.0
        %4805 = vmatprep.subr.mxu0 0.0
        %4806 = vmatpush1.msra.mxu0 0.0
        %4807 = vmatprep.subr.mxu0 0.0
        %4808 = vmatpush1.msra.mxu0 0.0
        %4809 = vmatprep.subr.mxu0 0.0
        %4810 = vmatpush1.msra.mxu0 0.0
        %4811 = vmatprep.subr.mxu0 0.0
        %4812 = vmatpush1.msra.mxu0 0.0
        %4813 = vmatprep.subr.mxu0 0.0
        %4814 = vmatpush1.msra.mxu0 0.0
        %4815 = vmatprep.subr.mxu0 0.0
        %4816 = vmatpush1.msra.mxu0 0.0
        %4817 = vmatprep.subr.mxu0 0.0
        %4818 = vmatpush1.msra.mxu0 0.0
        %4819 = vmatprep.subr.mxu0 0.0
        %4820 = vmatpush1.msra.mxu0 0.0
        %4821 = vmatprep.subr.mxu0 0.0
        %4822 = vmatpush1.msra.mxu0 0.0
        %4823 = vmatprep.subr.mxu0 0.0
        %4824 = vmatpush1.msra.mxu0 0.0
        %4825 = vmatprep.subr.mxu0 0.0
        %4826 = vmatpush1.msra.mxu0 0.0
        %4827 = vmatprep.subr.mxu0 0.0
        %4828 = vmatpush1.msra.mxu0 0.0
        %4829 = vmatprep.subr.mxu0 0.0
        %4830 = vmatpush1.msra.mxu0 0.0
        %4831 = vmatprep.subr.mxu0 0.0
        %4832 = vmatpush1.msra.mxu0 0.0
        %4833 = vmatprep.subr.mxu0 0.0
        %4834 = vmatpush1.msra.mxu0 0.0
        %4835 = vmatprep.mubr.f32.mxu0 0.0
        %4836 = vmatmul.mubr.f32.gmra.mrb[0].mxu0 %v4769
        %v4837 = vpop.f32.mrb[0].mxu0
        %v4838 = vadd.f32 %v4761, %v4837
        %v4839 = vpop.f32.mrb[0].mxu0
        %v4840 = vadd.f32 %v4765, %v4839
        %4841 = vdwg.mxu0
        %4843 = vrot.lane.b32.xlu0 %v4838, 116
        %v4844 = vpop.permute.xlu0 %4843
        %4845 = vrot.lane.b32.xlu0 %v4838, 104
        %v4846 = vpop.permute.xlu0 %4845
        %4847 = vrot.lane.b32.xlu0 %v4838, 92
        %v4848 = vpop.permute.xlu0 %4847
        %4850 = vrot.lane.b32.xlu0 %v4840, 104
        %v4851 = vpop.permute.xlu0 %4850
        %v4852 = vsel %vm1248, %v4846, %v4851
        %4853 = vrot.lane.b32.xlu0 %v4840, 92
        %v4854 = vpop.permute.xlu0 %4853
        %4855 = vrot.lane.b32.xlu0 %v4838, 80
        %v4856 = vpop.permute.xlu0 %4855
        %4857 = vrot.lane.b32.xlu0 %v4844, 80
        %v4858 = vpop.permute.xlu0 %4857
        %4859 = vrot.lane.b32.xlu0 %v4846, 80
        %v4860 = vpop.permute.xlu0 %4859
        %4861 = vrot.lane.b32.xlu0 %v4848, 80
        %v4862 = vpop.permute.xlu0 %4861
        %4867 = vxpose.xlu0.b32.start [1/16] %v4856, 128
        %4868 = vxpose.xlu0.b32.cont [2/16] 0.0, 128
        %4869 = vxpose.xlu0.b32.cont [3/16] 0.0, 128
        %4870 = vxpose.xlu0.b32.cont [4/16] 0.0, 128
        %4871 = vxpose.xlu0.b32.cont [5/16] 0.0, 128
        %4872 = vxpose.xlu0.b32.cont [6/16] 0.0, 128
        %4873 = vxpose.xlu0.b32.cont [7/16] 0.0, 128
        %4874 = vxpose.xlu0.b32.cont [8/16] 0.0, 128
        %4875 = vxpose.xlu0.b32.cont [9/16] 0.0, 128
        %4876 = vxpose.xlu0.b32.cont [10/16] 0.0, 128
        %4877 = vxpose.xlu0.b32.cont [11/16] 0.0, 128
        %4878 = vxpose.xlu0.b32.cont [12/16] 0.0, 128
        %4879 = vxpose.xlu0.b32.cont [13/16] 0.0, 128
        %4880 = vxpose.xlu0.b32.cont [14/16] 0.0, 128
        %4881 = vxpose.xlu0.b32.cont [15/16] 0.0, 128
        %4882 = vxpose.xlu0.b32.end [16/16] 0.0, 128
        %v4883 = vpop.trf.xlu0
        %v4884 = vpop.trf.xlu0
        %v4885 = vpop.trf.xlu0
        %v4886 = vpop.trf.xlu0
        %v4887 = vpop.trf.xlu0
        %v4888 = vpop.trf.xlu0
        %v4889 = vpop.trf.xlu0
        %v4890 = vpop.trf.xlu0
        %v4891 = vpop.trf.xlu0
        %v4892 = vpop.trf.xlu0
        %v4893 = vpop.trf.xlu0
        %v4894 = vpop.trf.xlu0
        %v4895 = vpop.trf.xlu0
        %v4896 = vpop.trf.xlu0
        %v4897 = vpop.trf.xlu0
        %v4898 = vpop.trf.xlu0
        %4899 = vxpose.xlu0.b32.start [1/16] %v4858, 128
        %4900 = vxpose.xlu0.b32.cont [2/16] 0.0, 128
        %4901 = vxpose.xlu0.b32.cont [3/16] 0.0, 128
        %4902 = vxpose.xlu0.b32.cont [4/16] 0.0, 128
        %4903 = vxpose.xlu0.b32.cont [5/16] 0.0, 128
        %4904 = vxpose.xlu0.b32.cont [6/16] 0.0, 128
        %4905 = vxpose.xlu0.b32.cont [7/16] 0.0, 128
        %4906 = vxpose.xlu0.b32.cont [8/16] 0.0, 128
        %4907 = vxpose.xlu0.b32.cont [9/16] 0.0, 128
        %4908 = vxpose.xlu0.b32.cont [10/16] 0.0, 128
        %4909 = vxpose.xlu0.b32.cont [11/16] 0.0, 128
        %4910 = vxpose.xlu0.b32.cont [12/16] 0.0, 128
        %4911 = vxpose.xlu0.b32.cont [13/16] 0.0, 128
        %4912 = vxpose.xlu0.b32.cont [14/16] 0.0, 128
        %4913 = vxpose.xlu0.b32.cont [15/16] 0.0, 128
        %4914 = vxpose.xlu0.b32.end [16/16] 0.0, 128
        %v4915 = vpop.trf.xlu0
        %v4916 = vpop.trf.xlu0
        %v4917 = vpop.trf.xlu0
        %v4918 = vpop.trf.xlu0
        %v4919 = vpop.trf.xlu0
        %v4920 = vpop.trf.xlu0
        %v4921 = vpop.trf.xlu0
        %v4922 = vpop.trf.xlu0
        %v4923 = vpop.trf.xlu0
        %v4924 = vpop.trf.xlu0
        %v4925 = vpop.trf.xlu0
        %v4926 = vpop.trf.xlu0
        %v4927 = vpop.trf.xlu0
        %v4928 = vpop.trf.xlu0
        %v4929 = vpop.trf.xlu0
        %v4930 = vpop.trf.xlu0
        %4931 = vxpose.xlu0.b32.start [1/16] %v4860, 128
        %4932 = vxpose.xlu0.b32.cont [2/16] 0.0, 128
        %4933 = vxpose.xlu0.b32.cont [3/16] 0.0, 128
        %4934 = vxpose.xlu0.b32.cont [4/16] 0.0, 128
        %4935 = vxpose.xlu0.b32.cont [5/16] 0.0, 128
        %4936 = vxpose.xlu0.b32.cont [6/16] 0.0, 128
        %4937 = vxpose.xlu0.b32.cont [7/16] 0.0, 128
        %4938 = vxpose.xlu0.b32.cont [8/16] 0.0, 128
        %4939 = vxpose.xlu0.b32.cont [9/16] 0.0, 128
        %4940 = vxpose.xlu0.b32.cont [10/16] 0.0, 128
        %4941 = vxpose.xlu0.b32.cont [11/16] 0.0, 128
        %4942 = vxpose.xlu0.b32.cont [12/16] 0.0, 128
        %4943 = vxpose.xlu0.b32.cont [13/16] 0.0, 128
        %4944 = vxpose.xlu0.b32.cont [14/16] 0.0, 128
        %4945 = vxpose.xlu0.b32.cont [15/16] 0.0, 128
        %4946 = vxpose.xlu0.b32.end [16/16] 0.0, 128
        %v4947 = vpop.trf.xlu0
        %v4948 = vpop.trf.xlu0
        %v4949 = vpop.trf.xlu0
        %v4950 = vpop.trf.xlu0
        %v4951 = vpop.trf.xlu0
        %v4952 = vpop.trf.xlu0
        %v4953 = vpop.trf.xlu0
        %v4954 = vpop.trf.xlu0
        %v4955 = vpop.trf.xlu0
        %v4956 = vpop.trf.xlu0
        %v4957 = vpop.trf.xlu0
        %v4958 = vpop.trf.xlu0
        %v4959 = vpop.trf.xlu0
        %v4960 = vpop.trf.xlu0
        %v4961 = vpop.trf.xlu0
        %v4962 = vpop.trf.xlu0
        %4963 = vxpose.xlu0.b32.start [1/16] %v4862, 128
        %4964 = vxpose.xlu0.b32.cont [2/16] 0.0, 128
        %4965 = vxpose.xlu0.b32.cont [3/16] 0.0, 128
        %4966 = vxpose.xlu0.b32.cont [4/16] 0.0, 128
        %4967 = vxpose.xlu0.b32.cont [5/16] 0.0, 128
        %4968 = vxpose.xlu0.b32.cont [6/16] 0.0, 128
        %4969 = vxpose.xlu0.b32.cont [7/16] 0.0, 128
        %4970 = vxpose.xlu0.b32.cont [8/16] 0.0, 128
        %4971 = vxpose.xlu0.b32.cont [9/16] 0.0, 128
        %4972 = vxpose.xlu0.b32.cont [10/16] 0.0, 128
        %4973 = vxpose.xlu0.b32.cont [11/16] 0.0, 128
        %4974 = vxpose.xlu0.b32.cont [12/16] 0.0, 128
        %4975 = vxpose.xlu0.b32.cont [13/16] 0.0, 128
        %4976 = vxpose.xlu0.b32.cont [14/16] 0.0, 128
        %4977 = vxpose.xlu0.b32.cont [15/16] 0.0, 128
        %4978 = vxpose.xlu0.b32.end [16/16] 0.0, 128
        %v4979 = vpop.trf.xlu0
        %v4980 = vpop.trf.xlu0
        %v4981 = vpop.trf.xlu0
        %v4982 = vpop.trf.xlu0
        %v4983 = vpop.trf.xlu0
        %v4984 = vpop.trf.xlu0
        %v4985 = vpop.trf.xlu0
        %v4986 = vpop.trf.xlu0
        %v4987 = vpop.trf.xlu0
        %v4988 = vpop.trf.xlu0
        %v4989 = vpop.trf.xlu0
        %v4990 = vpop.trf.xlu0
        %v4991 = vpop.trf.xlu0
        %v4992 = vpop.trf.xlu0
        %v4993 = vpop.trf.xlu0
        %v4994 = vpop.trf.xlu0
        %v4995 = vsel %vm1392, %v4838, 0
        %v4998 = vsel %vm1395, %v4884, 0
        %5000 = vmatprep.subr.mxu0 0.0
        %5001 = vmatpush1.msra.mxu0 %v4883
        %5002 = vmatprep.subr.mxu0 0.0
        %5003 = vmatpush1.msra.mxu0 %v4998
        %5004 = vmatprep.subr.mxu0 0.0
        %5005 = vmatpush1.msra.mxu0 0.0
        %5006 = vmatprep.subr.mxu0 0.0
        %5007 = vmatpush1.msra.mxu0 0.0
        %5008 = vmatprep.subr.mxu0 0.0
        %5009 = vmatpush1.msra.mxu0 0.0
        %5010 = vmatprep.subr.mxu0 0.0
        %5011 = vmatpush1.msra.mxu0 0.0
        %5012 = vmatprep.subr.mxu0 0.0
        %5013 = vmatpush1.msra.mxu0 0.0
        %5014 = vmatprep.subr.mxu0 0.0
        %5015 = vmatpush1.msra.mxu0 0.0
        %5016 = vmatprep.subr.mxu0 0.0
        %5017 = vmatpush1.msra.mxu0 0.0
        %5018 = vmatprep.subr.mxu0 0.0
        %5019 = vmatpush1.msra.mxu0 0.0
        %5020 = vmatprep.subr.mxu0 0.0
        %5021 = vmatpush1.msra.mxu0 0.0
        %5022 = vmatprep.subr.mxu0 0.0
        %5023 = vmatpush1.msra.mxu0 0.0
        %5024 = vmatprep.subr.mxu0 0.0
        %5025 = vmatpush1.msra.mxu0 0.0
        %5026 = vmatprep.subr.mxu0 0.0
        %5027 = vmatpush1.msra.mxu0 0.0
        %5028 = vmatprep.subr.mxu0 0.0
        %5029 = vmatpush1.msra.mxu0 0.0
        %5030 = vmatprep.subr.mxu0 0.0
        %5031 = vmatpush1.msra.mxu0 0.0
        %5032 = vmatprep.subr.mxu0 0.0
        %5033 = vmatpush1.msra.mxu0 0.0
        %5034 = vmatprep.subr.mxu0 0.0
        %5035 = vmatpush1.msra.mxu0 0.0
        %5036 = vmatprep.subr.mxu0 0.0
        %5037 = vmatpush1.msra.mxu0 0.0
        %5038 = vmatprep.subr.mxu0 0.0
        %5039 = vmatpush1.msra.mxu0 0.0
        %5040 = vmatprep.subr.mxu0 0.0
        %5041 = vmatpush1.msra.mxu0 0.0
        %5042 = vmatprep.subr.mxu0 0.0
        %5043 = vmatpush1.msra.mxu0 0.0
        %5044 = vmatprep.subr.mxu0 0.0
        %5045 = vmatpush1.msra.mxu0 0.0
        %5046 = vmatprep.subr.mxu0 0.0
        %5047 = vmatpush1.msra.mxu0 0.0
        %5048 = vmatprep.subr.mxu0 0.0
        %5049 = vmatpush1.msra.mxu0 0.0
        %5050 = vmatprep.subr.mxu0 0.0
        %5051 = vmatpush1.msra.mxu0 0.0
        %5052 = vmatprep.subr.mxu0 0.0
        %5053 = vmatpush1.msra.mxu0 0.0
        %5054 = vmatprep.subr.mxu0 0.0
        %5055 = vmatpush1.msra.mxu0 0.0
        %5056 = vmatprep.subr.mxu0 0.0
        %5057 = vmatpush1.msra.mxu0 0.0
        %5058 = vmatprep.subr.mxu0 0.0
        %5059 = vmatpush1.msra.mxu0 0.0
        %5060 = vmatprep.subr.mxu0 0.0
        %5061 = vmatpush1.msra.mxu0 0.0
        %5062 = vmatprep.subr.mxu0 0.0
        %5063 = vmatpush1.msra.mxu0 0.0
        %5064 = vmatprep.mubr.f32.mxu0 0.0
        %5065 = vmatmul.mubr.f32.gmra.mrb[0].mxu0 %v4995
        %v5066 = vpop.f32.mrb[0].mxu0
        %v5067 = vadd.f32 0.0, %v5066
        %v5068 = vpop.f32.mrb[0].mxu0
        %5069 = vdwg.mxu0
        %v5070 = vsel %vm1392, %v4844, 0
        %v5073 = vsel %vm1395, %v4916, 0
        %5075 = vmatprep.subr.mxu0 0.0
        %5076 = vmatpush1.msra.mxu0 %v4915
        %5077 = vmatprep.subr.mxu0 0.0
        %5078 = vmatpush1.msra.mxu0 %v5073
        %5079 = vmatprep.subr.mxu0 0.0
        %5080 = vmatpush1.msra.mxu0 0.0
        %5081 = vmatprep.subr.mxu0 0.0
        %5082 = vmatpush1.msra.mxu0 0.0
        %5083 = vmatprep.subr.mxu0 0.0
        %5084 = vmatpush1.msra.mxu0 0.0
        %5085 = vmatprep.subr.mxu0 0.0
        %5086 = vmatpush1.msra.mxu0 0.0
        %5087 = vmatprep.subr.mxu0 0.0
        %5088 = vmatpush1.msra.mxu0 0.0
        %5089 = vmatprep.subr.mxu0 0.0
        %5090 = vmatpush1.msra.mxu0 0.0
        %5091 = vmatprep.subr.mxu0 0.0
        %5092 = vmatpush1.msra.mxu0 0.0
        %5093 = vmatprep.subr.mxu0 0.0
        %5094 = vmatpush1.msra.mxu0 0.0
        %5095 = vmatprep.subr.mxu0 0.0
        %5096 = vmatpush1.msra.mxu0 0.0
        %5097 = vmatprep.subr.mxu0 0.0
        %5098 = vmatpush1.msra.mxu0 0.0
        %5099 = vmatprep.subr.mxu0 0.0
        %5100 = vmatpush1.msra.mxu0 0.0
        %5101 = vmatprep.subr.mxu0 0.0
        %5102 = vmatpush1.msra.mxu0 0.0
        %5103 = vmatprep.subr.mxu0 0.0
        %5104 = vmatpush1.msra.mxu0 0.0
        %5105 = vmatprep.subr.mxu0 0.0
        %5106 = vmatpush1.msra.mxu0 0.0
        %5107 = vmatprep.subr.mxu0 0.0
        %5108 = vmatpush1.msra.mxu0 0.0
        %5109 = vmatprep.subr.mxu0 0.0
        %5110 = vmatpush1.msra.mxu0 0.0
        %5111 = vmatprep.subr.mxu0 0.0
        %5112 = vmatpush1.msra.mxu0 0.0
        %5113 = vmatprep.subr.mxu0 0.0
        %5114 = vmatpush1.msra.mxu0 0.0
        %5115 = vmatprep.subr.mxu0 0.0
        %5116 = vmatpush1.msra.mxu0 0.0
        %5117 = vmatprep.subr.mxu0 0.0
        %5118 = vmatpush1.msra.mxu0 0.0
        %5119 = vmatprep.subr.mxu0 0.0
        %5120 = vmatpush1.msra.mxu0 0.0
        %5121 = vmatprep.subr.mxu0 0.0
        %5122 = vmatpush1.msra.mxu0 0.0
        %5123 = vmatprep.subr.mxu0 0.0
        %5124 = vmatpush1.msra.mxu0 0.0
        %5125 = vmatprep.subr.mxu0 0.0
        %5126 = vmatpush1.msra.mxu0 0.0
        %5127 = vmatprep.subr.mxu0 0.0
        %5128 = vmatpush1.msra.mxu0 0.0
        %5129 = vmatprep.subr.mxu0 0.0
        %5130 = vmatpush1.msra.mxu0 0.0
        %5131 = vmatprep.subr.mxu0 0.0
        %5132 = vmatpush1.msra.mxu0 0.0
        %5133 = vmatprep.subr.mxu0 0.0
        %5134 = vmatpush1.msra.mxu0 0.0
        %5135 = vmatprep.subr.mxu0 0.0
        %5136 = vmatpush1.msra.mxu0 0.0
        %5137 = vmatprep.subr.mxu0 0.0
        %5138 = vmatpush1.msra.mxu0 0.0
        %5139 = vmatprep.mubr.f32.mxu0 0.0
        %5140 = vmatmul.mubr.f32.gmra.mrb[0].mxu0 %v5070
        %v5141 = vpop.f32.mrb[0].mxu0
        %v5142 = vadd.f32 0.0, %v5141
        %v5143 = vpop.f32.mrb[0].mxu0
        %5144 = vdwg.mxu0
        %v5145 = vsel %vm1392, %v4846, 0
        %v5148 = vsel %vm1395, %v4948, 0
        %5150 = vmatprep.subr.mxu0 0.0
        %5151 = vmatpush1.msra.mxu0 %v4947
        %5152 = vmatprep.subr.mxu0 0.0
        %5153 = vmatpush1.msra.mxu0 %v5148
        %5154 = vmatprep.subr.mxu0 0.0
        %5155 = vmatpush1.msra.mxu0 0.0
        %5156 = vmatprep.subr.mxu0 0.0
        %5157 = vmatpush1.msra.mxu0 0.0
        %5158 = vmatprep.subr.mxu0 0.0
        %5159 = vmatpush1.msra.mxu0 0.0
        %5160 = vmatprep.subr.mxu0 0.0
        %5161 = vmatpush1.msra.mxu0 0.0
        %5162 = vmatprep.subr.mxu0 0.0
        %5163 = vmatpush1.msra.mxu0 0.0
        %5164 = vmatprep.subr.mxu0 0.0
        %5165 = vmatpush1.msra.mxu0 0.0
        %5166 = vmatprep.subr.mxu0 0.0
        %5167 = vmatpush1.msra.mxu0 0.0
        %5168 = vmatprep.subr.mxu0 0.0
        %5169 = vmatpush1.msra.mxu0 0.0
        %5170 = vmatprep.subr.mxu0 0.0
        %5171 = vmatpush1.msra.mxu0 0.0
        %5172 = vmatprep.subr.mxu0 0.0
        %5173 = vmatpush1.msra.mxu0 0.0
        %5174 = vmatprep.subr.mxu0 0.0
        %5175 = vmatpush1.msra.mxu0 0.0
        %5176 = vmatprep.subr.mxu0 0.0
        %5177 = vmatpush1.msra.mxu0 0.0
        %5178 = vmatprep.subr.mxu0 0.0
        %5179 = vmatpush1.msra.mxu0 0.0
        %5180 = vmatprep.subr.mxu0 0.0
        %5181 = vmatpush1.msra.mxu0 0.0
        %5182 = vmatprep.subr.mxu0 0.0
        %5183 = vmatpush1.msra.mxu0 0.0
        %5184 = vmatprep.subr.mxu0 0.0
        %5185 = vmatpush1.msra.mxu0 0.0
        %5186 = vmatprep.subr.mxu0 0.0
        %5187 = vmatpush1.msra.mxu0 0.0
        %5188 = vmatprep.subr.mxu0 0.0
        %5189 = vmatpush1.msra.mxu0 0.0
        %5190 = vmatprep.subr.mxu0 0.0
        %5191 = vmatpush1.msra.mxu0 0.0
        %5192 = vmatprep.subr.mxu0 0.0
        %5193 = vmatpush1.msra.mxu0 0.0
        %5194 = vmatprep.subr.mxu0 0.0
        %5195 = vmatpush1.msra.mxu0 0.0
        %5196 = vmatprep.subr.mxu0 0.0
        %5197 = vmatpush1.msra.mxu0 0.0
        %5198 = vmatprep.subr.mxu0 0.0
        %5199 = vmatpush1.msra.mxu0 0.0
        %5200 = vmatprep.subr.mxu0 0.0
        %5201 = vmatpush1.msra.mxu0 0.0
        %5202 = vmatprep.subr.mxu0 0.0
        %5203 = vmatpush1.msra.mxu0 0.0
        %5204 = vmatprep.subr.mxu0 0.0
        %5205 = vmatpush1.msra.mxu0 0.0
        %5206 = vmatprep.subr.mxu0 0.0
        %5207 = vmatpush1.msra.mxu0 0.0
        %5208 = vmatprep.subr.mxu0 0.0
        %5209 = vmatpush1.msra.mxu0 0.0
        %5210 = vmatprep.subr.mxu0 0.0
        %5211 = vmatpush1.msra.mxu0 0.0
        %5212 = vmatprep.subr.mxu0 0.0
        %5213 = vmatpush1.msra.mxu0 0.0
        %5214 = vmatprep.mubr.f32.mxu0 0.0
        %5215 = vmatmul.mubr.f32.gmra.mrb[0].mxu0 %v5145
        %v5216 = vpop.f32.mrb[0].mxu0
        %v5217 = vadd.f32 0.0, %v5216
        %v5218 = vpop.f32.mrb[0].mxu0
        %5219 = vdwg.mxu0
        %v5220 = vsel %vm1392, %v4848, 0
        %v5223 = vsel %vm1395, %v4980, 0
        %5225 = vmatprep.subr.mxu0 0.0
        %5226 = vmatpush1.msra.mxu0 %v4979
        %5227 = vmatprep.subr.mxu0 0.0
        %5228 = vmatpush1.msra.mxu0 %v5223
        %5229 = vmatprep.subr.mxu0 0.0
        %5230 = vmatpush1.msra.mxu0 0.0
        %5231 = vmatprep.subr.mxu0 0.0
        %5232 = vmatpush1.msra.mxu0 0.0
        %5233 = vmatprep.subr.mxu0 0.0
        %5234 = vmatpush1.msra.mxu0 0.0
        %5235 = vmatprep.subr.mxu0 0.0
        %5236 = vmatpush1.msra.mxu0 0.0
        %5237 = vmatprep.subr.mxu0 0.0
        %5238 = vmatpush1.msra.mxu0 0.0
        %5239 = vmatprep.subr.mxu0 0.0
        %5240 = vmatpush1.msra.mxu0 0.0
        %5241 = vmatprep.subr.mxu0 0.0
        %5242 = vmatpush1.msra.mxu0 0.0
        %5243 = vmatprep.subr.mxu0 0.0
        %5244 = vmatpush1.msra.mxu0 0.0
        %5245 = vmatprep.subr.mxu0 0.0
        %5246 = vmatpush1.msra.mxu0 0.0
        %5247 = vmatprep.subr.mxu0 0.0
        %5248 = vmatpush1.msra.mxu0 0.0
        %5249 = vmatprep.subr.mxu0 0.0
        %5250 = vmatpush1.msra.mxu0 0.0
        %5251 = vmatprep.subr.mxu0 0.0
        %5252 = vmatpush1.msra.mxu0 0.0
        %5253 = vmatprep.subr.mxu0 0.0
        %5254 = vmatpush1.msra.mxu0 0.0
        %5255 = vmatprep.subr.mxu0 0.0
        %5256 = vmatpush1.msra.mxu0 0.0
        %5257 = vmatprep.subr.mxu0 0.0
        %5258 = vmatpush1.msra.mxu0 0.0
        %5259 = vmatprep.subr.mxu0 0.0
        %5260 = vmatpush1.msra.mxu0 0.0
        %5261 = vmatprep.subr.mxu0 0.0
        %5262 = vmatpush1.msra.mxu0 0.0
        %5263 = vmatprep.subr.mxu0 0.0
        %5264 = vmatpush1.msra.mxu0 0.0
        %5265 = vmatprep.subr.mxu0 0.0
        %5266 = vmatpush1.msra.mxu0 0.0
        %5267 = vmatprep.subr.mxu0 0.0
        %5268 = vmatpush1.msra.mxu0 0.0
        %5269 = vmatprep.subr.mxu0 0.0
        %5270 = vmatpush1.msra.mxu0 0.0
        %5271 = vmatprep.subr.mxu0 0.0
        %5272 = vmatpush1.msra.mxu0 0.0
        %5273 = vmatprep.subr.mxu0 0.0
        %5274 = vmatpush1.msra.mxu0 0.0
        %5275 = vmatprep.subr.mxu0 0.0
        %5276 = vmatpush1.msra.mxu0 0.0
        %5277 = vmatprep.subr.mxu0 0.0
        %5278 = vmatpush1.msra.mxu0 0.0
        %5279 = vmatprep.subr.mxu0 0.0
        %5280 = vmatpush1.msra.mxu0 0.0
        %5281 = vmatprep.subr.mxu0 0.0
        %5282 = vmatpush1.msra.mxu0 0.0
        %5283 = vmatprep.subr.mxu0 0.0
        %5284 = vmatpush1.msra.mxu0 0.0
        %5285 = vmatprep.subr.mxu0 0.0
        %5286 = vmatpush1.msra.mxu0 0.0
        %5287 = vmatprep.subr.mxu0 0.0
        %5288 = vmatpush1.msra.mxu0 0.0
        %5289 = vmatprep.mubr.f32.mxu0 0.0
        %5290 = vmatmul.mubr.f32.gmra.mrb[0].mxu0 %v5220
        %v5291 = vpop.f32.mrb[0].mxu0
        %v5292 = vadd.f32 0.0, %v5291
        %v5293 = vpop.f32.mrb[0].mxu0
        %5294 = vdwg.mxu0
        %v5295 = vmul.f32 %v5067, 0.28867513
        %v5296 = vmul.f32 %v5142, 0.28867513
        %v5297 = vmul.f32 %v5217, 0.28867513
        %v5298 = vmul.f32 %v5292, 0.28867513
        %v5299 = vadd.f32 %v5295, %v1702
        %v5300 = vadd.f32 %v5296, %v1702
        %v5301 = vadd.f32 %v5297, %v1702
        %v5302 = vadd.f32 %v5298, %v1702
        %v5303 = vsel %vm1708, %v5299, -inf
        %5304 = vmax.xlane.f32.xlu0 %v5303
        %v5305 = vpop.xlane.xlu0 %5304
        %v5306 = vsel %vm1708, %v5300, -inf
        %5307 = vmax.xlane.f32.xlu0 %v5306
        %v5308 = vpop.xlane.xlu0 %5307
        %v5309 = vsel %vm1708, %v5301, -inf
        %5310 = vmax.xlane.f32.xlu0 %v5309
        %v5311 = vpop.xlane.xlu0 %5310
        %v5312 = vsel %vm1708, %v5302, -inf
        %5313 = vmax.xlane.f32.xlu0 %v5312
        %v5314 = vpop.xlane.xlu0 %5313
        %v5315 = vsub.f32 %v5299, %v5305
        %v5316 = vsub.f32 %v5300, %v5308
        %v5317 = vsub.f32 %v5301, %v5311
        %v5318 = vsub.f32 %v5302, %v5314
        %v5319 = vmul.f32 %v5315, 1.442695
        %v5320 = vpow.pop %v5319
        %v5321 = vmul.f32 %v5316, 1.442695
        %v5322 = vpow.pop %v5321
        %v5323 = vmul.f32 %v5317, 1.442695
        %v5324 = vpow.pop %v5323
        %v5325 = vmul.f32 %v5318, 1.442695
        %v5326 = vpow.pop %v5325
        %v5327 = vsel %vm1708, %v5320, 0.0
        %5328 = vadd.xlane.f32.xlu0 %v5327
        %v5329 = vpop.xlane.xlu0 %5328
        %v5330 = vsel %vm1708, %v5322, 0.0
        %5331 = vadd.xlane.f32.xlu0 %v5330
        %v5332 = vpop.xlane.xlu0 %5331
        %v5333 = vsel %vm1708, %v5324, 0.0
        %5334 = vadd.xlane.f32.xlu0 %v5333
        %v5335 = vpop.xlane.xlu0 %5334
        %v5336 = vsel %vm1708, %v5326, 0.0
        %5337 = vadd.xlane.f32.xlu0 %v5336
        %v5338 = vpop.xlane.xlu0 %5337
        %v5339 = vrcp.pop %v5329
        %v5340 = vrcp.pop %v5332
        %v5341 = vrcp.pop %v5335
        %v5342 = vrcp.pop %v5338
        %v5343 = vmul.f32 %v5320, %v5339
        %v5344 = vmul.f32 %v5322, %v5340
        %v5345 = vmul.f32 %v5324, %v5341
        %v5346 = vmul.f32 %v5326, %v5342
        %5347 = vrot.lane.b32.xlu0 %v4838, 32
        %v5348 = vpop.permute.xlu0 %5347
        %5349 = vrot.lane.b32.xlu0 %v4844, 32
        %v5350 = vpop.permute.xlu0 %5349
        %5351 = vrot.lane.b32.xlu0 %v4852, 32
        %v5352 = vpop.permute.xlu0 %5351
        %5353 = vrot.lane.b32.xlu0 %v4854, 32
        %v5354 = vpop.permute.xlu0 %5353
        %5359 = vxpose.xlu0.b32.start [1/16] %v5348, 128
        %5360 = vxpose.xlu0.b32.cont [2/16] 0.0, 128
        %5361 = vxpose.xlu0.b32.cont [3/16] 0.0, 128
        %5362 = vxpose.xlu0.b32.cont [4/16] 0.0, 128
        %5363 = vxpose.xlu0.b32.cont [5/16] 0.0, 128
        %5364 = vxpose.xlu0.b32.cont [6/16] 0.0, 128
        %5365 = vxpose.xlu0.b32.cont [7/16] 0.0, 128
        %5366 = vxpose.xlu0.b32.cont [8/16] 0.0, 128
        %5367 = vxpose.xlu0.b32.cont [9/16] 0.0, 128
        %5368 = vxpose.xlu0.b32.cont [10/16] 0.0, 128
        %5369 = vxpose.xlu0.b32.cont [11/16] 0.0, 128
        %5370 = vxpose.xlu0.b32.cont [12/16] 0.0, 128
        %5371 = vxpose.xlu0.b32.cont [13/16] 0.0, 128
        %5372 = vxpose.xlu0.b32.cont [14/16] 0.0, 128
        %5373 = vxpose.xlu0.b32.cont [15/16] 0.0, 128
        %5374 = vxpose.xlu0.b32.end [16/16] 0.0, 128
        %v5375 = vpop.trf.xlu0
        %v5376 = vpop.trf.xlu0
        %v5377 = vpop.trf.xlu0
        %v5378 = vpop.trf.xlu0
        %v5379 = vpop.trf.xlu0
        %v5380 = vpop.trf.xlu0
        %v5381 = vpop.trf.xlu0
        %v5382 = vpop.trf.xlu0
        %v5383 = vpop.trf.xlu0
        %v5384 = vpop.trf.xlu0
        %v5385 = vpop.trf.xlu0
        %v5386 = vpop.trf.xlu0
        %v5387 = vpop.trf.xlu0
        %v5388 = vpop.trf.xlu0
        %v5389 = vpop.trf.xlu0
        %v5390 = vpop.trf.xlu0
        %5391 = vxpose.xlu0.b32.start [1/16] %v5350, 128
        %5392 = vxpose.xlu0.b32.cont [2/16] 0.0, 128
        %5393 = vxpose.xlu0.b32.cont [3/16] 0.0, 128
        %5394 = vxpose.xlu0.b32.cont [4/16] 0.0, 128
        %5395 = vxpose.xlu0.b32.cont [5/16] 0.0, 128
        %5396 = vxpose.xlu0.b32.cont [6/16] 0.0, 128
        %5397 = vxpose.xlu0.b32.cont [7/16] 0.0, 128
        %5398 = vxpose.xlu0.b32.cont [8/16] 0.0, 128
        %5399 = vxpose.xlu0.b32.cont [9/16] 0.0, 128
        %5400 = vxpose.xlu0.b32.cont [10/16] 0.0, 128
        %5401 = vxpose.xlu0.b32.cont [11/16] 0.0, 128
        %5402 = vxpose.xlu0.b32.cont [12/16] 0.0, 128
        %5403 = vxpose.xlu0.b32.cont [13/16] 0.0, 128
        %5404 = vxpose.xlu0.b32.cont [14/16] 0.0, 128
        %5405 = vxpose.xlu0.b32.cont [15/16] 0.0, 128
        %5406 = vxpose.xlu0.b32.end [16/16] 0.0, 128
        %v5407 = vpop.trf.xlu0
        %v5408 = vpop.trf.xlu0
        %v5409 = vpop.trf.xlu0
        %v5410 = vpop.trf.xlu0
        %v5411 = vpop.trf.xlu0
        %v5412 = vpop.trf.xlu0
        %v5413 = vpop.trf.xlu0
        %v5414 = vpop.trf.xlu0
        %v5415 = vpop.trf.xlu0
        %v5416 = vpop.trf.xlu0
        %v5417 = vpop.trf.xlu0
        %v5418 = vpop.trf.xlu0
        %v5419 = vpop.trf.xlu0
        %v5420 = vpop.trf.xlu0
        %v5421 = vpop.trf.xlu0
        %v5422 = vpop.trf.xlu0
        %5423 = vxpose.xlu0.b32.start [1/16] %v5352, 128
        %5424 = vxpose.xlu0.b32.cont [2/16] 0.0, 128
        %5425 = vxpose.xlu0.b32.cont [3/16] 0.0, 128
        %5426 = vxpose.xlu0.b32.cont [4/16] 0.0, 128
        %5427 = vxpose.xlu0.b32.cont [5/16] 0.0, 128
        %5428 = vxpose.xlu0.b32.cont [6/16] 0.0, 128
        %5429 = vxpose.xlu0.b32.cont [7/16] 0.0, 128
        %5430 = vxpose.xlu0.b32.cont [8/16] 0.0, 128
        %5431 = vxpose.xlu0.b32.cont [9/16] 0.0, 128
        %5432 = vxpose.xlu0.b32.cont [10/16] 0.0, 128
        %5433 = vxpose.xlu0.b32.cont [11/16] 0.0, 128
        %5434 = vxpose.xlu0.b32.cont [12/16] 0.0, 128
        %5435 = vxpose.xlu0.b32.cont [13/16] 0.0, 128
        %5436 = vxpose.xlu0.b32.cont [14/16] 0.0, 128
        %5437 = vxpose.xlu0.b32.cont [15/16] 0.0, 128
        %5438 = vxpose.xlu0.b32.end [16/16] 0.0, 128
        %v5439 = vpop.trf.xlu0
        %v5440 = vpop.trf.xlu0
        %v5441 = vpop.trf.xlu0
        %v5442 = vpop.trf.xlu0
        %v5443 = vpop.trf.xlu0
        %v5444 = vpop.trf.xlu0
        %v5445 = vpop.trf.xlu0
        %v5446 = vpop.trf.xlu0
        %v5447 = vpop.trf.xlu0
        %v5448 = vpop.trf.xlu0
        %v5449 = vpop.trf.xlu0
        %v5450 = vpop.trf.xlu0
        %v5451 = vpop.trf.xlu0
        %v5452 = vpop.trf.xlu0
        %v5453 = vpop.trf.xlu0
        %v5454 = vpop.trf.xlu0
        %5455 = vxpose.xlu0.b32.start [1/16] %v5354, 128
        %5456 = vxpose.xlu0.b32.cont [2/16] 0.0, 128
        %5457 = vxpose.xlu0.b32.cont [3/16] 0.0, 128
        %5458 = vxpose.xlu0.b32.cont [4/16] 0.0, 128
        %5459 = vxpose.xlu0.b32.cont [5/16] 0.0, 128
        %5460 = vxpose.xlu0.b32.cont [6/16] 0.0, 128
        %5461 = vxpose.xlu0.b32.cont [7/16] 0.0, 128
        %5462 = vxpose.xlu0.b32.cont [8/16] 0.0, 128
        %5463 = vxpose.xlu0.b32.cont [9/16] 0.0, 128
        %5464 = vxpose.xlu0.b32.cont [10/16] 0.0, 128
        %5465 = vxpose.xlu0.b32.cont [11/16] 0.0, 128
        %5466 = vxpose.xlu0.b32.cont [12/16] 0.0, 128
        %5467 = vxpose.xlu0.b32.cont [13/16] 0.0, 128
        %5468 = vxpose.xlu0.b32.cont [14/16] 0.0, 128
        %5469 = vxpose.xlu0.b32.cont [15/16] 0.0, 128
        %5470 = vxpose.xlu0.b32.end [16/16] 0.0, 128
        %v5471 = vpop.trf.xlu0
        %v5472 = vpop.trf.xlu0
        %v5473 = vpop.trf.xlu0
        %v5474 = vpop.trf.xlu0
        %v5475 = vpop.trf.xlu0
        %v5476 = vpop.trf.xlu0
        %v5477 = vpop.trf.xlu0
        %v5478 = vpop.trf.xlu0
        %v5479 = vpop.trf.xlu0
        %v5480 = vpop.trf.xlu0
        %v5481 = vpop.trf.xlu0
        %v5482 = vpop.trf.xlu0
        %v5483 = vpop.trf.xlu0
        %v5484 = vpop.trf.xlu0
        %v5485 = vpop.trf.xlu0
        %v5486 = vpop.trf.xlu0
        %v5488 = vsel %vm1708, %v5375, 0
        %v5491 = vsel %vm1708, %v5376, 0
        %v5494 = vsel %vm1708, %v5343, 0
        %5496 = vmatprep.subr.mxu0 0.0
        %5497 = vmatpush1.xpose.msra.mxu0 %v5494
        %5498 = vmatprep.subr.mxu0 0.0
        %5499 = vmatpush1.xpose.msra.mxu0 0.0
        %5500 = vmatprep.subr.mxu0 0.0
        %5501 = vmatpush1.xpose.msra.mxu0 0.0
        %5502 = vmatprep.subr.mxu0 0.0
        %5503 = vmatpush1.xpose.msra.mxu0 0.0
        %5504 = vmatprep.subr.mxu0 0.0
        %5505 = vmatpush1.xpose.msra.mxu0 0.0
        %5506 = vmatprep.subr.mxu0 0.0
        %5507 = vmatpush1.xpose.msra.mxu0 0.0
        %5508 = vmatprep.subr.mxu0 0.0
        %5509 = vmatpush1.xpose.msra.mxu0 0.0
        %5510 = vmatprep.subr.mxu0 0.0
        %5511 = vmatpush1.xpose.msra.mxu0 0.0
        %5512 = vmatprep.subr.mxu0 0.0
        %5513 = vmatpush1.xpose.msra.mxu0 0.0
        %5514 = vmatprep.subr.mxu0 0.0
        %5515 = vmatpush1.xpose.msra.mxu0 0.0
        %5516 = vmatprep.subr.mxu0 0.0
        %5517 = vmatpush1.xpose.msra.mxu0 0.0
        %5518 = vmatprep.subr.mxu0 0.0
        %5519 = vmatpush1.xpose.msra.mxu0 0.0
        %5520 = vmatprep.subr.mxu0 0.0
        %5521 = vmatpush1.xpose.msra.mxu0 0.0
        %5522 = vmatprep.subr.mxu0 0.0
        %5523 = vmatpush1.xpose.msra.mxu0 0.0
        %5524 = vmatprep.subr.mxu0 0.0
        %5525 = vmatpush1.xpose.msra.mxu0 0.0
        %5526 = vmatprep.subr.mxu0 0.0
        %5527 = vmatpush1.xpose.msra.mxu0 0.0
        %5528 = vmatprep.subr.mxu0 0.0
        %5529 = vmatpush1.xpose.msra.mxu0 0.0
        %5530 = vmatprep.subr.mxu0 0.0
        %5531 = vmatpush1.xpose.msra.mxu0 0.0
        %5532 = vmatprep.subr.mxu0 0.0
        %5533 = vmatpush1.xpose.msra.mxu0 0.0
        %5534 = vmatprep.subr.mxu0 0.0
        %5535 = vmatpush1.xpose.msra.mxu0 0.0
        %5536 = vmatprep.subr.mxu0 0.0
        %5537 = vmatpush1.xpose.msra.mxu0 0.0
        %5538 = vmatprep.subr.mxu0 0.0
        %5539 = vmatpush1.xpose.msra.mxu0 0.0
        %5540 = vmatprep.subr.mxu0 0.0
        %5541 = vmatpush1.xpose.msra.mxu0 0.0
        %5542 = vmatprep.subr.mxu0 0.0
        %5543 = vmatpush1.xpose.msra.mxu0 0.0
        %5544 = vmatprep.subr.mxu0 0.0
        %5545 = vmatpush1.xpose.msra.mxu0 0.0
        %5546 = vmatprep.subr.mxu0 0.0
        %5547 = vmatpush1.xpose.msra.mxu0 0.0
        %5548 = vmatprep.subr.mxu0 0.0
        %5549 = vmatpush1.xpose.msra.mxu0 0.0
        %5550 = vmatprep.subr.mxu0 0.0
        %5551 = vmatpush1.xpose.msra.mxu0 0.0
        %5552 = vmatprep.subr.mxu0 0.0
        %5553 = vmatpush1.xpose.msra.mxu0 0.0
        %5554 = vmatprep.subr.mxu0 0.0
        %5555 = vmatpush1.xpose.msra.mxu0 0.0
        %5556 = vmatprep.subr.mxu0 0.0
        %5557 = vmatpush1.xpose.msra.mxu0 0.0
        %5558 = vmatprep.subr.mxu0 0.0
        %5559 = vmatpush1.xpose.msra.mxu0 0.0
        %5560 = vmatprep.mubr.f32.mxu0 0.0
        %5561 = vmatmul.mubr.f32.gmra.mrb[0].mxu0 %v5488
        %v5562 = vpop.f32.mrb[0].mxu0
        %v5563 = vadd.f32 0.0, %v5562
        %v5564 = vpop.f32.mrb[0].mxu0
        %5565 = vmatprep.mubr.f32.mxu0 0.0
        %5566 = vmatmul.mubr.f32.gmra.mrb[0].mxu0 %v5491
        %v5567 = vpop.f32.mrb[0].mxu0
        %v5568 = vadd.f32 0.0, %v5567
        %v5569 = vpop.f32.mrb[0].mxu0
        %5570 = vdwg.mxu0
        %v5572 = vsel %vm1708, %v5407, 0
        %v5575 = vsel %vm1708, %v5408, 0
        %v5578 = vsel %vm1708, %v5344, 0
        %5580 = vmatprep.subr.mxu0 0.0
        %5581 = vmatpush1.xpose.msra.mxu0 %v5578
        %5582 = vmatprep.subr.mxu0 0.0
        %5583 = vmatpush1.xpose.msra.mxu0 0.0
        %5584 = vmatprep.subr.mxu0 0.0
        %5585 = vmatpush1.xpose.msra.mxu0 0.0
        %5586 = vmatprep.subr.mxu0 0.0
        %5587 = vmatpush1.xpose.msra.mxu0 0.0
        %5588 = vmatprep.subr.mxu0 0.0
        %5589 = vmatpush1.xpose.msra.mxu0 0.0
        %5590 = vmatprep.subr.mxu0 0.0
        %5591 = vmatpush1.xpose.msra.mxu0 0.0
        %5592 = vmatprep.subr.mxu0 0.0
        %5593 = vmatpush1.xpose.msra.mxu0 0.0
        %5594 = vmatprep.subr.mxu0 0.0
        %5595 = vmatpush1.xpose.msra.mxu0 0.0
        %5596 = vmatprep.subr.mxu0 0.0
        %5597 = vmatpush1.xpose.msra.mxu0 0.0
        %5598 = vmatprep.subr.mxu0 0.0
        %5599 = vmatpush1.xpose.msra.mxu0 0.0
        %5600 = vmatprep.subr.mxu0 0.0
        %5601 = vmatpush1.xpose.msra.mxu0 0.0
        %5602 = vmatprep.subr.mxu0 0.0
        %5603 = vmatpush1.xpose.msra.mxu0 0.0
        %5604 = vmatprep.subr.mxu0 0.0
        %5605 = vmatpush1.xpose.msra.mxu0 0.0
        %5606 = vmatprep.subr.mxu0 0.0
        %5607 = vmatpush1.xpose.msra.mxu0 0.0
        %5608 = vmatprep.subr.mxu0 0.0
        %5609 = vmatpush1.xpose.msra.mxu0 0.0
        %5610 = vmatprep.subr.mxu0 0.0
        %5611 = vmatpush1.xpose.msra.mxu0 0.0
        %5612 = vmatprep.subr.mxu0 0.0
        %5613 = vmatpush1.xpose.msra.mxu0 0.0
        %5614 = vmatprep.subr.mxu0 0.0
        %5615 = vmatpush1.xpose.msra.mxu0 0.0
        %5616 = vmatprep.subr.mxu0 0.0
        %5617 = vmatpush1.xpose.msra.mxu0 0.0
        %5618 = vmatprep.subr.mxu0 0.0
        %5619 = vmatpush1.xpose.msra.mxu0 0.0
        %5620 = vmatprep.subr.mxu0 0.0
        %5621 = vmatpush1.xpose.msra.mxu0 0.0
        %5622 = vmatprep.subr.mxu0 0.0
        %5623 = vmatpush1.xpose.msra.mxu0 0.0
        %5624 = vmatprep.subr.mxu0 0.0
        %5625 = vmatpush1.xpose.msra.mxu0 0.0
        %5626 = vmatprep.subr.mxu0 0.0
        %5627 = vmatpush1.xpose.msra.mxu0 0.0
        %5628 = vmatprep.subr.mxu0 0.0
        %5629 = vmatpush1.xpose.msra.mxu0 0.0
        %5630 = vmatprep.subr.mxu0 0.0
        %5631 = vmatpush1.xpose.msra.mxu0 0.0
        %5632 = vmatprep.subr.mxu0 0.0
        %5633 = vmatpush1.xpose.msra.mxu0 0.0
        %5634 = vmatprep.subr.mxu0 0.0
        %5635 = vmatpush1.xpose.msra.mxu0 0.0
        %5636 = vmatprep.subr.mxu0 0.0
        %5637 = vmatpush1.xpose.msra.mxu0 0.0
        %5638 = vmatprep.subr.mxu0 0.0
        %5639 = vmatpush1.xpose.msra.mxu0 0.0
        %5640 = vmatprep.subr.mxu0 0.0
        %5641 = vmatpush1.xpose.msra.mxu0 0.0
        %5642 = vmatprep.subr.mxu0 0.0
        %5643 = vmatpush1.xpose.msra.mxu0 0.0
        %5644 = vmatprep.mubr.f32.mxu0 0.0
        %5645 = vmatmul.mubr.f32.gmra.mrb[0].mxu0 %v5572
        %v5646 = vpop.f32.mrb[0].mxu0
        %v5647 = vadd.f32 0.0, %v5646
        %v5648 = vpop.f32.mrb[0].mxu0
        %5649 = vmatprep.mubr.f32.mxu0 0.0
        %5650 = vmatmul.mubr.f32.gmra.mrb[0].mxu0 %v5575
        %v5651 = vpop.f32.mrb[0].mxu0
        %v5652 = vadd.f32 0.0, %v5651
        %v5653 = vpop.f32.mrb[0].mxu0
        %5654 = vdwg.mxu0
        %v5656 = vsel %vm1708, %v5439, 0
        %v5659 = vsel %vm1708, %v5440, 0
        %v5662 = vsel %vm1708, %v5345, 0
        %5664 = vmatprep.subr.mxu0 0.0
        %5665 = vmatpush1.xpose.msra.mxu0 %v5662
        %5666 = vmatprep.subr.mxu0 0.0
        %5667 = vmatpush1.xpose.msra.mxu0 0.0
        %5668 = vmatprep.subr.mxu0 0.0
        %5669 = vmatpush1.xpose.msra.mxu0 0.0
        %5670 = vmatprep.subr.mxu0 0.0
        %5671 = vmatpush1.xpose.msra.mxu0 0.0
        %5672 = vmatprep.subr.mxu0 0.0
        %5673 = vmatpush1.xpose.msra.mxu0 0.0
        %5674 = vmatprep.subr.mxu0 0.0
        %5675 = vmatpush1.xpose.msra.mxu0 0.0
        %5676 = vmatprep.subr.mxu0 0.0
        %5677 = vmatpush1.xpose.msra.mxu0 0.0
        %5678 = vmatprep.subr.mxu0 0.0
        %5679 = vmatpush1.xpose.msra.mxu0 0.0
        %5680 = vmatprep.subr.mxu0 0.0
        %5681 = vmatpush1.xpose.msra.mxu0 0.0
        %5682 = vmatprep.subr.mxu0 0.0
        %5683 = vmatpush1.xpose.msra.mxu0 0.0
        %5684 = vmatprep.subr.mxu0 0.0
        %5685 = vmatpush1.xpose.msra.mxu0 0.0
        %5686 = vmatprep.subr.mxu0 0.0
        %5687 = vmatpush1.xpose.msra.mxu0 0.0
        %5688 = vmatprep.subr.mxu0 0.0
        %5689 = vmatpush1.xpose.msra.mxu0 0.0
        %5690 = vmatprep.subr.mxu0 0.0
        %5691 = vmatpush1.xpose.msra.mxu0 0.0
        %5692 = vmatprep.subr.mxu0 0.0
        %5693 = vmatpush1.xpose.msra.mxu0 0.0
        %5694 = vmatprep.subr.mxu0 0.0
        %5695 = vmatpush1.xpose.msra.mxu0 0.0
        %5696 = vmatprep.subr.mxu0 0.0
        %5697 = vmatpush1.xpose.msra.mxu0 0.0
        %5698 = vmatprep.subr.mxu0 0.0
        %5699 = vmatpush1.xpose.msra.mxu0 0.0
        %5700 = vmatprep.subr.mxu0 0.0
        %5701 = vmatpush1.xpose.msra.mxu0 0.0
        %5702 = vmatprep.subr.mxu0 0.0
        %5703 = vmatpush1.xpose.msra.mxu0 0.0
        %5704 = vmatprep.subr.mxu0 0.0
        %5705 = vmatpush1.xpose.msra.mxu0 0.0
        %5706 = vmatprep.subr.mxu0 0.0
        %5707 = vmatpush1.xpose.msra.mxu0 0.0
        %5708 = vmatprep.subr.mxu0 0.0
        %5709 = vmatpush1.xpose.msra.mxu0 0.0
        %5710 = vmatprep.subr.mxu0 0.0
        %5711 = vmatpush1.xpose.msra.mxu0 0.0
        %5712 = vmatprep.subr.mxu0 0.0
        %5713 = vmatpush1.xpose.msra.mxu0 0.0
        %5714 = vmatprep.subr.mxu0 0.0
        %5715 = vmatpush1.xpose.msra.mxu0 0.0
        %5716 = vmatprep.subr.mxu0 0.0
        %5717 = vmatpush1.xpose.msra.mxu0 0.0
        %5718 = vmatprep.subr.mxu0 0.0
        %5719 = vmatpush1.xpose.msra.mxu0 0.0
        %5720 = vmatprep.subr.mxu0 0.0
        %5721 = vmatpush1.xpose.msra.mxu0 0.0
        %5722 = vmatprep.subr.mxu0 0.0
        %5723 = vmatpush1.xpose.msra.mxu0 0.0
        %5724 = vmatprep.subr.mxu0 0.0
        %5725 = vmatpush1.xpose.msra.mxu0 0.0
        %5726 = vmatprep.subr.mxu0 0.0
        %5727 = vmatpush1.xpose.msra.mxu0 0.0
        %5728 = vmatprep.mubr.f32.mxu0 0.0
        %5729 = vmatmul.mubr.f32.gmra.mrb[0].mxu0 %v5656
        %v5730 = vpop.f32.mrb[0].mxu0
        %v5731 = vadd.f32 0.0, %v5730
        %v5732 = vpop.f32.mrb[0].mxu0
        %5733 = vmatprep.mubr.f32.mxu0 0.0
        %5734 = vmatmul.mubr.f32.gmra.mrb[0].mxu0 %v5659
        %v5735 = vpop.f32.mrb[0].mxu0
        %v5736 = vadd.f32 0.0, %v5735
        %v5737 = vpop.f32.mrb[0].mxu0
        %5738 = vdwg.mxu0
        %v5740 = vsel %vm1708, %v5471, 0
        %v5743 = vsel %vm1708, %v5472, 0
        %v5746 = vsel %vm1708, %v5346, 0
        %5748 = vmatprep.subr.mxu0 0.0
        %5749 = vmatpush1.xpose.msra.mxu0 %v5746
        %5750 = vmatprep.subr.mxu0 0.0
        %5751 = vmatpush1.xpose.msra.mxu0 0.0
        %5752 = vmatprep.subr.mxu0 0.0
        %5753 = vmatpush1.xpose.msra.mxu0 0.0
        %5754 = vmatprep.subr.mxu0 0.0
        %5755 = vmatpush1.xpose.msra.mxu0 0.0
        %5756 = vmatprep.subr.mxu0 0.0
        %5757 = vmatpush1.xpose.msra.mxu0 0.0
        %5758 = vmatprep.subr.mxu0 0.0
        %5759 = vmatpush1.xpose.msra.mxu0 0.0
        %5760 = vmatprep.subr.mxu0 0.0
        %5761 = vmatpush1.xpose.msra.mxu0 0.0
        %5762 = vmatprep.subr.mxu0 0.0
        %5763 = vmatpush1.xpose.msra.mxu0 0.0
        %5764 = vmatprep.subr.mxu0 0.0
        %5765 = vmatpush1.xpose.msra.mxu0 0.0
        %5766 = vmatprep.subr.mxu0 0.0
        %5767 = vmatpush1.xpose.msra.mxu0 0.0
        %5768 = vmatprep.subr.mxu0 0.0
        %5769 = vmatpush1.xpose.msra.mxu0 0.0
        %5770 = vmatprep.subr.mxu0 0.0
        %5771 = vmatpush1.xpose.msra.mxu0 0.0
        %5772 = vmatprep.subr.mxu0 0.0
        %5773 = vmatpush1.xpose.msra.mxu0 0.0
        %5774 = vmatprep.subr.mxu0 0.0
        %5775 = vmatpush1.xpose.msra.mxu0 0.0
        %5776 = vmatprep.subr.mxu0 0.0
        %5777 = vmatpush1.xpose.msra.mxu0 0.0
        %5778 = vmatprep.subr.mxu0 0.0
        %5779 = vmatpush1.xpose.msra.mxu0 0.0
        %5780 = vmatprep.subr.mxu0 0.0
        %5781 = vmatpush1.xpose.msra.mxu0 0.0
        %5782 = vmatprep.subr.mxu0 0.0
        %5783 = vmatpush1.xpose.msra.mxu0 0.0
        %5784 = vmatprep.subr.mxu0 0.0
        %5785 = vmatpush1.xpose.msra.mxu0 0.0
        %5786 = vmatprep.subr.mxu0 0.0
        %5787 = vmatpush1.xpose.msra.mxu0 0.0
        %5788 = vmatprep.subr.mxu0 0.0
        %5789 = vmatpush1.xpose.msra.mxu0 0.0
        %5790 = vmatprep.subr.mxu0 0.0
        %5791 = vmatpush1.xpose.msra.mxu0 0.0
        %5792 = vmatprep.subr.mxu0 0.0
        %5793 = vmatpush1.xpose.msra.mxu0 0.0
        %5794 = vmatprep.subr.mxu0 0.0
        %5795 = vmatpush1.xpose.msra.mxu0 0.0
        %5796 = vmatprep.subr.mxu0 0.0
        %5797 = vmatpush1.xpose.msra.mxu0 0.0
        %5798 = vmatprep.subr.mxu0 0.0
        %5799 = vmatpush1.xpose.msra.mxu0 0.0
        %5800 = vmatprep.subr.mxu0 0.0
        %5801 = vmatpush1.xpose.msra.mxu0 0.0
        %5802 = vmatprep.subr.mxu0 0.0
        %5803 = vmatpush1.xpose.msra.mxu0 0.0
        %5804 = vmatprep.subr.mxu0 0.0
        %5805 = vmatpush1.xpose.msra.mxu0 0.0
        %5806 = vmatprep.subr.mxu0 0.0
        %5807 = vmatpush1.xpose.msra.mxu0 0.0
        %5808 = vmatprep.subr.mxu0 0.0
        %5809 = vmatpush1.xpose.msra.mxu0 0.0
        %5810 = vmatprep.subr.mxu0 0.0
        %5811 = vmatpush1.xpose.msra.mxu0 0.0
        %5812 = vmatprep.mubr.f32.mxu0 0.0
        %5813 = vmatmul.mubr.f32.gmra.mrb[0].mxu0 %v5740
        %v5814 = vpop.f32.mrb[0].mxu0
        %v5815 = vadd.f32 0.0, %v5814
        %v5816 = vpop.f32.mrb[0].mxu0
        %5817 = vmatprep.mubr.f32.mxu0 0.0
        %5818 = vmatmul.mubr.f32.gmra.mrb[0].mxu0 %v5743
        %v5819 = vpop.f32.mrb[0].mxu0
        %v5820 = vadd.f32 0.0, %v5819
        %v5821 = vpop.f32.mrb[0].mxu0
        %5822 = vdwg.mxu0
        %5823 = vxpose.xlu0.b32.start [1/16] %v5563, 128
        %5824 = vxpose.xlu0.b32.cont [2/16] %v5568, 128
        %5825 = vxpose.xlu0.b32.cont [3/16] 0.0, 128
        %5826 = vxpose.xlu0.b32.cont [4/16] 0.0, 128
        %5827 = vxpose.xlu0.b32.cont [5/16] 0.0, 128
        %5828 = vxpose.xlu0.b32.cont [6/16] 0.0, 128
        %5829 = vxpose.xlu0.b32.cont [7/16] 0.0, 128
        %5830 = vxpose.xlu0.b32.cont [8/16] 0.0, 128
        %5831 = vxpose.xlu0.b32.cont [9/16] 0.0, 128
        %5832 = vxpose.xlu0.b32.cont [10/16] 0.0, 128
        %5833 = vxpose.xlu0.b32.cont [11/16] 0.0, 128
        %5834 = vxpose.xlu0.b32.cont [12/16] 0.0, 128
        %5835 = vxpose.xlu0.b32.cont [13/16] 0.0, 128
        %5836 = vxpose.xlu0.b32.cont [14/16] 0.0, 128
        %5837 = vxpose.xlu0.b32.cont [15/16] 0.0, 128
        %5838 = vxpose.xlu0.b32.end [16/16] 0.0, 128
        %v5839 = vpop.trf.xlu0
        %v5840 = vpop.trf.xlu0
        %v5841 = vpop.trf.xlu0
        %v5842 = vpop.trf.xlu0
        %v5843 = vpop.trf.xlu0
        %v5844 = vpop.trf.xlu0
        %v5845 = vpop.trf.xlu0
        %v5846 = vpop.trf.xlu0
        %v5847 = vpop.trf.xlu0
        %v5848 = vpop.trf.xlu0
        %v5849 = vpop.trf.xlu0
        %v5850 = vpop.trf.xlu0
        %v5851 = vpop.trf.xlu0
        %v5852 = vpop.trf.xlu0
        %v5853 = vpop.trf.xlu0
        %v5854 = vpop.trf.xlu0
        %5855 = vxpose.xlu0.b32.start [1/16] %v5647, 128
        %5856 = vxpose.xlu0.b32.cont [2/16] %v5652, 128
        %5857 = vxpose.xlu0.b32.cont [3/16] 0.0, 128
        %5858 = vxpose.xlu0.b32.cont [4/16] 0.0, 128
        %5859 = vxpose.xlu0.b32.cont [5/16] 0.0, 128
        %5860 = vxpose.xlu0.b32.cont [6/16] 0.0, 128
        %5861 = vxpose.xlu0.b32.cont [7/16] 0.0, 128
        %5862 = vxpose.xlu0.b32.cont [8/16] 0.0, 128
        %5863 = vxpose.xlu0.b32.cont [9/16] 0.0, 128
        %5864 = vxpose.xlu0.b32.cont [10/16] 0.0, 128
        %5865 = vxpose.xlu0.b32.cont [11/16] 0.0, 128
        %5866 = vxpose.xlu0.b32.cont [12/16] 0.0, 128
        %5867 = vxpose.xlu0.b32.cont [13/16] 0.0, 128
        %5868 = vxpose.xlu0.b32.cont [14/16] 0.0, 128
        %5869 = vxpose.xlu0.b32.cont [15/16] 0.0, 128
        %5870 = vxpose.xlu0.b32.end [16/16] 0.0, 128
        %v5871 = vpop.trf.xlu0
        %v5872 = vpop.trf.xlu0
        %v5873 = vpop.trf.xlu0
        %v5874 = vpop.trf.xlu0
        %v5875 = vpop.trf.xlu0
        %v5876 = vpop.trf.xlu0
        %v5877 = vpop.trf.xlu0
        %v5878 = vpop.trf.xlu0
        %v5879 = vpop.trf.xlu0
        %v5880 = vpop.trf.xlu0
        %v5881 = vpop.trf.xlu0
        %v5882 = vpop.trf.xlu0
        %v5883 = vpop.trf.xlu0
        %v5884 = vpop.trf.xlu0
        %v5885 = vpop.trf.xlu0
        %v5886 = vpop.trf.xlu0
        %5887 = vxpose.xlu0.b32.start [1/16] %v5731, 128
        %5888 = vxpose.xlu0.b32.cont [2/16] %v5736, 128
        %5889 = vxpose.xlu0.b32.cont [3/16] 0.0, 128
        %5890 = vxpose.xlu0.b32.cont [4/16] 0.0, 128
        %5891 = vxpose.xlu0.b32.cont [5/16] 0.0, 128
        %5892 = vxpose.xlu0.b32.cont [6/16] 0.0, 128
        %5893 = vxpose.xlu0.b32.cont [7/16] 0.0, 128
        %5894 = vxpose.xlu0.b32.cont [8/16] 0.0, 128
        %5895 = vxpose.xlu0.b32.cont [9/16] 0.0, 128
        %5896 = vxpose.xlu0.b32.cont [10/16] 0.0, 128
        %5897 = vxpose.xlu0.b32.cont [11/16] 0.0, 128
        %5898 = vxpose.xlu0.b32.cont [12/16] 0.0, 128
        %5899 = vxpose.xlu0.b32.cont [13/16] 0.0, 128
        %5900 = vxpose.xlu0.b32.cont [14/16] 0.0, 128
        %5901 = vxpose.xlu0.b32.cont [15/16] 0.0, 128
        %5902 = vxpose.xlu0.b32.end [16/16] 0.0, 128
        %v5903 = vpop.trf.xlu0
        %v5904 = vpop.trf.xlu0
        %v5905 = vpop.trf.xlu0
        %v5906 = vpop.trf.xlu0
        %v5907 = vpop.trf.xlu0
        %v5908 = vpop.trf.xlu0
        %v5909 = vpop.trf.xlu0
        %v5910 = vpop.trf.xlu0
        %v5911 = vpop.trf.xlu0
        %v5912 = vpop.trf.xlu0
        %v5913 = vpop.trf.xlu0
        %v5914 = vpop.trf.xlu0
        %v5915 = vpop.trf.xlu0
        %v5916 = vpop.trf.xlu0
        %v5917 = vpop.trf.xlu0
        %v5918 = vpop.trf.xlu0
        %5919 = vxpose.xlu0.b32.start [1/16] %v5815, 128
        %5920 = vxpose.xlu0.b32.cont [2/16] %v5820, 128
        %5921 = vxpose.xlu0.b32.cont [3/16] 0.0, 128
        %5922 = vxpose.xlu0.b32.cont [4/16] 0.0, 128
        %5923 = vxpose.xlu0.b32.cont [5/16] 0.0, 128
        %5924 = vxpose.xlu0.b32.cont [6/16] 0.0, 128
        %5925 = vxpose.xlu0.b32.cont [7/16] 0.0, 128
        %5926 = vxpose.xlu0.b32.cont [8/16] 0.0, 128
        %5927 = vxpose.xlu0.b32.cont [9/16] 0.0, 128
        %5928 = vxpose.xlu0.b32.cont [10/16] 0.0, 128
        %5929 = vxpose.xlu0.b32.cont [11/16] 0.0, 128
        %5930 = vxpose.xlu0.b32.cont [12/16] 0.0, 128
        %5931 = vxpose.xlu0.b32.cont [13/16] 0.0, 128
        %5932 = vxpose.xlu0.b32.cont [14/16] 0.0, 128
        %5933 = vxpose.xlu0.b32.cont [15/16] 0.0, 128
        %5934 = vxpose.xlu0.b32.end [16/16] 0.0, 128
        %v5935 = vpop.trf.xlu0
        %v5936 = vpop.trf.xlu0
        %v5937 = vpop.trf.xlu0
        %v5938 = vpop.trf.xlu0
        %v5939 = vpop.trf.xlu0
        %v5940 = vpop.trf.xlu0
        %v5941 = vpop.trf.xlu0
        %v5942 = vpop.trf.xlu0
        %v5943 = vpop.trf.xlu0
        %v5944 = vpop.trf.xlu0
        %v5945 = vpop.trf.xlu0
        %v5946 = vpop.trf.xlu0
        %v5947 = vpop.trf.xlu0
        %v5948 = vpop.trf.xlu0
        %v5949 = vpop.trf.xlu0
        %v5950 = vpop.trf.xlu0
        %v5951 = vcombine.low %v5839, %v5903
        %v5952 = vcombine.high %v5839, %v5903
        %v5954 = vunpack.c.l.s4 1983009808
        %v5955 = vunpack.c.0.s8 %v5954
        %v5956 = vlaneseq
        %v5957 = vshrl.u32 %v5956, 7
        %v5958 = vsub.s32 %v5955, %v5957
        %v5959 = vrot.slane %v5951, %v5958
        %v5961 = vunpack.c.l.s4 1983009808
        %v5962 = vunpack.c.0.s8 %v5961
        %v5963 = vlaneseq
        %v5964 = vshrl.u32 %v5963, 7
        %v5965 = vsub.s32 %v5962, %v5964
        %v5966 = vrot.slane %v5952, %v5965
        %v5967 = vcombine.low %v5871, %v5935
        %v5968 = vcombine.high %v5871, %v5935
        %v5970 = vunpack.c.l.s4 1983009808
        %v5971 = vunpack.c.0.s8 %v5970
        %v5972 = vlaneseq
        %v5973 = vshrl.u32 %v5972, 7
        %v5974 = vsub.s32 %v5971, %v5973
        %v5975 = vrot.slane %v5967, %v5974
        %v5977 = vunpack.c.l.s4 1983009808
        %v5978 = vunpack.c.0.s8 %v5977
        %v5979 = vlaneseq
        %v5980 = vshrl.u32 %v5979, 7
        %v5981 = vsub.s32 %v5978, %v5980
        %v5982 = vrot.slane %v5968, %v5981
        %v5983 = vcombine.low %v5959, %v5975
        %v5984 = vcombine.high %v5959, %v5975
        %v5986 = vunpack.c.l.s4 1934713408
        %v5987 = vunpack.c.0.s8 %v5986
        %v5988 = vlaneseq
        %v5989 = vshrl.u32 %v5988, 7
        %v5990 = vsub.s32 %v5987, %v5989
        %v5991 = vrot.slane %v5983, %v5990
        %v5993 = vunpack.c.l.s4 1934713408
        %v5994 = vunpack.c.0.s8 %v5993
        %v5995 = vlaneseq
        %v5996 = vshrl.u32 %v5995, 7
        %v5997 = vsub.s32 %v5994, %v5996
        %v5998 = vrot.slane %v5984, %v5997
        %v5999 = vcombine.low %v5966, %v5982
        %v6000 = vcombine.high %v5966, %v5982
        %v6002 = vunpack.c.l.s4 1934713408
        %v6003 = vunpack.c.0.s8 %v6002
        %v6004 = vlaneseq
        %v6005 = vshrl.u32 %v6004, 7
        %v6006 = vsub.s32 %v6003, %v6005
        %v6007 = vrot.slane %v5999, %v6006
        %v6009 = vunpack.c.l.s4 1934713408
        %v6010 = vunpack.c.0.s8 %v6009
        %v6011 = vlaneseq
        %v6012 = vshrl.u32 %v6011, 7
        %v6013 = vsub.s32 %v6010, %v6012
        %v6014 = vrot.slane %v6000, %v6013
        %v6015 = vcombine.high %v5991, 0.0
        %v6016 = vcombine.high %v5998, 0.0
        %v6017 = vcombine.high %v6007, 0.0
        %v6018 = vcombine.high %v6014, 0.0
        %v6019 = vcombine.low %v5991, %v5998
        %v6021 = vunpack.c.l.s4 1983009808
        %v6022 = vunpack.c.0.s8 %v6021
        %v6023 = vlaneseq
        %v6024 = vshrl.u32 %v6023, 7
        %v6025 = vsub.s32 %v6022, %v6024
        %v6026 = vrot.slane %v6019, %v6025
        %v6027 = vcombine.low %v6015, %v6016
        %v6029 = vunpack.c.l.s4 1983009808
        %v6030 = vunpack.c.0.s8 %v6029
        %v6031 = vlaneseq
        %v6032 = vshrl.u32 %v6031, 7
        %v6033 = vsub.s32 %v6030, %v6032
        %v6034 = vrot.slane %v6027, %v6033
        %v6035 = vcombine.low %v6007, %v6014
        %v6037 = vunpack.c.l.s4 1983009808
        %v6038 = vunpack.c.0.s8 %v6037
        %v6039 = vlaneseq
        %v6040 = vshrl.u32 %v6039, 7
        %v6041 = vsub.s32 %v6038, %v6040
        %v6042 = vrot.slane %v6035, %v6041
        %v6043 = vcombine.low %v6017, %v6018
        %v6045 = vunpack.c.l.s4 1983009808
        %v6046 = vunpack.c.0.s8 %v6045
        %v6047 = vlaneseq
        %v6048 = vshrl.u32 %v6047, 7
        %v6049 = vsub.s32 %v6046, %v6048
        %v6050 = vrot.slane %v6043, %v6049
        %v6051 = vcombine.low %v6026, %v6034
        %v6052 = vcombine.high %v6026, %v6034
        %v6054 = vunpack.c.l.s4 1934713408
        %v6055 = vunpack.c.0.s8 %v6054
        %v6056 = vlaneseq
        %v6057 = vshrl.u32 %v6056, 7
        %v6058 = vsub.s32 %v6055, %v6057
        %v6059 = vrot.slane %v6051, %v6058
        %v6061 = vunpack.c.l.s4 1934713408
        %v6062 = vunpack.c.0.s8 %v6061
        %v6063 = vlaneseq
        %v6064 = vshrl.u32 %v6063, 7
        %v6065 = vsub.s32 %v6062, %v6064
        %v6066 = vrot.slane %v6052, %v6065
        %v6067 = vcombine.low %v6042, %v6050
        %v6068 = vcombine.high %v6042, %v6050
        %v6070 = vunpack.c.l.s4 1934713408
        %v6071 = vunpack.c.0.s8 %v6070
        %v6072 = vlaneseq
        %v6073 = vshrl.u32 %v6072, 7
        %v6074 = vsub.s32 %v6071, %v6073
        %v6075 = vrot.slane %v6067, %v6074
        %v6077 = vunpack.c.l.s4 1934713408
        %v6078 = vunpack.c.0.s8 %v6077
        %v6079 = vlaneseq
        %v6080 = vshrl.u32 %v6079, 7
        %v6081 = vsub.s32 %v6078, %v6080
        %v6082 = vrot.slane %v6068, %v6081
        %v6083 = vcombine.low %v6059, %v6075
        %v6084 = vcombine.high %v6059, %v6075
        %v6085 = vcombine.low %v6066, %v6082
        %v6086 = vcombine.high %v6066, %v6082
        %6088 = vrot.lane.b32.xlu0 %v6084, 12
        %v6089 = vpop.permute.xlu0 %6088
        %6092 = vrot.lane.b32.xlu0 %v6085, 24
        %v6093 = vpop.permute.xlu0 %6092
        %6096 = vrot.lane.b32.xlu0 %v6086, 36
        %v6097 = vpop.permute.xlu0 %6096
        %v6099 = vsel %vm1392, %v6083, %v6089
        %v6100 = vsel %vm2506, %v6099, %v6093
        %v6101 = vsel %vm2508, %v6100, %v6097
        %v6102 = vld [vmem:[%s39] sm:$0xff]
        %v6103 = vld [vmem:[%s39 + $0x8] sm:$0xff]
        %v6104 = vld [vmem:[%s39 + $0x10] sm:$0xff]
        %v6105 = vld [vmem:[%s39 + $0x18] sm:$0xff]
        %v6106 = vld [vmem:[%s39 + $0x20] sm:$0xff]
        %v6107 = vld [vmem:[%s39 + $0x28] sm:$0xff]
        %v6108 = vld [vmem:[%s41] sm:$0x1]
        %v6110 = vlaneseq
        %v6111 = vshrl.u32 %v6110, 7
        %v6112 = vsub.s32 0, %v6111
        %v6113 = vrot.slane %v6108, %v6112
        %v6116 = vsel %vm1163, %v6101, 0
        %6118 = vmatprep.subr.mxu0 0.0
        %6119 = vmatpush1.msra.mxu0 %v6102
        %6120 = vmatprep.subr.mxu0 0.0
        %6121 = vmatpush1.msra.mxu0 %v6103
        %6122 = vmatprep.subr.mxu0 0.0
        %6123 = vmatpush1.msra.mxu0 %v6104
        %6124 = vmatprep.subr.mxu0 0.0
        %6125 = vmatpush1.msra.mxu0 %v6105
        %6126 = vmatprep.subr.mxu0 0.0
        %6127 = vmatpush1.msra.mxu0 %v6106
        %6128 = vmatprep.subr.mxu0 0.0
        %6129 = vmatpush1.msra.mxu0 %v6107
        %6130 = vmatprep.subr.mxu0 0.0
        %6131 = vmatpush1.msra.mxu0 0.0
        %6132 = vmatprep.subr.mxu0 0.0
        %6133 = vmatpush1.msra.mxu0 0.0
        %6134 = vmatprep.subr.mxu0 0.0
        %6135 = vmatpush1.msra.mxu0 0.0
        %6136 = vmatprep.subr.mxu0 0.0
        %6137 = vmatpush1.msra.mxu0 0.0
        %6138 = vmatprep.subr.mxu0 0.0
        %6139 = vmatpush1.msra.mxu0 0.0
        %6140 = vmatprep.subr.mxu0 0.0
        %6141 = vmatpush1.msra.mxu0 0.0
        %6142 = vmatprep.subr.mxu0 0.0
        %6143 = vmatpush1.msra.mxu0 0.0
        %6144 = vmatprep.subr.mxu0 0.0
        %6145 = vmatpush1.msra.mxu0 0.0
        %6146 = vmatprep.subr.mxu0 0.0
        %6147 = vmatpush1.msra.mxu0 0.0
        %6148 = vmatprep.subr.mxu0 0.0
        %6149 = vmatpush1.msra.mxu0 0.0
        %6150 = vmatprep.subr.mxu0 0.0
        %6151 = vmatpush1.msra.mxu0 0.0
        %6152 = vmatprep.subr.mxu0 0.0
        %6153 = vmatpush1.msra.mxu0 0.0
        %6154 = vmatprep.subr.mxu0 0.0
        %6155 = vmatpush1.msra.mxu0 0.0
        %6156 = vmatprep.subr.mxu0 0.0
        %6157 = vmatpush1.msra.mxu0 0.0
        %6158 = vmatprep.subr.mxu0 0.0
        %6159 = vmatpush1.msra.mxu0 0.0
        %6160 = vmatprep.subr.mxu0 0.0
        %6161 = vmatpush1.msra.mxu0 0.0
        %6162 = vmatprep.subr.mxu0 0.0
        %6163 = vmatpush1.msra.mxu0 0.0
        %6164 = vmatprep.subr.mxu0 0.0
        %6165 = vmatpush1.msra.mxu0 0.0
        %6166 = vmatprep.subr.mxu0 0.0
        %6167 = vmatpush1.msra.mxu0 0.0
        %6168 = vmatprep.subr.mxu0 0.0
        %6169 = vmatpush1.msra.mxu0 0.0
        %6170 = vmatprep.subr.mxu0 0.0
        %6171 = vmatpush1.msra.mxu0 0.0
        %6172 = vmatprep.subr.mxu0 0.0
        %6173 = vmatpush1.msra.mxu0 0.0
        %6174 = vmatprep.subr.mxu0 0.0
        %6175 = vmatpush1.msra.mxu0 0.0
        %6176 = vmatprep.subr.mxu0 0.0
        %6177 = vmatpush1.msra.mxu0 0.0
        %6178 = vmatprep.subr.mxu0 0.0
        %6179 = vmatpush1.msra.mxu0 0.0
        %6180 = vmatprep.subr.mxu0 0.0
        %6181 = vmatpush1.msra.mxu0 0.0
        %6182 = vmatprep.mubr.f32.mxu0 0.0
        %6183 = vmatmul.mubr.f32.gmra.mrb[0].mxu0 %v6116
        %v6184 = vpop.f32.mrb[0].mxu0
        %v6185 = vadd.f32 %v6113, %v6184
        %v6186 = vpop.f32.mrb[0].mxu0
        %6187 = vdwg.mxu0
        %v6188 = vadd.f32 %v4743, %v6185
        %v6189 = vsel %vm1163, %v6188, 0.0
        %6190 = vadd.xlane.f32.xlu0 %v6189
        %v6191 = vpop.xlane.xlu0 %6190
        %v6192 = vmul.f32 %v6191, %v2600
        %v6193 = vsub.f32 %v6188, %v6192
        %v6194 = vmul.f32 %v6193, %v6193
        %v6195 = vsel %vm1163, %v6194, 0.0
        %6196 = vadd.xlane.f32.xlu0 %v6195
        %v6197 = vpop.xlane.xlu0 %6196
        %v6198 = vmul.f32 %v6197, %v2600
        %v6199 = vadd.f32 %v6198, 1e-05
        %v6200 = vrsqrt.pop %v6199
        %v6201 = vmul.f32 %v6193, %v6200
        %v6202 = vld [vmem:[%s43] sm:$0x1]
        %v6204 = vlaneseq
        %v6205 = vshrl.u32 %v6204, 7
        %v6206 = vsub.s32 0, %v6205
        %v6207 = vrot.slane %v6202, %v6206
        %v6209 = vmul.f32 %v6201, %v6207
        %v6210 = vld [vmem:[%s45] sm:$0x1]
        %v6212 = vlaneseq
        %v6213 = vshrl.u32 %v6212, 7
        %v6214 = vsub.s32 0, %v6213
        %v6215 = vrot.slane %v6210, %v6214
        %v6217 = vadd.f32 %v6209, %v6215
        %v6218 = vpack.c.bf16 %v6217, %v6217
        %v6219 = vld [vmem:[%s51] sm:$0xff]
        %v6220 = vld [vmem:[%s51 + $0x8] sm:$0xff]
        %v6221 = vld [vmem:[%s51 + $0x10] sm:$0xff]
        %v6222 = vld [vmem:[%s51 + $0x18] sm:$0xff]
        %v6223 = vld [vmem:[%s51 + $0x20] sm:$0xff]
        %v6224 = vld [vmem:[%s51 + $0x28] sm:$0xff]
        %v6225 = vld [vmem:[%s51 + $0x30] sm:$0xff]
        %v6226 = vld [vmem:[%s51 + $0x38] sm:$0xff]
        %v6227 = vld [vmem:[%s51 + $0x40] sm:$0xff]
        %v6228 = vld [vmem:[%s51 + $0x48] sm:$0xff]
        %v6229 = vld [vmem:[%s51 + $0x50] sm:$0xff]
        %v6230 = vld [vmem:[%s51 + $0x58] sm:$0xff]
        %v6231 = vld [vmem:[%s51 + $0x60] sm:$0xff]
        %v6232 = vld [vmem:[%s51 + $0x68] sm:$0xff]
        %v6233 = vld [vmem:[%s51 + $0x70] sm:$0xff]
        %v6234 = vld [vmem:[%s51 + $0x78] sm:$0xff]
        %v6235 = vld [vmem:[%s51 + $0x80] sm:$0xff]
        %v6236 = vld [vmem:[%s51 + $0x88] sm:$0xff]
        %v6237 = vld [vmem:[%s51 + $0x90] sm:$0xff]
        %v6238 = vld [vmem:[%s51 + $0x98] sm:$0xff]
        %v6239 = vld [vmem:[%s51 + $0xa0] sm:$0xff]
        %v6240 = vld [vmem:[%s51 + $0xa8] sm:$0xff]
        %v6241 = vld [vmem:[%s51 + $0xb0] sm:$0xff]
        %v6242 = vld [vmem:[%s51 + $0xb8] sm:$0xff]
        %v6243 = vld [vmem:[%s51 + $0xc0] sm:$0xff]
        %v6244 = vld [vmem:[%s51 + $0xc8] sm:$0xff]
        %v6245 = vld [vmem:[%s51 + $0xd0] sm:$0xff]
        %v6246 = vld [vmem:[%s51 + $0xd8] sm:$0xff]
        %v6247 = vld [vmem:[%s51 + $0xe0] sm:$0xff]
        %v6248 = vld [vmem:[%s51 + $0xe8] sm:$0xff]
        %v6249 = vld [vmem:[%s51 + $0xf0] sm:$0xff]
        %v6250 = vld [vmem:[%s51 + $0xf8] sm:$0xff]
        %v6251 = vld [vmem:[%s51 + $0x100] sm:$0xff]
        %v6252 = vld [vmem:[%s51 + $0x108] sm:$0xff]
        %v6253 = vld [vmem:[%s51 + $0x110] sm:$0xff]
        %v6254 = vld [vmem:[%s51 + $0x118] sm:$0xff]
        %v6255 = vld [vmem:[%s51 + $0x120] sm:$0xff]
        %v6256 = vld [vmem:[%s51 + $0x128] sm:$0xff]
        %v6257 = vld [vmem:[%s51 + $0x130] sm:$0xff]
        %v6258 = vld [vmem:[%s51 + $0x138] sm:$0xff]
        %v6259 = vld [vmem:[%s51 + $0x140] sm:$0xff]
        %v6260 = vld [vmem:[%s51 + $0x148] sm:$0xff]
        %v6261 = vld [vmem:[%s51 + $0x150] sm:$0xff]
        %v6262 = vld [vmem:[%s51 + $0x158] sm:$0xff]
        %v6263 = vld [vmem:[%s51 + $0x160] sm:$0xff]
        %v6264 = vld [vmem:[%s51 + $0x168] sm:$0xff]
        %v6265 = vld [vmem:[%s51 + $0x170] sm:$0xff]
        %v6266 = vld [vmem:[%s51 + $0x178] sm:$0xff]
        %v6267 = vld [vmem:[%s53] sm:$0xff]
        %v6268 = vld [vmem:[%s53 + $0x8] sm:$0xff]
        %v6271 = vlaneseq
        %v6272 = vshrl.u32 %v6271, 7
        %v6273 = vsub.s32 0, %v6272
        %v6274 = vrot.slane %v6267, %v6273
        %v6275 = vlaneseq
        %v6276 = vshrl.u32 %v6275, 7
        %v6277 = vsub.s32 1, %v6276
        %v6278 = vrot.slane %v6267, %v6277
        %v6279 = vlaneseq
        %v6280 = vshrl.u32 %v6279, 7
        %v6281 = vsub.s32 2, %v6280
        %v6282 = vrot.slane %v6267, %v6281
        %v6283 = vlaneseq
        %v6284 = vshrl.u32 %v6283, 7
        %v6285 = vsub.s32 3, %v6284
        %v6286 = vrot.slane %v6267, %v6285
        %v6287 = vlaneseq
        %v6288 = vshrl.u32 %v6287, 7
        %v6289 = vsub.s32 4, %v6288
        %v6290 = vrot.slane %v6267, %v6289
        %v6291 = vlaneseq
        %v6292 = vshrl.u32 %v6291, 7
        %v6293 = vsub.s32 5, %v6292
        %v6294 = vrot.slane %v6267, %v6293
        %v6295 = vlaneseq
        %v6296 = vshrl.u32 %v6295, 7
        %v6297 = vsub.s32 6, %v6296
        %v6298 = vrot.slane %v6267, %v6297
        %v6299 = vlaneseq
        %v6300 = vshrl.u32 %v6299, 7
        %v6301 = vsub.s32 7, %v6300
        %v6302 = vrot.slane %v6267, %v6301
        %v6303 = vlaneseq
        %v6304 = vshrl.u32 %v6303, 7
        %v6305 = vsub.s32 0, %v6304
        %v6306 = vrot.slane %v6268, %v6305
        %v6307 = vlaneseq
        %v6308 = vshrl.u32 %v6307, 7
        %v6309 = vsub.s32 1, %v6308
        %v6310 = vrot.slane %v6268, %v6309
        %v6311 = vlaneseq
        %v6312 = vshrl.u32 %v6311, 7
        %v6313 = vsub.s32 2, %v6312
        %v6314 = vrot.slane %v6268, %v6313
        %v6315 = vlaneseq
        %v6316 = vshrl.u32 %v6315, 7
        %v6317 = vsub.s32 3, %v6316
        %v6318 = vrot.slane %v6268, %v6317
        %v6319 = vlaneseq
        %v6320 = vshrl.u32 %v6319, 7
        %v6321 = vsub.s32 4, %v6320
        %v6322 = vrot.slane %v6268, %v6321
        %v6323 = vlaneseq
        %v6324 = vshrl.u32 %v6323, 7
        %v6325 = vsub.s32 5, %v6324
        %v6326 = vrot.slane %v6268, %v6325
        %v6327 = vlaneseq
        %v6328 = vshrl.u32 %v6327, 7
        %v6329 = vsub.s32 6, %v6328
        %v6330 = vrot.slane %v6268, %v6329
        %v6331 = vlaneseq
        %v6332 = vshrl.u32 %v6331, 7
        %v6333 = vsub.s32 7, %v6332
        %v6334 = vrot.slane %v6268, %v6333
        %v6399 = vunpack.c.l.b16 %v6219
        %v6400 = vunpack.c.h.b16 %v6219
        %v6401 = vunpack.c.l.b16 %v6220
        %v6402 = vunpack.c.h.b16 %v6220
        %v6403 = vunpack.c.l.b16 %v6221
        %v6404 = vunpack.c.h.b16 %v6221
        %v6405 = vunpack.c.l.b16 %v6222
        %v6406 = vunpack.c.h.b16 %v6222
        %v6407 = vunpack.c.l.b16 %v6223
        %v6408 = vunpack.c.h.b16 %v6223
        %v6409 = vunpack.c.l.b16 %v6224
        %v6410 = vunpack.c.h.b16 %v6224
        %v6411 = vunpack.c.l.b16 %v6225
        %v6412 = vunpack.c.h.b16 %v6225
        %v6413 = vunpack.c.l.b16 %v6226
        %v6414 = vunpack.c.h.b16 %v6226
        %v6415 = vunpack.c.l.b16 %v6227
        %v6416 = vunpack.c.h.b16 %v6227
        %v6417 = vunpack.c.l.b16 %v6228
        %v6418 = vunpack.c.h.b16 %v6228
        %v6419 = vunpack.c.l.b16 %v6229
        %v6420 = vunpack.c.h.b16 %v6229
        %v6421 = vunpack.c.l.b16 %v6230
        %v6422 = vunpack.c.h.b16 %v6230
        %v6423 = vunpack.c.l.b16 %v6231
        %v6424 = vunpack.c.h.b16 %v6231
        %v6425 = vunpack.c.l.b16 %v6232
        %v6426 = vunpack.c.h.b16 %v6232
        %v6427 = vunpack.c.l.b16 %v6233
        %v6428 = vunpack.c.h.b16 %v6233
        %v6429 = vunpack.c.l.b16 %v6234
        %v6430 = vunpack.c.h.b16 %v6234
        %v6431 = vunpack.c.l.b16 %v6235
        %v6432 = vunpack.c.h.b16 %v6235
        %v6433 = vunpack.c.l.b16 %v6236
        %v6434 = vunpack.c.h.b16 %v6236
        %v6435 = vunpack.c.l.b16 %v6237
        %v6436 = vunpack.c.h.b16 %v6237
        %v6437 = vunpack.c.l.b16 %v6238
        %v6438 = vunpack.c.h.b16 %v6238
        %v6439 = vunpack.c.l.b16 %v6239
        %v6440 = vunpack.c.h.b16 %v6239
        %v6441 = vunpack.c.l.b16 %v6240
        %v6442 = vunpack.c.h.b16 %v6240
        %v6443 = vunpack.c.l.b16 %v6241
        %v6444 = vunpack.c.h.b16 %v6241
        %v6445 = vunpack.c.l.b16 %v6242
        %v6446 = vunpack.c.h.b16 %v6242
        %v6447 = vunpack.c.l.b16 %v6243
        %v6448 = vunpack.c.h.b16 %v6243
        %v6449 = vunpack.c.l.b16 %v6244
        %v6450 = vunpack.c.h.b16 %v6244
        %v6451 = vunpack.c.l.b16 %v6245
        %v6452 = vunpack.c.h.b16 %v6245
        %v6453 = vunpack.c.l.b16 %v6246
        %v6454 = vunpack.c.h.b16 %v6246
        %v6455 = vunpack.c.l.b16 %v6247
        %v6456 = vunpack.c.h.b16 %v6247
        %v6457 = vunpack.c.l.b16 %v6248
        %v6458 = vunpack.c.h.b16 %v6248
        %v6459 = vunpack.c.l.b16 %v6249
        %v6460 = vunpack.c.h.b16 %v6249
        %v6461 = vunpack.c.l.b16 %v6250
        %v6462 = vunpack.c.h.b16 %v6250
        %v6463 = vunpack.c.l.b16 %v6251
        %v6464 = vunpack.c.h.b16 %v6251
        %v6465 = vunpack.c.l.b16 %v6252
        %v6466 = vunpack.c.h.b16 %v6252
        %v6467 = vunpack.c.l.b16 %v6253
        %v6468 = vunpack.c.h.b16 %v6253
        %v6469 = vunpack.c.l.b16 %v6254
        %v6470 = vunpack.c.h.b16 %v6254
        %v6471 = vunpack.c.l.b16 %v6255
        %v6472 = vunpack.c.h.b16 %v6255
        %v6473 = vunpack.c.l.b16 %v6256
        %v6474 = vunpack.c.h.b16 %v6256
        %v6475 = vunpack.c.l.b16 %v6257
        %v6476 = vunpack.c.h.b16 %v6257
        %v6477 = vunpack.c.l.b16 %v6258
        %v6478 = vunpack.c.h.b16 %v6258
        %v6479 = vunpack.c.l.b16 %v6259
        %v6480 = vunpack.c.h.b16 %v6259
        %v6481 = vunpack.c.l.b16 %v6260
        %v6482 = vunpack.c.h.b16 %v6260
        %v6483 = vunpack.c.l.b16 %v6261
        %v6484 = vunpack.c.h.b16 %v6261
        %v6485 = vunpack.c.l.b16 %v6262
        %v6486 = vunpack.c.h.b16 %v6262
        %v6487 = vunpack.c.l.b16 %v6263
        %v6488 = vunpack.c.h.b16 %v6263
        %v6489 = vunpack.c.l.b16 %v6264
        %v6490 = vunpack.c.h.b16 %v6264
        %v6491 = vunpack.c.l.b16 %v6265
        %v6492 = vunpack.c.h.b16 %v6265
        %v6493 = vunpack.c.l.b16 %v6266
        %v6494 = vunpack.c.h.b16 %v6266
        %v6495 = vpack.c.b16 %v6415, %v6399
        %v6496 = vpack.c.b16 %v6416, %v6400
        %v6497 = vpack.c.b16 %v6417, %v6401
        %v6498 = vpack.c.b16 %v6418, %v6402
        %v6499 = vpack.c.b16 %v6419, %v6403
        %v6500 = vpack.c.b16 %v6420, %v6404
        %v6501 = vpack.c.b16 %v6421, %v6405
        %v6502 = vpack.c.b16 %v6422, %v6406
        %v6503 = vpack.c.b16 %v6423, %v6407
        %v6504 = vpack.c.b16 %v6424, %v6408
        %v6505 = vpack.c.b16 %v6425, %v6409
        %v6506 = vpack.c.b16 %v6426, %v6410
        %v6507 = vpack.c.b16 %v6427, %v6411
        %v6508 = vpack.c.b16 %v6428, %v6412
        %v6509 = vpack.c.b16 %v6429, %v6413
        %v6510 = vpack.c.b16 %v6430, %v6414
        %v6511 = vpack.c.b16 %v6447, %v6431
        %v6512 = vpack.c.b16 %v6448, %v6432
        %v6513 = vpack.c.b16 %v6449, %v6433
        %v6514 = vpack.c.b16 %v6450, %v6434
        %v6515 = vpack.c.b16 %v6451, %v6435
        %v6516 = vpack.c.b16 %v6452, %v6436
        %v6517 = vpack.c.b16 %v6453, %v6437
        %v6518 = vpack.c.b16 %v6454, %v6438
        %v6519 = vpack.c.b16 %v6455, %v6439
        %v6520 = vpack.c.b16 %v6456, %v6440
        %v6521 = vpack.c.b16 %v6457, %v6441
        %v6522 = vpack.c.b16 %v6458, %v6442
        %v6523 = vpack.c.b16 %v6459, %v6443
        %v6524 = vpack.c.b16 %v6460, %v6444
        %v6525 = vpack.c.b16 %v6461, %v6445
        %v6526 = vpack.c.b16 %v6462, %v6446
        %v6527 = vpack.c.b16 %v6479, %v6463
        %v6528 = vpack.c.b16 %v6480, %v6464
        %v6529 = vpack.c.b16 %v6481, %v6465
        %v6530 = vpack.c.b16 %v6482, %v6466
        %v6531 = vpack.c.b16 %v6483, %v6467
        %v6532 = vpack.c.b16 %v6484, %v6468
        %v6533 = vpack.c.b16 %v6485, %v6469
        %v6534 = vpack.c.b16 %v6486, %v6470
        %v6535 = vpack.c.b16 %v6487, %v6471
        %v6536 = vpack.c.b16 %v6488, %v6472
        %v6537 = vpack.c.b16 %v6489, %v6473
        %v6538 = vpack.c.b16 %v6490, %v6474
        %v6539 = vpack.c.b16 %v6491, %v6475
        %v6540 = vpack.c.b16 %v6492, %v6476
        %v6541 = vpack.c.b16 %v6493, %v6477
        %v6542 = vpack.c.b16 %v6494, %v6478
        %v6592 = vsel %vm1163, %v6218, 0
        %6594 = vmatprep.subr.bf16.mxu0 %v6496
        %6595 = vmatpush1.bf16.msra.mxu0 %v6495
        %6596 = vmatprep.subr.bf16.mxu0 %v6512
        %6597 = vmatpush1.bf16.msra.mxu0 %v6511
        %6598 = vmatprep.subr.bf16.mxu0 %v6528
        %6599 = vmatpush1.bf16.msra.mxu0 %v6527
        %6600 = vmatprep.subr.bf16.mxu0 0
        %6601 = vmatpush1.bf16.msra.mxu0 0
        %6602 = vmatprep.subr.bf16.mxu0 0
        %6603 = vmatpush1.bf16.msra.mxu0 0
        %6604 = vmatprep.subr.bf16.mxu0 0
        %6605 = vmatpush1.bf16.msra.mxu0 0
        %6606 = vmatprep.subr.bf16.mxu0 0
        %6607 = vmatpush1.bf16.msra.mxu0 0
        %6608 = vmatprep.subr.bf16.mxu0 0
        %6609 = vmatpush1.bf16.msra.mxu0 0
        %6610 = vmatprep.subr.bf16.mxu0 0
        %6611 = vmatpush1.bf16.msra.mxu0 0
        %6612 = vmatprep.subr.bf16.mxu0 0
        %6613 = vmatpush1.bf16.msra.mxu0 0
        %6614 = vmatprep.subr.bf16.mxu0 0
        %6615 = vmatpush1.bf16.msra.mxu0 0
        %6616 = vmatprep.subr.bf16.mxu0 0
        %6617 = vmatpush1.bf16.msra.mxu0 0
        %6618 = vmatprep.subr.bf16.mxu0 0
        %6619 = vmatpush1.bf16.msra.mxu0 0
        %6620 = vmatprep.subr.bf16.mxu0 0
        %6621 = vmatpush1.bf16.msra.mxu0 0
        %6622 = vmatprep.subr.bf16.mxu0 0
        %6623 = vmatpush1.bf16.msra.mxu0 0
        %6624 = vmatprep.subr.bf16.mxu0 0
        %6625 = vmatpush1.bf16.msra.mxu0 0
        %6626 = vmatprep.mubr.bf16.mxu0 0
        %6627 = vmatmul.mubr.bf16.gmra.mrb[0].mxu0 %v6592
        %v6628 = vpop.f32.mrb[0].mxu0
        %v6629 = vadd.f32 %v6274, %v6628
        %v6630 = vpop.f32.mrb[0].mxu0
        %v6631 = vadd.f32 %v6278, %v6630
        %v6632 = vpop.f32.mrb[0].mxu0
        %v6633 = vpop.f32.mrb[0].mxu0
        %6634 = vdwg.mxu0
        %6635 = vmatprep.subr.bf16.mxu0 %v6498
        %6636 = vmatpush1.bf16.msra.mxu0 %v6497
        %6637 = vmatprep.subr.bf16.mxu0 %v6514
        %6638 = vmatpush1.bf16.msra.mxu0 %v6513
        %6639 = vmatprep.subr.bf16.mxu0 %v6530
        %6640 = vmatpush1.bf16.msra.mxu0 %v6529
        %6641 = vmatprep.subr.bf16.mxu0 0
        %6642 = vmatpush1.bf16.msra.mxu0 0
        %6643 = vmatprep.subr.bf16.mxu0 0
        %6644 = vmatpush1.bf16.msra.mxu0 0
        %6645 = vmatprep.subr.bf16.mxu0 0
        %6646 = vmatpush1.bf16.msra.mxu0 0
        %6647 = vmatprep.subr.bf16.mxu0 0
        %6648 = vmatpush1.bf16.msra.mxu0 0
        %6649 = vmatprep.subr.bf16.mxu0 0
        %6650 = vmatpush1.bf16.msra.mxu0 0
        %6651 = vmatprep.subr.bf16.mxu0 0
        %6652 = vmatpush1.bf16.msra.mxu0 0
        %6653 = vmatprep.subr.bf16.mxu0 0
        %6654 = vmatpush1.bf16.msra.mxu0 0
        %6655 = vmatprep.subr.bf16.mxu0 0
        %6656 = vmatpush1.bf16.msra.mxu0 0
        %6657 = vmatprep.subr.bf16.mxu0 0
        %6658 = vmatpush1.bf16.msra.mxu0 0
        %6659 = vmatprep.subr.bf16.mxu0 0
        %6660 = vmatpush1.bf16.msra.mxu0 0
        %6661 = vmatprep.subr.bf16.mxu0 0
        %6662 = vmatpush1.bf16.msra.mxu0 0
        %6663 = vmatprep.subr.bf16.mxu0 0
        %6664 = vmatpush1.bf16.msra.mxu0 0
        %6665 = vmatprep.subr.bf16.mxu0 0
        %6666 = vmatpush1.bf16.msra.mxu0 0
        %6667 = vmatprep.mubr.bf16.mxu0 0
        %6668 = vmatmul.mubr.bf16.gmra.mrb[0].mxu0 %v6592
        %v6669 = vpop.f32.mrb[0].mxu0
        %v6670 = vadd.f32 %v6282, %v6669
        %v6671 = vpop.f32.mrb[0].mxu0
        %v6672 = vadd.f32 %v6286, %v6671
        %v6673 = vpop.f32.mrb[0].mxu0
        %v6674 = vpop.f32.mrb[0].mxu0
        %6675 = vdwg.mxu0
        %6676 = vmatprep.subr.bf16.mxu0 %v6500
        %6677 = vmatpush1.bf16.msra.mxu0 %v6499
        %6678 = vmatprep.subr.bf16.mxu0 %v6516
        %6679 = vmatpush1.bf16.msra.mxu0 %v6515
        %6680 = vmatprep.subr.bf16.mxu0 %v6532
        %6681 = vmatpush1.bf16.msra.mxu0 %v6531
        %6682 = vmatprep.subr.bf16.mxu0 0
        %6683 = vmatpush1.bf16.msra.mxu0 0
        %6684 = vmatprep.subr.bf16.mxu0 0
        %6685 = vmatpush1.bf16.msra.mxu0 0
        %6686 = vmatprep.subr.bf16.mxu0 0
        %6687 = vmatpush1.bf16.msra.mxu0 0
        %6688 = vmatprep.subr.bf16.mxu0 0
        %6689 = vmatpush1.bf16.msra.mxu0 0
        %6690 = vmatprep.subr.bf16.mxu0 0
        %6691 = vmatpush1.bf16.msra.mxu0 0
        %6692 = vmatprep.subr.bf16.mxu0 0
        %6693 = vmatpush1.bf16.msra.mxu0 0
        %6694 = vmatprep.subr.bf16.mxu0 0
        %6695 = vmatpush1.bf16.msra.mxu0 0
        %6696 = vmatprep.subr.bf16.mxu0 0
        %6697 = vmatpush1.bf16.msra.mxu0 0
        %6698 = vmatprep.subr.bf16.mxu0 0
        %6699 = vmatpush1.bf16.msra.mxu0 0
        %6700 = vmatprep.subr.bf16.mxu0 0
        %6701 = vmatpush1.bf16.msra.mxu0 0
        %6702 = vmatprep.subr.bf16.mxu0 0
        %6703 = vmatpush1.bf16.msra.mxu0 0
        %6704 = vmatprep.subr.bf16.mxu0 0
        %6705 = vmatpush1.bf16.msra.mxu0 0
        %6706 = vmatprep.subr.bf16.mxu0 0
        %6707 = vmatpush1.bf16.msra.mxu0 0
        %6708 = vmatprep.mubr.bf16.mxu0 0
        %6709 = vmatmul.mubr.bf16.gmra.mrb[0].mxu0 %v6592
        %v6710 = vpop.f32.mrb[0].mxu0
        %v6711 = vadd.f32 %v6290, %v6710
        %v6712 = vpop.f32.mrb[0].mxu0
        %v6713 = vadd.f32 %v6294, %v6712
        %v6714 = vpop.f32.mrb[0].mxu0
        %v6715 = vpop.f32.mrb[0].mxu0
        %6716 = vdwg.mxu0
        %6717 = vmatprep.subr.bf16.mxu0 %v6502
        %6718 = vmatpush1.bf16.msra.mxu0 %v6501
        %6719 = vmatprep.subr.bf16.mxu0 %v6518
        %6720 = vmatpush1.bf16.msra.mxu0 %v6517
        %6721 = vmatprep.subr.bf16.mxu0 %v6534
        %6722 = vmatpush1.bf16.msra.mxu0 %v6533
        %6723 = vmatprep.subr.bf16.mxu0 0
        %6724 = vmatpush1.bf16.msra.mxu0 0
        %6725 = vmatprep.subr.bf16.mxu0 0
        %6726 = vmatpush1.bf16.msra.mxu0 0
        %6727 = vmatprep.subr.bf16.mxu0 0
        %6728 = vmatpush1.bf16.msra.mxu0 0
        %6729 = vmatprep.subr.bf16.mxu0 0
        %6730 = vmatpush1.bf16.msra.mxu0 0
        %6731 = vmatprep.subr.bf16.mxu0 0
        %6732 = vmatpush1.bf16.msra.mxu0 0
        %6733 = vmatprep.subr.bf16.mxu0 0
        %6734 = vmatpush1.bf16.msra.mxu0 0
        %6735 = vmatprep.subr.bf16.mxu0 0
        %6736 = vmatpush1.bf16.msra.mxu0 0
        %6737 = vmatprep.subr.bf16.mxu0 0
        %6738 = vmatpush1.bf16.msra.mxu0 0
        %6739 = vmatprep.subr.bf16.mxu0 0
        %6740 = vmatpush1.bf16.msra.mxu0 0
        %6741 = vmatprep.subr.bf16.mxu0 0
        %6742 = vmatpush1.bf16.msra.mxu0 0
        %6743 = vmatprep.subr.bf16.mxu0 0
        %6744 = vmatpush1.bf16.msra.mxu0 0
        %6745 = vmatprep.subr.bf16.mxu0 0
        %6746 = vmatpush1.bf16.msra.mxu0 0
        %6747 = vmatprep.subr.bf16.mxu0 0
        %6748 = vmatpush1.bf16.msra.mxu0 0
        %6749 = vmatprep.mubr.bf16.mxu0 0
        %6750 = vmatmul.mubr.bf16.gmra.mrb[0].mxu0 %v6592
        %v6751 = vpop.f32.mrb[0].mxu0
        %v6752 = vadd.f32 %v6298, %v6751
        %v6753 = vpop.f32.mrb[0].mxu0
        %v6754 = vadd.f32 %v6302, %v6753
        %v6755 = vpop.f32.mrb[0].mxu0
        %v6756 = vpop.f32.mrb[0].mxu0
        %6757 = vdwg.mxu0
        %6758 = vmatprep.subr.bf16.mxu0 %v6504
        %6759 = vmatpush1.bf16.msra.mxu0 %v6503
        %6760 = vmatprep.subr.bf16.mxu0 %v6520
        %6761 = vmatpush1.bf16.msra.mxu0 %v6519
        %6762 = vmatprep.subr.bf16.mxu0 %v6536
        %6763 = vmatpush1.bf16.msra.mxu0 %v6535
        %6764 = vmatprep.subr.bf16.mxu0 0
        %6765 = vmatpush1.bf16.msra.mxu0 0
        %6766 = vmatprep.subr.bf16.mxu0 0
        %6767 = vmatpush1.bf16.msra.mxu0 0
        %6768 = vmatprep.subr.bf16.mxu0 0
        %6769 = vmatpush1.bf16.msra.mxu0 0
        %6770 = vmatprep.subr.bf16.mxu0 0
        %6771 = vmatpush1.bf16.msra.mxu0 0
        %6772 = vmatprep.subr.bf16.mxu0 0
        %6773 = vmatpush1.bf16.msra.mxu0 0
        %6774 = vmatprep.subr.bf16.mxu0 0
        %6775 = vmatpush1.bf16.msra.mxu0 0
        %6776 = vmatprep.subr.bf16.mxu0 0
        %6777 = vmatpush1.bf16.msra.mxu0 0
        %6778 = vmatprep.subr.bf16.mxu0 0
        %6779 = vmatpush1.bf16.msra.mxu0 0
        %6780 = vmatprep.subr.bf16.mxu0 0
        %6781 = vmatpush1.bf16.msra.mxu0 0
        %6782 = vmatprep.subr.bf16.mxu0 0
        %6783 = vmatpush1.bf16.msra.mxu0 0
        %6784 = vmatprep.subr.bf16.mxu0 0
        %6785 = vmatpush1.bf16.msra.mxu0 0
        %6786 = vmatprep.subr.bf16.mxu0 0
        %6787 = vmatpush1.bf16.msra.mxu0 0
        %6788 = vmatprep.subr.bf16.mxu0 0
        %6789 = vmatpush1.bf16.msra.mxu0 0
        %6790 = vmatprep.mubr.bf16.mxu0 0
        %6791 = vmatmul.mubr.bf16.gmra.mrb[0].mxu0 %v6592
        %v6792 = vpop.f32.mrb[0].mxu0
        %v6793 = vadd.f32 %v6306, %v6792
        %v6794 = vpop.f32.mrb[0].mxu0
        %v6795 = vadd.f32 %v6310, %v6794
        %v6796 = vpop.f32.mrb[0].mxu0
        %v6797 = vpop.f32.mrb[0].mxu0
        %6798 = vdwg.mxu0
        %6799 = vmatprep.subr.bf16.mxu0 %v6506
        %6800 = vmatpush1.bf16.msra.mxu0 %v6505
        %6801 = vmatprep.subr.bf16.mxu0 %v6522
        %6802 = vmatpush1.bf16.msra.mxu0 %v6521
        %6803 = vmatprep.subr.bf16.mxu0 %v6538
        %6804 = vmatpush1.bf16.msra.mxu0 %v6537
        %6805 = vmatprep.subr.bf16.mxu0 0
        %6806 = vmatpush1.bf16.msra.mxu0 0
        %6807 = vmatprep.subr.bf16.mxu0 0
        %6808 = vmatpush1.bf16.msra.mxu0 0
        %6809 = vmatprep.subr.bf16.mxu0 0
        %6810 = vmatpush1.bf16.msra.mxu0 0
        %6811 = vmatprep.subr.bf16.mxu0 0
        %6812 = vmatpush1.bf16.msra.mxu0 0
        %6813 = vmatprep.subr.bf16.mxu0 0
        %6814 = vmatpush1.bf16.msra.mxu0 0
        %6815 = vmatprep.subr.bf16.mxu0 0
        %6816 = vmatpush1.bf16.msra.mxu0 0
        %6817 = vmatprep.subr.bf16.mxu0 0
        %6818 = vmatpush1.bf16.msra.mxu0 0
        %6819 = vmatprep.subr.bf16.mxu0 0
        %6820 = vmatpush1.bf16.msra.mxu0 0
        %6821 = vmatprep.subr.bf16.mxu0 0
        %6822 = vmatpush1.bf16.msra.mxu0 0
        %6823 = vmatprep.subr.bf16.mxu0 0
        %6824 = vmatpush1.bf16.msra.mxu0 0
        %6825 = vmatprep.subr.bf16.mxu0 0
        %6826 = vmatpush1.bf16.msra.mxu0 0
        %6827 = vmatprep.subr.bf16.mxu0 0
        %6828 = vmatpush1.bf16.msra.mxu0 0
        %6829 = vmatprep.subr.bf16.mxu0 0
        %6830 = vmatpush1.bf16.msra.mxu0 0
        %6831 = vmatprep.mubr.bf16.mxu0 0
        %6832 = vmatmul.mubr.bf16.gmra.mrb[0].mxu0 %v6592
        %v6833 = vpop.f32.mrb[0].mxu0
        %v6834 = vadd.f32 %v6314, %v6833
        %v6835 = vpop.f32.mrb[0].mxu0
        %v6836 = vadd.f32 %v6318, %v6835
        %v6837 = vpop.f32.mrb[0].mxu0
        %v6838 = vpop.f32.mrb[0].mxu0
        %6839 = vdwg.mxu0
        %6840 = vmatprep.subr.bf16.mxu0 %v6508
        %6841 = vmatpush1.bf16.msra.mxu0 %v6507
        %6842 = vmatprep.subr.bf16.mxu0 %v6524
        %6843 = vmatpush1.bf16.msra.mxu0 %v6523
        %6844 = vmatprep.subr.bf16.mxu0 %v6540
        %6845 = vmatpush1.bf16.msra.mxu0 %v6539
        %6846 = vmatprep.subr.bf16.mxu0 0
        %6847 = vmatpush1.bf16.msra.mxu0 0
        %6848 = vmatprep.subr.bf16.mxu0 0
        %6849 = vmatpush1.bf16.msra.mxu0 0
        %6850 = vmatprep.subr.bf16.mxu0 0
        %6851 = vmatpush1.bf16.msra.mxu0 0
        %6852 = vmatprep.subr.bf16.mxu0 0
        %6853 = vmatpush1.bf16.msra.mxu0 0
        %6854 = vmatprep.subr.bf16.mxu0 0
        %6855 = vmatpush1.bf16.msra.mxu0 0
        %6856 = vmatprep.subr.bf16.mxu0 0
        %6857 = vmatpush1.bf16.msra.mxu0 0
        %6858 = vmatprep.subr.bf16.mxu0 0
        %6859 = vmatpush1.bf16.msra.mxu0 0
        %6860 = vmatprep.subr.bf16.mxu0 0
        %6861 = vmatpush1.bf16.msra.mxu0 0
        %6862 = vmatprep.subr.bf16.mxu0 0
        %6863 = vmatpush1.bf16.msra.mxu0 0
        %6864 = vmatprep.subr.bf16.mxu0 0
        %6865 = vmatpush1.bf16.msra.mxu0 0
        %6866 = vmatprep.subr.bf16.mxu0 0
        %6867 = vmatpush1.bf16.msra.mxu0 0
        %6868 = vmatprep.subr.bf16.mxu0 0
        %6869 = vmatpush1.bf16.msra.mxu0 0
        %6870 = vmatprep.subr.bf16.mxu0 0
        %6871 = vmatpush1.bf16.msra.mxu0 0
        %6872 = vmatprep.mubr.bf16.mxu0 0
        %6873 = vmatmul.mubr.bf16.gmra.mrb[0].mxu0 %v6592
        %v6874 = vpop.f32.mrb[0].mxu0
        %v6875 = vadd.f32 %v6322, %v6874
        %v6876 = vpop.f32.mrb[0].mxu0
        %v6877 = vadd.f32 %v6326, %v6876
        %v6878 = vpop.f32.mrb[0].mxu0
        %v6879 = vpop.f32.mrb[0].mxu0
        %6880 = vdwg.mxu0
        %6881 = vmatprep.subr.bf16.mxu0 %v6510
        %6882 = vmatpush1.bf16.msra.mxu0 %v6509
        %6883 = vmatprep.subr.bf16.mxu0 %v6526
        %6884 = vmatpush1.bf16.msra.mxu0 %v6525
        %6885 = vmatprep.subr.bf16.mxu0 %v6542
        %6886 = vmatpush1.bf16.msra.mxu0 %v6541
        %6887 = vmatprep.subr.bf16.mxu0 0
        %6888 = vmatpush1.bf16.msra.mxu0 0
        %6889 = vmatprep.subr.bf16.mxu0 0
        %6890 = vmatpush1.bf16.msra.mxu0 0
        %6891 = vmatprep.subr.bf16.mxu0 0
        %6892 = vmatpush1.bf16.msra.mxu0 0
        %6893 = vmatprep.subr.bf16.mxu0 0
        %6894 = vmatpush1.bf16.msra.mxu0 0
        %6895 = vmatprep.subr.bf16.mxu0 0
        %6896 = vmatpush1.bf16.msra.mxu0 0
        %6897 = vmatprep.subr.bf16.mxu0 0
        %6898 = vmatpush1.bf16.msra.mxu0 0
        %6899 = vmatprep.subr.bf16.mxu0 0
        %6900 = vmatpush1.bf16.msra.mxu0 0
        %6901 = vmatprep.subr.bf16.mxu0 0
        %6902 = vmatpush1.bf16.msra.mxu0 0
        %6903 = vmatprep.subr.bf16.mxu0 0
        %6904 = vmatpush1.bf16.msra.mxu0 0
        %6905 = vmatprep.subr.bf16.mxu0 0
        %6906 = vmatpush1.bf16.msra.mxu0 0
        %6907 = vmatprep.subr.bf16.mxu0 0
        %6908 = vmatpush1.bf16.msra.mxu0 0
        %6909 = vmatprep.subr.bf16.mxu0 0
        %6910 = vmatpush1.bf16.msra.mxu0 0
        %6911 = vmatprep.subr.bf16.mxu0 0
        %6912 = vmatpush1.bf16.msra.mxu0 0
        %6913 = vmatprep.mubr.bf16.mxu0 0
        %6914 = vmatmul.mubr.bf16.gmra.mrb[0].mxu0 %v6592
        %v6915 = vpop.f32.mrb[0].mxu0
        %v6916 = vadd.f32 %v6330, %v6915
        %v6917 = vpop.f32.mrb[0].mxu0
        %v6918 = vadd.f32 %v6334, %v6917
        %v6919 = vpop.f32.mrb[0].mxu0
        %v6920 = vpop.f32.mrb[0].mxu0
        %6921 = vdwg.mxu0
        %v6922 = vmax.f32 %v6629, 0.0
        %v6923 = vmax.f32 %v6631, 0.0
        %v6924 = vmax.f32 %v6670, 0.0
        %v6925 = vmax.f32 %v6672, 0.0
        %v6926 = vmax.f32 %v6711, 0.0
        %v6927 = vmax.f32 %v6713, 0.0
        %v6928 = vmax.f32 %v6752, 0.0
        %v6929 = vmax.f32 %v6754, 0.0
        %v6930 = vmax.f32 %v6793, 0.0
        %v6931 = vmax.f32 %v6795, 0.0
        %v6932 = vmax.f32 %v6834, 0.0
        %v6933 = vmax.f32 %v6836, 0.0
        %v6934 = vmax.f32 %v6875, 0.0
        %v6935 = vmax.f32 %v6877, 0.0
        %v6936 = vmax.f32 %v6916, 0.0
        %v6937 = vmax.f32 %v6918, 0.0
        %v6938 = vpack.c.bf16 %v6922, %v6922
        %v6939 = vpack.c.bf16 %v6923, %v6923
        %v6940 = vpack.c.bf16 %v6924, %v6924
        %v6941 = vpack.c.bf16 %v6925, %v6925
        %v6942 = vpack.c.bf16 %v6926, %v6926
        %v6943 = vpack.c.bf16 %v6927, %v6927
        %v6944 = vpack.c.bf16 %v6928, %v6928
        %v6945 = vpack.c.bf16 %v6929, %v6929
        %v6946 = vpack.c.bf16 %v6930, %v6930
        %v6947 = vpack.c.bf16 %v6931, %v6931
        %v6948 = vpack.c.bf16 %v6932, %v6932
        %v6949 = vpack.c.bf16 %v6933, %v6933
        %v6950 = vpack.c.bf16 %v6934, %v6934
        %v6951 = vpack.c.bf16 %v6935, %v6935
        %v6952 = vpack.c.bf16 %v6936, %v6936
        %v6953 = vpack.c.bf16 %v6937, %v6937
        %v6954 = vld [vmem:[%s55] sm:$0xf]
        %v6955 = vld [vmem:[%s55 + $0x4] sm:$0xf]
        %v6956 = vld [vmem:[%s55 + $0x8] sm:$0xf]
        %v6957 = vld [vmem:[%s55 + $0xc] sm:$0xf]
        %v6958 = vld [vmem:[%s55 + $0x10] sm:$0xf]
        %v6959 = vld [vmem:[%s55 + $0x14] sm:$0xf]
        %v6960 = vld [vmem:[%s55 + $0x18] sm:$0xf]
        %v6961 = vld [vmem:[%s55 + $0x1c] sm:$0xf]
        %v6962 = vld [vmem:[%s55 + $0x20] sm:$0xf]
        %v6963 = vld [vmem:[%s55 + $0x24] sm:$0xf]
        %v6964 = vld [vmem:[%s55 + $0x28] sm:$0xf]
        %v6965 = vld [vmem:[%s55 + $0x2c] sm:$0xf]
        %v6966 = vld [vmem:[%s55 + $0x30] sm:$0xf]
        %v6967 = vld [vmem:[%s55 + $0x34] sm:$0xf]
        %v6968 = vld [vmem:[%s55 + $0x38] sm:$0xf]
        %v6969 = vld [vmem:[%s55 + $0x3c] sm:$0xf]
        %v6970 = vld [vmem:[%s55 + $0x40] sm:$0xf]
        %v6971 = vld [vmem:[%s55 + $0x44] sm:$0xf]
        %v6972 = vld [vmem:[%s55 + $0x48] sm:$0xf]
        %v6973 = vld [vmem:[%s55 + $0x4c] sm:$0xf]
        %v6974 = vld [vmem:[%s55 + $0x50] sm:$0xf]
        %v6975 = vld [vmem:[%s55 + $0x54] sm:$0xf]
        %v6976 = vld [vmem:[%s55 + $0x58] sm:$0xf]
        %v6977 = vld [vmem:[%s55 + $0x5c] sm:$0xf]
        %v6978 = vld [vmem:[%s55 + $0x60] sm:$0xf]
        %v6979 = vld [vmem:[%s55 + $0x64] sm:$0xf]
        %v6980 = vld [vmem:[%s55 + $0x68] sm:$0xf]
        %v6981 = vld [vmem:[%s55 + $0x6c] sm:$0xf]
        %v6982 = vld [vmem:[%s55 + $0x70] sm:$0xf]
        %v6983 = vld [vmem:[%s55 + $0x74] sm:$0xf]
        %v6984 = vld [vmem:[%s55 + $0x78] sm:$0xf]
        %v6985 = vld [vmem:[%s55 + $0x7c] sm:$0xf]
        %v6986 = vld [vmem:[%s55 + $0x80] sm:$0xf]
        %v6987 = vld [vmem:[%s55 + $0x84] sm:$0xf]
        %v6988 = vld [vmem:[%s55 + $0x88] sm:$0xf]
        %v6989 = vld [vmem:[%s55 + $0x8c] sm:$0xf]
        %v6990 = vld [vmem:[%s55 + $0x90] sm:$0xf]
        %v6991 = vld [vmem:[%s55 + $0x94] sm:$0xf]
        %v6992 = vld [vmem:[%s55 + $0x98] sm:$0xf]
        %v6993 = vld [vmem:[%s55 + $0x9c] sm:$0xf]
        %v6994 = vld [vmem:[%s55 + $0xa0] sm:$0xf]
        %v6995 = vld [vmem:[%s55 + $0xa4] sm:$0xf]
        %v6996 = vld [vmem:[%s55 + $0xa8] sm:$0xf]
        %v6997 = vld [vmem:[%s55 + $0xac] sm:$0xf]
        %v6998 = vld [vmem:[%s55 + $0xb0] sm:$0xf]
        %v6999 = vld [vmem:[%s55 + $0xb4] sm:$0xf]
        %v7000 = vld [vmem:[%s55 + $0xb8] sm:$0xf]
        %v7001 = vld [vmem:[%s55 + $0xbc] sm:$0xf]
        %v7002 = vld [vmem:[%s55 + $0xc0] sm:$0xf]
        %v7003 = vld [vmem:[%s55 + $0xc4] sm:$0xf]
        %v7004 = vld [vmem:[%s55 + $0xc8] sm:$0xf]
        %v7005 = vld [vmem:[%s55 + $0xcc] sm:$0xf]
        %v7006 = vld [vmem:[%s55 + $0xd0] sm:$0xf]
        %v7007 = vld [vmem:[%s55 + $0xd4] sm:$0xf]
        %v7008 = vld [vmem:[%s55 + $0xd8] sm:$0xf]
        %v7009 = vld [vmem:[%s55 + $0xdc] sm:$0xf]
        %v7010 = vld [vmem:[%s55 + $0xe0] sm:$0xf]
        %v7011 = vld [vmem:[%s55 + $0xe4] sm:$0xf]
        %v7012 = vld [vmem:[%s55 + $0xe8] sm:$0xf]
        %v7013 = vld [vmem:[%s55 + $0xec] sm:$0xf]
        %v7014 = vld [vmem:[%s55 + $0xf0] sm:$0xf]
        %v7015 = vld [vmem:[%s55 + $0xf4] sm:$0xf]
        %v7016 = vld [vmem:[%s55 + $0xf8] sm:$0xf]
        %v7017 = vld [vmem:[%s55 + $0xfc] sm:$0xf]
        %v7018 = vld [vmem:[%s55 + $0x100] sm:$0xf]
        %v7019 = vld [vmem:[%s55 + $0x104] sm:$0xf]
        %v7020 = vld [vmem:[%s55 + $0x108] sm:$0xf]
        %v7021 = vld [vmem:[%s55 + $0x10c] sm:$0xf]
        %v7022 = vld [vmem:[%s55 + $0x110] sm:$0xf]
        %v7023 = vld [vmem:[%s55 + $0x114] sm:$0xf]
        %v7024 = vld [vmem:[%s55 + $0x118] sm:$0xf]
        %v7025 = vld [vmem:[%s55 + $0x11c] sm:$0xf]
        %v7026 = vld [vmem:[%s55 + $0x120] sm:$0xf]
        %v7027 = vld [vmem:[%s55 + $0x124] sm:$0xf]
        %v7028 = vld [vmem:[%s55 + $0x128] sm:$0xf]
        %v7029 = vld [vmem:[%s55 + $0x12c] sm:$0xf]
        %v7030 = vld [vmem:[%s55 + $0x130] sm:$0xf]
        %v7031 = vld [vmem:[%s55 + $0x134] sm:$0xf]
        %v7032 = vld [vmem:[%s55 + $0x138] sm:$0xf]
        %v7033 = vld [vmem:[%s55 + $0x13c] sm:$0xf]
        %v7034 = vld [vmem:[%s55 + $0x140] sm:$0xf]
        %v7035 = vld [vmem:[%s55 + $0x144] sm:$0xf]
        %v7036 = vld [vmem:[%s55 + $0x148] sm:$0xf]
        %v7037 = vld [vmem:[%s55 + $0x14c] sm:$0xf]
        %v7038 = vld [vmem:[%s55 + $0x150] sm:$0xf]
        %v7039 = vld [vmem:[%s55 + $0x154] sm:$0xf]
        %v7040 = vld [vmem:[%s55 + $0x158] sm:$0xf]
        %v7041 = vld [vmem:[%s55 + $0x15c] sm:$0xf]
        %v7042 = vld [vmem:[%s55 + $0x160] sm:$0xf]
        %v7043 = vld [vmem:[%s55 + $0x164] sm:$0xf]
        %v7044 = vld [vmem:[%s55 + $0x168] sm:$0xf]
        %v7045 = vld [vmem:[%s55 + $0x16c] sm:$0xf]
        %v7046 = vld [vmem:[%s55 + $0x170] sm:$0xf]
        %v7047 = vld [vmem:[%s55 + $0x174] sm:$0xf]
        %v7048 = vld [vmem:[%s55 + $0x178] sm:$0xf]
        %v7049 = vld [vmem:[%s55 + $0x17c] sm:$0xf]
        %v7050 = vld [vmem:[%s55 + $0x180] sm:$0xf]
        %v7051 = vld [vmem:[%s55 + $0x184] sm:$0xf]
        %v7052 = vld [vmem:[%s55 + $0x188] sm:$0xf]
        %v7053 = vld [vmem:[%s55 + $0x18c] sm:$0xf]
        %v7054 = vld [vmem:[%s55 + $0x190] sm:$0xf]
        %v7055 = vld [vmem:[%s55 + $0x194] sm:$0xf]
        %v7056 = vld [vmem:[%s55 + $0x198] sm:$0xf]
        %v7057 = vld [vmem:[%s55 + $0x19c] sm:$0xf]
        %v7058 = vld [vmem:[%s55 + $0x1a0] sm:$0xf]
        %v7059 = vld [vmem:[%s55 + $0x1a4] sm:$0xf]
        %v7060 = vld [vmem:[%s55 + $0x1a8] sm:$0xf]
        %v7061 = vld [vmem:[%s55 + $0x1ac] sm:$0xf]
        %v7062 = vld [vmem:[%s55 + $0x1b0] sm:$0xf]
        %v7063 = vld [vmem:[%s55 + $0x1b4] sm:$0xf]
        %v7064 = vld [vmem:[%s55 + $0x1b8] sm:$0xf]
        %v7065 = vld [vmem:[%s55 + $0x1bc] sm:$0xf]
        %v7066 = vld [vmem:[%s55 + $0x1c0] sm:$0xf]
        %v7067 = vld [vmem:[%s55 + $0x1c4] sm:$0xf]
        %v7068 = vld [vmem:[%s55 + $0x1c8] sm:$0xf]
        %v7069 = vld [vmem:[%s55 + $0x1cc] sm:$0xf]
        %v7070 = vld [vmem:[%s55 + $0x1d0] sm:$0xf]
        %v7071 = vld [vmem:[%s55 + $0x1d4] sm:$0xf]
        %v7072 = vld [vmem:[%s55 + $0x1d8] sm:$0xf]
        %v7073 = vld [vmem:[%s55 + $0x1dc] sm:$0xf]
        %v7074 = vld [vmem:[%s55 + $0x1e0] sm:$0xf]
        %v7075 = vld [vmem:[%s55 + $0x1e4] sm:$0xf]
        %v7076 = vld [vmem:[%s55 + $0x1e8] sm:$0xf]
        %v7077 = vld [vmem:[%s55 + $0x1ec] sm:$0xf]
        %v7078 = vld [vmem:[%s55 + $0x1f0] sm:$0xf]
        %v7079 = vld [vmem:[%s55 + $0x1f4] sm:$0xf]
        %v7080 = vld [vmem:[%s55 + $0x1f8] sm:$0xf]
        %v7081 = vld [vmem:[%s55 + $0x1fc] sm:$0xf]
        %v7082 = vld [vmem:[%s55 + $0x200] sm:$0xf]
        %v7083 = vld [vmem:[%s55 + $0x204] sm:$0xf]
        %v7084 = vld [vmem:[%s55 + $0x208] sm:$0xf]
        %v7085 = vld [vmem:[%s55 + $0x20c] sm:$0xf]
        %v7086 = vld [vmem:[%s55 + $0x210] sm:$0xf]
        %v7087 = vld [vmem:[%s55 + $0x214] sm:$0xf]
        %v7088 = vld [vmem:[%s55 + $0x218] sm:$0xf]
        %v7089 = vld [vmem:[%s55 + $0x21c] sm:$0xf]
        %v7090 = vld [vmem:[%s55 + $0x220] sm:$0xf]
        %v7091 = vld [vmem:[%s55 + $0x224] sm:$0xf]
        %v7092 = vld [vmem:[%s55 + $0x228] sm:$0xf]
        %v7093 = vld [vmem:[%s55 + $0x22c] sm:$0xf]
        %v7094 = vld [vmem:[%s55 + $0x230] sm:$0xf]
        %v7095 = vld [vmem:[%s55 + $0x234] sm:$0xf]
        %v7096 = vld [vmem:[%s55 + $0x238] sm:$0xf]
        %v7097 = vld [vmem:[%s55 + $0x23c] sm:$0xf]
        %v7098 = vld [vmem:[%s55 + $0x240] sm:$0xf]
        %v7099 = vld [vmem:[%s55 + $0x244] sm:$0xf]
        %v7100 = vld [vmem:[%s55 + $0x248] sm:$0xf]
        %v7101 = vld [vmem:[%s55 + $0x24c] sm:$0xf]
        %v7102 = vld [vmem:[%s55 + $0x250] sm:$0xf]
        %v7103 = vld [vmem:[%s55 + $0x254] sm:$0xf]
        %v7104 = vld [vmem:[%s55 + $0x258] sm:$0xf]
        %v7105 = vld [vmem:[%s55 + $0x25c] sm:$0xf]
        %v7106 = vld [vmem:[%s55 + $0x260] sm:$0xf]
        %v7107 = vld [vmem:[%s55 + $0x264] sm:$0xf]
        %v7108 = vld [vmem:[%s55 + $0x268] sm:$0xf]
        %v7109 = vld [vmem:[%s55 + $0x26c] sm:$0xf]
        %v7110 = vld [vmem:[%s55 + $0x270] sm:$0xf]
        %v7111 = vld [vmem:[%s55 + $0x274] sm:$0xf]
        %v7112 = vld [vmem:[%s55 + $0x278] sm:$0xf]
        %v7113 = vld [vmem:[%s55 + $0x27c] sm:$0xf]
        %v7114 = vld [vmem:[%s55 + $0x280] sm:$0xf]
        %v7115 = vld [vmem:[%s55 + $0x284] sm:$0xf]
        %v7116 = vld [vmem:[%s55 + $0x288] sm:$0xf]
        %v7117 = vld [vmem:[%s55 + $0x28c] sm:$0xf]
        %v7118 = vld [vmem:[%s55 + $0x290] sm:$0xf]
        %v7119 = vld [vmem:[%s55 + $0x294] sm:$0xf]
        %v7120 = vld [vmem:[%s55 + $0x298] sm:$0xf]
        %v7121 = vld [vmem:[%s55 + $0x29c] sm:$0xf]
        %v7122 = vld [vmem:[%s55 + $0x2a0] sm:$0xf]
        %v7123 = vld [vmem:[%s55 + $0x2a4] sm:$0xf]
        %v7124 = vld [vmem:[%s55 + $0x2a8] sm:$0xf]
        %v7125 = vld [vmem:[%s55 + $0x2ac] sm:$0xf]
        %v7126 = vld [vmem:[%s55 + $0x2b0] sm:$0xf]
        %v7127 = vld [vmem:[%s55 + $0x2b4] sm:$0xf]
        %v7128 = vld [vmem:[%s55 + $0x2b8] sm:$0xf]
        %v7129 = vld [vmem:[%s55 + $0x2bc] sm:$0xf]
        %v7130 = vld [vmem:[%s55 + $0x2c0] sm:$0xf]
        %v7131 = vld [vmem:[%s55 + $0x2c4] sm:$0xf]
        %v7132 = vld [vmem:[%s55 + $0x2c8] sm:$0xf]
        %v7133 = vld [vmem:[%s55 + $0x2cc] sm:$0xf]
        %v7134 = vld [vmem:[%s55 + $0x2d0] sm:$0xf]
        %v7135 = vld [vmem:[%s55 + $0x2d4] sm:$0xf]
        %v7136 = vld [vmem:[%s55 + $0x2d8] sm:$0xf]
        %v7137 = vld [vmem:[%s55 + $0x2dc] sm:$0xf]
        %v7138 = vld [vmem:[%s55 + $0x2e0] sm:$0xf]
        %v7139 = vld [vmem:[%s55 + $0x2e4] sm:$0xf]
        %v7140 = vld [vmem:[%s55 + $0x2e8] sm:$0xf]
        %v7141 = vld [vmem:[%s55 + $0x2ec] sm:$0xf]
        %v7142 = vld [vmem:[%s55 + $0x2f0] sm:$0xf]
        %v7143 = vld [vmem:[%s55 + $0x2f4] sm:$0xf]
        %v7144 = vld [vmem:[%s55 + $0x2f8] sm:$0xf]
        %v7145 = vld [vmem:[%s55 + $0x2fc] sm:$0xf]
        %v7146 = vld [vmem:[%s55 + $0x300] sm:$0xf]
        %v7147 = vld [vmem:[%s55 + $0x304] sm:$0xf]
        %v7148 = vld [vmem:[%s55 + $0x308] sm:$0xf]
        %v7149 = vld [vmem:[%s55 + $0x30c] sm:$0xf]
        %v7150 = vld [vmem:[%s55 + $0x310] sm:$0xf]
        %v7151 = vld [vmem:[%s55 + $0x314] sm:$0xf]
        %v7152 = vld [vmem:[%s55 + $0x318] sm:$0xf]
        %v7153 = vld [vmem:[%s55 + $0x31c] sm:$0xf]
        %v7154 = vld [vmem:[%s55 + $0x320] sm:$0xf]
        %v7155 = vld [vmem:[%s55 + $0x324] sm:$0xf]
        %v7156 = vld [vmem:[%s55 + $0x328] sm:$0xf]
        %v7157 = vld [vmem:[%s55 + $0x32c] sm:$0xf]
        %v7158 = vld [vmem:[%s55 + $0x330] sm:$0xf]
        %v7159 = vld [vmem:[%s55 + $0x334] sm:$0xf]
        %v7160 = vld [vmem:[%s55 + $0x338] sm:$0xf]
        %v7161 = vld [vmem:[%s55 + $0x33c] sm:$0xf]
        %v7162 = vld [vmem:[%s55 + $0x340] sm:$0xf]
        %v7163 = vld [vmem:[%s55 + $0x344] sm:$0xf]
        %v7164 = vld [vmem:[%s55 + $0x348] sm:$0xf]
        %v7165 = vld [vmem:[%s55 + $0x34c] sm:$0xf]
        %v7166 = vld [vmem:[%s55 + $0x350] sm:$0xf]
        %v7167 = vld [vmem:[%s55 + $0x354] sm:$0xf]
        %v7168 = vld [vmem:[%s55 + $0x358] sm:$0xf]
        %v7169 = vld [vmem:[%s55 + $0x35c] sm:$0xf]
        %v7170 = vld [vmem:[%s55 + $0x360] sm:$0xf]
        %v7171 = vld [vmem:[%s55 + $0x364] sm:$0xf]
        %v7172 = vld [vmem:[%s55 + $0x368] sm:$0xf]
        %v7173 = vld [vmem:[%s55 + $0x36c] sm:$0xf]
        %v7174 = vld [vmem:[%s55 + $0x370] sm:$0xf]
        %v7175 = vld [vmem:[%s55 + $0x374] sm:$0xf]
        %v7176 = vld [vmem:[%s55 + $0x378] sm:$0xf]
        %v7177 = vld [vmem:[%s55 + $0x37c] sm:$0xf]
        %v7178 = vld [vmem:[%s55 + $0x380] sm:$0xf]
        %v7179 = vld [vmem:[%s55 + $0x384] sm:$0xf]
        %v7180 = vld [vmem:[%s55 + $0x388] sm:$0xf]
        %v7181 = vld [vmem:[%s55 + $0x38c] sm:$0xf]
        %v7182 = vld [vmem:[%s55 + $0x390] sm:$0xf]
        %v7183 = vld [vmem:[%s55 + $0x394] sm:$0xf]
        %v7184 = vld [vmem:[%s55 + $0x398] sm:$0xf]
        %v7185 = vld [vmem:[%s55 + $0x39c] sm:$0xf]
        %v7186 = vld [vmem:[%s55 + $0x3a0] sm:$0xf]
        %v7187 = vld [vmem:[%s55 + $0x3a4] sm:$0xf]
        %v7188 = vld [vmem:[%s55 + $0x3a8] sm:$0xf]
        %v7189 = vld [vmem:[%s55 + $0x3ac] sm:$0xf]
        %v7190 = vld [vmem:[%s55 + $0x3b0] sm:$0xf]
        %v7191 = vld [vmem:[%s55 + $0x3b4] sm:$0xf]
        %v7192 = vld [vmem:[%s55 + $0x3b8] sm:$0xf]
        %v7193 = vld [vmem:[%s55 + $0x3bc] sm:$0xf]
        %v7194 = vld [vmem:[%s55 + $0x3c0] sm:$0xf]
        %v7195 = vld [vmem:[%s55 + $0x3c4] sm:$0xf]
        %v7196 = vld [vmem:[%s55 + $0x3c8] sm:$0xf]
        %v7197 = vld [vmem:[%s55 + $0x3cc] sm:$0xf]
        %v7198 = vld [vmem:[%s55 + $0x3d0] sm:$0xf]
        %v7199 = vld [vmem:[%s55 + $0x3d4] sm:$0xf]
        %v7200 = vld [vmem:[%s55 + $0x3d8] sm:$0xf]
        %v7201 = vld [vmem:[%s55 + $0x3dc] sm:$0xf]
        %v7202 = vld [vmem:[%s55 + $0x3e0] sm:$0xf]
        %v7203 = vld [vmem:[%s55 + $0x3e4] sm:$0xf]
        %v7204 = vld [vmem:[%s55 + $0x3e8] sm:$0xf]
        %v7205 = vld [vmem:[%s55 + $0x3ec] sm:$0xf]
        %v7206 = vld [vmem:[%s55 + $0x3f0] sm:$0xf]
        %v7207 = vld [vmem:[%s55 + $0x3f4] sm:$0xf]
        %v7208 = vld [vmem:[%s55 + $0x3f8] sm:$0xf]
        %v7209 = vld [vmem:[%s55 + $0x3fc] sm:$0xf]
        %v7210 = vld [vmem:[%s57] sm:$0x1]
        %v7212 = vlaneseq
        %v7213 = vshrl.u32 %v7212, 7
        %v7214 = vsub.s32 0, %v7213
        %v7215 = vrot.slane %v7210, %v7214
        %v7473 = vunpack.c.l.b16 %v6954
        %v7474 = vunpack.c.l.b16 %v6955
        %v7475 = vunpack.c.l.b16 %v6956
        %v7476 = vunpack.c.l.b16 %v6957
        %v7477 = vunpack.c.l.b16 %v6958
        %v7478 = vunpack.c.l.b16 %v6959
        %v7479 = vunpack.c.l.b16 %v6960
        %v7480 = vunpack.c.l.b16 %v6961
        %v7481 = vunpack.c.l.b16 %v6962
        %v7482 = vunpack.c.l.b16 %v6963
        %v7483 = vunpack.c.l.b16 %v6964
        %v7484 = vunpack.c.l.b16 %v6965
        %v7485 = vunpack.c.l.b16 %v6966
        %v7486 = vunpack.c.l.b16 %v6967
        %v7487 = vunpack.c.l.b16 %v6968
        %v7488 = vunpack.c.l.b16 %v6969
        %v7489 = vunpack.c.l.b16 %v6970
        %v7490 = vunpack.c.l.b16 %v6971
        %v7491 = vunpack.c.l.b16 %v6972
        %v7492 = vunpack.c.l.b16 %v6973
        %v7493 = vunpack.c.l.b16 %v6974
        %v7494 = vunpack.c.l.b16 %v6975
        %v7495 = vunpack.c.l.b16 %v6976
        %v7496 = vunpack.c.l.b16 %v6977
        %v7497 = vunpack.c.l.b16 %v6978
        %v7498 = vunpack.c.l.b16 %v6979
        %v7499 = vunpack.c.l.b16 %v6980
        %v7500 = vunpack.c.l.b16 %v6981
        %v7501 = vunpack.c.l.b16 %v6982
        %v7502 = vunpack.c.l.b16 %v6983
        %v7503 = vunpack.c.l.b16 %v6984
        %v7504 = vunpack.c.l.b16 %v6985
        %v7505 = vunpack.c.l.b16 %v6986
        %v7506 = vunpack.c.l.b16 %v6987
        %v7507 = vunpack.c.l.b16 %v6988
        %v7508 = vunpack.c.l.b16 %v6989
        %v7509 = vunpack.c.l.b16 %v6990
        %v7510 = vunpack.c.l.b16 %v6991
        %v7511 = vunpack.c.l.b16 %v6992
        %v7512 = vunpack.c.l.b16 %v6993
        %v7513 = vunpack.c.l.b16 %v6994
        %v7514 = vunpack.c.l.b16 %v6995
        %v7515 = vunpack.c.l.b16 %v6996
        %v7516 = vunpack.c.l.b16 %v6997
        %v7517 = vunpack.c.l.b16 %v6998
        %v7518 = vunpack.c.l.b16 %v6999
        %v7519 = vunpack.c.l.b16 %v7000
        %v7520 = vunpack.c.l.b16 %v7001
        %v7521 = vunpack.c.l.b16 %v7002
        %v7522 = vunpack.c.l.b16 %v7003
        %v7523 = vunpack.c.l.b16 %v7004
        %v7524 = vunpack.c.l.b16 %v7005
        %v7525 = vunpack.c.l.b16 %v7006
        %v7526 = vunpack.c.l.b16 %v7007
        %v7527 = vunpack.c.l.b16 %v7008
        %v7528 = vunpack.c.l.b16 %v7009
        %v7529 = vunpack.c.l.b16 %v7010
        %v7530 = vunpack.c.l.b16 %v7011
        %v7531 = vunpack.c.l.b16 %v7012
        %v7532 = vunpack.c.l.b16 %v7013
        %v7533 = vunpack.c.l.b16 %v7014
        %v7534 = vunpack.c.l.b16 %v7015
        %v7535 = vunpack.c.l.b16 %v7016
        %v7536 = vunpack.c.l.b16 %v7017
        %v7537 = vunpack.c.l.b16 %v7018
        %v7538 = vunpack.c.l.b16 %v7019
        %v7539 = vunpack.c.l.b16 %v7020
        %v7540 = vunpack.c.l.b16 %v7021
        %v7541 = vunpack.c.l.b16 %v7022
        %v7542 = vunpack.c.l.b16 %v7023
        %v7543 = vunpack.c.l.b16 %v7024
        %v7544 = vunpack.c.l.b16 %v7025
        %v7545 = vunpack.c.l.b16 %v7026
        %v7546 = vunpack.c.l.b16 %v7027
        %v7547 = vunpack.c.l.b16 %v7028
        %v7548 = vunpack.c.l.b16 %v7029
        %v7549 = vunpack.c.l.b16 %v7030
        %v7550 = vunpack.c.l.b16 %v7031
        %v7551 = vunpack.c.l.b16 %v7032
        %v7552 = vunpack.c.l.b16 %v7033
        %v7553 = vunpack.c.l.b16 %v7034
        %v7554 = vunpack.c.l.b16 %v7035
        %v7555 = vunpack.c.l.b16 %v7036
        %v7556 = vunpack.c.l.b16 %v7037
        %v7557 = vunpack.c.l.b16 %v7038
        %v7558 = vunpack.c.l.b16 %v7039
        %v7559 = vunpack.c.l.b16 %v7040
        %v7560 = vunpack.c.l.b16 %v7041
        %v7561 = vunpack.c.l.b16 %v7042
        %v7562 = vunpack.c.l.b16 %v7043
        %v7563 = vunpack.c.l.b16 %v7044
        %v7564 = vunpack.c.l.b16 %v7045
        %v7565 = vunpack.c.l.b16 %v7046
        %v7566 = vunpack.c.l.b16 %v7047
        %v7567 = vunpack.c.l.b16 %v7048
        %v7568 = vunpack.c.l.b16 %v7049
        %v7569 = vunpack.c.l.b16 %v7050
        %v7570 = vunpack.c.l.b16 %v7051
        %v7571 = vunpack.c.l.b16 %v7052
        %v7572 = vunpack.c.l.b16 %v7053
        %v7573 = vunpack.c.l.b16 %v7054
        %v7574 = vunpack.c.l.b16 %v7055
        %v7575 = vunpack.c.l.b16 %v7056
        %v7576 = vunpack.c.l.b16 %v7057
        %v7577 = vunpack.c.l.b16 %v7058
        %v7578 = vunpack.c.l.b16 %v7059
        %v7579 = vunpack.c.l.b16 %v7060
        %v7580 = vunpack.c.l.b16 %v7061
        %v7581 = vunpack.c.l.b16 %v7062
        %v7582 = vunpack.c.l.b16 %v7063
        %v7583 = vunpack.c.l.b16 %v7064
        %v7584 = vunpack.c.l.b16 %v7065
        %v7585 = vunpack.c.l.b16 %v7066
        %v7586 = vunpack.c.l.b16 %v7067
        %v7587 = vunpack.c.l.b16 %v7068
        %v7588 = vunpack.c.l.b16 %v7069
        %v7589 = vunpack.c.l.b16 %v7070
        %v7590 = vunpack.c.l.b16 %v7071
        %v7591 = vunpack.c.l.b16 %v7072
        %v7592 = vunpack.c.l.b16 %v7073
        %v7593 = vunpack.c.l.b16 %v7074
        %v7594 = vunpack.c.l.b16 %v7075
        %v7595 = vunpack.c.l.b16 %v7076
        %v7596 = vunpack.c.l.b16 %v7077
        %v7597 = vunpack.c.l.b16 %v7078
        %v7598 = vunpack.c.l.b16 %v7079
        %v7599 = vunpack.c.l.b16 %v7080
        %v7600 = vunpack.c.l.b16 %v7081
        %v7601 = vunpack.c.l.b16 %v7082
        %v7602 = vunpack.c.l.b16 %v7083
        %v7603 = vunpack.c.l.b16 %v7084
        %v7604 = vunpack.c.l.b16 %v7085
        %v7605 = vunpack.c.l.b16 %v7086
        %v7606 = vunpack.c.l.b16 %v7087
        %v7607 = vunpack.c.l.b16 %v7088
        %v7608 = vunpack.c.l.b16 %v7089
        %v7609 = vunpack.c.l.b16 %v7090
        %v7610 = vunpack.c.l.b16 %v7091
        %v7611 = vunpack.c.l.b16 %v7092
        %v7612 = vunpack.c.l.b16 %v7093
        %v7613 = vunpack.c.l.b16 %v7094
        %v7614 = vunpack.c.l.b16 %v7095
        %v7615 = vunpack.c.l.b16 %v7096
        %v7616 = vunpack.c.l.b16 %v7097
        %v7617 = vunpack.c.l.b16 %v7098
        %v7618 = vunpack.c.l.b16 %v7099
        %v7619 = vunpack.c.l.b16 %v7100
        %v7620 = vunpack.c.l.b16 %v7101
        %v7621 = vunpack.c.l.b16 %v7102
        %v7622 = vunpack.c.l.b16 %v7103
        %v7623 = vunpack.c.l.b16 %v7104
        %v7624 = vunpack.c.l.b16 %v7105
        %v7625 = vunpack.c.l.b16 %v7106
        %v7626 = vunpack.c.l.b16 %v7107
        %v7627 = vunpack.c.l.b16 %v7108
        %v7628 = vunpack.c.l.b16 %v7109
        %v7629 = vunpack.c.l.b16 %v7110
        %v7630 = vunpack.c.l.b16 %v7111
        %v7631 = vunpack.c.l.b16 %v7112
        %v7632 = vunpack.c.l.b16 %v7113
        %v7633 = vunpack.c.l.b16 %v7114
        %v7634 = vunpack.c.l.b16 %v7115
        %v7635 = vunpack.c.l.b16 %v7116
        %v7636 = vunpack.c.l.b16 %v7117
        %v7637 = vunpack.c.l.b16 %v7118
        %v7638 = vunpack.c.l.b16 %v7119
        %v7639 = vunpack.c.l.b16 %v7120
        %v7640 = vunpack.c.l.b16 %v7121
        %v7641 = vunpack.c.l.b16 %v7122
        %v7642 = vunpack.c.l.b16 %v7123
        %v7643 = vunpack.c.l.b16 %v7124
        %v7644 = vunpack.c.l.b16 %v7125
        %v7645 = vunpack.c.l.b16 %v7126
        %v7646 = vunpack.c.l.b16 %v7127
        %v7647 = vunpack.c.l.b16 %v7128
        %v7648 = vunpack.c.l.b16 %v7129
        %v7649 = vunpack.c.l.b16 %v7130
        %v7650 = vunpack.c.l.b16 %v7131
        %v7651 = vunpack.c.l.b16 %v7132
        %v7652 = vunpack.c.l.b16 %v7133
        %v7653 = vunpack.c.l.b16 %v7134
        %v7654 = vunpack.c.l.b16 %v7135
        %v7655 = vunpack.c.l.b16 %v7136
        %v7656 = vunpack.c.l.b16 %v7137
        %v7657 = vunpack.c.l.b16 %v7138
        %v7658 = vunpack.c.l.b16 %v7139
        %v7659 = vunpack.c.l.b16 %v7140
        %v7660 = vunpack.c.l.b16 %v7141
        %v7661 = vunpack.c.l.b16 %v7142
        %v7662 = vunpack.c.l.b16 %v7143
        %v7663 = vunpack.c.l.b16 %v7144
        %v7664 = vunpack.c.l.b16 %v7145
        %v7665 = vunpack.c.l.b16 %v7146
        %v7666 = vunpack.c.l.b16 %v7147
        %v7667 = vunpack.c.l.b16 %v7148
        %v7668 = vunpack.c.l.b16 %v7149
        %v7669 = vunpack.c.l.b16 %v7150
        %v7670 = vunpack.c.l.b16 %v7151
        %v7671 = vunpack.c.l.b16 %v7152
        %v7672 = vunpack.c.l.b16 %v7153
        %v7673 = vunpack.c.l.b16 %v7154
        %v7674 = vunpack.c.l.b16 %v7155
        %v7675 = vunpack.c.l.b16 %v7156
        %v7676 = vunpack.c.l.b16 %v7157
        %v7677 = vunpack.c.l.b16 %v7158
        %v7678 = vunpack.c.l.b16 %v7159
        %v7679 = vunpack.c.l.b16 %v7160
        %v7680 = vunpack.c.l.b16 %v7161
        %v7681 = vunpack.c.l.b16 %v7162
        %v7682 = vunpack.c.l.b16 %v7163
        %v7683 = vunpack.c.l.b16 %v7164
        %v7684 = vunpack.c.l.b16 %v7165
        %v7685 = vunpack.c.l.b16 %v7166
        %v7686 = vunpack.c.l.b16 %v7167
        %v7687 = vunpack.c.l.b16 %v7168
        %v7688 = vunpack.c.l.b16 %v7169
        %v7689 = vunpack.c.l.b16 %v7170
        %v7690 = vunpack.c.l.b16 %v7171
        %v7691 = vunpack.c.l.b16 %v7172
        %v7692 = vunpack.c.l.b16 %v7173
        %v7693 = vunpack.c.l.b16 %v7174
        %v7694 = vunpack.c.l.b16 %v7175
        %v7695 = vunpack.c.l.b16 %v7176
        %v7696 = vunpack.c.l.b16 %v7177
        %v7697 = vunpack.c.l.b16 %v7178
        %v7698 = vunpack.c.l.b16 %v7179
        %v7699 = vunpack.c.l.b16 %v7180
        %v7700 = vunpack.c.l.b16 %v7181
        %v7701 = vunpack.c.l.b16 %v7182
        %v7702 = vunpack.c.l.b16 %v7183
        %v7703 = vunpack.c.l.b16 %v7184
        %v7704 = vunpack.c.l.b16 %v7185
        %v7705 = vunpack.c.l.b16 %v7186
        %v7706 = vunpack.c.l.b16 %v7187
        %v7707 = vunpack.c.l.b16 %v7188
        %v7708 = vunpack.c.l.b16 %v7189
        %v7709 = vunpack.c.l.b16 %v7190
        %v7710 = vunpack.c.l.b16 %v7191
        %v7711 = vunpack.c.l.b16 %v7192
        %v7712 = vunpack.c.l.b16 %v7193
        %v7713 = vunpack.c.l.b16 %v7194
        %v7714 = vunpack.c.l.b16 %v7195
        %v7715 = vunpack.c.l.b16 %v7196
        %v7716 = vunpack.c.l.b16 %v7197
        %v7717 = vunpack.c.l.b16 %v7198
        %v7718 = vunpack.c.l.b16 %v7199
        %v7719 = vunpack.c.l.b16 %v7200
        %v7720 = vunpack.c.l.b16 %v7201
        %v7721 = vunpack.c.l.b16 %v7202
        %v7722 = vunpack.c.l.b16 %v7203
        %v7723 = vunpack.c.l.b16 %v7204
        %v7724 = vunpack.c.l.b16 %v7205
        %v7725 = vunpack.c.l.b16 %v7206
        %v7726 = vunpack.c.l.b16 %v7207
        %v7727 = vunpack.c.l.b16 %v7208
        %v7728 = vunpack.c.l.b16 %v7209
        %v7729 = vpack.c.b16 %v7474, %v7473
        %v7730 = vpack.c.b16 %v7476, %v7475
        %v7731 = vpack.c.b16 %v7478, %v7477
        %v7732 = vpack.c.b16 %v7480, %v7479
        %v7733 = vpack.c.b16 %v7482, %v7481
        %v7734 = vpack.c.b16 %v7484, %v7483
        %v7735 = vpack.c.b16 %v7486, %v7485
        %v7736 = vpack.c.b16 %v7488, %v7487
        %v7737 = vpack.c.b16 %v7490, %v7489
        %v7738 = vpack.c.b16 %v7492, %v7491
        %v7739 = vpack.c.b16 %v7494, %v7493
        %v7740 = vpack.c.b16 %v7496, %v7495
        %v7741 = vpack.c.b16 %v7498, %v7497
        %v7742 = vpack.c.b16 %v7500, %v7499
        %v7743 = vpack.c.b16 %v7502, %v7501
        %v7744 = vpack.c.b16 %v7504, %v7503
        %v7745 = vpack.c.b16 %v7506, %v7505
        %v7746 = vpack.c.b16 %v7508, %v7507
        %v7747 = vpack.c.b16 %v7510, %v7509
        %v7748 = vpack.c.b16 %v7512, %v7511
        %v7749 = vpack.c.b16 %v7514, %v7513
        %v7750 = vpack.c.b16 %v7516, %v7515
        %v7751 = vpack.c.b16 %v7518, %v7517
        %v7752 = vpack.c.b16 %v7520, %v7519
        %v7753 = vpack.c.b16 %v7522, %v7521
        %v7754 = vpack.c.b16 %v7524, %v7523
        %v7755 = vpack.c.b16 %v7526, %v7525
        %v7756 = vpack.c.b16 %v7528, %v7527
        %v7757 = vpack.c.b16 %v7530, %v7529
        %v7758 = vpack.c.b16 %v7532, %v7531
        %v7759 = vpack.c.b16 %v7534, %v7533
        %v7760 = vpack.c.b16 %v7536, %v7535
        %v7761 = vpack.c.b16 %v7538, %v7537
        %v7762 = vpack.c.b16 %v7540, %v7539
        %v7763 = vpack.c.b16 %v7542, %v7541
        %v7764 = vpack.c.b16 %v7544, %v7543
        %v7765 = vpack.c.b16 %v7546, %v7545
        %v7766 = vpack.c.b16 %v7548, %v7547
        %v7767 = vpack.c.b16 %v7550, %v7549
        %v7768 = vpack.c.b16 %v7552, %v7551
        %v7769 = vpack.c.b16 %v7554, %v7553
        %v7770 = vpack.c.b16 %v7556, %v7555
        %v7771 = vpack.c.b16 %v7558, %v7557
        %v7772 = vpack.c.b16 %v7560, %v7559
        %v7773 = vpack.c.b16 %v7562, %v7561
        %v7774 = vpack.c.b16 %v7564, %v7563
        %v7775 = vpack.c.b16 %v7566, %v7565
        %v7776 = vpack.c.b16 %v7568, %v7567
        %v7777 = vpack.c.b16 %v7570, %v7569
        %v7778 = vpack.c.b16 %v7572, %v7571
        %v7779 = vpack.c.b16 %v7574, %v7573
        %v7780 = vpack.c.b16 %v7576, %v7575
        %v7781 = vpack.c.b16 %v7578, %v7577
        %v7782 = vpack.c.b16 %v7580, %v7579
        %v7783 = vpack.c.b16 %v7582, %v7581
        %v7784 = vpack.c.b16 %v7584, %v7583
        %v7785 = vpack.c.b16 %v7586, %v7585
        %v7786 = vpack.c.b16 %v7588, %v7587
        %v7787 = vpack.c.b16 %v7590, %v7589
        %v7788 = vpack.c.b16 %v7592, %v7591
        %v7789 = vpack.c.b16 %v7594, %v7593
        %v7790 = vpack.c.b16 %v7596, %v7595
        %v7791 = vpack.c.b16 %v7598, %v7597
        %v7792 = vpack.c.b16 %v7600, %v7599
        %v7793 = vpack.c.b16 %v7602, %v7601
        %v7794 = vpack.c.b16 %v7604, %v7603
        %v7795 = vpack.c.b16 %v7606, %v7605
        %v7796 = vpack.c.b16 %v7608, %v7607
        %v7797 = vpack.c.b16 %v7610, %v7609
        %v7798 = vpack.c.b16 %v7612, %v7611
        %v7799 = vpack.c.b16 %v7614, %v7613
        %v7800 = vpack.c.b16 %v7616, %v7615
        %v7801 = vpack.c.b16 %v7618, %v7617
        %v7802 = vpack.c.b16 %v7620, %v7619
        %v7803 = vpack.c.b16 %v7622, %v7621
        %v7804 = vpack.c.b16 %v7624, %v7623
        %v7805 = vpack.c.b16 %v7626, %v7625
        %v7806 = vpack.c.b16 %v7628, %v7627
        %v7807 = vpack.c.b16 %v7630, %v7629
        %v7808 = vpack.c.b16 %v7632, %v7631
        %v7809 = vpack.c.b16 %v7634, %v7633
        %v7810 = vpack.c.b16 %v7636, %v7635
        %v7811 = vpack.c.b16 %v7638, %v7637
        %v7812 = vpack.c.b16 %v7640, %v7639
        %v7813 = vpack.c.b16 %v7642, %v7641
        %v7814 = vpack.c.b16 %v7644, %v7643
        %v7815 = vpack.c.b16 %v7646, %v7645
        %v7816 = vpack.c.b16 %v7648, %v7647
        %v7817 = vpack.c.b16 %v7650, %v7649
        %v7818 = vpack.c.b16 %v7652, %v7651
        %v7819 = vpack.c.b16 %v7654, %v7653
        %v7820 = vpack.c.b16 %v7656, %v7655
        %v7821 = vpack.c.b16 %v7658, %v7657
        %v7822 = vpack.c.b16 %v7660, %v7659
        %v7823 = vpack.c.b16 %v7662, %v7661
        %v7824 = vpack.c.b16 %v7664, %v7663
        %v7825 = vpack.c.b16 %v7666, %v7665
        %v7826 = vpack.c.b16 %v7668, %v7667
        %v7827 = vpack.c.b16 %v7670, %v7669
        %v7828 = vpack.c.b16 %v7672, %v7671
        %v7829 = vpack.c.b16 %v7674, %v7673
        %v7830 = vpack.c.b16 %v7676, %v7675
        %v7831 = vpack.c.b16 %v7678, %v7677
        %v7832 = vpack.c.b16 %v7680, %v7679
        %v7833 = vpack.c.b16 %v7682, %v7681
        %v7834 = vpack.c.b16 %v7684, %v7683
        %v7835 = vpack.c.b16 %v7686, %v7685
        %v7836 = vpack.c.b16 %v7688, %v7687
        %v7837 = vpack.c.b16 %v7690, %v7689
        %v7838 = vpack.c.b16 %v7692, %v7691
        %v7839 = vpack.c.b16 %v7694, %v7693
        %v7840 = vpack.c.b16 %v7696, %v7695
        %v7841 = vpack.c.b16 %v7698, %v7697
        %v7842 = vpack.c.b16 %v7700, %v7699
        %v7843 = vpack.c.b16 %v7702, %v7701
        %v7844 = vpack.c.b16 %v7704, %v7703
        %v7845 = vpack.c.b16 %v7706, %v7705
        %v7846 = vpack.c.b16 %v7708, %v7707
        %v7847 = vpack.c.b16 %v7710, %v7709
        %v7848 = vpack.c.b16 %v7712, %v7711
        %v7849 = vpack.c.b16 %v7714, %v7713
        %v7850 = vpack.c.b16 %v7716, %v7715
        %v7851 = vpack.c.b16 %v7718, %v7717
        %v7852 = vpack.c.b16 %v7720, %v7719
        %v7853 = vpack.c.b16 %v7722, %v7721
        %v7854 = vpack.c.b16 %v7724, %v7723
        %v7855 = vpack.c.b16 %v7726, %v7725
        %v7856 = vpack.c.b16 %v7728, %v7727
        %7985 = vmatprep.subr.bf16.mxu0 0
        %7986 = vmatpush1.bf16.msra.mxu0 %v7729
        %7987 = vmatprep.subr.bf16.mxu0 0
        %7988 = vmatpush1.bf16.msra.mxu0 %v7730
        %7989 = vmatprep.subr.bf16.mxu0 0
        %7990 = vmatpush1.bf16.msra.mxu0 %v7731
        %7991 = vmatprep.subr.bf16.mxu0 0
        %7992 = vmatpush1.bf16.msra.mxu0 %v7732
        %7993 = vmatprep.subr.bf16.mxu0 0
        %7994 = vmatpush1.bf16.msra.mxu0 %v7733
        %7995 = vmatprep.subr.bf16.mxu0 0
        %7996 = vmatpush1.bf16.msra.mxu0 %v7734
        %7997 = vmatprep.subr.bf16.mxu0 0
        %7998 = vmatpush1.bf16.msra.mxu0 %v7735
        %7999 = vmatprep.subr.bf16.mxu0 0
        %8000 = vmatpush1.bf16.msra.mxu0 %v7736
        %8001 = vmatprep.subr.bf16.mxu0 0
        %8002 = vmatpush1.bf16.msra.mxu0 %v7737
        %8003 = vmatprep.subr.bf16.mxu0 0
        %8004 = vmatpush1.bf16.msra.mxu0 %v7738
        %8005 = vmatprep.subr.bf16.mxu0 0
        %8006 = vmatpush1.bf16.msra.mxu0 %v7739
        %8007 = vmatprep.subr.bf16.mxu0 0
        %8008 = vmatpush1.bf16.msra.mxu0 %v7740
        %8009 = vmatprep.subr.bf16.mxu0 0
        %8010 = vmatpush1.bf16.msra.mxu0 %v7741
        %8011 = vmatprep.subr.bf16.mxu0 0
        %8012 = vmatpush1.bf16.msra.mxu0 %v7742
        %8013 = vmatprep.subr.bf16.mxu0 0
        %8014 = vmatpush1.bf16.msra.mxu0 %v7743
        %8015 = vmatprep.subr.bf16.mxu0 0
        %8016 = vmatpush1.bf16.msra.mxu0 %v7744
        %8017 = vmatprep.mubr.bf16.mxu0 %v6939
        %8018 = vmatmul.mubr.bf16.gmra.mrb[0].mxu0 %v6938
        %v8019 = vpop.f32.mrb[0].mxu0
        %v8020 = vadd.f32 %v7215, %v8019
        %v8021 = vpop.f32.mrb[0].mxu0
        %v8022 = vpop.f32.mrb[0].mxu0
        %v8023 = vpop.f32.mrb[0].mxu0
        %8024 = vdwg.mxu0
        %8025 = vmatprep.subr.bf16.mxu0 0
        %8026 = vmatpush1.bf16.msra.mxu0 %v7745
        %8027 = vmatprep.subr.bf16.mxu0 0
        %8028 = vmatpush1.bf16.msra.mxu0 %v7746
        %8029 = vmatprep.subr.bf16.mxu0 0
        %8030 = vmatpush1.bf16.msra.mxu0 %v7747
        %8031 = vmatprep.subr.bf16.mxu0 0
        %8032 = vmatpush1.bf16.msra.mxu0 %v7748
        %8033 = vmatprep.subr.bf16.mxu0 0
        %8034 = vmatpush1.bf16.msra.mxu0 %v7749
        %8035 = vmatprep.subr.bf16.mxu0 0
        %8036 = vmatpush1.bf16.msra.mxu0 %v7750
        %8037 = vmatprep.subr.bf16.mxu0 0
        %8038 = vmatpush1.bf16.msra.mxu0 %v7751
        %8039 = vmatprep.subr.bf16.mxu0 0
        %8040 = vmatpush1.bf16.msra.mxu0 %v7752
        %8041 = vmatprep.subr.bf16.mxu0 0
        %8042 = vmatpush1.bf16.msra.mxu0 %v7753
        %8043 = vmatprep.subr.bf16.mxu0 0
        %8044 = vmatpush1.bf16.msra.mxu0 %v7754
        %8045 = vmatprep.subr.bf16.mxu0 0
        %8046 = vmatpush1.bf16.msra.mxu0 %v7755
        %8047 = vmatprep.subr.bf16.mxu0 0
        %8048 = vmatpush1.bf16.msra.mxu0 %v7756
        %8049 = vmatprep.subr.bf16.mxu0 0
        %8050 = vmatpush1.bf16.msra.mxu0 %v7757
        %8051 = vmatprep.subr.bf16.mxu0 0
        %8052 = vmatpush1.bf16.msra.mxu0 %v7758
        %8053 = vmatprep.subr.bf16.mxu0 0
        %8054 = vmatpush1.bf16.msra.mxu0 %v7759
        %8055 = vmatprep.subr.bf16.mxu0 0
        %8056 = vmatpush1.bf16.msra.mxu0 %v7760
        %8057 = vmatprep.mubr.bf16.mxu0 %v6941
        %8058 = vmatmul.mubr.bf16.gmra.mrb[0].mxu0 %v6940
        %v8059 = vpop.f32.mrb[0].mxu0
        %v8060 = vadd.f32 %v8020, %v8059
        %v8061 = vpop.f32.mrb[0].mxu0
        %v8062 = vpop.f32.mrb[0].mxu0
        %v8063 = vpop.f32.mrb[0].mxu0
        %8064 = vdwg.mxu0
        %8065 = vmatprep.subr.bf16.mxu0 0
        %8066 = vmatpush1.bf16.msra.mxu0 %v7761
        %8067 = vmatprep.subr.bf16.mxu0 0
        %8068 = vmatpush1.bf16.msra.mxu0 %v7762
        %8069 = vmatprep.subr.bf16.mxu0 0
        %8070 = vmatpush1.bf16.msra.mxu0 %v7763
        %8071 = vmatprep.subr.bf16.mxu0 0
        %8072 = vmatpush1.bf16.msra.mxu0 %v7764
        %8073 = vmatprep.subr.bf16.mxu0 0
        %8074 = vmatpush1.bf16.msra.mxu0 %v7765
        %8075 = vmatprep.subr.bf16.mxu0 0
        %8076 = vmatpush1.bf16.msra.mxu0 %v7766
        %8077 = vmatprep.subr.bf16.mxu0 0
        %8078 = vmatpush1.bf16.msra.mxu0 %v7767
        %8079 = vmatprep.subr.bf16.mxu0 0
        %8080 = vmatpush1.bf16.msra.mxu0 %v7768
        %8081 = vmatprep.subr.bf16.mxu0 0
        %8082 = vmatpush1.bf16.msra.mxu0 %v7769
        %8083 = vmatprep.subr.bf16.mxu0 0
        %8084 = vmatpush1.bf16.msra.mxu0 %v7770
        %8085 = vmatprep.subr.bf16.mxu0 0
        %8086 = vmatpush1.bf16.msra.mxu0 %v7771
        %8087 = vmatprep.subr.bf16.mxu0 0
        %8088 = vmatpush1.bf16.msra.mxu0 %v7772
        %8089 = vmatprep.subr.bf16.mxu0 0
        %8090 = vmatpush1.bf16.msra.mxu0 %v7773
        %8091 = vmatprep.subr.bf16.mxu0 0
        %8092 = vmatpush1.bf16.msra.mxu0 %v7774
        %8093 = vmatprep.subr.bf16.mxu0 0
        %8094 = vmatpush1.bf16.msra.mxu0 %v7775
        %8095 = vmatprep.subr.bf16.mxu0 0
        %8096 = vmatpush1.bf16.msra.mxu0 %v7776
        %8097 = vmatprep.mubr.bf16.mxu0 %v6943
        %8098 = vmatmul.mubr.bf16.gmra.mrb[0].mxu0 %v6942
        %v8099 = vpop.f32.mrb[0].mxu0
        %v8100 = vadd.f32 %v8060, %v8099
        %v8101 = vpop.f32.mrb[0].mxu0
        %v8102 = vpop.f32.mrb[0].mxu0
        %v8103 = vpop.f32.mrb[0].mxu0
        %8104 = vdwg.mxu0
        %8105 = vmatprep.subr.bf16.mxu0 0
        %8106 = vmatpush1.bf16.msra.mxu0 %v7777
        %8107 = vmatprep.subr.bf16.mxu0 0
        %8108 = vmatpush1.bf16.msra.mxu0 %v7778
        %8109 = vmatprep.subr.bf16.mxu0 0
        %8110 = vmatpush1.bf16.msra.mxu0 %v7779
        %8111 = vmatprep.subr.bf16.mxu0 0
        %8112 = vmatpush1.bf16.msra.mxu0 %v7780
        %8113 = vmatprep.subr.bf16.mxu0 0
        %8114 = vmatpush1.bf16.msra.mxu0 %v7781
        %8115 = vmatprep.subr.bf16.mxu0 0
        %8116 = vmatpush1.bf16.msra.mxu0 %v7782
        %8117 = vmatprep.subr.bf16.mxu0 0
        %8118 = vmatpush1.bf16.msra.mxu0 %v7783
        %8119 = vmatprep.subr.bf16.mxu0 0
        %8120 = vmatpush1.bf16.msra.mxu0 %v7784
        %8121 = vmatprep.subr.bf16.mxu0 0
        %8122 = vmatpush1.bf16.msra.mxu0 %v7785
        %8123 = vmatprep.subr.bf16.mxu0 0
        %8124 = vmatpush1.bf16.msra.mxu0 %v7786
        %8125 = vmatprep.subr.bf16.mxu0 0
        %8126 = vmatpush1.bf16.msra.mxu0 %v7787
        %8127 = vmatprep.subr.bf16.mxu0 0
        %8128 = vmatpush1.bf16.msra.mxu0 %v7788
        %8129 = vmatprep.subr.bf16.mxu0 0
        %8130 = vmatpush1.bf16.msra.mxu0 %v7789
        %8131 = vmatprep.subr.bf16.mxu0 0
        %8132 = vmatpush1.bf16.msra.mxu0 %v7790
        %8133 = vmatprep.subr.bf16.mxu0 0
        %8134 = vmatpush1.bf16.msra.mxu0 %v7791
        %8135 = vmatprep.subr.bf16.mxu0 0
        %8136 = vmatpush1.bf16.msra.mxu0 %v7792
        %8137 = vmatprep.mubr.bf16.mxu0 %v6945
        %8138 = vmatmul.mubr.bf16.gmra.mrb[0].mxu0 %v6944
        %v8139 = vpop.f32.mrb[0].mxu0
        %v8140 = vadd.f32 %v8100, %v8139
        %v8141 = vpop.f32.mrb[0].mxu0
        %v8142 = vpop.f32.mrb[0].mxu0
        %v8143 = vpop.f32.mrb[0].mxu0
        %8144 = vdwg.mxu0
        %8145 = vmatprep.subr.bf16.mxu0 0
        %8146 = vmatpush1.bf16.msra.mxu0 %v7793
        %8147 = vmatprep.subr.bf16.mxu0 0
        %8148 = vmatpush1.bf16.msra.mxu0 %v7794
        %8149 = vmatprep.subr.bf16.mxu0 0
        %8150 = vmatpush1.bf16.msra.mxu0 %v7795
        %8151 = vmatprep.subr.bf16.mxu0 0
        %8152 = vmatpush1.bf16.msra.mxu0 %v7796
        %8153 = vmatprep.subr.bf16.mxu0 0
        %8154 = vmatpush1.bf16.msra.mxu0 %v7797
        %8155 = vmatprep.subr.bf16.mxu0 0
        %8156 = vmatpush1.bf16.msra.mxu0 %v7798
        %8157 = vmatprep.subr.bf16.mxu0 0
        %8158 = vmatpush1.bf16.msra.mxu0 %v7799
        %8159 = vmatprep.subr.bf16.mxu0 0
        %8160 = vmatpush1.bf16.msra.mxu0 %v7800
        %8161 = vmatprep.subr.bf16.mxu0 0
        %8162 = vmatpush1.bf16.msra.mxu0 %v7801
        %8163 = vmatprep.subr.bf16.mxu0 0
        %8164 = vmatpush1.bf16.msra.mxu0 %v7802
        %8165 = vmatprep.subr.bf16.mxu0 0
        %8166 = vmatpush1.bf16.msra.mxu0 %v7803
        %8167 = vmatprep.subr.bf16.mxu0 0
        %8168 = vmatpush1.bf16.msra.mxu0 %v7804
        %8169 = vmatprep.subr.bf16.mxu0 0
        %8170 = vmatpush1.bf16.msra.mxu0 %v7805
        %8171 = vmatprep.subr.bf16.mxu0 0
        %8172 = vmatpush1.bf16.msra.mxu0 %v7806
        %8173 = vmatprep.subr.bf16.mxu0 0
        %8174 = vmatpush1.bf16.msra.mxu0 %v7807
        %8175 = vmatprep.subr.bf16.mxu0 0
        %8176 = vmatpush1.bf16.msra.mxu0 %v7808
        %8177 = vmatprep.mubr.bf16.mxu0 %v6947
        %8178 = vmatmul.mubr.bf16.gmra.mrb[0].mxu0 %v6946
        %v8179 = vpop.f32.mrb[0].mxu0
        %v8180 = vadd.f32 %v8140, %v8179
        %v8181 = vpop.f32.mrb[0].mxu0
        %v8182 = vpop.f32.mrb[0].mxu0
        %v8183 = vpop.f32.mrb[0].mxu0
        %8184 = vdwg.mxu0
        %8185 = vmatprep.subr.bf16.mxu0 0
        %8186 = vmatpush1.bf16.msra.mxu0 %v7809
        %8187 = vmatprep.subr.bf16.mxu0 0
        %8188 = vmatpush1.bf16.msra.mxu0 %v7810
        %8189 = vmatprep.subr.bf16.mxu0 0
        %8190 = vmatpush1.bf16.msra.mxu0 %v7811
        %8191 = vmatprep.subr.bf16.mxu0 0
        %8192 = vmatpush1.bf16.msra.mxu0 %v7812
        %8193 = vmatprep.subr.bf16.mxu0 0
        %8194 = vmatpush1.bf16.msra.mxu0 %v7813
        %8195 = vmatprep.subr.bf16.mxu0 0
        %8196 = vmatpush1.bf16.msra.mxu0 %v7814
        %8197 = vmatprep.subr.bf16.mxu0 0
        %8198 = vmatpush1.bf16.msra.mxu0 %v7815
        %8199 = vmatprep.subr.bf16.mxu0 0
        %8200 = vmatpush1.bf16.msra.mxu0 %v7816
        %8201 = vmatprep.subr.bf16.mxu0 0
        %8202 = vmatpush1.bf16.msra.mxu0 %v7817
        %8203 = vmatprep.subr.bf16.mxu0 0
        %8204 = vmatpush1.bf16.msra.mxu0 %v7818
        %8205 = vmatprep.subr.bf16.mxu0 0
        %8206 = vmatpush1.bf16.msra.mxu0 %v7819
        %8207 = vmatprep.subr.bf16.mxu0 0
        %8208 = vmatpush1.bf16.msra.mxu0 %v7820
        %8209 = vmatprep.subr.bf16.mxu0 0
        %8210 = vmatpush1.bf16.msra.mxu0 %v7821
        %8211 = vmatprep.subr.bf16.mxu0 0
        %8212 = vmatpush1.bf16.msra.mxu0 %v7822
        %8213 = vmatprep.subr.bf16.mxu0 0
        %8214 = vmatpush1.bf16.msra.mxu0 %v7823
        %8215 = vmatprep.subr.bf16.mxu0 0
        %8216 = vmatpush1.bf16.msra.mxu0 %v7824
        %8217 = vmatprep.mubr.bf16.mxu0 %v6949
        %8218 = vmatmul.mubr.bf16.gmra.mrb[0].mxu0 %v6948
        %v8219 = vpop.f32.mrb[0].mxu0
        %v8220 = vadd.f32 %v8180, %v8219
        %v8221 = vpop.f32.mrb[0].mxu0
        %v8222 = vpop.f32.mrb[0].mxu0
        %v8223 = vpop.f32.mrb[0].mxu0
        %8224 = vdwg.mxu0
        %8225 = vmatprep.subr.bf16.mxu0 0
        %8226 = vmatpush1.bf16.msra.mxu0 %v7825
        %8227 = vmatprep.subr.bf16.mxu0 0
        %8228 = vmatpush1.bf16.msra.mxu0 %v7826
        %8229 = vmatprep.subr.bf16.mxu0 0
        %8230 = vmatpush1.bf16.msra.mxu0 %v7827
        %8231 = vmatprep.subr.bf16.mxu0 0
        %8232 = vmatpush1.bf16.msra.mxu0 %v7828
        %8233 = vmatprep.subr.bf16.mxu0 0
        %8234 = vmatpush1.bf16.msra.mxu0 %v7829
        %8235 = vmatprep.subr.bf16.mxu0 0
        %8236 = vmatpush1.bf16.msra.mxu0 %v7830
        %8237 = vmatprep.subr.bf16.mxu0 0
        %8238 = vmatpush1.bf16.msra.mxu0 %v7831
        %8239 = vmatprep.subr.bf16.mxu0 0
        %8240 = vmatpush1.bf16.msra.mxu0 %v7832
        %8241 = vmatprep.subr.bf16.mxu0 0
        %8242 = vmatpush1.bf16.msra.mxu0 %v7833
        %8243 = vmatprep.subr.bf16.mxu0 0
        %8244 = vmatpush1.bf16.msra.mxu0 %v7834
        %8245 = vmatprep.subr.bf16.mxu0 0
        %8246 = vmatpush1.bf16.msra.mxu0 %v7835
        %8247 = vmatprep.subr.bf16.mxu0 0
        %8248 = vmatpush1.bf16.msra.mxu0 %v7836
        %8249 = vmatprep.subr.bf16.mxu0 0
        %8250 = vmatpush1.bf16.msra.mxu0 %v7837
        %8251 = vmatprep.subr.bf16.mxu0 0
        %8252 = vmatpush1.bf16.msra.mxu0 %v7838
        %8253 = vmatprep.subr.bf16.mxu0 0
        %8254 = vmatpush1.bf16.msra.mxu0 %v7839
        %8255 = vmatprep.subr.bf16.mxu0 0
        %8256 = vmatpush1.bf16.msra.mxu0 %v7840
        %8257 = vmatprep.mubr.bf16.mxu0 %v6951
        %8258 = vmatmul.mubr.bf16.gmra.mrb[0].mxu0 %v6950
        %v8259 = vpop.f32.mrb[0].mxu0
        %v8260 = vadd.f32 %v8220, %v8259
        %v8261 = vpop.f32.mrb[0].mxu0
        %v8262 = vpop.f32.mrb[0].mxu0
        %v8263 = vpop.f32.mrb[0].mxu0
        %8264 = vdwg.mxu0
        %8265 = vmatprep.subr.bf16.mxu0 0
        %8266 = vmatpush1.bf16.msra.mxu0 %v7841
        %8267 = vmatprep.subr.bf16.mxu0 0
        %8268 = vmatpush1.bf16.msra.mxu0 %v7842
        %8269 = vmatprep.subr.bf16.mxu0 0
        %8270 = vmatpush1.bf16.msra.mxu0 %v7843
        %8271 = vmatprep.subr.bf16.mxu0 0
        %8272 = vmatpush1.bf16.msra.mxu0 %v7844
        %8273 = vmatprep.subr.bf16.mxu0 0
        %8274 = vmatpush1.bf16.msra.mxu0 %v7845
        %8275 = vmatprep.subr.bf16.mxu0 0
        %8276 = vmatpush1.bf16.msra.mxu0 %v7846
        %8277 = vmatprep.subr.bf16.mxu0 0
        %8278 = vmatpush1.bf16.msra.mxu0 %v7847
        %8279 = vmatprep.subr.bf16.mxu0 0
        %8280 = vmatpush1.bf16.msra.mxu0 %v7848
        %8281 = vmatprep.subr.bf16.mxu0 0
        %8282 = vmatpush1.bf16.msra.mxu0 %v7849
        %8283 = vmatprep.subr.bf16.mxu0 0
        %8284 = vmatpush1.bf16.msra.mxu0 %v7850
        %8285 = vmatprep.subr.bf16.mxu0 0
        %8286 = vmatpush1.bf16.msra.mxu0 %v7851
        %8287 = vmatprep.subr.bf16.mxu0 0
        %8288 = vmatpush1.bf16.msra.mxu0 %v7852
        %8289 = vmatprep.subr.bf16.mxu0 0
        %8290 = vmatpush1.bf16.msra.mxu0 %v7853
        %8291 = vmatprep.subr.bf16.mxu0 0
        %8292 = vmatpush1.bf16.msra.mxu0 %v7854
        %8293 = vmatprep.subr.bf16.mxu0 0
        %8294 = vmatpush1.bf16.msra.mxu0 %v7855
        %8295 = vmatprep.subr.bf16.mxu0 0
        %8296 = vmatpush1.bf16.msra.mxu0 %v7856
        %8297 = vmatprep.mubr.bf16.mxu0 %v6953
        %8298 = vmatmul.mubr.bf16.gmra.mrb[0].mxu0 %v6952
        %v8299 = vpop.f32.mrb[0].mxu0
        %v8300 = vadd.f32 %v8260, %v8299
        %v8301 = vpop.f32.mrb[0].mxu0
        %v8302 = vpop.f32.mrb[0].mxu0
        %v8303 = vpop.f32.mrb[0].mxu0
        %8304 = vdwg.mxu0
        %v8305 = vadd.f32 %v6217, %v8300
        %v8306 = vsel %vm1163, %v8305, 0.0
        %8307 = vadd.xlane.f32.xlu0 %v8306
        %v8308 = vpop.xlane.xlu0 %8307
        %v8309 = vmul.f32 %v8308, %v2600
        %v8310 = vsub.f32 %v8305, %v8309
        %v8311 = vmul.f32 %v8310, %v8310
        %v8312 = vsel %vm1163, %v8311, 0.0
        %8313 = vadd.xlane.f32.xlu0 %v8312
        %v8314 = vpop.xlane.xlu0 %8313
        %v8315 = vmul.f32 %v8314, %v2600
        %v8316 = vadd.f32 %v8315, 1e-05
        %v8317 = vrsqrt.pop %v8316
        %v8318 = vmul.f32 %v8310, %v8317
        %v8319 = vld [vmem:[%s47] sm:$0x1]
        %v8321 = vlaneseq
        %v8322 = vshrl.u32 %v8321, 7
        %v8323 = vsub.s32 0, %v8322
        %v8324 = vrot.slane %v8319, %v8323
        %v8326 = vmul.f32 %v8318, %v8324
        %v8327 = vld [vmem:[%s49] sm:$0x1]
        %v8329 = vlaneseq
        %v8330 = vshrl.u32 %v8329, 7
        %v8331 = vsub.s32 0, %v8330
        %v8332 = vrot.slane %v8327, %v8331
        %v8334 = vadd.f32 %v8326, %v8332
        %v8335 = vld [vmem:[%s59] sm:$0xff]
        %v8336 = vld [vmem:[%s59 + $0x8] sm:$0xff]
        %v8337 = vld [vmem:[%s59 + $0x10] sm:$0xff]
        %v8338 = vld [vmem:[%s59 + $0x18] sm:$0xff]
        %v8339 = vld [vmem:[%s59 + $0x20] sm:$0xff]
        %v8340 = vld [vmem:[%s59 + $0x28] sm:$0xff]
        %v8341 = vld [vmem:[%s61] sm:$0x1]
        %v8343 = vlaneseq
        %v8344 = vshrl.u32 %v8343, 7
        %v8345 = vsub.s32 0, %v8344
        %v8346 = vrot.slane %v8341, %v8345
        %v8349 = vsel %vm1163, %v8334, 0
        %8351 = vmatprep.subr.mxu0 0.0
        %8352 = vmatpush1.msra.mxu0 %v8335
        %8353 = vmatprep.subr.mxu0 0.0
        %8354 = vmatpush1.msra.mxu0 %v8336
        %8355 = vmatprep.subr.mxu0 0.0
        %8356 = vmatpush1.msra.mxu0 %v8337
        %8357 = vmatprep.subr.mxu0 0.0
        %8358 = vmatpush1.msra.mxu0 %v8338
        %8359 = vmatprep.subr.mxu0 0.0
        %8360 = vmatpush1.msra.mxu0 %v8339
        %8361 = vmatprep.subr.mxu0 0.0
        %8362 = vmatpush1.msra.mxu0 %v8340
        %8363 = vmatprep.subr.mxu0 0.0
        %8364 = vmatpush1.msra.mxu0 0.0
        %8365 = vmatprep.subr.mxu0 0.0
        %8366 = vmatpush1.msra.mxu0 0.0
        %8367 = vmatprep.subr.mxu0 0.0
        %8368 = vmatpush1.msra.mxu0 0.0
        %8369 = vmatprep.subr.mxu0 0.0
        %8370 = vmatpush1.msra.mxu0 0.0
        %8371 = vmatprep.subr.mxu0 0.0
        %8372 = vmatpush1.msra.mxu0 0.0
        %8373 = vmatprep.subr.mxu0 0.0
        %8374 = vmatpush1.msra.mxu0 0.0
        %8375 = vmatprep.subr.mxu0 0.0
        %8376 = vmatpush1.msra.mxu0 0.0
        %8377 = vmatprep.subr.mxu0 0.0
        %8378 = vmatpush1.msra.mxu0 0.0
        %8379 = vmatprep.subr.mxu0 0.0
        %8380 = vmatpush1.msra.mxu0 0.0
        %8381 = vmatprep.subr.mxu0 0.0
        %8382 = vmatpush1.msra.mxu0 0.0
        %8383 = vmatprep.subr.mxu0 0.0
        %8384 = vmatpush1.msra.mxu0 0.0
        %8385 = vmatprep.subr.mxu0 0.0
        %8386 = vmatpush1.msra.mxu0 0.0
        %8387 = vmatprep.subr.mxu0 0.0
        %8388 = vmatpush1.msra.mxu0 0.0
        %8389 = vmatprep.subr.mxu0 0.0
        %8390 = vmatpush1.msra.mxu0 0.0
        %8391 = vmatprep.subr.mxu0 0.0
        %8392 = vmatpush1.msra.mxu0 0.0
        %8393 = vmatprep.subr.mxu0 0.0
        %8394 = vmatpush1.msra.mxu0 0.0
        %8395 = vmatprep.subr.mxu0 0.0
        %8396 = vmatpush1.msra.mxu0 0.0
        %8397 = vmatprep.subr.mxu0 0.0
        %8398 = vmatpush1.msra.mxu0 0.0
        %8399 = vmatprep.subr.mxu0 0.0
        %8400 = vmatpush1.msra.mxu0 0.0
        %8401 = vmatprep.subr.mxu0 0.0
        %8402 = vmatpush1.msra.mxu0 0.0
        %8403 = vmatprep.subr.mxu0 0.0
        %8404 = vmatpush1.msra.mxu0 0.0
        %8405 = vmatprep.subr.mxu0 0.0
        %8406 = vmatpush1.msra.mxu0 0.0
        %8407 = vmatprep.subr.mxu0 0.0
        %8408 = vmatpush1.msra.mxu0 0.0
        %8409 = vmatprep.subr.mxu0 0.0
        %8410 = vmatpush1.msra.mxu0 0.0
        %8411 = vmatprep.subr.mxu0 0.0
        %8412 = vmatpush1.msra.mxu0 0.0
        %8413 = vmatprep.subr.mxu0 0.0
        %8414 = vmatpush1.msra.mxu0 0.0
        %8415 = vmatprep.mubr.f32.mxu0 0.0
        %8416 = vmatmul.mubr.f32.gmra.mrb[0].mxu0 %v8349
        %v8417 = vpop.f32.mrb[0].mxu0
        %v8418 = vadd.f32 %v8346, %v8417
        %v8419 = vpop.f32.mrb[0].mxu0
        %8420 = vdwg.mxu0
        %v8421 = vmax.f32 %v8418, 0.0
        %v8422 = vld [vmem:[%s63] sm:$0x1]
        %v8423 = vld [vmem:[#allocation2] sm:$0x1]
        %8425 = vset.pattern.permute.xlu0 0
        %8426 = vperm.xlu0 %8425, %v8423
        %v8427 = vpop.permute.xlu0 %8426
        %v8429 = vlaneseq
        %v8430 = vshrl.u32 %v8429, 7
        %v8431 = vsub.s32 0, %v8430
        %v8432 = vrot.slane %v8427, %v8431
        %v8434 = vsel %vm1163, %v8422, 0
        %v8437 = vsel %vm1163, %v8421, 0
        %8439 = vmatprep.subr.mxu0 0.0
        %8440 = vmatpush1.xpose.msra.mxu0 %v8437
        %8441 = vmatprep.subr.mxu0 0.0
        %8442 = vmatpush1.xpose.msra.mxu0 0.0
        %8443 = vmatprep.subr.mxu0 0.0
        %8444 = vmatpush1.xpose.msra.mxu0 0.0
        %8445 = vmatprep.subr.mxu0 0.0
        %8446 = vmatpush1.xpose.msra.mxu0 0.0
        %8447 = vmatprep.subr.mxu0 0.0
        %8448 = vmatpush1.xpose.msra.mxu0 0.0
        %8449 = vmatprep.subr.mxu0 0.0
        %8450 = vmatpush1.xpose.msra.mxu0 0.0
        %8451 = vmatprep.subr.mxu0 0.0
        %8452 = vmatpush1.xpose.msra.mxu0 0.0
        %8453 = vmatprep.subr.mxu0 0.0
        %8454 = vmatpush1.xpose.msra.mxu0 0.0
        %8455 = vmatprep.subr.mxu0 0.0
        %8456 = vmatpush1.xpose.msra.mxu0 0.0
        %8457 = vmatprep.subr.mxu0 0.0
        %8458 = vmatpush1.xpose.msra.mxu0 0.0
        %8459 = vmatprep.subr.mxu0 0.0
        %8460 = vmatpush1.xpose.msra.mxu0 0.0
        %8461 = vmatprep.subr.mxu0 0.0
        %8462 = vmatpush1.xpose.msra.mxu0 0.0
        %8463 = vmatprep.subr.mxu0 0.0
        %8464 = vmatpush1.xpose.msra.mxu0 0.0
        %8465 = vmatprep.subr.mxu0 0.0
        %8466 = vmatpush1.xpose.msra.mxu0 0.0
        %8467 = vmatprep.subr.mxu0 0.0
        %8468 = vmatpush1.xpose.msra.mxu0 0.0
        %8469 = vmatprep.subr.mxu0 0.0
        %8470 = vmatpush1.xpose.msra.mxu0 0.0
        %8471 = vmatprep.subr.mxu0 0.0
        %8472 = vmatpush1.xpose.msra.mxu0 0.0
        %8473 = vmatprep.subr.mxu0 0.0
        %8474 = vmatpush1.xpose.msra.mxu0 0.0
        %8475 = vmatprep.subr.mxu0 0.0
        %8476 = vmatpush1.xpose.msra.mxu0 0.0
        %8477 = vmatprep.subr.mxu0 0.0
        %8478 = vmatpush1.xpose.msra.mxu0 0.0
        %8479 = vmatprep.subr.mxu0 0.0
        %8480 = vmatpush1.xpose.msra.mxu0 0.0
        %8481 = vmatprep.subr.mxu0 0.0
        %8482 = vmatpush1.xpose.msra.mxu0 0.0
        %8483 = vmatprep.subr.mxu0 0.0
        %8484 = vmatpush1.xpose.msra.mxu0 0.0
        %8485 = vmatprep.subr.mxu0 0.0
        %8486 = vmatpush1.xpose.msra.mxu0 0.0
        %8487 = vmatprep.subr.mxu0 0.0
        %8488 = vmatpush1.xpose.msra.mxu0 0.0
        %8489 = vmatprep.subr.mxu0 0.0
        %8490 = vmatpush1.xpose.msra.mxu0 0.0
        %8491 = vmatprep.subr.mxu0 0.0
        %8492 = vmatpush1.xpose.msra.mxu0 0.0
        %8493 = vmatprep.subr.mxu0 0.0
        %8494 = vmatpush1.xpose.msra.mxu0 0.0
        %8495 = vmatprep.subr.mxu0 0.0
        %8496 = vmatpush1.xpose.msra.mxu0 0.0
        %8497 = vmatprep.subr.mxu0 0.0
        %8498 = vmatpush1.xpose.msra.mxu0 0.0
        %8499 = vmatprep.subr.mxu0 0.0
        %8500 = vmatpush1.xpose.msra.mxu0 0.0
        %8501 = vmatprep.subr.mxu0 0.0
        %8502 = vmatpush1.xpose.msra.mxu0 0.0
        %8503 = vmatprep.mubr.f32.mxu0 0.0
        %8504 = vmatmul.mubr.f32.gmra.mrb[0].mxu0 %v8434
        %v8505 = vpop.f32.mrb[0].mxu0
        %v8506 = vadd.f32 %v8432, %v8505
        %v8507 = vpop.f32.mrb[0].mxu0
        %8508 = vdwg.mxu0
        %vm8509 = vcmask 57344
        %8510 = vst.msk [vmem:[%s1030] sm:$0x1] %vm8509, %v8506
        %s8511 = sand.u32 %s799, 1
        %s8512 = scalar_lea.sflag [#allocation4], %s8511
        %s8513 = sand.u32 %s799, 1
        %s8514 = scalar_lea.vmem [#allocation3], %s8513
        // Predicated region
        $region153: #{tpu_custom_call.1} parent=151 // pred_check
          %p8515 = pneg %p809
        $region154: #{tpu_custom_call.1} parent=151 // pred_check_branch
          %8517 = sbr.rel (%p8515) target = $region156
        $region155: #{tpu_custom_call.1} parent=151 // pred_region
          %s8519 = ssub.s32 16, 16
          %8520 = vsyncadd %s8512, %s8519
          %s8521 = smul.addr %s83, 16
          %s8522 = scalar_lea.hbm %s67, %s8521
          %s8524 = sshll.u32 %s8514, 4
          %s8525 = int_to_ptr.vmem [resolvable:$true] %s8524
          %8527 = dma.vmem_to_hbm [thread:$0]  %s8525, 16, %s8522, %s8512
        $region156: #{tpu_custom_call.1} parent=151 // pred_fallthru
          _
      $region152: #{tpu_custom_call.1} parent=5 // pred_fallthru
        _
      %p8528 = scmp.le.s32.totalorder 2, %s78
      // Predicated region
      $region157: #{tpu_custom_call.1} parent=5 // pred_check
        %p8529 = pneg %p8528
      $region158: #{tpu_custom_call.1} parent=5 // pred_check_branch
        %8531 = sbr.rel (%p8529) target = $region160
      $region159: #{tpu_custom_call.1} parent=5 // pred_region
        %s8532 = ssub.s32 %s78, 2
        // Predicated region
        $region161: #{tpu_custom_call.1} parent=159 // pred_check
          %p8533 = pneg %p815
        $region162: #{tpu_custom_call.1} parent=159 // pred_check_branch
          %8535 = sbr.rel (%p8533) target = $region164
        $region163: #{tpu_custom_call.1} parent=159 // pred_region
          %s8536 = sand.u32 %s800, 1
          %s8537 = scalar_lea.sflag [#allocation4], %s8536
          %s8538 = sand.u32 %s800, 1
          %s8539 = scalar_lea.vmem [#allocation3], %s8538
          %8540 = dma.done %s8537, 16
        $region164: #{tpu_custom_call.1} parent=159 // pred_fallthru
          _
      $region160: #{tpu_custom_call.1} parent=5 // pred_fallthru
        _
    $region6: #{tpu_custom_call.1} parent=1 // loop_footer
      %s82 = sadd.s32 1, %s78
    $region7: #{tpu_custom_call.1} parent=1 // loop_footer_branch
      %77 = sbr.rel target = $region3
    $region8: #{tpu_custom_call.1} parent=1 // loop_exit
      _
    %8541 = vsyncpa [#allocation4], 1
    %s8542 = scalar_lea.sflag [#allocation4], 1
    %8543 = vsyncpa %s8542, 1

</llo_original>
